<compile_context>
chip_gen: v5e
topology: v5e:2x2
jax: 0.10.0
libtpu: 0.0.40
codegen_flags: <defaults>
</compile_context>

<pallas_src>
import jax
import jax.numpy as jnp
from jax.experimental import pallas as pl
from jax.experimental.pallas import tpu as pltpu

nc = 3     # input channels
ndf = 8    # base feature maps (small for the demo)
IMG = 32   # input spatial size (3 stride-2 convs + final 4x4 valid conv -> 1x1)


def _tree_concat_lanes(pieces):
  """Pairwise concatenation along the last (lane) axis.

  Keeps every concat to two operands (friendlier lowering, smaller live
  intermediates) while preserving left-to-right ordering.
  """
  while len(pieces) > 1:
    nxt = []
    for i in range(0, len(pieces) - 1, 2):
      nxt.append(jnp.concatenate([pieces[i], pieces[i + 1]], axis=-1))
    if len(pieces) % 2 == 1:
      nxt.append(pieces[-1])
    pieces = nxt
  return pieces[0]


def _make_fused_kernel(N):
  """Fused kernel: conv1+lrelu -> conv2+bn+lrelu -> conv3+bn+lrelu -> conv4+sigmoid."""
  H1, H2, H3, H4 = IMG, IMG // 2, IMG // 4, IMG // 8   # 32, 16, 8, 4

  def lrelu(v):
    return jnp.where(v >= 0, v, 0.2 * v)

  def batchnorm(y, g_ref, b_ref):
    # BatchNorm2d forward, training mode: per-channel stats over N*OH*OW.
    mean = jnp.mean(y, axis=0, keepdims=True)
    var = jnp.mean((y - mean) ** 2, axis=0, keepdims=True)   # biased variance
    return (y - mean) * jax.lax.rsqrt(var + 1e-5) * g_ref[...] + b_ref[...]

  def pad_into(dst_ref, val, h, w):
    # dst_ref: (N, h+2, w+2, C) zero-padded NHWC buffer; write the interior.
    dst_ref[...] = jnp.zeros(dst_ref.shape, dst_ref.dtype)
    dst_ref[:, 1:h + 1, 1:w + 1, :] = val

  def im2col(src_ref, oh, ow, cin, stride):
    # Build the (M, 16*cin) im2col matrix with in-kernel strided ref loads.
    # Tap t = kh*4 + kw occupies columns [t*cin, (t+1)*cin), which matches the
    # row order of w_hwio.reshape(16*cin, cout).
    slabs = []
    for kh in range(4):
      for kw in range(4):
        slabs.append(src_ref[:, pl.ds(kh, oh, stride=stride),
                             pl.ds(kw, ow, stride=stride), :])
    patch = _tree_concat_lanes(slabs)                 # (N, oh, ow, 16*cin)
    return patch.reshape(N * oh * ow, 16 * cin)

  def kernel(x_ref, w1_ref, w2_ref, w3_ref, w4_ref,
             g2_ref, b2_ref, g3_ref, b3_ref, o_ref,
             a0p, a1p, a2p, a3):
    # ---- layer 1: conv(nc -> ndf, k4 s2 p1) + LeakyReLU --------------------
    pad_into(a0p, x_ref[...], H1, H1)
    p1 = im2col(a0p, H2, H2, nc, 2)                                  # (512, 48)
    y1 = lrelu(jnp.dot(p1, w1_ref[...],
                       preferred_element_type=jnp.float32))          # (512, 8)

    # ---- layer 2: conv(ndf -> 2ndf, k4 s2 p1) + BN + LeakyReLU -------------
    pad_into(a1p, y1.reshape(N, H2, H2, ndf), H2, H2)
    p2 = im2col(a1p, H3, H3, ndf, 2)                                 # (128, 128)
    y2 = lrelu(batchnorm(jnp.dot(p2, w2_ref[...],
                                 preferred_element_type=jnp.float32),
                         g2_ref, b2_ref))                            # (128, 16)

    # ---- layer 3: conv(2ndf -> 4ndf, k4 s2 p1) + BN + LeakyReLU ------------
    pad_into(a2p, y2.reshape(N, H3, H3, 2 * ndf), H3, H3)
    p3 = im2col(a2p, H4, H4, 2 * ndf, 2)                             # (32, 256)
    y3 = lrelu(batchnorm(jnp.dot(p3, w3_ref[...],
                                 preferred_element_type=jnp.float32),
                         g3_ref, b3_ref))                            # (32, 32)

    # ---- layer 4: conv(4ndf -> 1, k4 s1 p0) + sigmoid ----------------------
    a3[...] = y3.reshape(N, H4, H4, 4 * ndf)
    p4 = im2col(a3, 1, 1, 4 * ndf, 1)                                # (N, 512)
    logits = jnp.dot(p4, w4_ref[...],
                     preferred_element_type=jnp.float32)             # (N, 1)
    # Numerically stable sigmoid (no inf intermediate for large |logits|).
    z = jnp.exp(-jnp.abs(logits))
    o_ref[...] = jnp.where(logits >= 0, 1.0 / (1.0 + z), z / (1.0 + z))

  return kernel


@jax.jit
def discriminator_forward(x_nchw, params):
  """Pallas forward pass.  Input/output in PyTorch NCHW convention."""
  N = x_nchw.shape[0]
  x = jnp.transpose(x_nchw, (0, 2, 3, 1)).astype(jnp.float32)   # NCHW -> NHWC

  # Fold conv weights to im2col form: (KH, KW, Cin, Cout) -> (KH*KW*Cin, Cout).
  w1 = params["w1"].reshape(-1, ndf)
  w2 = params["w2"].reshape(-1, 2 * ndf)
  w3 = params["w3"].reshape(-1, 4 * ndf)
  w4 = params["w4"].reshape(-1, 1)
  g2 = params["g2"].reshape(1, -1).astype(jnp.float32)
  b2 = params["b2"].reshape(1, -1).astype(jnp.float32)
  g3 = params["g3"].reshape(1, -1).astype(jnp.float32)
  b3 = params["b3"].reshape(1, -1).astype(jnp.float32)

  f32 = jnp.float32
  vmem = pltpu.MemorySpace.VMEM
  args = (x, w1, w2, w3, w4, g2, b2, g3, b3)
  out2d = pl.pallas_call(
      _make_fused_kernel(N),
      out_shape=jax.ShapeDtypeStruct((N, 1), f32),
      in_specs=[pl.BlockSpec(memory_space=vmem)] * len(args),
      out_specs=pl.BlockSpec(memory_space=vmem),
      scratch_shapes=[
          # Zero-padded NHWC activations (next-layer conv inputs), all VMEM.
          pltpu.VMEM((N, IMG + 2, IMG + 2, nc), f32),              # 34x34x3
          pltpu.VMEM((N, IMG // 2 + 2, IMG // 2 + 2, ndf), f32),   # 18x18x8
          pltpu.VMEM((N, IMG // 4 + 2, IMG // 4 + 2, 2 * ndf), f32),  # 10x10x16
          pltpu.VMEM((N, IMG // 8, IMG // 8, 4 * ndf), f32),       # 4x4x32
      ],
  )(*args)
  return out2d.reshape(N, 1, 1, 1)


# ---------------------------------------------------------------------------
# Pure-JAX reference (lax.conv) for correctness checking.
# ---------------------------------------------------------------------------
def ref_forward(x, p):
  def conv(x, w_oihw, s, pad):
    return jax.lax.conv_general_dilated(
        x, w_oihw, (s, s), [(pad, pad), (pad, pad)],
        dimension_numbers=("NCHW", "OIHW", "NCHW"))

  def bn(x, g, b):
    mean = x.mean(axis=(0, 2, 3), keepdims=True)
    var = ((x - mean) ** 2).mean(axis=(0, 2, 3), keepdims=True)
    return ((x - mean) * jax.lax.rsqrt(var + 1e-5)
            * g.reshape(1, -1, 1, 1) + b.reshape(1, -1, 1, 1))

  lrelu = lambda v: jnp.where(v >= 0, v, 0.2 * v)
  x = lrelu(conv(x, p["w1o"], 2, 1))
  x = lrelu(bn(conv(x, p["w2o"], 2, 1), p["g2"], p["b2"]))
  x = lrelu(bn(conv(x, p["w3o"], 2, 1), p["g3"], p["b3"]))
  x = jax.nn.sigmoid(conv(x, p["w4o"], 1, 0))
  return x


def init_params(key):
  """Deterministic DCGAN-style init: conv ~ N(0, 0.02), gamma ~ N(1, 0.02)."""
  ks = jax.random.split(key, 8)
  def convw(k, o, i):  # OIHW
    return 0.02 * jax.random.normal(k, (o, i, 4, 4), dtype=jnp.float32)
  w1o = convw(ks[0], ndf, nc)
  w2o = convw(ks[1], ndf * 2, ndf)
  w3o = convw(ks[2], ndf * 4, ndf * 2)
  w4o = convw(ks[3], 1, ndf * 4)
  g2 = 1.0 + 0.02 * jax.random.normal(ks[4], (ndf * 2,), dtype=jnp.float32)
  g3 = 1.0 + 0.02 * jax.random.normal(ks[5], (ndf * 4,), dtype=jnp.float32)
  b2 = jnp.zeros((ndf * 2,), jnp.float32)
  b3 = jnp.zeros((ndf * 4,), jnp.float32)
  oihw_to_hwio = lambda w: jnp.transpose(w, (2, 3, 1, 0))  # (KH,KW,Cin,Cout)
  return {
      "w1": oihw_to_hwio(w1o), "w2": oihw_to_hwio(w2o),
      "w3": oihw_to_hwio(w3o), "w4": oihw_to_hwio(w4o),
      "w1o": w1o, "w2o": w2o, "w3o": w3o, "w4o": w4o,
      "g2": g2, "b2": b2, "g3": g3, "b3": b3,
  }


if __name__ == "__main__":
  key = jax.random.PRNGKey(0)
  pkey, xkey = jax.random.split(key)
  params = init_params(pkey)

  # Input image batch: (N, nc, 32, 32) so the final 4x4/stride-1 conv yields 1x1.
  x = jax.random.normal(xkey, (2, nc, IMG, IMG), dtype=jnp.float32)

  out = jax.block_until_ready(discriminator_forward(x, params))
  ref = jax.block_until_ready(ref_forward(x, params))

  assert out.shape == (2, 1, 1, 1), out.shape
  assert jnp.allclose(out, ref, atol=2e-4, rtol=2e-4), (
      "mismatch vs lax.conv reference")

  print("KERNEL_OK")
</pallas_src>

<mosaic_0001>
module attributes {stable_mosaic.version = 11 : i64} {
  func.func @kernel(%arg0: memref<2x32x32x3xf32, #tpu.memory_space<vmem>>, %arg1: memref<48x8xf32, #tpu.memory_space<vmem>>, %arg2: memref<128x16xf32, #tpu.memory_space<vmem>>, %arg3: memref<256x32xf32, #tpu.memory_space<vmem>>, %arg4: memref<512x1xf32, #tpu.memory_space<vmem>>, %arg5: memref<1x16xf32, #tpu.memory_space<vmem>>, %arg6: memref<1x16xf32, #tpu.memory_space<vmem>>, %arg7: memref<1x32xf32, #tpu.memory_space<vmem>>, %arg8: memref<1x32xf32, #tpu.memory_space<vmem>>, %arg9: memref<2x1xf32, #tpu.memory_space<vmem>>, %arg10: memref<2x34x34x3xf32, #tpu.memory_space<vmem>>, %arg11: memref<2x18x18x8xf32, #tpu.memory_space<vmem>>, %arg12: memref<2x10x10x16xf32, #tpu.memory_space<vmem>>, %arg13: memref<2x4x4x32xf32, #tpu.memory_space<vmem>>) attributes {dimension_semantics = [], scalar_prefetch = 0 : i64, scratch_operands = 4 : i64, tpu.core_type = #tpu.core_type<tc>} {
    %c0 = arith.constant 0 : index
    %c0_0 = arith.constant 0 : index
    %c0_1 = arith.constant 0 : index
    %c0_2 = arith.constant 0 : index
    %0 = vector.load %arg0[%c0, %c0_0, %c0_1, %c0_2] : memref<2x32x32x3xf32, #tpu.memory_space<vmem>>, vector<2x32x32x3xf32>
    %cst = arith.constant 0.000000e+00 : f32
    %1 = vector.broadcast %cst : f32 to vector<2x34x34x3xf32>
    %c0_3 = arith.constant 0 : index
    %c0_4 = arith.constant 0 : index
    %c0_5 = arith.constant 0 : index
    %c0_6 = arith.constant 0 : index
    %2 = vector.load %arg10[%c0_3, %c0_4, %c0_5, %c0_6] : memref<2x34x34x3xf32, #tpu.memory_space<vmem>>, vector<2x34x34x3xf32>
    tpu.vector_store %arg10[%c0_3, %c0_4, %c0_5, %c0_6], %1 {strides = array<i32>} : memref<2x34x34x3xf32, #tpu.memory_space<vmem>>, vector<2x34x34x3xf32>,
    %c0_7 = arith.constant 0 : index
    %c1 = arith.constant 1 : index
    %c1_8 = arith.constant 1 : index
    %c0_9 = arith.constant 0 : index
    %3 = vector.load %arg10[%c0_7, %c1, %c1_8, %c0_9] : memref<2x34x34x3xf32, #tpu.memory_space<vmem>>, vector<2x32x32x3xf32>
    tpu.vector_store %arg10[%c0_7, %c1, %c1_8, %c0_9], %0 {strides = array<i32>} : memref<2x34x34x3xf32, #tpu.memory_space<vmem>>, vector<2x32x32x3xf32>,
    %c0_10 = arith.constant 0 : index
    %c0_11 = arith.constant 0 : index
    %c0_12 = arith.constant 0 : index
    %c0_13 = arith.constant 0 : index
    %4 = tpu.strided_load %arg10[%c0_10, %c0_11, %c0_12, %c0_13] {strides = array<i32: 1, 2, 2, 1>} : memref<2x34x34x3xf32, #tpu.memory_space<vmem>>, vector<2x16x16x3xf32>
    %c0_14 = arith.constant 0 : index
    %c0_15 = arith.constant 0 : index
    %c1_16 = arith.constant 1 : index
    %c0_17 = arith.constant 0 : index
    %5 = tpu.strided_load %arg10[%c0_14, %c0_15, %c1_16, %c0_17] {strides = array<i32: 1, 2, 2, 1>} : memref<2x34x34x3xf32, #tpu.memory_space<vmem>>, vector<2x16x16x3xf32>
    %c0_18 = arith.constant 0 : index
    %c0_19 = arith.constant 0 : index
    %c2 = arith.constant 2 : index
    %c0_20 = arith.constant 0 : index
    %6 = tpu.strided_load %arg10[%c0_18, %c0_19, %c2, %c0_20] {strides = array<i32: 1, 2, 2, 1>} : memref<2x34x34x3xf32, #tpu.memory_space<vmem>>, vector<2x16x16x3xf32>
    %c0_21 = arith.constant 0 : index
    %c0_22 = arith.constant 0 : index
    %c3 = arith.constant 3 : index
    %c0_23 = arith.constant 0 : index
    %7 = tpu.strided_load %arg10[%c0_21, %c0_22, %c3, %c0_23] {strides = array<i32: 1, 2, 2, 1>} : memref<2x34x34x3xf32, #tpu.memory_space<vmem>>, vector<2x16x16x3xf32>
    %c0_24 = arith.constant 0 : index
    %c1_25 = arith.constant 1 : index
    %c0_26 = arith.constant 0 : index
    %c0_27 = arith.constant 0 : index
    %8 = tpu.strided_load %arg10[%c0_24, %c1_25, %c0_26, %c0_27] {strides = array<i32: 1, 2, 2, 1>} : memref<2x34x34x3xf32, #tpu.memory_space<vmem>>, vector<2x16x16x3xf32>
    %c0_28 = arith.constant 0 : index
    %c1_29 = arith.constant 1 : index
    %c1_30 = arith.constant 1 : index
    %c0_31 = arith.constant 0 : index
    %9 = tpu.strided_load %arg10[%c0_28, %c1_29, %c1_30, %c0_31] {strides = array<i32: 1, 2, 2, 1>} : memref<2x34x34x3xf32, #tpu.memory_space<vmem>>, vector<2x16x16x3xf32>
    %c0_32 = arith.constant 0 : index
    %c1_33 = arith.constant 1 : index
    %c2_34 = arith.constant 2 : index
    %c0_35 = arith.constant 0 : index
    %10 = tpu.strided_load %arg10[%c0_32, %c1_33, %c2_34, %c0_35] {strides = array<i32: 1, 2, 2, 1>} : memref<2x34x34x3xf32, #tpu.memory_space<vmem>>, vector<2x16x16x3xf32>
    %c0_36 = arith.constant 0 : index
    %c1_37 = arith.constant 1 : index
    %c3_38 = arith.constant 3 : index
    %c0_39 = arith.constant 0 : index
    %11 = tpu.strided_load %arg10[%c0_36, %c1_37, %c3_38, %c0_39] {strides = array<i32: 1, 2, 2, 1>} : memref<2x34x34x3xf32, #tpu.memory_space<vmem>>, vector<2x16x16x3xf32>
    %c0_40 = arith.constant 0 : index
    %c2_41 = arith.constant 2 : index
    %c0_42 = arith.constant 0 : index
    %c0_43 = arith.constant 0 : index
    %12 = tpu.strided_load %arg10[%c0_40, %c2_41, %c0_42, %c0_43] {strides = array<i32: 1, 2, 2, 1>} : memref<2x34x34x3xf32, #tpu.memory_space<vmem>>, vector<2x16x16x3xf32>
    %c0_44 = arith.constant 0 : index
    %c2_45 = arith.constant 2 : index
    %c1_46 = arith.constant 1 : index
    %c0_47 = arith.constant 0 : index
    %13 = tpu.strided_load %arg10[%c0_44, %c2_45, %c1_46, %c0_47] {strides = array<i32: 1, 2, 2, 1>} : memref<2x34x34x3xf32, #tpu.memory_space<vmem>>, vector<2x16x16x3xf32>
    %c0_48 = arith.constant 0 : index
    %c2_49 = arith.constant 2 : index
    %c2_50 = arith.constant 2 : index
    %c0_51 = arith.constant 0 : index
    %14 = tpu.strided_load %arg10[%c0_48, %c2_49, %c2_50, %c0_51] {strides = array<i32: 1, 2, 2, 1>} : memref<2x34x34x3xf32, #tpu.memory_space<vmem>>, vector<2x16x16x3xf32>
    %c0_52 = arith.constant 0 : index
    %c2_53 = arith.constant 2 : index
    %c3_54 = arith.constant 3 : index
    %c0_55 = arith.constant 0 : index
    %15 = tpu.strided_load %arg10[%c0_52, %c2_53, %c3_54, %c0_55] {strides = array<i32: 1, 2, 2, 1>} : memref<2x34x34x3xf32, #tpu.memory_space<vmem>>, vector<2x16x16x3xf32>
    %c0_56 = arith.constant 0 : index
    %c3_57 = arith.constant 3 : index
    %c0_58 = arith.constant 0 : index
    %c0_59 = arith.constant 0 : index
    %16 = tpu.strided_load %arg10[%c0_56, %c3_57, %c0_58, %c0_59] {strides = array<i32: 1, 2, 2, 1>} : memref<2x34x34x3xf32, #tpu.memory_space<vmem>>, vector<2x16x16x3xf32>
    %c0_60 = arith.constant 0 : index
    %c3_61 = arith.constant 3 : index
    %c1_62 = arith.constant 1 : index
    %c0_63 = arith.constant 0 : index
    %17 = tpu.strided_load %arg10[%c0_60, %c3_61, %c1_62, %c0_63] {strides = array<i32: 1, 2, 2, 1>} : memref<2x34x34x3xf32, #tpu.memory_space<vmem>>, vector<2x16x16x3xf32>
    %c0_64 = arith.constant 0 : index
    %c3_65 = arith.constant 3 : index
    %c2_66 = arith.constant 2 : index
    %c0_67 = arith.constant 0 : index
    %18 = tpu.strided_load %arg10[%c0_64, %c3_65, %c2_66, %c0_67] {strides = array<i32: 1, 2, 2, 1>} : memref<2x34x34x3xf32, #tpu.memory_space<vmem>>, vector<2x16x16x3xf32>
    %c0_68 = arith.constant 0 : index
    %c3_69 = arith.constant 3 : index
    %c3_70 = arith.constant 3 : index
    %c0_71 = arith.constant 0 : index
    %19 = tpu.strided_load %arg10[%c0_68, %c3_69, %c3_70, %c0_71] {strides = array<i32: 1, 2, 2, 1>} : memref<2x34x34x3xf32, #tpu.memory_space<vmem>>, vector<2x16x16x3xf32>
    %20 = tpu.concatenate %4, %5 in 3 : vector<2x16x16x3xf32>, vector<2x16x16x3xf32> -> vector<2x16x16x6xf32>
    %21 = tpu.concatenate %6, %7 in 3 : vector<2x16x16x3xf32>, vector<2x16x16x3xf32> -> vector<2x16x16x6xf32>
    %22 = tpu.concatenate %8, %9 in 3 : vector<2x16x16x3xf32>, vector<2x16x16x3xf32> -> vector<2x16x16x6xf32>
    %23 = tpu.concatenate %10, %11 in 3 : vector<2x16x16x3xf32>, vector<2x16x16x3xf32> -> vector<2x16x16x6xf32>
    %24 = tpu.concatenate %12, %13 in 3 : vector<2x16x16x3xf32>, vector<2x16x16x3xf32> -> vector<2x16x16x6xf32>
    %25 = tpu.concatenate %14, %15 in 3 : vector<2x16x16x3xf32>, vector<2x16x16x3xf32> -> vector<2x16x16x6xf32>
    %26 = tpu.concatenate %16, %17 in 3 : vector<2x16x16x3xf32>, vector<2x16x16x3xf32> -> vector<2x16x16x6xf32>
    %27 = tpu.concatenate %18, %19 in 3 : vector<2x16x16x3xf32>, vector<2x16x16x3xf32> -> vector<2x16x16x6xf32>
    %28 = tpu.concatenate %20, %21 in 3 : vector<2x16x16x6xf32>, vector<2x16x16x6xf32> -> vector<2x16x16x12xf32>
    %29 = tpu.concatenate %22, %23 in 3 : vector<2x16x16x6xf32>, vector<2x16x16x6xf32> -> vector<2x16x16x12xf32>
    %30 = tpu.concatenate %24, %25 in 3 : vector<2x16x16x6xf32>, vector<2x16x16x6xf32> -> vector<2x16x16x12xf32>
    %31 = tpu.concatenate %26, %27 in 3 : vector<2x16x16x6xf32>, vector<2x16x16x6xf32> -> vector<2x16x16x12xf32>
    %32 = tpu.concatenate %28, %29 in 3 : vector<2x16x16x12xf32>, vector<2x16x16x12xf32> -> vector<2x16x16x24xf32>
    %33 = tpu.concatenate %30, %31 in 3 : vector<2x16x16x12xf32>, vector<2x16x16x12xf32> -> vector<2x16x16x24xf32>
    %34 = tpu.concatenate %32, %33 in 3 : vector<2x16x16x24xf32>, vector<2x16x16x24xf32> -> vector<2x16x16x48xf32>
    %35 = vector.shape_cast %34 : vector<2x16x16x48xf32> to vector<512x48xf32>
    %c0_72 = arith.constant 0 : index
    %c0_73 = arith.constant 0 : index
    %36 = vector.load %arg1[%c0_72, %c0_73] : memref<48x8xf32, #tpu.memory_space<vmem>>, vector<48x8xf32>
    %cst_74 = arith.constant dense<0.000000e+00> : vector<512x8xf32>
    %37 = tpu.matmul %35, %36, %cst_74 {dimension_numbers = #tpu.dot_dimension_numbers<[1], [0], [0], [1], [0, 0, 1, 1], [], []>} : vector<512x48xf32>, vector<48x8xf32>, vector<512x8xf32> -> vector<512x8xf32>
    %cst_75 = arith.constant 0.000000e+00 : f32
    %38 = vector.broadcast %cst_75 : f32 to vector<512x8xf32>
    %39 = arith.cmpf oge, %37, %38 : vector<512x8xf32>
    %cst_76 = arith.constant 2.000000e-01 : f32
    %40 = vector.broadcast %cst_76 : f32 to vector<512x8xf32>
    %41 = arith.mulf %40, %37 : vector<512x8xf32>
    %42 = arith.select %39, %37, %41 : vector<512x8xi1>, vector<512x8xf32>
    %43 = vector.shape_cast %42 : vector<512x8xf32> to vector<2x16x16x8xf32>
    %cst_77 = arith.constant 0.000000e+00 : f32
    %44 = vector.broadcast %cst_77 : f32 to vector<2x18x18x8xf32>
    %c0_78 = arith.constant 0 : index
    %c0_79 = arith.constant 0 : index
    %c0_80 = arith.constant 0 : index
    %c0_81 = arith.constant 0 : index
    %45 = vector.load %arg11[%c0_78, %c0_79, %c0_80, %c0_81] : memref<2x18x18x8xf32, #tpu.memory_space<vmem>>, vector<2x18x18x8xf32>
    tpu.vector_store %arg11[%c0_78, %c0_79, %c0_80, %c0_81], %44 {strides = array<i32>} : memref<2x18x18x8xf32, #tpu.memory_space<vmem>>, vector<2x18x18x8xf32>,
    %c0_82 = arith.constant 0 : index
    %c1_83 = arith.constant 1 : index
    %c1_84 = arith.constant 1 : index
    %c0_85 = arith.constant 0 : index
    %46 = vector.load %arg11[%c0_82, %c1_83, %c1_84, %c0_85] : memref<2x18x18x8xf32, #tpu.memory_space<vmem>>, vector<2x16x16x8xf32>
    tpu.vector_store %arg11[%c0_82, %c1_83, %c1_84, %c0_85], %43 {strides = array<i32>} : memref<2x18x18x8xf32, #tpu.memory_space<vmem>>, vector<2x16x16x8xf32>,
    %c0_86 = arith.constant 0 : index
    %c0_87 = arith.constant 0 : index
    %c0_88 = arith.constant 0 : index
    %c0_89 = arith.constant 0 : index
    %47 = tpu.strided_load %arg11[%c0_86, %c0_87, %c0_88, %c0_89] {strides = array<i32: 1, 2, 2, 1>} : memref<2x18x18x8xf32, #tpu.memory_space<vmem>>, vector<2x8x8x8xf32>
    %c0_90 = arith.constant 0 : index
    %c0_91 = arith.constant 0 : index
    %c1_92 = arith.constant 1 : index
    %c0_93 = arith.constant 0 : index
    %48 = tpu.strided_load %arg11[%c0_90, %c0_91, %c1_92, %c0_93] {strides = array<i32: 1, 2, 2, 1>} : memref<2x18x18x8xf32, #tpu.memory_space<vmem>>, vector<2x8x8x8xf32>
    %c0_94 = arith.constant 0 : index
    %c0_95 = arith.constant 0 : index
    %c2_96 = arith.constant 2 : index
    %c0_97 = arith.constant 0 : index
    %49 = tpu.strided_load %arg11[%c0_94, %c0_95, %c2_96, %c0_97] {strides = array<i32: 1, 2, 2, 1>} : memref<2x18x18x8xf32, #tpu.memory_space<vmem>>, vector<2x8x8x8xf32>
    %c0_98 = arith.constant 0 : index
    %c0_99 = arith.constant 0 : index
    %c3_100 = arith.constant 3 : index
    %c0_101 = arith.constant 0 : index
    %50 = tpu.strided_load %arg11[%c0_98, %c0_99, %c3_100, %c0_101] {strides = array<i32: 1, 2, 2, 1>} : memref<2x18x18x8xf32, #tpu.memory_space<vmem>>, vector<2x8x8x8xf32>
    %c0_102 = arith.constant 0 : index
    %c1_103 = arith.constant 1 : index
    %c0_104 = arith.constant 0 : index
    %c0_105 = arith.constant 0 : index
    %51 = tpu.strided_load %arg11[%c0_102, %c1_103, %c0_104, %c0_105] {strides = array<i32: 1, 2, 2, 1>} : memref<2x18x18x8xf32, #tpu.memory_space<vmem>>, vector<2x8x8x8xf32>
    %c0_106 = arith.constant 0 : index
    %c1_107 = arith.constant 1 : index
    %c1_108 = arith.constant 1 : index
    %c0_109 = arith.constant 0 : index
    %52 = tpu.strided_load %arg11[%c0_106, %c1_107, %c1_108, %c0_109] {strides = array<i32: 1, 2, 2, 1>} : memref<2x18x18x8xf32, #tpu.memory_space<vmem>>, vector<2x8x8x8xf32>
    %c0_110 = arith.constant 0 : index
    %c1_111 = arith.constant 1 : index
    %c2_112 = arith.constant 2 : index
    %c0_113 = arith.constant 0 : index
    %53 = tpu.strided_load %arg11[%c0_110, %c1_111, %c2_112, %c0_113] {strides = array<i32: 1, 2, 2, 1>} : memref<2x18x18x8xf32, #tpu.memory_space<vmem>>, vector<2x8x8x8xf32>
    %c0_114 = arith.constant 0 : index
    %c1_115 = arith.constant 1 : index
    %c3_116 = arith.constant 3 : index
    %c0_117 = arith.constant 0 : index
    %54 = tpu.strided_load %arg11[%c0_114, %c1_115, %c3_116, %c0_117] {strides = array<i32: 1, 2, 2, 1>} : memref<2x18x18x8xf32, #tpu.memory_space<vmem>>, vector<2x8x8x8xf32>
    %c0_118 = arith.constant 0 : index
    %c2_119 = arith.constant 2 : index
    %c0_120 = arith.constant 0 : index
    %c0_121 = arith.constant 0 : index
    %55 = tpu.strided_load %arg11[%c0_118, %c2_119, %c0_120, %c0_121] {strides = array<i32: 1, 2, 2, 1>} : memref<2x18x18x8xf32, #tpu.memory_space<vmem>>, vector<2x8x8x8xf32>
    %c0_122 = arith.constant 0 : index
    %c2_123 = arith.constant 2 : index
    %c1_124 = arith.constant 1 : index
    %c0_125 = arith.constant 0 : index
    %56 = tpu.strided_load %arg11[%c0_122, %c2_123, %c1_124, %c0_125] {strides = array<i32: 1, 2, 2, 1>} : memref<2x18x18x8xf32, #tpu.memory_space<vmem>>, vector<2x8x8x8xf32>
    %c0_126 = arith.constant 0 : index
    %c2_127 = arith.constant 2 : index
    %c2_128 = arith.constant 2 : index
    %c0_129 = arith.constant 0 : index
    %57 = tpu.strided_load %arg11[%c0_126, %c2_127, %c2_128, %c0_129] {strides = array<i32: 1, 2, 2, 1>} : memref<2x18x18x8xf32, #tpu.memory_space<vmem>>, vector<2x8x8x8xf32>
    %c0_130 = arith.constant 0 : index
    %c2_131 = arith.constant 2 : index
    %c3_132 = arith.constant 3 : index
    %c0_133 = arith.constant 0 : index
    %58 = tpu.strided_load %arg11[%c0_130, %c2_131, %c3_132, %c0_133] {strides = array<i32: 1, 2, 2, 1>} : memref<2x18x18x8xf32, #tpu.memory_space<vmem>>, vector<2x8x8x8xf32>
    %c0_134 = arith.constant 0 : index
    %c3_135 = arith.constant 3 : index
    %c0_136 = arith.constant 0 : index
    %c0_137 = arith.constant 0 : index
    %59 = tpu.strided_load %arg11[%c0_134, %c3_135, %c0_136, %c0_137] {strides = array<i32: 1, 2, 2, 1>} : memref<2x18x18x8xf32, #tpu.memory_space<vmem>>, vector<2x8x8x8xf32>
    %c0_138 = arith.constant 0 : index
    %c3_139 = arith.constant 3 : index
    %c1_140 = arith.constant 1 : index
    %c0_141 = arith.constant 0 : index
    %60 = tpu.strided_load %arg11[%c0_138, %c3_139, %c1_140, %c0_141] {strides = array<i32: 1, 2, 2, 1>} : memref<2x18x18x8xf32, #tpu.memory_space<vmem>>, vector<2x8x8x8xf32>
    %c0_142 = arith.constant 0 : index
    %c3_143 = arith.constant 3 : index
    %c2_144 = arith.constant 2 : index
    %c0_145 = arith.constant 0 : index
    %61 = tpu.strided_load %arg11[%c0_142, %c3_143, %c2_144, %c0_145] {strides = array<i32: 1, 2, 2, 1>} : memref<2x18x18x8xf32, #tpu.memory_space<vmem>>, vector<2x8x8x8xf32>
    %c0_146 = arith.constant 0 : index
    %c3_147 = arith.constant 3 : index
    %c3_148 = arith.constant 3 : index
    %c0_149 = arith.constant 0 : index
    %62 = tpu.strided_load %arg11[%c0_146, %c3_147, %c3_148, %c0_149] {strides = array<i32: 1, 2, 2, 1>} : memref<2x18x18x8xf32, #tpu.memory_space<vmem>>, vector<2x8x8x8xf32>
    %63 = tpu.concatenate %47, %48 in 3 : vector<2x8x8x8xf32>, vector<2x8x8x8xf32> -> vector<2x8x8x16xf32>
    %64 = tpu.concatenate %49, %50 in 3 : vector<2x8x8x8xf32>, vector<2x8x8x8xf32> -> vector<2x8x8x16xf32>
    %65 = tpu.concatenate %51, %52 in 3 : vector<2x8x8x8xf32>, vector<2x8x8x8xf32> -> vector<2x8x8x16xf32>
    %66 = tpu.concatenate %53, %54 in 3 : vector<2x8x8x8xf32>, vector<2x8x8x8xf32> -> vector<2x8x8x16xf32>
    %67 = tpu.concatenate %55, %56 in 3 : vector<2x8x8x8xf32>, vector<2x8x8x8xf32> -> vector<2x8x8x16xf32>
    %68 = tpu.concatenate %57, %58 in 3 : vector<2x8x8x8xf32>, vector<2x8x8x8xf32> -> vector<2x8x8x16xf32>
    %69 = tpu.concatenate %59, %60 in 3 : vector<2x8x8x8xf32>, vector<2x8x8x8xf32> -> vector<2x8x8x16xf32>
    %70 = tpu.concatenate %61, %62 in 3 : vector<2x8x8x8xf32>, vector<2x8x8x8xf32> -> vector<2x8x8x16xf32>
    %71 = tpu.concatenate %63, %64 in 3 : vector<2x8x8x16xf32>, vector<2x8x8x16xf32> -> vector<2x8x8x32xf32>
    %72 = tpu.concatenate %65, %66 in 3 : vector<2x8x8x16xf32>, vector<2x8x8x16xf32> -> vector<2x8x8x32xf32>
    %73 = tpu.concatenate %67, %68 in 3 : vector<2x8x8x16xf32>, vector<2x8x8x16xf32> -> vector<2x8x8x32xf32>
    %74 = tpu.concatenate %69, %70 in 3 : vector<2x8x8x16xf32>, vector<2x8x8x16xf32> -> vector<2x8x8x32xf32>
    %75 = tpu.concatenate %71, %72 in 3 : vector<2x8x8x32xf32>, vector<2x8x8x32xf32> -> vector<2x8x8x64xf32>
    %76 = tpu.concatenate %73, %74 in 3 : vector<2x8x8x32xf32>, vector<2x8x8x32xf32> -> vector<2x8x8x64xf32>
    %77 = tpu.concatenate %75, %76 in 3 : vector<2x8x8x64xf32>, vector<2x8x8x64xf32> -> vector<2x8x8x128xf32>
    %78 = vector.shape_cast %77 : vector<2x8x8x128xf32> to vector<128x128xf32>
    %c0_150 = arith.constant 0 : index
    %c0_151 = arith.constant 0 : index
    %79 = vector.load %arg2[%c0_150, %c0_151] : memref<128x16xf32, #tpu.memory_space<vmem>>, vector<128x16xf32>
    %cst_152 = arith.constant dense<0.000000e+00> : vector<128x16xf32>
    %80 = tpu.matmul %78, %79, %cst_152 {dimension_numbers = #tpu.dot_dimension_numbers<[1], [0], [0], [1], [0, 0, 1, 1], [], []>} : vector<128x128xf32>, vector<128x16xf32>, vector<128x16xf32> -> vector<128x16xf32>
    %cst_153 = arith.constant dense<0.000000e+00> : vector<16xf32>
    %81 = vector.multi_reduction <add>, %80, %cst_153 [0] : vector<128x16xf32> to vector<16xf32>
    %82 = vector.shape_cast %81 : vector<16xf32> to vector<1x16xf32>
    %cst_154 = arith.constant 1.280000e+02 : f32
    %83 = vector.broadcast %cst_154 : f32 to vector<1x16xf32>
    %84 = arith.divf %82, %83 : vector<1x16xf32>
    %85 = vector.broadcast %84 : vector<1x16xf32> to vector<128x16xf32>
    %86 = arith.subf %80, %85 : vector<128x16xf32>
    %87 = arith.mulf %86, %86 : vector<128x16xf32>
    %cst_155 = arith.constant dense<0.000000e+00> : vector<16xf32>
    %88 = vector.multi_reduction <add>, %87, %cst_155 [0] : vector<128x16xf32> to vector<16xf32>
    %89 = vector.shape_cast %88 : vector<16xf32> to vector<1x16xf32>
    %cst_156 = arith.constant 1.280000e+02 : f32
    %90 = vector.broadcast %cst_156 : f32 to vector<1x16xf32>
    %91 = arith.divf %89, %90 : vector<1x16xf32>
    %92 = vector.broadcast %84 : vector<1x16xf32> to vector<128x16xf32>
    %93 = arith.subf %80, %92 : vector<128x16xf32>
    %cst_157 = arith.constant 9.99999974E-6 : f32
    %94 = vector.broadcast %cst_157 : f32 to vector<1x16xf32>
    %95 = arith.addf %91, %94 : vector<1x16xf32>
    %96 = math.rsqrt %95 : vector<1x16xf32>
    %97 = vector.broadcast %96 : vector<1x16xf32> to vector<128x16xf32>
    %98 = arith.mulf %93, %97 : vector<128x16xf32>
    %c0_158 = arith.constant 0 : index
    %c0_159 = arith.constant 0 : index
    %99 = vector.load %arg5[%c0_158, %c0_159] : memref<1x16xf32, #tpu.memory_space<vmem>>, vector<1x16xf32>
    %100 = vector.broadcast %99 : vector<1x16xf32> to vector<128x16xf32>
    %101 = arith.mulf %98, %100 : vector<128x16xf32>
    %c0_160 = arith.constant 0 : index
    %c0_161 = arith.constant 0 : index
    %102 = vector.load %arg6[%c0_160, %c0_161] : memref<1x16xf32, #tpu.memory_space<vmem>>, vector<1x16xf32>
    %103 = vector.broadcast %102 : vector<1x16xf32> to vector<128x16xf32>
    %104 = arith.addf %101, %103 : vector<128x16xf32>
    %cst_162 = arith.constant 0.000000e+00 : f32
    %105 = vector.broadcast %cst_162 : f32 to vector<128x16xf32>
    %106 = arith.cmpf oge, %104, %105 : vector<128x16xf32>
    %cst_163 = arith.constant 2.000000e-01 : f32
    %107 = vector.broadcast %cst_163 : f32 to vector<128x16xf32>
    %108 = arith.mulf %107, %104 : vector<128x16xf32>
    %109 = arith.select %106, %104, %108 : vector<128x16xi1>, vector<128x16xf32>
    %110 = vector.shape_cast %109 : vector<128x16xf32> to vector<2x8x8x16xf32>
    %cst_164 = arith.constant 0.000000e+00 : f32
    %111 = vector.broadcast %cst_164 : f32 to vector<2x10x10x16xf32>
    %c0_165 = arith.constant 0 : index
    %c0_166 = arith.constant 0 : index
    %c0_167 = arith.constant 0 : index
    %c0_168 = arith.constant 0 : index
    %112 = vector.load %arg12[%c0_165, %c0_166, %c0_167, %c0_168] : memref<2x10x10x16xf32, #tpu.memory_space<vmem>>, vector<2x10x10x16xf32>
    tpu.vector_store %arg12[%c0_165, %c0_166, %c0_167, %c0_168], %111 {strides = array<i32>} : memref<2x10x10x16xf32, #tpu.memory_space<vmem>>, vector<2x10x10x16xf32>,
    %c0_169 = arith.constant 0 : index
    %c1_170 = arith.constant 1 : index
    %c1_171 = arith.constant 1 : index
    %c0_172 = arith.constant 0 : index
    %113 = vector.load %arg12[%c0_169, %c1_170, %c1_171, %c0_172] : memref<2x10x10x16xf32, #tpu.memory_space<vmem>>, vector<2x8x8x16xf32>
    tpu.vector_store %arg12[%c0_169, %c1_170, %c1_171, %c0_172], %110 {strides = array<i32>} : memref<2x10x10x16xf32, #tpu.memory_space<vmem>>, vector<2x8x8x16xf32>,
    %c0_173 = arith.constant 0 : index
    %c0_174 = arith.constant 0 : index
    %c0_175 = arith.constant 0 : index
    %c0_176 = arith.constant 0 : index
    %114 = tpu.strided_load %arg12[%c0_173, %c0_174, %c0_175, %c0_176] {strides = array<i32: 1, 2, 2, 1>} : memref<2x10x10x16xf32, #tpu.memory_space<vmem>>, vector<2x4x4x16xf32>
    %c0_177 = arith.constant 0 : index
    %c0_178 = arith.constant 0 : index
    %c1_179 = arith.constant 1 : index
    %c0_180 = arith.constant 0 : index
    %115 = tpu.strided_load %arg12[%c0_177, %c0_178, %c1_179, %c0_180] {strides = array<i32: 1, 2, 2, 1>} : memref<2x10x10x16xf32, #tpu.memory_space<vmem>>, vector<2x4x4x16xf32>
    %c0_181 = arith.constant 0 : index
    %c0_182 = arith.constant 0 : index
    %c2_183 = arith.constant 2 : index
    %c0_184 = arith.constant 0 : index
    %116 = tpu.strided_load %arg12[%c0_181, %c0_182, %c2_183, %c0_184] {strides = array<i32: 1, 2, 2, 1>} : memref<2x10x10x16xf32, #tpu.memory_space<vmem>>, vector<2x4x4x16xf32>
    %c0_185 = arith.constant 0 : index
    %c0_186 = arith.constant 0 : index
    %c3_187 = arith.constant 3 : index
    %c0_188 = arith.constant 0 : index
    %117 = tpu.strided_load %arg12[%c0_185, %c0_186, %c3_187, %c0_188] {strides = array<i32: 1, 2, 2, 1>} : memref<2x10x10x16xf32, #tpu.memory_space<vmem>>, vector<2x4x4x16xf32>
    %c0_189 = arith.constant 0 : index
    %c1_190 = arith.constant 1 : index
    %c0_191 = arith.constant 0 : index
    %c0_192 = arith.constant 0 : index
    %118 = tpu.strided_load %arg12[%c0_189, %c1_190, %c0_191, %c0_192] {strides = array<i32: 1, 2, 2, 1>} : memref<2x10x10x16xf32, #tpu.memory_space<vmem>>, vector<2x4x4x16xf32>
    %c0_193 = arith.constant 0 : index
    %c1_194 = arith.constant 1 : index
    %c1_195 = arith.constant 1 : index
    %c0_196 = arith.constant 0 : index
    %119 = tpu.strided_load %arg12[%c0_193, %c1_194, %c1_195, %c0_196] {strides = array<i32: 1, 2, 2, 1>} : memref<2x10x10x16xf32, #tpu.memory_space<vmem>>, vector<2x4x4x16xf32>
    %c0_197 = arith.constant 0 : index
    %c1_198 = arith.constant 1 : index
    %c2_199 = arith.constant 2 : index
    %c0_200 = arith.constant 0 : index
    %120 = tpu.strided_load %arg12[%c0_197, %c1_198, %c2_199, %c0_200] {strides = array<i32: 1, 2, 2, 1>} : memref<2x10x10x16xf32, #tpu.memory_space<vmem>>, vector<2x4x4x16xf32>
    %c0_201 = arith.constant 0 : index
    %c1_202 = arith.constant 1 : index
    %c3_203 = arith.constant 3 : index
    %c0_204 = arith.constant 0 : index
    %121 = tpu.strided_load %arg12[%c0_201, %c1_202, %c3_203, %c0_204] {strides = array<i32: 1, 2, 2, 1>} : memref<2x10x10x16xf32, #tpu.memory_space<vmem>>, vector<2x4x4x16xf32>
    %c0_205 = arith.constant 0 : index
    %c2_206 = arith.constant 2 : index
    %c0_207 = arith.constant 0 : index
    %c0_208 = arith.constant 0 : index
    %122 = tpu.strided_load %arg12[%c0_205, %c2_206, %c0_207, %c0_208] {strides = array<i32: 1, 2, 2, 1>} : memref<2x10x10x16xf32, #tpu.memory_space<vmem>>, vector<2x4x4x16xf32>
    %c0_209 = arith.constant 0 : index
    %c2_210 = arith.constant 2 : index
    %c1_211 = arith.constant 1 : index
    %c0_212 = arith.constant 0 : index
    %123 = tpu.strided_load %arg12[%c0_209, %c2_210, %c1_211, %c0_212] {strides = array<i32: 1, 2, 2, 1>} : memref<2x10x10x16xf32, #tpu.memory_space<vmem>>, vector<2x4x4x16xf32>
    %c0_213 = arith.constant 0 : index
    %c2_214 = arith.constant 2 : index
    %c2_215 = arith.constant 2 : index
    %c0_216 = arith.constant 0 : index
    %124 = tpu.strided_load %arg12[%c0_213, %c2_214, %c2_215, %c0_216] {strides = array<i32: 1, 2, 2, 1>} : memref<2x10x10x16xf32, #tpu.memory_space<vmem>>, vector<2x4x4x16xf32>
    %c0_217 = arith.constant 0 : index
    %c2_218 = arith.constant 2 : index
    %c3_219 = arith.constant 3 : index
    %c0_220 = arith.constant 0 : index
    %125 = tpu.strided_load %arg12[%c0_217, %c2_218, %c3_219, %c0_220] {strides = array<i32: 1, 2, 2, 1>} : memref<2x10x10x16xf32, #tpu.memory_space<vmem>>, vector<2x4x4x16xf32>
    %c0_221 = arith.constant 0 : index
    %c3_222 = arith.constant 3 : index
    %c0_223 = arith.constant 0 : index
    %c0_224 = arith.constant 0 : index
    %126 = tpu.strided_load %arg12[%c0_221, %c3_222, %c0_223, %c0_224] {strides = array<i32: 1, 2, 2, 1>} : memref<2x10x10x16xf32, #tpu.memory_space<vmem>>, vector<2x4x4x16xf32>
    %c0_225 = arith.constant 0 : index
    %c3_226 = arith.constant 3 : index
    %c1_227 = arith.constant 1 : index
    %c0_228 = arith.constant 0 : index
    %127 = tpu.strided_load %arg12[%c0_225, %c3_226, %c1_227, %c0_228] {strides = array<i32: 1, 2, 2, 1>} : memref<2x10x10x16xf32, #tpu.memory_space<vmem>>, vector<2x4x4x16xf32>
    %c0_229 = arith.constant 0 : index
    %c3_230 = arith.constant 3 : index
    %c2_231 = arith.constant 2 : index
    %c0_232 = arith.constant 0 : index
    %128 = tpu.strided_load %arg12[%c0_229, %c3_230, %c2_231, %c0_232] {strides = array<i32: 1, 2, 2, 1>} : memref<2x10x10x16xf32, #tpu.memory_space<vmem>>, vector<2x4x4x16xf32>
    %c0_233 = arith.constant 0 : index
    %c3_234 = arith.constant 3 : index
    %c3_235 = arith.constant 3 : index
    %c0_236 = arith.constant 0 : index
    %129 = tpu.strided_load %arg12[%c0_233, %c3_234, %c3_235, %c0_236] {strides = array<i32: 1, 2, 2, 1>} : memref<2x10x10x16xf32, #tpu.memory_space<vmem>>, vector<2x4x4x16xf32>
    %130 = tpu.concatenate %114, %115 in 3 : vector<2x4x4x16xf32>, vector<2x4x4x16xf32> -> vector<2x4x4x32xf32>
    %131 = tpu.concatenate %116, %117 in 3 : vector<2x4x4x16xf32>, vector<2x4x4x16xf32> -> vector<2x4x4x32xf32>
    %132 = tpu.concatenate %118, %119 in 3 : vector<2x4x4x16xf32>, vector<2x4x4x16xf32> -> vector<2x4x4x32xf32>
    %133 = tpu.concatenate %120, %121 in 3 : vector<2x4x4x16xf32>, vector<2x4x4x16xf32> -> vector<2x4x4x32xf32>
    %134 = tpu.concatenate %122, %123 in 3 : vector<2x4x4x16xf32>, vector<2x4x4x16xf32> -> vector<2x4x4x32xf32>
    %135 = tpu.concatenate %124, %125 in 3 : vector<2x4x4x16xf32>, vector<2x4x4x16xf32> -> vector<2x4x4x32xf32>
    %136 = tpu.concatenate %126, %127 in 3 : vector<2x4x4x16xf32>, vector<2x4x4x16xf32> -> vector<2x4x4x32xf32>
    %137 = tpu.concatenate %128, %129 in 3 : vector<2x4x4x16xf32>, vector<2x4x4x16xf32> -> vector<2x4x4x32xf32>
    %138 = tpu.concatenate %130, %131 in 3 : vector<2x4x4x32xf32>, vector<2x4x4x32xf32> -> vector<2x4x4x64xf32>
    %139 = tpu.concatenate %132, %133 in 3 : vector<2x4x4x32xf32>, vector<2x4x4x32xf32> -> vector<2x4x4x64xf32>
    %140 = tpu.concatenate %134, %135 in 3 : vector<2x4x4x32xf32>, vector<2x4x4x32xf32> -> vector<2x4x4x64xf32>
    %141 = tpu.concatenate %136, %137 in 3 : vector<2x4x4x32xf32>, vector<2x4x4x32xf32> -> vector<2x4x4x64xf32>
    %142 = tpu.concatenate %138, %139 in 3 : vector<2x4x4x64xf32>, vector<2x4x4x64xf32> -> vector<2x4x4x128xf32>
    %143 = tpu.concatenate %140, %141 in 3 : vector<2x4x4x64xf32>, vector<2x4x4x64xf32> -> vector<2x4x4x128xf32>
    %144 = tpu.concatenate %142, %143 in 3 : vector<2x4x4x128xf32>, vector<2x4x4x128xf32> -> vector<2x4x4x256xf32>
    %145 = vector.shape_cast %144 : vector<2x4x4x256xf32> to vector<32x256xf32>
    %c0_237 = arith.constant 0 : index
    %c0_238 = arith.constant 0 : index
    %146 = vector.load %arg3[%c0_237, %c0_238] : memref<256x32xf32, #tpu.memory_space<vmem>>, vector<256x32xf32>
    %cst_239 = arith.constant dense<0.000000e+00> : vector<32x32xf32>
    %147 = tpu.matmul %145, %146, %cst_239 {dimension_numbers = #tpu.dot_dimension_numbers<[1], [0], [0], [1], [0, 0, 1, 1], [], []>} : vector<32x256xf32>, vector<256x32xf32>, vector<32x32xf32> -> vector<32x32xf32>
    %cst_240 = arith.constant dense<0.000000e+00> : vector<32xf32>
    %148 = vector.multi_reduction <add>, %147, %cst_240 [0] : vector<32x32xf32> to vector<32xf32>
    %149 = vector.shape_cast %148 : vector<32xf32> to vector<1x32xf32>
    %cst_241 = arith.constant 3.200000e+01 : f32
    %150 = vector.broadcast %cst_241 : f32 to vector<1x32xf32>
    %151 = arith.divf %149, %150 : vector<1x32xf32>
    %152 = vector.broadcast %151 : vector<1x32xf32> to vector<32x32xf32>
    %153 = arith.subf %147, %152 : vector<32x32xf32>
    %154 = arith.mulf %153, %153 : vector<32x32xf32>
    %cst_242 = arith.constant dense<0.000000e+00> : vector<32xf32>
    %155 = vector.multi_reduction <add>, %154, %cst_242 [0] : vector<32x32xf32> to vector<32xf32>
    %156 = vector.shape_cast %155 : vector<32xf32> to vector<1x32xf32>
    %cst_243 = arith.constant 3.200000e+01 : f32
    %157 = vector.broadcast %cst_243 : f32 to vector<1x32xf32>
    %158 = arith.divf %156, %157 : vector<1x32xf32>
    %159 = vector.broadcast %151 : vector<1x32xf32> to vector<32x32xf32>
    %160 = arith.subf %147, %159 : vector<32x32xf32>
    %cst_244 = arith.constant 9.99999974E-6 : f32
    %161 = vector.broadcast %cst_244 : f32 to vector<1x32xf32>
    %162 = arith.addf %158, %161 : vector<1x32xf32>
    %163 = math.rsqrt %162 : vector<1x32xf32>
    %164 = vector.broadcast %163 : vector<1x32xf32> to vector<32x32xf32>
    %165 = arith.mulf %160, %164 : vector<32x32xf32>
    %c0_245 = arith.constant 0 : index
    %c0_246 = arith.constant 0 : index
    %166 = vector.load %arg7[%c0_245, %c0_246] : memref<1x32xf32, #tpu.memory_space<vmem>>, vector<1x32xf32>
    %167 = vector.broadcast %166 : vector<1x32xf32> to vector<32x32xf32>
    %168 = arith.mulf %165, %167 : vector<32x32xf32>
    %c0_247 = arith.constant 0 : index
    %c0_248 = arith.constant 0 : index
    %169 = vector.load %arg8[%c0_247, %c0_248] : memref<1x32xf32, #tpu.memory_space<vmem>>, vector<1x32xf32>
    %170 = vector.broadcast %169 : vector<1x32xf32> to vector<32x32xf32>
    %171 = arith.addf %168, %170 : vector<32x32xf32>
    %cst_249 = arith.constant 0.000000e+00 : f32
    %172 = vector.broadcast %cst_249 : f32 to vector<32x32xf32>
    %173 = arith.cmpf oge, %171, %172 : vector<32x32xf32>
    %cst_250 = arith.constant 2.000000e-01 : f32
    %174 = vector.broadcast %cst_250 : f32 to vector<32x32xf32>
    %175 = arith.mulf %174, %171 : vector<32x32xf32>
    %176 = arith.select %173, %171, %175 : vector<32x32xi1>, vector<32x32xf32>
    %177 = vector.shape_cast %176 : vector<32x32xf32> to vector<2x4x4x32xf32>
    %c0_251 = arith.constant 0 : index
    %c0_252 = arith.constant 0 : index
    %c0_253 = arith.constant 0 : index
    %c0_254 = arith.constant 0 : index
    %178 = vector.load %arg13[%c0_251, %c0_252, %c0_253, %c0_254] : memref<2x4x4x32xf32, #tpu.memory_space<vmem>>, vector<2x4x4x32xf32>
    tpu.vector_store %arg13[%c0_251, %c0_252, %c0_253, %c0_254], %177 {strides = array<i32>} : memref<2x4x4x32xf32, #tpu.memory_space<vmem>>, vector<2x4x4x32xf32>,
    %c0_255 = arith.constant 0 : index
    %c0_256 = arith.constant 0 : index
    %c0_257 = arith.constant 0 : index
    %c0_258 = arith.constant 0 : index
    %179 = vector.load %arg13[%c0_255, %c0_256, %c0_257, %c0_258] : memref<2x4x4x32xf32, #tpu.memory_space<vmem>>, vector<2x1x1x32xf32>
    %c0_259 = arith.constant 0 : index
    %c0_260 = arith.constant 0 : index
    %c1_261 = arith.constant 1 : index
    %c0_262 = arith.constant 0 : index
    %180 = vector.load %arg13[%c0_259, %c0_260, %c1_261, %c0_262] : memref<2x4x4x32xf32, #tpu.memory_space<vmem>>, vector<2x1x1x32xf32>
    %c0_263 = arith.constant 0 : index
    %c0_264 = arith.constant 0 : index
    %c2_265 = arith.constant 2 : index
    %c0_266 = arith.constant 0 : index
    %181 = vector.load %arg13[%c0_263, %c0_264, %c2_265, %c0_266] : memref<2x4x4x32xf32, #tpu.memory_space<vmem>>, vector<2x1x1x32xf32>
    %c0_267 = arith.constant 0 : index
    %c0_268 = arith.constant 0 : index
    %c3_269 = arith.constant 3 : index
    %c0_270 = arith.constant 0 : index
    %182 = vector.load %arg13[%c0_267, %c0_268, %c3_269, %c0_270] : memref<2x4x4x32xf32, #tpu.memory_space<vmem>>, vector<2x1x1x32xf32>
    %c0_271 = arith.constant 0 : index
    %c1_272 = arith.constant 1 : index
    %c0_273 = arith.constant 0 : index
    %c0_274 = arith.constant 0 : index
    %183 = vector.load %arg13[%c0_271, %c1_272, %c0_273, %c0_274] : memref<2x4x4x32xf32, #tpu.memory_space<vmem>>, vector<2x1x1x32xf32>
    %c0_275 = arith.constant 0 : index
    %c1_276 = arith.constant 1 : index
    %c1_277 = arith.constant 1 : index
    %c0_278 = arith.constant 0 : index
    %184 = vector.load %arg13[%c0_275, %c1_276, %c1_277, %c0_278] : memref<2x4x4x32xf32, #tpu.memory_space<vmem>>, vector<2x1x1x32xf32>
    %c0_279 = arith.constant 0 : index
    %c1_280 = arith.constant 1 : index
    %c2_281 = arith.constant 2 : index
    %c0_282 = arith.constant 0 : index
    %185 = vector.load %arg13[%c0_279, %c1_280, %c2_281, %c0_282] : memref<2x4x4x32xf32, #tpu.memory_space<vmem>>, vector<2x1x1x32xf32>
    %c0_283 = arith.constant 0 : index
    %c1_284 = arith.constant 1 : index
    %c3_285 = arith.constant 3 : index
    %c0_286 = arith.constant 0 : index
    %186 = vector.load %arg13[%c0_283, %c1_284, %c3_285, %c0_286] : memref<2x4x4x32xf32, #tpu.memory_space<vmem>>, vector<2x1x1x32xf32>
    %c0_287 = arith.constant 0 : index
    %c2_288 = arith.constant 2 : index
    %c0_289 = arith.constant 0 : index
    %c0_290 = arith.constant 0 : index
    %187 = vector.load %arg13[%c0_287, %c2_288, %c0_289, %c0_290] : memref<2x4x4x32xf32, #tpu.memory_space<vmem>>, vector<2x1x1x32xf32>
    %c0_291 = arith.constant 0 : index
    %c2_292 = arith.constant 2 : index
    %c1_293 = arith.constant 1 : index
    %c0_294 = arith.constant 0 : index
    %188 = vector.load %arg13[%c0_291, %c2_292, %c1_293, %c0_294] : memref<2x4x4x32xf32, #tpu.memory_space<vmem>>, vector<2x1x1x32xf32>
    %c0_295 = arith.constant 0 : index
    %c2_296 = arith.constant 2 : index
    %c2_297 = arith.constant 2 : index
    %c0_298 = arith.constant 0 : index
    %189 = vector.load %arg13[%c0_295, %c2_296, %c2_297, %c0_298] : memref<2x4x4x32xf32, #tpu.memory_space<vmem>>, vector<2x1x1x32xf32>
    %c0_299 = arith.constant 0 : index
    %c2_300 = arith.constant 2 : index
    %c3_301 = arith.constant 3 : index
    %c0_302 = arith.constant 0 : index
    %190 = vector.load %arg13[%c0_299, %c2_300, %c3_301, %c0_302] : memref<2x4x4x32xf32, #tpu.memory_space<vmem>>, vector<2x1x1x32xf32>
    %c0_303 = arith.constant 0 : index
    %c3_304 = arith.constant 3 : index
    %c0_305 = arith.constant 0 : index
    %c0_306 = arith.constant 0 : index
    %191 = vector.load %arg13[%c0_303, %c3_304, %c0_305, %c0_306] : memref<2x4x4x32xf32, #tpu.memory_space<vmem>>, vector<2x1x1x32xf32>
    %c0_307 = arith.constant 0 : index
    %c3_308 = arith.constant 3 : index
    %c1_309 = arith.constant 1 : index
    %c0_310 = arith.constant 0 : index
    %192 = vector.load %arg13[%c0_307, %c3_308, %c1_309, %c0_310] : memref<2x4x4x32xf32, #tpu.memory_space<vmem>>, vector<2x1x1x32xf32>
    %c0_311 = arith.constant 0 : index
    %c3_312 = arith.constant 3 : index
    %c2_313 = arith.constant 2 : index
    %c0_314 = arith.constant 0 : index
    %193 = vector.load %arg13[%c0_311, %c3_312, %c2_313, %c0_314] : memref<2x4x4x32xf32, #tpu.memory_space<vmem>>, vector<2x1x1x32xf32>
    %c0_315 = arith.constant 0 : index
    %c3_316 = arith.constant 3 : index
    %c3_317 = arith.constant 3 : index
    %c0_318 = arith.constant 0 : index
    %194 = vector.load %arg13[%c0_315, %c3_316, %c3_317, %c0_318] : memref<2x4x4x32xf32, #tpu.memory_space<vmem>>, vector<2x1x1x32xf32>
    %195 = tpu.concatenate %179, %180 in 3 : vector<2x1x1x32xf32>, vector<2x1x1x32xf32> -> vector<2x1x1x64xf32>
    %196 = tpu.concatenate %181, %182 in 3 : vector<2x1x1x32xf32>, vector<2x1x1x32xf32> -> vector<2x1x1x64xf32>
    %197 = tpu.concatenate %183, %184 in 3 : vector<2x1x1x32xf32>, vector<2x1x1x32xf32> -> vector<2x1x1x64xf32>
    %198 = tpu.concatenate %185, %186 in 3 : vector<2x1x1x32xf32>, vector<2x1x1x32xf32> -> vector<2x1x1x64xf32>
    %199 = tpu.concatenate %187, %188 in 3 : vector<2x1x1x32xf32>, vector<2x1x1x32xf32> -> vector<2x1x1x64xf32>
    %200 = tpu.concatenate %189, %190 in 3 : vector<2x1x1x32xf32>, vector<2x1x1x32xf32> -> vector<2x1x1x64xf32>
    %201 = tpu.concatenate %191, %192 in 3 : vector<2x1x1x32xf32>, vector<2x1x1x32xf32> -> vector<2x1x1x64xf32>
    %202 = tpu.concatenate %193, %194 in 3 : vector<2x1x1x32xf32>, vector<2x1x1x32xf32> -> vector<2x1x1x64xf32>
    %203 = tpu.concatenate %195, %196 in 3 : vector<2x1x1x64xf32>, vector<2x1x1x64xf32> -> vector<2x1x1x128xf32>
    %204 = tpu.concatenate %197, %198 in 3 : vector<2x1x1x64xf32>, vector<2x1x1x64xf32> -> vector<2x1x1x128xf32>
    %205 = tpu.concatenate %199, %200 in 3 : vector<2x1x1x64xf32>, vector<2x1x1x64xf32> -> vector<2x1x1x128xf32>
    %206 = tpu.concatenate %201, %202 in 3 : vector<2x1x1x64xf32>, vector<2x1x1x64xf32> -> vector<2x1x1x128xf32>
    %207 = tpu.concatenate %203, %204 in 3 : vector<2x1x1x128xf32>, vector<2x1x1x128xf32> -> vector<2x1x1x256xf32>
    %208 = tpu.concatenate %205, %206 in 3 : vector<2x1x1x128xf32>, vector<2x1x1x128xf32> -> vector<2x1x1x256xf32>
    %209 = tpu.concatenate %207, %208 in 3 : vector<2x1x1x256xf32>, vector<2x1x1x256xf32> -> vector<2x1x1x512xf32>
    %210 = vector.shape_cast %209 : vector<2x1x1x512xf32> to vector<2x512xf32>
    %c0_319 = arith.constant 0 : index
    %c0_320 = arith.constant 0 : index
    %211 = vector.load %arg4[%c0_319, %c0_320] : memref<512x1xf32, #tpu.memory_space<vmem>>, vector<512x1xf32>
    %cst_321 = arith.constant dense<0.000000e+00> : vector<2x1xf32>
    %212 = tpu.matmul %210, %211, %cst_321 {dimension_numbers = #tpu.dot_dimension_numbers<[1], [0], [0], [1], [0, 0, 1, 1], [], []>} : vector<2x512xf32>, vector<512x1xf32>, vector<2x1xf32> -> vector<2x1xf32>
    %213 = math.absf %212 : vector<2x1xf32>
    %cst_322 = arith.constant 0.000000e+00 : f32
    %214 = vector.broadcast %cst_322 : f32 to vector<2x1xf32>
    %215 = arith.subf %214, %213 : vector<2x1xf32>
    %216 = math.exp %215 : vector<2x1xf32>
    %cst_323 = arith.constant 0.000000e+00 : f32
    %217 = vector.broadcast %cst_323 : f32 to vector<2x1xf32>
    %218 = arith.cmpf oge, %212, %217 : vector<2x1xf32>
    %cst_324 = arith.constant 1.000000e+00 : f32
    %219 = vector.broadcast %cst_324 : f32 to vector<2x1xf32>
    %220 = arith.addf %219, %216 : vector<2x1xf32>
    %cst_325 = arith.constant 1.000000e+00 : f32
    %221 = vector.broadcast %cst_325 : f32 to vector<2x1xf32>
    %222 = arith.divf %221, %220 : vector<2x1xf32>
    %cst_326 = arith.constant 1.000000e+00 : f32
    %223 = vector.broadcast %cst_326 : f32 to vector<2x1xf32>
    %224 = arith.addf %223, %216 : vector<2x1xf32>
    %225 = arith.divf %216, %224 : vector<2x1xf32>
    %226 = arith.select %218, %222, %225 : vector<2x1xi1>, vector<2x1xf32>
    %c0_327 = arith.constant 0 : index
    %c0_328 = arith.constant 0 : index
    %227 = vector.load %arg9[%c0_327, %c0_328] : memref<2x1xf32, #tpu.memory_space<vmem>>, vector<2x1xf32>
    tpu.vector_store %arg9[%c0_327, %c0_328], %226 {strides = array<i32>} : memref<2x1xf32, #tpu.memory_space<vmem>>, vector<2x1xf32>,
    return
  }
}

</mosaic_0001>

<llo_original>
// kernel: discriminator_forward.1
$region0: #{discriminator_forward.1}
  #allocation0 [shape = 'u32[]', space=smem, size = 0x4, offset = 0x4, fixed_abs, tag = 'smem constant byte address 0x4 - core index']
  #allocation1 [shape = 'u32[72,128]{1,0:T(1,128)}', space=vmem, size = 0x9000, scoped, tag = 'internal scratch']
  #allocation2 [shape = 'f32[2,34,34,3]{3,2,1,0:T(8,128)}', space=vmem, size = 0x154000, scoped, tag = 'scratch operand']
  #allocation3 [shape = 'f32[2,18,18,8]{3,2,1,0:T(8,128)}', space=vmem, size = 0x6c000, scoped, tag = 'scratch operand']
  #allocation4 [shape = 'f32[2,10,10,16]{3,2,1,0:T(8,128)}', space=vmem, size = 0x28000, scoped, tag = 'scratch operand']
  #allocation5 [shape = 'f32[2,4,4,32]{3,2,1,0:T(4,128)}', space=vmem, size = 0x4000, scoped, tag = 'scratch operand']
  %s0 = inlined_call_operand.vmem [shape: f32[2,32,32,3], index: 0, kind: input, shape index: {}]
  %s1 = inlined_call_operand.vmem [shape: f32[48,8], index: 1, kind: input, shape index: {}]
  %s2 = inlined_call_operand.vmem [shape: f32[128,16], index: 2, kind: input, shape index: {}]
  %s3 = inlined_call_operand.vmem [shape: f32[256,32], index: 3, kind: input, shape index: {}]
  %s4 = inlined_call_operand.vmem [shape: f32[512,1], index: 4, kind: input, shape index: {}]
  %s5 = inlined_call_operand.vmem [shape: f32[1,16], index: 5, kind: input, shape index: {}]
  %s6 = inlined_call_operand.vmem [shape: f32[1,16], index: 6, kind: input, shape index: {}]
  %s7 = inlined_call_operand.vmem [shape: f32[1,32], index: 7, kind: input, shape index: {}]
  %s8 = inlined_call_operand.vmem [shape: f32[1,32], index: 8, kind: input, shape index: {}]
  %s9 = inlined_call_operand.vmem [shape: f32[2,1], index: 9, kind: output, shape index: {}]
  %s10 = sld [smem:[#allocation0]]
  $region46: #{discriminator_forward.1} parent=0
    _
  %s12 = ssub.s32 1, %s10
  %s13 = scalar_select 0, %s12, %s10
  // Predicated region
  $region2: #{discriminator_forward.1} parent=0 // pred_check
    _
  $region3: #{discriminator_forward.1} parent=0 // pred_check_branch
    %15 = sbr.rel (0) target = $region5
  $region4: #{discriminator_forward.1} parent=0 // pred_region
    _
  $region5: #{discriminator_forward.1} parent=0 // pred_fallthru
    _
  // Predicated region
  $region6: #{discriminator_forward.1} parent=0 // pred_check
    _
  $region7: #{discriminator_forward.1} parent=0 // pred_check_branch
    %17 = sbr.rel (0) target = $region9
  $region8: #{discriminator_forward.1} parent=0 // pred_region
    _
  $region9: #{discriminator_forward.1} parent=0 // pred_fallthru
    _
  // Predicated region
  $region10: #{discriminator_forward.1} parent=0 // pred_check
    _
  $region11: #{discriminator_forward.1} parent=0 // pred_check_branch
    %19 = sbr.rel (0) target = $region13
  $region12: #{discriminator_forward.1} parent=0 // pred_region
    _
  $region13: #{discriminator_forward.1} parent=0 // pred_fallthru
    _
  // Predicated region
  $region14: #{discriminator_forward.1} parent=0 // pred_check
    _
  $region15: #{discriminator_forward.1} parent=0 // pred_check_branch
    %21 = sbr.rel (0) target = $region17
  $region16: #{discriminator_forward.1} parent=0 // pred_region
    _
  $region17: #{discriminator_forward.1} parent=0 // pred_fallthru
    _
  // Predicated region
  $region18: #{discriminator_forward.1} parent=0 // pred_check
    _
  $region19: #{discriminator_forward.1} parent=0 // pred_check_branch
    %23 = sbr.rel (0) target = $region21
  $region20: #{discriminator_forward.1} parent=0 // pred_region
    _
  $region21: #{discriminator_forward.1} parent=0 // pred_fallthru
    _
  // Predicated region
  $region22: #{discriminator_forward.1} parent=0 // pred_check
    _
  $region23: #{discriminator_forward.1} parent=0 // pred_check_branch
    %25 = sbr.rel (0) target = $region25
  $region24: #{discriminator_forward.1} parent=0 // pred_region
    _
  $region25: #{discriminator_forward.1} parent=0 // pred_fallthru
    _
  // Predicated region
  $region26: #{discriminator_forward.1} parent=0 // pred_check
    _
  $region27: #{discriminator_forward.1} parent=0 // pred_check_branch
    %27 = sbr.rel (0) target = $region29
  $region28: #{discriminator_forward.1} parent=0 // pred_region
    _
  $region29: #{discriminator_forward.1} parent=0 // pred_fallthru
    _
  // Predicated region
  $region30: #{discriminator_forward.1} parent=0 // pred_check
    _
  $region31: #{discriminator_forward.1} parent=0 // pred_check_branch
    %29 = sbr.rel (0) target = $region33
  $region32: #{discriminator_forward.1} parent=0 // pred_region
    _
  $region33: #{discriminator_forward.1} parent=0 // pred_fallthru
    _
  // Predicated region
  $region34: #{discriminator_forward.1} parent=0 // pred_check
    _
  $region35: #{discriminator_forward.1} parent=0 // pred_check_branch
    %31 = sbr.rel (0) target = $region37
  $region36: #{discriminator_forward.1} parent=0 // pred_region
    _
  $region37: #{discriminator_forward.1} parent=0 // pred_fallthru
    _
  %v32 = vld [vmem:[%s0] sm:$0xff]
  %v33 = vld [vmem:[%s0 + $0x8] sm:$0xff]
  %v34 = vld [vmem:[%s0 + $0x10] sm:$0xff]
  %v35 = vld [vmem:[%s0 + $0x18] sm:$0xff]
  %v36 = vld [vmem:[%s0 + $0x20] sm:$0xff]
  %v37 = vld [vmem:[%s0 + $0x28] sm:$0xff]
  %v38 = vld [vmem:[%s0 + $0x30] sm:$0xff]
  %v39 = vld [vmem:[%s0 + $0x38] sm:$0xff]
  %v40 = vld [vmem:[%s0 + $0x40] sm:$0xff]
  %v41 = vld [vmem:[%s0 + $0x48] sm:$0xff]
  %v42 = vld [vmem:[%s0 + $0x50] sm:$0xff]
  %v43 = vld [vmem:[%s0 + $0x58] sm:$0xff]
  %v44 = vld [vmem:[%s0 + $0x60] sm:$0xff]
  %v45 = vld [vmem:[%s0 + $0x68] sm:$0xff]
  %v46 = vld [vmem:[%s0 + $0x70] sm:$0xff]
  %v47 = vld [vmem:[%s0 + $0x78] sm:$0xff]
  %v48 = vld [vmem:[%s0 + $0x80] sm:$0xff]
  %v49 = vld [vmem:[%s0 + $0x88] sm:$0xff]
  %v50 = vld [vmem:[%s0 + $0x90] sm:$0xff]
  %v51 = vld [vmem:[%s0 + $0x98] sm:$0xff]
  %v52 = vld [vmem:[%s0 + $0xa0] sm:$0xff]
  %v53 = vld [vmem:[%s0 + $0xa8] sm:$0xff]
  %v54 = vld [vmem:[%s0 + $0xb0] sm:$0xff]
  %v55 = vld [vmem:[%s0 + $0xb8] sm:$0xff]
  %v56 = vld [vmem:[%s0 + $0xc0] sm:$0xff]
  %v57 = vld [vmem:[%s0 + $0xc8] sm:$0xff]
  %v58 = vld [vmem:[%s0 + $0xd0] sm:$0xff]
  %v59 = vld [vmem:[%s0 + $0xd8] sm:$0xff]
  %v60 = vld [vmem:[%s0 + $0xe0] sm:$0xff]
  %v61 = vld [vmem:[%s0 + $0xe8] sm:$0xff]
  %v62 = vld [vmem:[%s0 + $0xf0] sm:$0xff]
  %v63 = vld [vmem:[%s0 + $0xf8] sm:$0xff]
  %v64 = vld [vmem:[%s0 + $0x100] sm:$0xff]
  %v65 = vld [vmem:[%s0 + $0x108] sm:$0xff]
  %v66 = vld [vmem:[%s0 + $0x110] sm:$0xff]
  %v67 = vld [vmem:[%s0 + $0x118] sm:$0xff]
  %v68 = vld [vmem:[%s0 + $0x120] sm:$0xff]
  %v69 = vld [vmem:[%s0 + $0x128] sm:$0xff]
  %v70 = vld [vmem:[%s0 + $0x130] sm:$0xff]
  %v71 = vld [vmem:[%s0 + $0x138] sm:$0xff]
  %v72 = vld [vmem:[%s0 + $0x140] sm:$0xff]
  %v73 = vld [vmem:[%s0 + $0x148] sm:$0xff]
  %v74 = vld [vmem:[%s0 + $0x150] sm:$0xff]
  %v75 = vld [vmem:[%s0 + $0x158] sm:$0xff]
  %v76 = vld [vmem:[%s0 + $0x160] sm:$0xff]
  %v77 = vld [vmem:[%s0 + $0x168] sm:$0xff]
  %v78 = vld [vmem:[%s0 + $0x170] sm:$0xff]
  %v79 = vld [vmem:[%s0 + $0x178] sm:$0xff]
  %v80 = vld [vmem:[%s0 + $0x180] sm:$0xff]
  %v81 = vld [vmem:[%s0 + $0x188] sm:$0xff]
  %v82 = vld [vmem:[%s0 + $0x190] sm:$0xff]
  %v83 = vld [vmem:[%s0 + $0x198] sm:$0xff]
  %v84 = vld [vmem:[%s0 + $0x1a0] sm:$0xff]
  %v85 = vld [vmem:[%s0 + $0x1a8] sm:$0xff]
  %v86 = vld [vmem:[%s0 + $0x1b0] sm:$0xff]
  %v87 = vld [vmem:[%s0 + $0x1b8] sm:$0xff]
  %v88 = vld [vmem:[%s0 + $0x1c0] sm:$0xff]
  %v89 = vld [vmem:[%s0 + $0x1c8] sm:$0xff]
  %v90 = vld [vmem:[%s0 + $0x1d0] sm:$0xff]
  %v91 = vld [vmem:[%s0 + $0x1d8] sm:$0xff]
  %v92 = vld [vmem:[%s0 + $0x1e0] sm:$0xff]
  %v93 = vld [vmem:[%s0 + $0x1e8] sm:$0xff]
  %v94 = vld [vmem:[%s0 + $0x1f0] sm:$0xff]
  %v95 = vld [vmem:[%s0 + $0x1f8] sm:$0xff]
  %v96 = vld [vmem:[%s0 + $0x200] sm:$0xff]
  %v97 = vld [vmem:[%s0 + $0x208] sm:$0xff]
  %v98 = vld [vmem:[%s0 + $0x210] sm:$0xff]
  %v99 = vld [vmem:[%s0 + $0x218] sm:$0xff]
  %v100 = vld [vmem:[%s0 + $0x220] sm:$0xff]
  %v101 = vld [vmem:[%s0 + $0x228] sm:$0xff]
  %v102 = vld [vmem:[%s0 + $0x230] sm:$0xff]
  %v103 = vld [vmem:[%s0 + $0x238] sm:$0xff]
  %v104 = vld [vmem:[%s0 + $0x240] sm:$0xff]
  %v105 = vld [vmem:[%s0 + $0x248] sm:$0xff]
  %v106 = vld [vmem:[%s0 + $0x250] sm:$0xff]
  %v107 = vld [vmem:[%s0 + $0x258] sm:$0xff]
  %v108 = vld [vmem:[%s0 + $0x260] sm:$0xff]
  %v109 = vld [vmem:[%s0 + $0x268] sm:$0xff]
  %v110 = vld [vmem:[%s0 + $0x270] sm:$0xff]
  %v111 = vld [vmem:[%s0 + $0x278] sm:$0xff]
  %v112 = vld [vmem:[%s0 + $0x280] sm:$0xff]
  %v113 = vld [vmem:[%s0 + $0x288] sm:$0xff]
  %v114 = vld [vmem:[%s0 + $0x290] sm:$0xff]
  %v115 = vld [vmem:[%s0 + $0x298] sm:$0xff]
  %v116 = vld [vmem:[%s0 + $0x2a0] sm:$0xff]
  %v117 = vld [vmem:[%s0 + $0x2a8] sm:$0xff]
  %v118 = vld [vmem:[%s0 + $0x2b0] sm:$0xff]
  %v119 = vld [vmem:[%s0 + $0x2b8] sm:$0xff]
  %v120 = vld [vmem:[%s0 + $0x2c0] sm:$0xff]
  %v121 = vld [vmem:[%s0 + $0x2c8] sm:$0xff]
  %v122 = vld [vmem:[%s0 + $0x2d0] sm:$0xff]
  %v123 = vld [vmem:[%s0 + $0x2d8] sm:$0xff]
  %v124 = vld [vmem:[%s0 + $0x2e0] sm:$0xff]
  %v125 = vld [vmem:[%s0 + $0x2e8] sm:$0xff]
  %v126 = vld [vmem:[%s0 + $0x2f0] sm:$0xff]
  %v127 = vld [vmem:[%s0 + $0x2f8] sm:$0xff]
  %v128 = vld [vmem:[%s0 + $0x300] sm:$0xff]
  %v129 = vld [vmem:[%s0 + $0x308] sm:$0xff]
  %v130 = vld [vmem:[%s0 + $0x310] sm:$0xff]
  %v131 = vld [vmem:[%s0 + $0x318] sm:$0xff]
  %v132 = vld [vmem:[%s0 + $0x320] sm:$0xff]
  %v133 = vld [vmem:[%s0 + $0x328] sm:$0xff]
  %v134 = vld [vmem:[%s0 + $0x330] sm:$0xff]
  %v135 = vld [vmem:[%s0 + $0x338] sm:$0xff]
  %v136 = vld [vmem:[%s0 + $0x340] sm:$0xff]
  %v137 = vld [vmem:[%s0 + $0x348] sm:$0xff]
  %v138 = vld [vmem:[%s0 + $0x350] sm:$0xff]
  %v139 = vld [vmem:[%s0 + $0x358] sm:$0xff]
  %v140 = vld [vmem:[%s0 + $0x360] sm:$0xff]
  %v141 = vld [vmem:[%s0 + $0x368] sm:$0xff]
  %v142 = vld [vmem:[%s0 + $0x370] sm:$0xff]
  %v143 = vld [vmem:[%s0 + $0x378] sm:$0xff]
  %v144 = vld [vmem:[%s0 + $0x380] sm:$0xff]
  %v145 = vld [vmem:[%s0 + $0x388] sm:$0xff]
  %v146 = vld [vmem:[%s0 + $0x390] sm:$0xff]
  %v147 = vld [vmem:[%s0 + $0x398] sm:$0xff]
  %v148 = vld [vmem:[%s0 + $0x3a0] sm:$0xff]
  %v149 = vld [vmem:[%s0 + $0x3a8] sm:$0xff]
  %v150 = vld [vmem:[%s0 + $0x3b0] sm:$0xff]
  %v151 = vld [vmem:[%s0 + $0x3b8] sm:$0xff]
  %v152 = vld [vmem:[%s0 + $0x3c0] sm:$0xff]
  %v153 = vld [vmem:[%s0 + $0x3c8] sm:$0xff]
  %v154 = vld [vmem:[%s0 + $0x3d0] sm:$0xff]
  %v155 = vld [vmem:[%s0 + $0x3d8] sm:$0xff]
  %v156 = vld [vmem:[%s0 + $0x3e0] sm:$0xff]
  %v157 = vld [vmem:[%s0 + $0x3e8] sm:$0xff]
  %v158 = vld [vmem:[%s0 + $0x3f0] sm:$0xff]
  %v159 = vld [vmem:[%s0 + $0x3f8] sm:$0xff]
  %v160 = vld [vmem:[%s0 + $0x400] sm:$0xff]
  %v161 = vld [vmem:[%s0 + $0x408] sm:$0xff]
  %v162 = vld [vmem:[%s0 + $0x410] sm:$0xff]
  %v163 = vld [vmem:[%s0 + $0x418] sm:$0xff]
  %v164 = vld [vmem:[%s0 + $0x420] sm:$0xff]
  %v165 = vld [vmem:[%s0 + $0x428] sm:$0xff]
  %v166 = vld [vmem:[%s0 + $0x430] sm:$0xff]
  %v167 = vld [vmem:[%s0 + $0x438] sm:$0xff]
  %v168 = vld [vmem:[%s0 + $0x440] sm:$0xff]
  %v169 = vld [vmem:[%s0 + $0x448] sm:$0xff]
  %v170 = vld [vmem:[%s0 + $0x450] sm:$0xff]
  %v171 = vld [vmem:[%s0 + $0x458] sm:$0xff]
  %v172 = vld [vmem:[%s0 + $0x460] sm:$0xff]
  %v173 = vld [vmem:[%s0 + $0x468] sm:$0xff]
  %v174 = vld [vmem:[%s0 + $0x470] sm:$0xff]
  %v175 = vld [vmem:[%s0 + $0x478] sm:$0xff]
  %v176 = vld [vmem:[%s0 + $0x480] sm:$0xff]
  %v177 = vld [vmem:[%s0 + $0x488] sm:$0xff]
  %v178 = vld [vmem:[%s0 + $0x490] sm:$0xff]
  %v179 = vld [vmem:[%s0 + $0x498] sm:$0xff]
  %v180 = vld [vmem:[%s0 + $0x4a0] sm:$0xff]
  %v181 = vld [vmem:[%s0 + $0x4a8] sm:$0xff]
  %v182 = vld [vmem:[%s0 + $0x4b0] sm:$0xff]
  %v183 = vld [vmem:[%s0 + $0x4b8] sm:$0xff]
  %v184 = vld [vmem:[%s0 + $0x4c0] sm:$0xff]
  %v185 = vld [vmem:[%s0 + $0x4c8] sm:$0xff]
  %v186 = vld [vmem:[%s0 + $0x4d0] sm:$0xff]
  %v187 = vld [vmem:[%s0 + $0x4d8] sm:$0xff]
  %v188 = vld [vmem:[%s0 + $0x4e0] sm:$0xff]
  %v189 = vld [vmem:[%s0 + $0x4e8] sm:$0xff]
  %v190 = vld [vmem:[%s0 + $0x4f0] sm:$0xff]
  %v191 = vld [vmem:[%s0 + $0x4f8] sm:$0xff]
  %v192 = vld [vmem:[%s0 + $0x500] sm:$0xff]
  %v193 = vld [vmem:[%s0 + $0x508] sm:$0xff]
  %v194 = vld [vmem:[%s0 + $0x510] sm:$0xff]
  %v195 = vld [vmem:[%s0 + $0x518] sm:$0xff]
  %v196 = vld [vmem:[%s0 + $0x520] sm:$0xff]
  %v197 = vld [vmem:[%s0 + $0x528] sm:$0xff]
  %v198 = vld [vmem:[%s0 + $0x530] sm:$0xff]
  %v199 = vld [vmem:[%s0 + $0x538] sm:$0xff]
  %v200 = vld [vmem:[%s0 + $0x540] sm:$0xff]
  %v201 = vld [vmem:[%s0 + $0x548] sm:$0xff]
  %v202 = vld [vmem:[%s0 + $0x550] sm:$0xff]
  %v203 = vld [vmem:[%s0 + $0x558] sm:$0xff]
  %v204 = vld [vmem:[%s0 + $0x560] sm:$0xff]
  %v205 = vld [vmem:[%s0 + $0x568] sm:$0xff]
  %v206 = vld [vmem:[%s0 + $0x570] sm:$0xff]
  %v207 = vld [vmem:[%s0 + $0x578] sm:$0xff]
  %v208 = vld [vmem:[%s0 + $0x580] sm:$0xff]
  %v209 = vld [vmem:[%s0 + $0x588] sm:$0xff]
  %v210 = vld [vmem:[%s0 + $0x590] sm:$0xff]
  %v211 = vld [vmem:[%s0 + $0x598] sm:$0xff]
  %v212 = vld [vmem:[%s0 + $0x5a0] sm:$0xff]
  %v213 = vld [vmem:[%s0 + $0x5a8] sm:$0xff]
  %v214 = vld [vmem:[%s0 + $0x5b0] sm:$0xff]
  %v215 = vld [vmem:[%s0 + $0x5b8] sm:$0xff]
  %v216 = vld [vmem:[%s0 + $0x5c0] sm:$0xff]
  %v217 = vld [vmem:[%s0 + $0x5c8] sm:$0xff]
  %v218 = vld [vmem:[%s0 + $0x5d0] sm:$0xff]
  %v219 = vld [vmem:[%s0 + $0x5d8] sm:$0xff]
  %v220 = vld [vmem:[%s0 + $0x5e0] sm:$0xff]
  %v221 = vld [vmem:[%s0 + $0x5e8] sm:$0xff]
  %v222 = vld [vmem:[%s0 + $0x5f0] sm:$0xff]
  %v223 = vld [vmem:[%s0 + $0x5f8] sm:$0xff]
  %v224 = vld [vmem:[%s0 + $0x600] sm:$0xff]
  %v225 = vld [vmem:[%s0 + $0x608] sm:$0xff]
  %v226 = vld [vmem:[%s0 + $0x610] sm:$0xff]
  %v227 = vld [vmem:[%s0 + $0x618] sm:$0xff]
  %v228 = vld [vmem:[%s0 + $0x620] sm:$0xff]
  %v229 = vld [vmem:[%s0 + $0x628] sm:$0xff]
  %v230 = vld [vmem:[%s0 + $0x630] sm:$0xff]
  %v231 = vld [vmem:[%s0 + $0x638] sm:$0xff]
  %v232 = vld [vmem:[%s0 + $0x640] sm:$0xff]
  %v233 = vld [vmem:[%s0 + $0x648] sm:$0xff]
  %v234 = vld [vmem:[%s0 + $0x650] sm:$0xff]
  %v235 = vld [vmem:[%s0 + $0x658] sm:$0xff]
  %v236 = vld [vmem:[%s0 + $0x660] sm:$0xff]
  %v237 = vld [vmem:[%s0 + $0x668] sm:$0xff]
  %v238 = vld [vmem:[%s0 + $0x670] sm:$0xff]
  %v239 = vld [vmem:[%s0 + $0x678] sm:$0xff]
  %v240 = vld [vmem:[%s0 + $0x680] sm:$0xff]
  %v241 = vld [vmem:[%s0 + $0x688] sm:$0xff]
  %v242 = vld [vmem:[%s0 + $0x690] sm:$0xff]
  %v243 = vld [vmem:[%s0 + $0x698] sm:$0xff]
  %v244 = vld [vmem:[%s0 + $0x6a0] sm:$0xff]
  %v245 = vld [vmem:[%s0 + $0x6a8] sm:$0xff]
  %v246 = vld [vmem:[%s0 + $0x6b0] sm:$0xff]
  %v247 = vld [vmem:[%s0 + $0x6b8] sm:$0xff]
  %v248 = vld [vmem:[%s0 + $0x6c0] sm:$0xff]
  %v249 = vld [vmem:[%s0 + $0x6c8] sm:$0xff]
  %v250 = vld [vmem:[%s0 + $0x6d0] sm:$0xff]
  %v251 = vld [vmem:[%s0 + $0x6d8] sm:$0xff]
  %v252 = vld [vmem:[%s0 + $0x6e0] sm:$0xff]
  %v253 = vld [vmem:[%s0 + $0x6e8] sm:$0xff]
  %v254 = vld [vmem:[%s0 + $0x6f0] sm:$0xff]
  %v255 = vld [vmem:[%s0 + $0x6f8] sm:$0xff]
  %v256 = vld [vmem:[%s0 + $0x700] sm:$0xff]
  %v257 = vld [vmem:[%s0 + $0x708] sm:$0xff]
  %v258 = vld [vmem:[%s0 + $0x710] sm:$0xff]
  %v259 = vld [vmem:[%s0 + $0x718] sm:$0xff]
  %v260 = vld [vmem:[%s0 + $0x720] sm:$0xff]
  %v261 = vld [vmem:[%s0 + $0x728] sm:$0xff]
  %v262 = vld [vmem:[%s0 + $0x730] sm:$0xff]
  %v263 = vld [vmem:[%s0 + $0x738] sm:$0xff]
  %v264 = vld [vmem:[%s0 + $0x740] sm:$0xff]
  %v265 = vld [vmem:[%s0 + $0x748] sm:$0xff]
  %v266 = vld [vmem:[%s0 + $0x750] sm:$0xff]
  %v267 = vld [vmem:[%s0 + $0x758] sm:$0xff]
  %v268 = vld [vmem:[%s0 + $0x760] sm:$0xff]
  %v269 = vld [vmem:[%s0 + $0x768] sm:$0xff]
  %v270 = vld [vmem:[%s0 + $0x770] sm:$0xff]
  %v271 = vld [vmem:[%s0 + $0x778] sm:$0xff]
  %v272 = vld [vmem:[%s0 + $0x780] sm:$0xff]
  %v273 = vld [vmem:[%s0 + $0x788] sm:$0xff]
  %v274 = vld [vmem:[%s0 + $0x790] sm:$0xff]
  %v275 = vld [vmem:[%s0 + $0x798] sm:$0xff]
  %v276 = vld [vmem:[%s0 + $0x7a0] sm:$0xff]
  %v277 = vld [vmem:[%s0 + $0x7a8] sm:$0xff]
  %v278 = vld [vmem:[%s0 + $0x7b0] sm:$0xff]
  %v279 = vld [vmem:[%s0 + $0x7b8] sm:$0xff]
  %v280 = vld [vmem:[%s0 + $0x7c0] sm:$0xff]
  %v281 = vld [vmem:[%s0 + $0x7c8] sm:$0xff]
  %v282 = vld [vmem:[%s0 + $0x7d0] sm:$0xff]
  %v283 = vld [vmem:[%s0 + $0x7d8] sm:$0xff]
  %v284 = vld [vmem:[%s0 + $0x7e0] sm:$0xff]
  %v285 = vld [vmem:[%s0 + $0x7e8] sm:$0xff]
  %v286 = vld [vmem:[%s0 + $0x7f0] sm:$0xff]
  %v287 = vld [vmem:[%s0 + $0x7f8] sm:$0xff]
  %vm288 = vcmask 23552
  %289 = vst.msk [vmem:[#allocation2] sm:$0xff] %vm288, 0.0
  %290 = vst.msk [vmem:[#allocation2 + $0x8] sm:$0xff] %vm288, 0.0
  %291 = vst.msk [vmem:[#allocation2 + $0x10] sm:$0xff] %vm288, 0.0
  %292 = vst.msk [vmem:[#allocation2 + $0x18] sm:$0xff] %vm288, 0.0
  %vm293 = vcmask 17408
  %294 = vst.msk [vmem:[#allocation2 + $0x20] sm:$0x3] %vm293, 0.0
  %295 = vst.msk [vmem:[#allocation2 + $0x28] sm:$0xff] %vm288, 0.0
  %296 = vst.msk [vmem:[#allocation2 + $0x30] sm:$0xff] %vm288, 0.0
  %297 = vst.msk [vmem:[#allocation2 + $0x38] sm:$0xff] %vm288, 0.0
  %298 = vst.msk [vmem:[#allocation2 + $0x40] sm:$0xff] %vm288, 0.0
  %299 = vst.msk [vmem:[#allocation2 + $0x48] sm:$0x3] %vm293, 0.0
  %300 = vst.msk [vmem:[#allocation2 + $0x50] sm:$0xff] %vm288, 0.0
  %301 = vst.msk [vmem:[#allocation2 + $0x58] sm:$0xff] %vm288, 0.0
  %302 = vst.msk [vmem:[#allocation2 + $0x60] sm:$0xff] %vm288, 0.0
  %303 = vst.msk [vmem:[#allocation2 + $0x68] sm:$0xff] %vm288, 0.0
  %304 = vst.msk [vmem:[#allocation2 + $0x70] sm:$0x3] %vm293, 0.0
  %305 = vst.msk [vmem:[#allocation2 + $0x78] sm:$0xff] %vm288, 0.0
  %306 = vst.msk [vmem:[#allocation2 + $0x80] sm:$0xff] %vm288, 0.0
  %307 = vst.msk [vmem:[#allocation2 + $0x88] sm:$0xff] %vm288, 0.0
  %308 = vst.msk [vmem:[#allocation2 + $0x90] sm:$0xff] %vm288, 0.0
  %309 = vst.msk [vmem:[#allocation2 + $0x98] sm:$0x3] %vm293, 0.0
  %310 = vst.msk [vmem:[#allocation2 + $0xa0] sm:$0xff] %vm288, 0.0
  %311 = vst.msk [vmem:[#allocation2 + $0xa8] sm:$0xff] %vm288, 0.0
  %312 = vst.msk [vmem:[#allocation2 + $0xb0] sm:$0xff] %vm288, 0.0
  %313 = vst.msk [vmem:[#allocation2 + $0xb8] sm:$0xff] %vm288, 0.0
  %314 = vst.msk [vmem:[#allocation2 + $0xc0] sm:$0x3] %vm293, 0.0
  %315 = vst.msk [vmem:[#allocation2 + $0xc8] sm:$0xff] %vm288, 0.0
  %316 = vst.msk [vmem:[#allocation2 + $0xd0] sm:$0xff] %vm288, 0.0
  %317 = vst.msk [vmem:[#allocation2 + $0xd8] sm:$0xff] %vm288, 0.0
  %318 = vst.msk [vmem:[#allocation2 + $0xe0] sm:$0xff] %vm288, 0.0
  %319 = vst.msk [vmem:[#allocation2 + $0xe8] sm:$0x3] %vm293, 0.0
  %320 = vst.msk [vmem:[#allocation2 + $0xf0] sm:$0xff] %vm288, 0.0
  %321 = vst.msk [vmem:[#allocation2 + $0xf8] sm:$0xff] %vm288, 0.0
  %322 = vst.msk [vmem:[#allocation2 + $0x100] sm:$0xff] %vm288, 0.0
  %323 = vst.msk [vmem:[#allocation2 + $0x108] sm:$0xff] %vm288, 0.0
  %324 = vst.msk [vmem:[#allocation2 + $0x110] sm:$0x3] %vm293, 0.0
  %325 = vst.msk [vmem:[#allocation2 + $0x118] sm:$0xff] %vm288, 0.0
  %326 = vst.msk [vmem:[#allocation2 + $0x120] sm:$0xff] %vm288, 0.0
  %327 = vst.msk [vmem:[#allocation2 + $0x128] sm:$0xff] %vm288, 0.0
  %328 = vst.msk [vmem:[#allocation2 + $0x130] sm:$0xff] %vm288, 0.0
  %329 = vst.msk [vmem:[#allocation2 + $0x138] sm:$0x3] %vm293, 0.0
  %330 = vst.msk [vmem:[#allocation2 + $0x140] sm:$0xff] %vm288, 0.0
  %331 = vst.msk [vmem:[#allocation2 + $0x148] sm:$0xff] %vm288, 0.0
  %332 = vst.msk [vmem:[#allocation2 + $0x150] sm:$0xff] %vm288, 0.0
  %333 = vst.msk [vmem:[#allocation2 + $0x158] sm:$0xff] %vm288, 0.0
  %334 = vst.msk [vmem:[#allocation2 + $0x160] sm:$0x3] %vm293, 0.0
  %335 = vst.msk [vmem:[#allocation2 + $0x168] sm:$0xff] %vm288, 0.0
  %336 = vst.msk [vmem:[#allocation2 + $0x170] sm:$0xff] %vm288, 0.0
  %337 = vst.msk [vmem:[#allocation2 + $0x178] sm:$0xff] %vm288, 0.0
  %338 = vst.msk [vmem:[#allocation2 + $0x180] sm:$0xff] %vm288, 0.0
  %339 = vst.msk [vmem:[#allocation2 + $0x188] sm:$0x3] %vm293, 0.0
  %340 = vst.msk [vmem:[#allocation2 + $0x190] sm:$0xff] %vm288, 0.0
  %341 = vst.msk [vmem:[#allocation2 + $0x198] sm:$0xff] %vm288, 0.0
  %342 = vst.msk [vmem:[#allocation2 + $0x1a0] sm:$0xff] %vm288, 0.0
  %343 = vst.msk [vmem:[#allocation2 + $0x1a8] sm:$0xff] %vm288, 0.0
  %344 = vst.msk [vmem:[#allocation2 + $0x1b0] sm:$0x3] %vm293, 0.0
  %345 = vst.msk [vmem:[#allocation2 + $0x1b8] sm:$0xff] %vm288, 0.0
  %346 = vst.msk [vmem:[#allocation2 + $0x1c0] sm:$0xff] %vm288, 0.0
  %347 = vst.msk [vmem:[#allocation2 + $0x1c8] sm:$0xff] %vm288, 0.0
  %348 = vst.msk [vmem:[#allocation2 + $0x1d0] sm:$0xff] %vm288, 0.0
  %349 = vst.msk [vmem:[#allocation2 + $0x1d8] sm:$0x3] %vm293, 0.0
  %350 = vst.msk [vmem:[#allocation2 + $0x1e0] sm:$0xff] %vm288, 0.0
  %351 = vst.msk [vmem:[#allocation2 + $0x1e8] sm:$0xff] %vm288, 0.0
  %352 = vst.msk [vmem:[#allocation2 + $0x1f0] sm:$0xff] %vm288, 0.0
  %353 = vst.msk [vmem:[#allocation2 + $0x1f8] sm:$0xff] %vm288, 0.0
  %354 = vst.msk [vmem:[#allocation2 + $0x200] sm:$0x3] %vm293, 0.0
  %355 = vst.msk [vmem:[#allocation2 + $0x208] sm:$0xff] %vm288, 0.0
  %356 = vst.msk [vmem:[#allocation2 + $0x210] sm:$0xff] %vm288, 0.0
  %357 = vst.msk [vmem:[#allocation2 + $0x218] sm:$0xff] %vm288, 0.0
  %358 = vst.msk [vmem:[#allocation2 + $0x220] sm:$0xff] %vm288, 0.0
  %359 = vst.msk [vmem:[#allocation2 + $0x228] sm:$0x3] %vm293, 0.0
  %360 = vst.msk [vmem:[#allocation2 + $0x230] sm:$0xff] %vm288, 0.0
  %361 = vst.msk [vmem:[#allocation2 + $0x238] sm:$0xff] %vm288, 0.0
  %362 = vst.msk [vmem:[#allocation2 + $0x240] sm:$0xff] %vm288, 0.0
  %363 = vst.msk [vmem:[#allocation2 + $0x248] sm:$0xff] %vm288, 0.0
  %364 = vst.msk [vmem:[#allocation2 + $0x250] sm:$0x3] %vm293, 0.0
  %365 = vst.msk [vmem:[#allocation2 + $0x258] sm:$0xff] %vm288, 0.0
  %366 = vst.msk [vmem:[#allocation2 + $0x260] sm:$0xff] %vm288, 0.0
  %367 = vst.msk [vmem:[#allocation2 + $0x268] sm:$0xff] %vm288, 0.0
  %368 = vst.msk [vmem:[#allocation2 + $0x270] sm:$0xff] %vm288, 0.0
  %369 = vst.msk [vmem:[#allocation2 + $0x278] sm:$0x3] %vm293, 0.0
  %370 = vst.msk [vmem:[#allocation2 + $0x280] sm:$0xff] %vm288, 0.0
  %371 = vst.msk [vmem:[#allocation2 + $0x288] sm:$0xff] %vm288, 0.0
  %372 = vst.msk [vmem:[#allocation2 + $0x290] sm:$0xff] %vm288, 0.0
  %373 = vst.msk [vmem:[#allocation2 + $0x298] sm:$0xff] %vm288, 0.0
  %374 = vst.msk [vmem:[#allocation2 + $0x2a0] sm:$0x3] %vm293, 0.0
  %375 = vst.msk [vmem:[#allocation2 + $0x2a8] sm:$0xff] %vm288, 0.0
  %376 = vst.msk [vmem:[#allocation2 + $0x2b0] sm:$0xff] %vm288, 0.0
  %377 = vst.msk [vmem:[#allocation2 + $0x2b8] sm:$0xff] %vm288, 0.0
  %378 = vst.msk [vmem:[#allocation2 + $0x2c0] sm:$0xff] %vm288, 0.0
  %379 = vst.msk [vmem:[#allocation2 + $0x2c8] sm:$0x3] %vm293, 0.0
  %380 = vst.msk [vmem:[#allocation2 + $0x2d0] sm:$0xff] %vm288, 0.0
  %381 = vst.msk [vmem:[#allocation2 + $0x2d8] sm:$0xff] %vm288, 0.0
  %382 = vst.msk [vmem:[#allocation2 + $0x2e0] sm:$0xff] %vm288, 0.0
  %383 = vst.msk [vmem:[#allocation2 + $0x2e8] sm:$0xff] %vm288, 0.0
  %384 = vst.msk [vmem:[#allocation2 + $0x2f0] sm:$0x3] %vm293, 0.0
  %385 = vst.msk [vmem:[#allocation2 + $0x2f8] sm:$0xff] %vm288, 0.0
  %386 = vst.msk [vmem:[#allocation2 + $0x300] sm:$0xff] %vm288, 0.0
  %387 = vst.msk [vmem:[#allocation2 + $0x308] sm:$0xff] %vm288, 0.0
  %388 = vst.msk [vmem:[#allocation2 + $0x310] sm:$0xff] %vm288, 0.0
  %389 = vst.msk [vmem:[#allocation2 + $0x318] sm:$0x3] %vm293, 0.0
  %390 = vst.msk [vmem:[#allocation2 + $0x320] sm:$0xff] %vm288, 0.0
  %391 = vst.msk [vmem:[#allocation2 + $0x328] sm:$0xff] %vm288, 0.0
  %392 = vst.msk [vmem:[#allocation2 + $0x330] sm:$0xff] %vm288, 0.0
  %393 = vst.msk [vmem:[#allocation2 + $0x338] sm:$0xff] %vm288, 0.0
  %394 = vst.msk [vmem:[#allocation2 + $0x340] sm:$0x3] %vm293, 0.0
  %395 = vst.msk [vmem:[#allocation2 + $0x348] sm:$0xff] %vm288, 0.0
  %396 = vst.msk [vmem:[#allocation2 + $0x350] sm:$0xff] %vm288, 0.0
  %397 = vst.msk [vmem:[#allocation2 + $0x358] sm:$0xff] %vm288, 0.0
  %398 = vst.msk [vmem:[#allocation2 + $0x360] sm:$0xff] %vm288, 0.0
  %399 = vst.msk [vmem:[#allocation2 + $0x368] sm:$0x3] %vm293, 0.0
  %400 = vst.msk [vmem:[#allocation2 + $0x370] sm:$0xff] %vm288, 0.0
  %401 = vst.msk [vmem:[#allocation2 + $0x378] sm:$0xff] %vm288, 0.0
  %402 = vst.msk [vmem:[#allocation2 + $0x380] sm:$0xff] %vm288, 0.0
  %403 = vst.msk [vmem:[#allocation2 + $0x388] sm:$0xff] %vm288, 0.0
  %404 = vst.msk [vmem:[#allocation2 + $0x390] sm:$0x3] %vm293, 0.0
  %405 = vst.msk [vmem:[#allocation2 + $0x398] sm:$0xff] %vm288, 0.0
  %406 = vst.msk [vmem:[#allocation2 + $0x3a0] sm:$0xff] %vm288, 0.0
  %407 = vst.msk [vmem:[#allocation2 + $0x3a8] sm:$0xff] %vm288, 0.0
  %408 = vst.msk [vmem:[#allocation2 + $0x3b0] sm:$0xff] %vm288, 0.0
  %409 = vst.msk [vmem:[#allocation2 + $0x3b8] sm:$0x3] %vm293, 0.0
  %410 = vst.msk [vmem:[#allocation2 + $0x3c0] sm:$0xff] %vm288, 0.0
  %411 = vst.msk [vmem:[#allocation2 + $0x3c8] sm:$0xff] %vm288, 0.0
  %412 = vst.msk [vmem:[#allocation2 + $0x3d0] sm:$0xff] %vm288, 0.0
  %413 = vst.msk [vmem:[#allocation2 + $0x3d8] sm:$0xff] %vm288, 0.0
  %414 = vst.msk [vmem:[#allocation2 + $0x3e0] sm:$0x3] %vm293, 0.0
  %415 = vst.msk [vmem:[#allocation2 + $0x3e8] sm:$0xff] %vm288, 0.0
  %416 = vst.msk [vmem:[#allocation2 + $0x3f0] sm:$0xff] %vm288, 0.0
  %417 = vst.msk [vmem:[#allocation2 + $0x3f8] sm:$0xff] %vm288, 0.0
  %418 = vst.msk [vmem:[#allocation2 + $0x400] sm:$0xff] %vm288, 0.0
  %419 = vst.msk [vmem:[#allocation2 + $0x408] sm:$0x3] %vm293, 0.0
  %420 = vst.msk [vmem:[#allocation2 + $0x410] sm:$0xff] %vm288, 0.0
  %421 = vst.msk [vmem:[#allocation2 + $0x418] sm:$0xff] %vm288, 0.0
  %422 = vst.msk [vmem:[#allocation2 + $0x420] sm:$0xff] %vm288, 0.0
  %423 = vst.msk [vmem:[#allocation2 + $0x428] sm:$0xff] %vm288, 0.0
  %424 = vst.msk [vmem:[#allocation2 + $0x430] sm:$0x3] %vm293, 0.0
  %425 = vst.msk [vmem:[#allocation2 + $0x438] sm:$0xff] %vm288, 0.0
  %426 = vst.msk [vmem:[#allocation2 + $0x440] sm:$0xff] %vm288, 0.0
  %427 = vst.msk [vmem:[#allocation2 + $0x448] sm:$0xff] %vm288, 0.0
  %428 = vst.msk [vmem:[#allocation2 + $0x450] sm:$0xff] %vm288, 0.0
  %429 = vst.msk [vmem:[#allocation2 + $0x458] sm:$0x3] %vm293, 0.0
  %430 = vst.msk [vmem:[#allocation2 + $0x460] sm:$0xff] %vm288, 0.0
  %431 = vst.msk [vmem:[#allocation2 + $0x468] sm:$0xff] %vm288, 0.0
  %432 = vst.msk [vmem:[#allocation2 + $0x470] sm:$0xff] %vm288, 0.0
  %433 = vst.msk [vmem:[#allocation2 + $0x478] sm:$0xff] %vm288, 0.0
  %434 = vst.msk [vmem:[#allocation2 + $0x480] sm:$0x3] %vm293, 0.0
  %435 = vst.msk [vmem:[#allocation2 + $0x488] sm:$0xff] %vm288, 0.0
  %436 = vst.msk [vmem:[#allocation2 + $0x490] sm:$0xff] %vm288, 0.0
  %437 = vst.msk [vmem:[#allocation2 + $0x498] sm:$0xff] %vm288, 0.0
  %438 = vst.msk [vmem:[#allocation2 + $0x4a0] sm:$0xff] %vm288, 0.0
  %439 = vst.msk [vmem:[#allocation2 + $0x4a8] sm:$0x3] %vm293, 0.0
  %440 = vst.msk [vmem:[#allocation2 + $0x4b0] sm:$0xff] %vm288, 0.0
  %441 = vst.msk [vmem:[#allocation2 + $0x4b8] sm:$0xff] %vm288, 0.0
  %442 = vst.msk [vmem:[#allocation2 + $0x4c0] sm:$0xff] %vm288, 0.0
  %443 = vst.msk [vmem:[#allocation2 + $0x4c8] sm:$0xff] %vm288, 0.0
  %444 = vst.msk [vmem:[#allocation2 + $0x4d0] sm:$0x3] %vm293, 0.0
  %445 = vst.msk [vmem:[#allocation2 + $0x4d8] sm:$0xff] %vm288, 0.0
  %446 = vst.msk [vmem:[#allocation2 + $0x4e0] sm:$0xff] %vm288, 0.0
  %447 = vst.msk [vmem:[#allocation2 + $0x4e8] sm:$0xff] %vm288, 0.0
  %448 = vst.msk [vmem:[#allocation2 + $0x4f0] sm:$0xff] %vm288, 0.0
  %449 = vst.msk [vmem:[#allocation2 + $0x4f8] sm:$0x3] %vm293, 0.0
  %450 = vst.msk [vmem:[#allocation2 + $0x500] sm:$0xff] %vm288, 0.0
  %451 = vst.msk [vmem:[#allocation2 + $0x508] sm:$0xff] %vm288, 0.0
  %452 = vst.msk [vmem:[#allocation2 + $0x510] sm:$0xff] %vm288, 0.0
  %453 = vst.msk [vmem:[#allocation2 + $0x518] sm:$0xff] %vm288, 0.0
  %454 = vst.msk [vmem:[#allocation2 + $0x520] sm:$0x3] %vm293, 0.0
  %455 = vst.msk [vmem:[#allocation2 + $0x528] sm:$0xff] %vm288, 0.0
  %456 = vst.msk [vmem:[#allocation2 + $0x530] sm:$0xff] %vm288, 0.0
  %457 = vst.msk [vmem:[#allocation2 + $0x538] sm:$0xff] %vm288, 0.0
  %458 = vst.msk [vmem:[#allocation2 + $0x540] sm:$0xff] %vm288, 0.0
  %459 = vst.msk [vmem:[#allocation2 + $0x548] sm:$0x3] %vm293, 0.0
  %460 = vst.msk [vmem:[#allocation2 + $0x550] sm:$0xff] %vm288, 0.0
  %461 = vst.msk [vmem:[#allocation2 + $0x558] sm:$0xff] %vm288, 0.0
  %462 = vst.msk [vmem:[#allocation2 + $0x560] sm:$0xff] %vm288, 0.0
  %463 = vst.msk [vmem:[#allocation2 + $0x568] sm:$0xff] %vm288, 0.0
  %464 = vst.msk [vmem:[#allocation2 + $0x570] sm:$0x3] %vm293, 0.0
  %465 = vst.msk [vmem:[#allocation2 + $0x578] sm:$0xff] %vm288, 0.0
  %466 = vst.msk [vmem:[#allocation2 + $0x580] sm:$0xff] %vm288, 0.0
  %467 = vst.msk [vmem:[#allocation2 + $0x588] sm:$0xff] %vm288, 0.0
  %468 = vst.msk [vmem:[#allocation2 + $0x590] sm:$0xff] %vm288, 0.0
  %469 = vst.msk [vmem:[#allocation2 + $0x598] sm:$0x3] %vm293, 0.0
  %470 = vst.msk [vmem:[#allocation2 + $0x5a0] sm:$0xff] %vm288, 0.0
  %471 = vst.msk [vmem:[#allocation2 + $0x5a8] sm:$0xff] %vm288, 0.0
  %472 = vst.msk [vmem:[#allocation2 + $0x5b0] sm:$0xff] %vm288, 0.0
  %473 = vst.msk [vmem:[#allocation2 + $0x5b8] sm:$0xff] %vm288, 0.0
  %474 = vst.msk [vmem:[#allocation2 + $0x5c0] sm:$0x3] %vm293, 0.0
  %475 = vst.msk [vmem:[#allocation2 + $0x5c8] sm:$0xff] %vm288, 0.0
  %476 = vst.msk [vmem:[#allocation2 + $0x5d0] sm:$0xff] %vm288, 0.0
  %477 = vst.msk [vmem:[#allocation2 + $0x5d8] sm:$0xff] %vm288, 0.0
  %478 = vst.msk [vmem:[#allocation2 + $0x5e0] sm:$0xff] %vm288, 0.0
  %479 = vst.msk [vmem:[#allocation2 + $0x5e8] sm:$0x3] %vm293, 0.0
  %480 = vst.msk [vmem:[#allocation2 + $0x5f0] sm:$0xff] %vm288, 0.0
  %481 = vst.msk [vmem:[#allocation2 + $0x5f8] sm:$0xff] %vm288, 0.0
  %482 = vst.msk [vmem:[#allocation2 + $0x600] sm:$0xff] %vm288, 0.0
  %483 = vst.msk [vmem:[#allocation2 + $0x608] sm:$0xff] %vm288, 0.0
  %484 = vst.msk [vmem:[#allocation2 + $0x610] sm:$0x3] %vm293, 0.0
  %485 = vst.msk [vmem:[#allocation2 + $0x618] sm:$0xff] %vm288, 0.0
  %486 = vst.msk [vmem:[#allocation2 + $0x620] sm:$0xff] %vm288, 0.0
  %487 = vst.msk [vmem:[#allocation2 + $0x628] sm:$0xff] %vm288, 0.0
  %488 = vst.msk [vmem:[#allocation2 + $0x630] sm:$0xff] %vm288, 0.0
  %489 = vst.msk [vmem:[#allocation2 + $0x638] sm:$0x3] %vm293, 0.0
  %490 = vst.msk [vmem:[#allocation2 + $0x640] sm:$0xff] %vm288, 0.0
  %491 = vst.msk [vmem:[#allocation2 + $0x648] sm:$0xff] %vm288, 0.0
  %492 = vst.msk [vmem:[#allocation2 + $0x650] sm:$0xff] %vm288, 0.0
  %493 = vst.msk [vmem:[#allocation2 + $0x658] sm:$0xff] %vm288, 0.0
  %494 = vst.msk [vmem:[#allocation2 + $0x660] sm:$0x3] %vm293, 0.0
  %495 = vst.msk [vmem:[#allocation2 + $0x668] sm:$0xff] %vm288, 0.0
  %496 = vst.msk [vmem:[#allocation2 + $0x670] sm:$0xff] %vm288, 0.0
  %497 = vst.msk [vmem:[#allocation2 + $0x678] sm:$0xff] %vm288, 0.0
  %498 = vst.msk [vmem:[#allocation2 + $0x680] sm:$0xff] %vm288, 0.0
  %499 = vst.msk [vmem:[#allocation2 + $0x688] sm:$0x3] %vm293, 0.0
  %500 = vst.msk [vmem:[#allocation2 + $0x690] sm:$0xff] %vm288, 0.0
  %501 = vst.msk [vmem:[#allocation2 + $0x698] sm:$0xff] %vm288, 0.0
  %502 = vst.msk [vmem:[#allocation2 + $0x6a0] sm:$0xff] %vm288, 0.0
  %503 = vst.msk [vmem:[#allocation2 + $0x6a8] sm:$0xff] %vm288, 0.0
  %504 = vst.msk [vmem:[#allocation2 + $0x6b0] sm:$0x3] %vm293, 0.0
  %505 = vst.msk [vmem:[#allocation2 + $0x6b8] sm:$0xff] %vm288, 0.0
  %506 = vst.msk [vmem:[#allocation2 + $0x6c0] sm:$0xff] %vm288, 0.0
  %507 = vst.msk [vmem:[#allocation2 + $0x6c8] sm:$0xff] %vm288, 0.0
  %508 = vst.msk [vmem:[#allocation2 + $0x6d0] sm:$0xff] %vm288, 0.0
  %509 = vst.msk [vmem:[#allocation2 + $0x6d8] sm:$0x3] %vm293, 0.0
  %510 = vst.msk [vmem:[#allocation2 + $0x6e0] sm:$0xff] %vm288, 0.0
  %511 = vst.msk [vmem:[#allocation2 + $0x6e8] sm:$0xff] %vm288, 0.0
  %512 = vst.msk [vmem:[#allocation2 + $0x6f0] sm:$0xff] %vm288, 0.0
  %513 = vst.msk [vmem:[#allocation2 + $0x6f8] sm:$0xff] %vm288, 0.0
  %514 = vst.msk [vmem:[#allocation2 + $0x700] sm:$0x3] %vm293, 0.0
  %515 = vst.msk [vmem:[#allocation2 + $0x708] sm:$0xff] %vm288, 0.0
  %516 = vst.msk [vmem:[#allocation2 + $0x710] sm:$0xff] %vm288, 0.0
  %517 = vst.msk [vmem:[#allocation2 + $0x718] sm:$0xff] %vm288, 0.0
  %518 = vst.msk [vmem:[#allocation2 + $0x720] sm:$0xff] %vm288, 0.0
  %519 = vst.msk [vmem:[#allocation2 + $0x728] sm:$0x3] %vm293, 0.0
  %520 = vst.msk [vmem:[#allocation2 + $0x730] sm:$0xff] %vm288, 0.0
  %521 = vst.msk [vmem:[#allocation2 + $0x738] sm:$0xff] %vm288, 0.0
  %522 = vst.msk [vmem:[#allocation2 + $0x740] sm:$0xff] %vm288, 0.0
  %523 = vst.msk [vmem:[#allocation2 + $0x748] sm:$0xff] %vm288, 0.0
  %524 = vst.msk [vmem:[#allocation2 + $0x750] sm:$0x3] %vm293, 0.0
  %525 = vst.msk [vmem:[#allocation2 + $0x758] sm:$0xff] %vm288, 0.0
  %526 = vst.msk [vmem:[#allocation2 + $0x760] sm:$0xff] %vm288, 0.0
  %527 = vst.msk [vmem:[#allocation2 + $0x768] sm:$0xff] %vm288, 0.0
  %528 = vst.msk [vmem:[#allocation2 + $0x770] sm:$0xff] %vm288, 0.0
  %529 = vst.msk [vmem:[#allocation2 + $0x778] sm:$0x3] %vm293, 0.0
  %530 = vst.msk [vmem:[#allocation2 + $0x780] sm:$0xff] %vm288, 0.0
  %531 = vst.msk [vmem:[#allocation2 + $0x788] sm:$0xff] %vm288, 0.0
  %532 = vst.msk [vmem:[#allocation2 + $0x790] sm:$0xff] %vm288, 0.0
  %533 = vst.msk [vmem:[#allocation2 + $0x798] sm:$0xff] %vm288, 0.0
  %534 = vst.msk [vmem:[#allocation2 + $0x7a0] sm:$0x3] %vm293, 0.0
  %535 = vst.msk [vmem:[#allocation2 + $0x7a8] sm:$0xff] %vm288, 0.0
  %536 = vst.msk [vmem:[#allocation2 + $0x7b0] sm:$0xff] %vm288, 0.0
  %537 = vst.msk [vmem:[#allocation2 + $0x7b8] sm:$0xff] %vm288, 0.0
  %538 = vst.msk [vmem:[#allocation2 + $0x7c0] sm:$0xff] %vm288, 0.0
  %539 = vst.msk [vmem:[#allocation2 + $0x7c8] sm:$0x3] %vm293, 0.0
  %540 = vst.msk [vmem:[#allocation2 + $0x7d0] sm:$0xff] %vm288, 0.0
  %541 = vst.msk [vmem:[#allocation2 + $0x7d8] sm:$0xff] %vm288, 0.0
  %542 = vst.msk [vmem:[#allocation2 + $0x7e0] sm:$0xff] %vm288, 0.0
  %543 = vst.msk [vmem:[#allocation2 + $0x7e8] sm:$0xff] %vm288, 0.0
  %544 = vst.msk [vmem:[#allocation2 + $0x7f0] sm:$0x3] %vm293, 0.0
  %545 = vst.msk [vmem:[#allocation2 + $0x7f8] sm:$0xff] %vm288, 0.0
  %546 = vst.msk [vmem:[#allocation2 + $0x800] sm:$0xff] %vm288, 0.0
  %547 = vst.msk [vmem:[#allocation2 + $0x808] sm:$0xff] %vm288, 0.0
  %548 = vst.msk [vmem:[#allocation2 + $0x810] sm:$0xff] %vm288, 0.0
  %549 = vst.msk [vmem:[#allocation2 + $0x818] sm:$0x3] %vm293, 0.0
  %550 = vst.msk [vmem:[#allocation2 + $0x820] sm:$0xff] %vm288, 0.0
  %551 = vst.msk [vmem:[#allocation2 + $0x828] sm:$0xff] %vm288, 0.0
  %552 = vst.msk [vmem:[#allocation2 + $0x830] sm:$0xff] %vm288, 0.0
  %553 = vst.msk [vmem:[#allocation2 + $0x838] sm:$0xff] %vm288, 0.0
  %554 = vst.msk [vmem:[#allocation2 + $0x840] sm:$0x3] %vm293, 0.0
  %555 = vst.msk [vmem:[#allocation2 + $0x848] sm:$0xff] %vm288, 0.0
  %556 = vst.msk [vmem:[#allocation2 + $0x850] sm:$0xff] %vm288, 0.0
  %557 = vst.msk [vmem:[#allocation2 + $0x858] sm:$0xff] %vm288, 0.0
  %558 = vst.msk [vmem:[#allocation2 + $0x860] sm:$0xff] %vm288, 0.0
  %559 = vst.msk [vmem:[#allocation2 + $0x868] sm:$0x3] %vm293, 0.0
  %560 = vst.msk [vmem:[#allocation2 + $0x870] sm:$0xff] %vm288, 0.0
  %561 = vst.msk [vmem:[#allocation2 + $0x878] sm:$0xff] %vm288, 0.0
  %562 = vst.msk [vmem:[#allocation2 + $0x880] sm:$0xff] %vm288, 0.0
  %563 = vst.msk [vmem:[#allocation2 + $0x888] sm:$0xff] %vm288, 0.0
  %564 = vst.msk [vmem:[#allocation2 + $0x890] sm:$0x3] %vm293, 0.0
  %565 = vst.msk [vmem:[#allocation2 + $0x898] sm:$0xff] %vm288, 0.0
  %566 = vst.msk [vmem:[#allocation2 + $0x8a0] sm:$0xff] %vm288, 0.0
  %567 = vst.msk [vmem:[#allocation2 + $0x8a8] sm:$0xff] %vm288, 0.0
  %568 = vst.msk [vmem:[#allocation2 + $0x8b0] sm:$0xff] %vm288, 0.0
  %569 = vst.msk [vmem:[#allocation2 + $0x8b8] sm:$0x3] %vm293, 0.0
  %570 = vst.msk [vmem:[#allocation2 + $0x8c0] sm:$0xff] %vm288, 0.0
  %571 = vst.msk [vmem:[#allocation2 + $0x8c8] sm:$0xff] %vm288, 0.0
  %572 = vst.msk [vmem:[#allocation2 + $0x8d0] sm:$0xff] %vm288, 0.0
  %573 = vst.msk [vmem:[#allocation2 + $0x8d8] sm:$0xff] %vm288, 0.0
  %574 = vst.msk [vmem:[#allocation2 + $0x8e0] sm:$0x3] %vm293, 0.0
  %575 = vst.msk [vmem:[#allocation2 + $0x8e8] sm:$0xff] %vm288, 0.0
  %576 = vst.msk [vmem:[#allocation2 + $0x8f0] sm:$0xff] %vm288, 0.0
  %577 = vst.msk [vmem:[#allocation2 + $0x8f8] sm:$0xff] %vm288, 0.0
  %578 = vst.msk [vmem:[#allocation2 + $0x900] sm:$0xff] %vm288, 0.0
  %579 = vst.msk [vmem:[#allocation2 + $0x908] sm:$0x3] %vm293, 0.0
  %580 = vst.msk [vmem:[#allocation2 + $0x910] sm:$0xff] %vm288, 0.0
  %581 = vst.msk [vmem:[#allocation2 + $0x918] sm:$0xff] %vm288, 0.0
  %582 = vst.msk [vmem:[#allocation2 + $0x920] sm:$0xff] %vm288, 0.0
  %583 = vst.msk [vmem:[#allocation2 + $0x928] sm:$0xff] %vm288, 0.0
  %584 = vst.msk [vmem:[#allocation2 + $0x930] sm:$0x3] %vm293, 0.0
  %585 = vst.msk [vmem:[#allocation2 + $0x938] sm:$0xff] %vm288, 0.0
  %586 = vst.msk [vmem:[#allocation2 + $0x940] sm:$0xff] %vm288, 0.0
  %587 = vst.msk [vmem:[#allocation2 + $0x948] sm:$0xff] %vm288, 0.0
  %588 = vst.msk [vmem:[#allocation2 + $0x950] sm:$0xff] %vm288, 0.0
  %589 = vst.msk [vmem:[#allocation2 + $0x958] sm:$0x3] %vm293, 0.0
  %590 = vst.msk [vmem:[#allocation2 + $0x960] sm:$0xff] %vm288, 0.0
  %591 = vst.msk [vmem:[#allocation2 + $0x968] sm:$0xff] %vm288, 0.0
  %592 = vst.msk [vmem:[#allocation2 + $0x970] sm:$0xff] %vm288, 0.0
  %593 = vst.msk [vmem:[#allocation2 + $0x978] sm:$0xff] %vm288, 0.0
  %594 = vst.msk [vmem:[#allocation2 + $0x980] sm:$0x3] %vm293, 0.0
  %595 = vst.msk [vmem:[#allocation2 + $0x988] sm:$0xff] %vm288, 0.0
  %596 = vst.msk [vmem:[#allocation2 + $0x990] sm:$0xff] %vm288, 0.0
  %597 = vst.msk [vmem:[#allocation2 + $0x998] sm:$0xff] %vm288, 0.0
  %598 = vst.msk [vmem:[#allocation2 + $0x9a0] sm:$0xff] %vm288, 0.0
  %599 = vst.msk [vmem:[#allocation2 + $0x9a8] sm:$0x3] %vm293, 0.0
  %600 = vst.msk [vmem:[#allocation2 + $0x9b0] sm:$0xff] %vm288, 0.0
  %601 = vst.msk [vmem:[#allocation2 + $0x9b8] sm:$0xff] %vm288, 0.0
  %602 = vst.msk [vmem:[#allocation2 + $0x9c0] sm:$0xff] %vm288, 0.0
  %603 = vst.msk [vmem:[#allocation2 + $0x9c8] sm:$0xff] %vm288, 0.0
  %604 = vst.msk [vmem:[#allocation2 + $0x9d0] sm:$0x3] %vm293, 0.0
  %605 = vst.msk [vmem:[#allocation2 + $0x9d8] sm:$0xff] %vm288, 0.0
  %606 = vst.msk [vmem:[#allocation2 + $0x9e0] sm:$0xff] %vm288, 0.0
  %607 = vst.msk [vmem:[#allocation2 + $0x9e8] sm:$0xff] %vm288, 0.0
  %608 = vst.msk [vmem:[#allocation2 + $0x9f0] sm:$0xff] %vm288, 0.0
  %609 = vst.msk [vmem:[#allocation2 + $0x9f8] sm:$0x3] %vm293, 0.0
  %610 = vst.msk [vmem:[#allocation2 + $0xa00] sm:$0xff] %vm288, 0.0
  %611 = vst.msk [vmem:[#allocation2 + $0xa08] sm:$0xff] %vm288, 0.0
  %612 = vst.msk [vmem:[#allocation2 + $0xa10] sm:$0xff] %vm288, 0.0
  %613 = vst.msk [vmem:[#allocation2 + $0xa18] sm:$0xff] %vm288, 0.0
  %614 = vst.msk [vmem:[#allocation2 + $0xa20] sm:$0x3] %vm293, 0.0
  %615 = vst.msk [vmem:[#allocation2 + $0xa28] sm:$0xff] %vm288, 0.0
  %616 = vst.msk [vmem:[#allocation2 + $0xa30] sm:$0xff] %vm288, 0.0
  %617 = vst.msk [vmem:[#allocation2 + $0xa38] sm:$0xff] %vm288, 0.0
  %618 = vst.msk [vmem:[#allocation2 + $0xa40] sm:$0xff] %vm288, 0.0
  %619 = vst.msk [vmem:[#allocation2 + $0xa48] sm:$0x3] %vm293, 0.0
  %620 = vst.msk [vmem:[#allocation2 + $0xa50] sm:$0xff] %vm288, 0.0
  %621 = vst.msk [vmem:[#allocation2 + $0xa58] sm:$0xff] %vm288, 0.0
  %622 = vst.msk [vmem:[#allocation2 + $0xa60] sm:$0xff] %vm288, 0.0
  %623 = vst.msk [vmem:[#allocation2 + $0xa68] sm:$0xff] %vm288, 0.0
  %624 = vst.msk [vmem:[#allocation2 + $0xa70] sm:$0x3] %vm293, 0.0
  %625 = vst.msk [vmem:[#allocation2 + $0xa78] sm:$0xff] %vm288, 0.0
  %626 = vst.msk [vmem:[#allocation2 + $0xa80] sm:$0xff] %vm288, 0.0
  %627 = vst.msk [vmem:[#allocation2 + $0xa88] sm:$0xff] %vm288, 0.0
  %628 = vst.msk [vmem:[#allocation2 + $0xa90] sm:$0xff] %vm288, 0.0
  %629 = vst.msk [vmem:[#allocation2 + $0xa98] sm:$0x3] %vm293, 0.0
  %s630 = scalar_lea.vmem [#allocation2], 40
  %631 = vst.msk [vmem:[%s630 + $0x1] sm:$0xff] %vm288, %v32
  %632 = vst.msk [vmem:[%s630 + $0x9] sm:$0xff] %vm288, %v33
  %633 = vst.msk [vmem:[%s630 + $0x11] sm:$0xff] %vm288, %v34
  %634 = vst.msk [vmem:[%s630 + $0x19] sm:$0xff] %vm288, %v35
  %635 = vst.msk [vmem:[%s630 + $0x29] sm:$0xff] %vm288, %v36
  %636 = vst.msk [vmem:[%s630 + $0x31] sm:$0xff] %vm288, %v37
  %637 = vst.msk [vmem:[%s630 + $0x39] sm:$0xff] %vm288, %v38
  %638 = vst.msk [vmem:[%s630 + $0x41] sm:$0xff] %vm288, %v39
  %639 = vst.msk [vmem:[%s630 + $0x51] sm:$0xff] %vm288, %v40
  %640 = vst.msk [vmem:[%s630 + $0x59] sm:$0xff] %vm288, %v41
  %641 = vst.msk [vmem:[%s630 + $0x61] sm:$0xff] %vm288, %v42
  %642 = vst.msk [vmem:[%s630 + $0x69] sm:$0xff] %vm288, %v43
  %643 = vst.msk [vmem:[%s630 + $0x79] sm:$0xff] %vm288, %v44
  %644 = vst.msk [vmem:[%s630 + $0x81] sm:$0xff] %vm288, %v45
  %645 = vst.msk [vmem:[%s630 + $0x89] sm:$0xff] %vm288, %v46
  %646 = vst.msk [vmem:[%s630 + $0x91] sm:$0xff] %vm288, %v47
  %647 = vst.msk [vmem:[%s630 + $0xa1] sm:$0xff] %vm288, %v48
  %648 = vst.msk [vmem:[%s630 + $0xa9] sm:$0xff] %vm288, %v49
  %649 = vst.msk [vmem:[%s630 + $0xb1] sm:$0xff] %vm288, %v50
  %650 = vst.msk [vmem:[%s630 + $0xb9] sm:$0xff] %vm288, %v51
  %651 = vst.msk [vmem:[%s630 + $0xc9] sm:$0xff] %vm288, %v52
  %652 = vst.msk [vmem:[%s630 + $0xd1] sm:$0xff] %vm288, %v53
  %653 = vst.msk [vmem:[%s630 + $0xd9] sm:$0xff] %vm288, %v54
  %654 = vst.msk [vmem:[%s630 + $0xe1] sm:$0xff] %vm288, %v55
  %655 = vst.msk [vmem:[%s630 + $0xf1] sm:$0xff] %vm288, %v56
  %656 = vst.msk [vmem:[%s630 + $0xf9] sm:$0xff] %vm288, %v57
  %657 = vst.msk [vmem:[%s630 + $0x101] sm:$0xff] %vm288, %v58
  %658 = vst.msk [vmem:[%s630 + $0x109] sm:$0xff] %vm288, %v59
  %659 = vst.msk [vmem:[%s630 + $0x119] sm:$0xff] %vm288, %v60
  %660 = vst.msk [vmem:[%s630 + $0x121] sm:$0xff] %vm288, %v61
  %661 = vst.msk [vmem:[%s630 + $0x129] sm:$0xff] %vm288, %v62
  %662 = vst.msk [vmem:[%s630 + $0x131] sm:$0xff] %vm288, %v63
  %663 = vst.msk [vmem:[%s630 + $0x141] sm:$0xff] %vm288, %v64
  %664 = vst.msk [vmem:[%s630 + $0x149] sm:$0xff] %vm288, %v65
  %665 = vst.msk [vmem:[%s630 + $0x151] sm:$0xff] %vm288, %v66
  %666 = vst.msk [vmem:[%s630 + $0x159] sm:$0xff] %vm288, %v67
  %667 = vst.msk [vmem:[%s630 + $0x169] sm:$0xff] %vm288, %v68
  %668 = vst.msk [vmem:[%s630 + $0x171] sm:$0xff] %vm288, %v69
  %669 = vst.msk [vmem:[%s630 + $0x179] sm:$0xff] %vm288, %v70
  %670 = vst.msk [vmem:[%s630 + $0x181] sm:$0xff] %vm288, %v71
  %671 = vst.msk [vmem:[%s630 + $0x191] sm:$0xff] %vm288, %v72
  %672 = vst.msk [vmem:[%s630 + $0x199] sm:$0xff] %vm288, %v73
  %673 = vst.msk [vmem:[%s630 + $0x1a1] sm:$0xff] %vm288, %v74
  %674 = vst.msk [vmem:[%s630 + $0x1a9] sm:$0xff] %vm288, %v75
  %675 = vst.msk [vmem:[%s630 + $0x1b9] sm:$0xff] %vm288, %v76
  %676 = vst.msk [vmem:[%s630 + $0x1c1] sm:$0xff] %vm288, %v77
  %677 = vst.msk [vmem:[%s630 + $0x1c9] sm:$0xff] %vm288, %v78
  %678 = vst.msk [vmem:[%s630 + $0x1d1] sm:$0xff] %vm288, %v79
  %679 = vst.msk [vmem:[%s630 + $0x1e1] sm:$0xff] %vm288, %v80
  %680 = vst.msk [vmem:[%s630 + $0x1e9] sm:$0xff] %vm288, %v81
  %681 = vst.msk [vmem:[%s630 + $0x1f1] sm:$0xff] %vm288, %v82
  %682 = vst.msk [vmem:[%s630 + $0x1f9] sm:$0xff] %vm288, %v83
  %683 = vst.msk [vmem:[%s630 + $0x209] sm:$0xff] %vm288, %v84
  %684 = vst.msk [vmem:[%s630 + $0x211] sm:$0xff] %vm288, %v85
  %685 = vst.msk [vmem:[%s630 + $0x219] sm:$0xff] %vm288, %v86
  %686 = vst.msk [vmem:[%s630 + $0x221] sm:$0xff] %vm288, %v87
  %687 = vst.msk [vmem:[%s630 + $0x231] sm:$0xff] %vm288, %v88
  %688 = vst.msk [vmem:[%s630 + $0x239] sm:$0xff] %vm288, %v89
  %689 = vst.msk [vmem:[%s630 + $0x241] sm:$0xff] %vm288, %v90
  %690 = vst.msk [vmem:[%s630 + $0x249] sm:$0xff] %vm288, %v91
  %691 = vst.msk [vmem:[%s630 + $0x259] sm:$0xff] %vm288, %v92
  %692 = vst.msk [vmem:[%s630 + $0x261] sm:$0xff] %vm288, %v93
  %693 = vst.msk [vmem:[%s630 + $0x269] sm:$0xff] %vm288, %v94
  %694 = vst.msk [vmem:[%s630 + $0x271] sm:$0xff] %vm288, %v95
  %695 = vst.msk [vmem:[%s630 + $0x281] sm:$0xff] %vm288, %v96
  %696 = vst.msk [vmem:[%s630 + $0x289] sm:$0xff] %vm288, %v97
  %697 = vst.msk [vmem:[%s630 + $0x291] sm:$0xff] %vm288, %v98
  %698 = vst.msk [vmem:[%s630 + $0x299] sm:$0xff] %vm288, %v99
  %699 = vst.msk [vmem:[%s630 + $0x2a9] sm:$0xff] %vm288, %v100
  %700 = vst.msk [vmem:[%s630 + $0x2b1] sm:$0xff] %vm288, %v101
  %701 = vst.msk [vmem:[%s630 + $0x2b9] sm:$0xff] %vm288, %v102
  %702 = vst.msk [vmem:[%s630 + $0x2c1] sm:$0xff] %vm288, %v103
  %703 = vst.msk [vmem:[%s630 + $0x2d1] sm:$0xff] %vm288, %v104
  %704 = vst.msk [vmem:[%s630 + $0x2d9] sm:$0xff] %vm288, %v105
  %705 = vst.msk [vmem:[%s630 + $0x2e1] sm:$0xff] %vm288, %v106
  %706 = vst.msk [vmem:[%s630 + $0x2e9] sm:$0xff] %vm288, %v107
  %707 = vst.msk [vmem:[%s630 + $0x2f9] sm:$0xff] %vm288, %v108
  %708 = vst.msk [vmem:[%s630 + $0x301] sm:$0xff] %vm288, %v109
  %709 = vst.msk [vmem:[%s630 + $0x309] sm:$0xff] %vm288, %v110
  %710 = vst.msk [vmem:[%s630 + $0x311] sm:$0xff] %vm288, %v111
  %711 = vst.msk [vmem:[%s630 + $0x321] sm:$0xff] %vm288, %v112
  %712 = vst.msk [vmem:[%s630 + $0x329] sm:$0xff] %vm288, %v113
  %713 = vst.msk [vmem:[%s630 + $0x331] sm:$0xff] %vm288, %v114
  %714 = vst.msk [vmem:[%s630 + $0x339] sm:$0xff] %vm288, %v115
  %715 = vst.msk [vmem:[%s630 + $0x349] sm:$0xff] %vm288, %v116
  %716 = vst.msk [vmem:[%s630 + $0x351] sm:$0xff] %vm288, %v117
  %717 = vst.msk [vmem:[%s630 + $0x359] sm:$0xff] %vm288, %v118
  %718 = vst.msk [vmem:[%s630 + $0x361] sm:$0xff] %vm288, %v119
  %719 = vst.msk [vmem:[%s630 + $0x371] sm:$0xff] %vm288, %v120
  %720 = vst.msk [vmem:[%s630 + $0x379] sm:$0xff] %vm288, %v121
  %721 = vst.msk [vmem:[%s630 + $0x381] sm:$0xff] %vm288, %v122
  %722 = vst.msk [vmem:[%s630 + $0x389] sm:$0xff] %vm288, %v123
  %723 = vst.msk [vmem:[%s630 + $0x399] sm:$0xff] %vm288, %v124
  %724 = vst.msk [vmem:[%s630 + $0x3a1] sm:$0xff] %vm288, %v125
  %725 = vst.msk [vmem:[%s630 + $0x3a9] sm:$0xff] %vm288, %v126
  %726 = vst.msk [vmem:[%s630 + $0x3b1] sm:$0xff] %vm288, %v127
  %727 = vst.msk [vmem:[%s630 + $0x3c1] sm:$0xff] %vm288, %v128
  %728 = vst.msk [vmem:[%s630 + $0x3c9] sm:$0xff] %vm288, %v129
  %729 = vst.msk [vmem:[%s630 + $0x3d1] sm:$0xff] %vm288, %v130
  %730 = vst.msk [vmem:[%s630 + $0x3d9] sm:$0xff] %vm288, %v131
  %731 = vst.msk [vmem:[%s630 + $0x3e9] sm:$0xff] %vm288, %v132
  %732 = vst.msk [vmem:[%s630 + $0x3f1] sm:$0xff] %vm288, %v133
  %733 = vst.msk [vmem:[%s630 + $0x3f9] sm:$0xff] %vm288, %v134
  %734 = vst.msk [vmem:[%s630 + $0x401] sm:$0xff] %vm288, %v135
  %735 = vst.msk [vmem:[%s630 + $0x411] sm:$0xff] %vm288, %v136
  %736 = vst.msk [vmem:[%s630 + $0x419] sm:$0xff] %vm288, %v137
  %737 = vst.msk [vmem:[%s630 + $0x421] sm:$0xff] %vm288, %v138
  %738 = vst.msk [vmem:[%s630 + $0x429] sm:$0xff] %vm288, %v139
  %739 = vst.msk [vmem:[%s630 + $0x439] sm:$0xff] %vm288, %v140
  %740 = vst.msk [vmem:[%s630 + $0x441] sm:$0xff] %vm288, %v141
  %741 = vst.msk [vmem:[%s630 + $0x449] sm:$0xff] %vm288, %v142
  %742 = vst.msk [vmem:[%s630 + $0x451] sm:$0xff] %vm288, %v143
  %743 = vst.msk [vmem:[%s630 + $0x461] sm:$0xff] %vm288, %v144
  %744 = vst.msk [vmem:[%s630 + $0x469] sm:$0xff] %vm288, %v145
  %745 = vst.msk [vmem:[%s630 + $0x471] sm:$0xff] %vm288, %v146
  %746 = vst.msk [vmem:[%s630 + $0x479] sm:$0xff] %vm288, %v147
  %747 = vst.msk [vmem:[%s630 + $0x489] sm:$0xff] %vm288, %v148
  %748 = vst.msk [vmem:[%s630 + $0x491] sm:$0xff] %vm288, %v149
  %749 = vst.msk [vmem:[%s630 + $0x499] sm:$0xff] %vm288, %v150
  %750 = vst.msk [vmem:[%s630 + $0x4a1] sm:$0xff] %vm288, %v151
  %751 = vst.msk [vmem:[%s630 + $0x4b1] sm:$0xff] %vm288, %v152
  %752 = vst.msk [vmem:[%s630 + $0x4b9] sm:$0xff] %vm288, %v153
  %753 = vst.msk [vmem:[%s630 + $0x4c1] sm:$0xff] %vm288, %v154
  %754 = vst.msk [vmem:[%s630 + $0x4c9] sm:$0xff] %vm288, %v155
  %755 = vst.msk [vmem:[%s630 + $0x4d9] sm:$0xff] %vm288, %v156
  %756 = vst.msk [vmem:[%s630 + $0x4e1] sm:$0xff] %vm288, %v157
  %757 = vst.msk [vmem:[%s630 + $0x4e9] sm:$0xff] %vm288, %v158
  %758 = vst.msk [vmem:[%s630 + $0x4f1] sm:$0xff] %vm288, %v159
  %759 = vst.msk [vmem:[%s630 + $0x551] sm:$0xff] %vm288, %v160
  %760 = vst.msk [vmem:[%s630 + $0x559] sm:$0xff] %vm288, %v161
  %761 = vst.msk [vmem:[%s630 + $0x561] sm:$0xff] %vm288, %v162
  %762 = vst.msk [vmem:[%s630 + $0x569] sm:$0xff] %vm288, %v163
  %763 = vst.msk [vmem:[%s630 + $0x579] sm:$0xff] %vm288, %v164
  %764 = vst.msk [vmem:[%s630 + $0x581] sm:$0xff] %vm288, %v165
  %765 = vst.msk [vmem:[%s630 + $0x589] sm:$0xff] %vm288, %v166
  %766 = vst.msk [vmem:[%s630 + $0x591] sm:$0xff] %vm288, %v167
  %767 = vst.msk [vmem:[%s630 + $0x5a1] sm:$0xff] %vm288, %v168
  %768 = vst.msk [vmem:[%s630 + $0x5a9] sm:$0xff] %vm288, %v169
  %769 = vst.msk [vmem:[%s630 + $0x5b1] sm:$0xff] %vm288, %v170
  %770 = vst.msk [vmem:[%s630 + $0x5b9] sm:$0xff] %vm288, %v171
  %771 = vst.msk [vmem:[%s630 + $0x5c9] sm:$0xff] %vm288, %v172
  %772 = vst.msk [vmem:[%s630 + $0x5d1] sm:$0xff] %vm288, %v173
  %773 = vst.msk [vmem:[%s630 + $0x5d9] sm:$0xff] %vm288, %v174
  %774 = vst.msk [vmem:[%s630 + $0x5e1] sm:$0xff] %vm288, %v175
  %775 = vst.msk [vmem:[%s630 + $0x5f1] sm:$0xff] %vm288, %v176
  %776 = vst.msk [vmem:[%s630 + $0x5f9] sm:$0xff] %vm288, %v177
  %777 = vst.msk [vmem:[%s630 + $0x601] sm:$0xff] %vm288, %v178
  %778 = vst.msk [vmem:[%s630 + $0x609] sm:$0xff] %vm288, %v179
  %779 = vst.msk [vmem:[%s630 + $0x619] sm:$0xff] %vm288, %v180
  %780 = vst.msk [vmem:[%s630 + $0x621] sm:$0xff] %vm288, %v181
  %781 = vst.msk [vmem:[%s630 + $0x629] sm:$0xff] %vm288, %v182
  %782 = vst.msk [vmem:[%s630 + $0x631] sm:$0xff] %vm288, %v183
  %783 = vst.msk [vmem:[%s630 + $0x641] sm:$0xff] %vm288, %v184
  %784 = vst.msk [vmem:[%s630 + $0x649] sm:$0xff] %vm288, %v185
  %785 = vst.msk [vmem:[%s630 + $0x651] sm:$0xff] %vm288, %v186
  %786 = vst.msk [vmem:[%s630 + $0x659] sm:$0xff] %vm288, %v187
  %787 = vst.msk [vmem:[%s630 + $0x669] sm:$0xff] %vm288, %v188
  %788 = vst.msk [vmem:[%s630 + $0x671] sm:$0xff] %vm288, %v189
  %789 = vst.msk [vmem:[%s630 + $0x679] sm:$0xff] %vm288, %v190
  %790 = vst.msk [vmem:[%s630 + $0x681] sm:$0xff] %vm288, %v191
  %791 = vst.msk [vmem:[%s630 + $0x691] sm:$0xff] %vm288, %v192
  %792 = vst.msk [vmem:[%s630 + $0x699] sm:$0xff] %vm288, %v193
  %793 = vst.msk [vmem:[%s630 + $0x6a1] sm:$0xff] %vm288, %v194
  %794 = vst.msk [vmem:[%s630 + $0x6a9] sm:$0xff] %vm288, %v195
  %795 = vst.msk [vmem:[%s630 + $0x6b9] sm:$0xff] %vm288, %v196
  %796 = vst.msk [vmem:[%s630 + $0x6c1] sm:$0xff] %vm288, %v197
  %797 = vst.msk [vmem:[%s630 + $0x6c9] sm:$0xff] %vm288, %v198
  %798 = vst.msk [vmem:[%s630 + $0x6d1] sm:$0xff] %vm288, %v199
  %799 = vst.msk [vmem:[%s630 + $0x6e1] sm:$0xff] %vm288, %v200
  %800 = vst.msk [vmem:[%s630 + $0x6e9] sm:$0xff] %vm288, %v201
  %801 = vst.msk [vmem:[%s630 + $0x6f1] sm:$0xff] %vm288, %v202
  %802 = vst.msk [vmem:[%s630 + $0x6f9] sm:$0xff] %vm288, %v203
  %803 = vst.msk [vmem:[%s630 + $0x709] sm:$0xff] %vm288, %v204
  %804 = vst.msk [vmem:[%s630 + $0x711] sm:$0xff] %vm288, %v205
  %805 = vst.msk [vmem:[%s630 + $0x719] sm:$0xff] %vm288, %v206
  %806 = vst.msk [vmem:[%s630 + $0x721] sm:$0xff] %vm288, %v207
  %807 = vst.msk [vmem:[%s630 + $0x731] sm:$0xff] %vm288, %v208
  %808 = vst.msk [vmem:[%s630 + $0x739] sm:$0xff] %vm288, %v209
  %809 = vst.msk [vmem:[%s630 + $0x741] sm:$0xff] %vm288, %v210
  %810 = vst.msk [vmem:[%s630 + $0x749] sm:$0xff] %vm288, %v211
  %811 = vst.msk [vmem:[%s630 + $0x759] sm:$0xff] %vm288, %v212
  %812 = vst.msk [vmem:[%s630 + $0x761] sm:$0xff] %vm288, %v213
  %813 = vst.msk [vmem:[%s630 + $0x769] sm:$0xff] %vm288, %v214
  %814 = vst.msk [vmem:[%s630 + $0x771] sm:$0xff] %vm288, %v215
  %815 = vst.msk [vmem:[%s630 + $0x781] sm:$0xff] %vm288, %v216
  %816 = vst.msk [vmem:[%s630 + $0x789] sm:$0xff] %vm288, %v217
  %817 = vst.msk [vmem:[%s630 + $0x791] sm:$0xff] %vm288, %v218
  %818 = vst.msk [vmem:[%s630 + $0x799] sm:$0xff] %vm288, %v219
  %819 = vst.msk [vmem:[%s630 + $0x7a9] sm:$0xff] %vm288, %v220
  %820 = vst.msk [vmem:[%s630 + $0x7b1] sm:$0xff] %vm288, %v221
  %821 = vst.msk [vmem:[%s630 + $0x7b9] sm:$0xff] %vm288, %v222
  %822 = vst.msk [vmem:[%s630 + $0x7c1] sm:$0xff] %vm288, %v223
  %823 = vst.msk [vmem:[%s630 + $0x7d1] sm:$0xff] %vm288, %v224
  %824 = vst.msk [vmem:[%s630 + $0x7d9] sm:$0xff] %vm288, %v225
  %825 = vst.msk [vmem:[%s630 + $0x7e1] sm:$0xff] %vm288, %v226
  %826 = vst.msk [vmem:[%s630 + $0x7e9] sm:$0xff] %vm288, %v227
  %827 = vst.msk [vmem:[%s630 + $0x7f9] sm:$0xff] %vm288, %v228
  %828 = vst.msk [vmem:[%s630 + $0x801] sm:$0xff] %vm288, %v229
  %829 = vst.msk [vmem:[%s630 + $0x809] sm:$0xff] %vm288, %v230
  %830 = vst.msk [vmem:[%s630 + $0x811] sm:$0xff] %vm288, %v231
  %831 = vst.msk [vmem:[%s630 + $0x821] sm:$0xff] %vm288, %v232
  %832 = vst.msk [vmem:[%s630 + $0x829] sm:$0xff] %vm288, %v233
  %833 = vst.msk [vmem:[%s630 + $0x831] sm:$0xff] %vm288, %v234
  %834 = vst.msk [vmem:[%s630 + $0x839] sm:$0xff] %vm288, %v235
  %835 = vst.msk [vmem:[%s630 + $0x849] sm:$0xff] %vm288, %v236
  %836 = vst.msk [vmem:[%s630 + $0x851] sm:$0xff] %vm288, %v237
  %837 = vst.msk [vmem:[%s630 + $0x859] sm:$0xff] %vm288, %v238
  %838 = vst.msk [vmem:[%s630 + $0x861] sm:$0xff] %vm288, %v239
  %839 = vst.msk [vmem:[%s630 + $0x871] sm:$0xff] %vm288, %v240
  %840 = vst.msk [vmem:[%s630 + $0x879] sm:$0xff] %vm288, %v241
  %841 = vst.msk [vmem:[%s630 + $0x881] sm:$0xff] %vm288, %v242
  %842 = vst.msk [vmem:[%s630 + $0x889] sm:$0xff] %vm288, %v243
  %843 = vst.msk [vmem:[%s630 + $0x899] sm:$0xff] %vm288, %v244
  %844 = vst.msk [vmem:[%s630 + $0x8a1] sm:$0xff] %vm288, %v245
  %845 = vst.msk [vmem:[%s630 + $0x8a9] sm:$0xff] %vm288, %v246
  %846 = vst.msk [vmem:[%s630 + $0x8b1] sm:$0xff] %vm288, %v247
  %847 = vst.msk [vmem:[%s630 + $0x8c1] sm:$0xff] %vm288, %v248
  %848 = vst.msk [vmem:[%s630 + $0x8c9] sm:$0xff] %vm288, %v249
  %849 = vst.msk [vmem:[%s630 + $0x8d1] sm:$0xff] %vm288, %v250
  %850 = vst.msk [vmem:[%s630 + $0x8d9] sm:$0xff] %vm288, %v251
  %851 = vst.msk [vmem:[%s630 + $0x8e9] sm:$0xff] %vm288, %v252
  %852 = vst.msk [vmem:[%s630 + $0x8f1] sm:$0xff] %vm288, %v253
  %853 = vst.msk [vmem:[%s630 + $0x8f9] sm:$0xff] %vm288, %v254
  %854 = vst.msk [vmem:[%s630 + $0x901] sm:$0xff] %vm288, %v255
  %855 = vst.msk [vmem:[%s630 + $0x911] sm:$0xff] %vm288, %v256
  %856 = vst.msk [vmem:[%s630 + $0x919] sm:$0xff] %vm288, %v257
  %857 = vst.msk [vmem:[%s630 + $0x921] sm:$0xff] %vm288, %v258
  %858 = vst.msk [vmem:[%s630 + $0x929] sm:$0xff] %vm288, %v259
  %859 = vst.msk [vmem:[%s630 + $0x939] sm:$0xff] %vm288, %v260
  %860 = vst.msk [vmem:[%s630 + $0x941] sm:$0xff] %vm288, %v261
  %861 = vst.msk [vmem:[%s630 + $0x949] sm:$0xff] %vm288, %v262
  %862 = vst.msk [vmem:[%s630 + $0x951] sm:$0xff] %vm288, %v263
  %863 = vst.msk [vmem:[%s630 + $0x961] sm:$0xff] %vm288, %v264
  %864 = vst.msk [vmem:[%s630 + $0x969] sm:$0xff] %vm288, %v265
  %865 = vst.msk [vmem:[%s630 + $0x971] sm:$0xff] %vm288, %v266
  %866 = vst.msk [vmem:[%s630 + $0x979] sm:$0xff] %vm288, %v267
  %867 = vst.msk [vmem:[%s630 + $0x989] sm:$0xff] %vm288, %v268
  %868 = vst.msk [vmem:[%s630 + $0x991] sm:$0xff] %vm288, %v269
  %869 = vst.msk [vmem:[%s630 + $0x999] sm:$0xff] %vm288, %v270
  %870 = vst.msk [vmem:[%s630 + $0x9a1] sm:$0xff] %vm288, %v271
  %871 = vst.msk [vmem:[%s630 + $0x9b1] sm:$0xff] %vm288, %v272
  %872 = vst.msk [vmem:[%s630 + $0x9b9] sm:$0xff] %vm288, %v273
  %873 = vst.msk [vmem:[%s630 + $0x9c1] sm:$0xff] %vm288, %v274
  %874 = vst.msk [vmem:[%s630 + $0x9c9] sm:$0xff] %vm288, %v275
  %875 = vst.msk [vmem:[%s630 + $0x9d9] sm:$0xff] %vm288, %v276
  %876 = vst.msk [vmem:[%s630 + $0x9e1] sm:$0xff] %vm288, %v277
  %877 = vst.msk [vmem:[%s630 + $0x9e9] sm:$0xff] %vm288, %v278
  %878 = vst.msk [vmem:[%s630 + $0x9f1] sm:$0xff] %vm288, %v279
  %879 = vst.msk [vmem:[%s630 + $0xa01] sm:$0xff] %vm288, %v280
  %880 = vst.msk [vmem:[%s630 + $0xa09] sm:$0xff] %vm288, %v281
  %881 = vst.msk [vmem:[%s630 + $0xa11] sm:$0xff] %vm288, %v282
  %882 = vst.msk [vmem:[%s630 + $0xa19] sm:$0xff] %vm288, %v283
  %883 = vst.msk [vmem:[%s630 + $0xa29] sm:$0xff] %vm288, %v284
  %884 = vst.msk [vmem:[%s630 + $0xa31] sm:$0xff] %vm288, %v285
  %885 = vst.msk [vmem:[%s630 + $0xa39] sm:$0xff] %vm288, %v286
  %886 = vst.msk [vmem:[%s630 + $0xa41] sm:$0xff] %vm288, %v287
  %v887 = vld [vmem:[#allocation2] ss:$2 sm:$0xff]
  %s888 = scalar_lea.vmem [#allocation2], 16
  %v889 = vld [vmem:[%s888] ss:$2 sm:$0xff]
  %s890 = scalar_lea.vmem [#allocation2], 80
  %v891 = vld [vmem:[%s890] ss:$2 sm:$0xff]
  %s892 = scalar_lea.vmem [#allocation2], 96
  %v893 = vld [vmem:[%s892] ss:$2 sm:$0xff]
  %s894 = scalar_lea.vmem [#allocation2], 160
  %v895 = vld [vmem:[%s894] ss:$2 sm:$0xff]
  %s896 = scalar_lea.vmem [#allocation2], 176
  %v897 = vld [vmem:[%s896] ss:$2 sm:$0xff]
  %s898 = scalar_lea.vmem [#allocation2], 240
  %v899 = vld [vmem:[%s898] ss:$2 sm:$0xff]
  %s900 = scalar_lea.vmem [#allocation2], 256
  %v901 = vld [vmem:[%s900] ss:$2 sm:$0xff]
  %s902 = scalar_lea.vmem [#allocation2], 320
  %v903 = vld [vmem:[%s902] ss:$2 sm:$0xff]
  %s904 = scalar_lea.vmem [#allocation2], 336
  %v905 = vld [vmem:[%s904] ss:$2 sm:$0xff]
  %s906 = scalar_lea.vmem [#allocation2], 400
  %v907 = vld [vmem:[%s906] ss:$2 sm:$0xff]
  %s908 = scalar_lea.vmem [#allocation2], 416
  %v909 = vld [vmem:[%s908] ss:$2 sm:$0xff]
  %s910 = scalar_lea.vmem [#allocation2], 480
  %v911 = vld [vmem:[%s910] ss:$2 sm:$0xff]
  %s912 = scalar_lea.vmem [#allocation2], 496
  %v913 = vld [vmem:[%s912] ss:$2 sm:$0xff]
  %s914 = scalar_lea.vmem [#allocation2], 560
  %v915 = vld [vmem:[%s914] ss:$2 sm:$0xff]
  %s916 = scalar_lea.vmem [#allocation2], 576
  %v917 = vld [vmem:[%s916] ss:$2 sm:$0xff]
  %s918 = scalar_lea.vmem [#allocation2], 640
  %v919 = vld [vmem:[%s918] ss:$2 sm:$0xff]
  %s920 = scalar_lea.vmem [#allocation2], 656
  %v921 = vld [vmem:[%s920] ss:$2 sm:$0xff]
  %s922 = scalar_lea.vmem [#allocation2], 720
  %v923 = vld [vmem:[%s922] ss:$2 sm:$0xff]
  %s924 = scalar_lea.vmem [#allocation2], 736
  %v925 = vld [vmem:[%s924] ss:$2 sm:$0xff]
  %s926 = scalar_lea.vmem [#allocation2], 800
  %v927 = vld [vmem:[%s926] ss:$2 sm:$0xff]
  %s928 = scalar_lea.vmem [#allocation2], 816
  %v929 = vld [vmem:[%s928] ss:$2 sm:$0xff]
  %s930 = scalar_lea.vmem [#allocation2], 880
  %v931 = vld [vmem:[%s930] ss:$2 sm:$0xff]
  %s932 = scalar_lea.vmem [#allocation2], 896
  %v933 = vld [vmem:[%s932] ss:$2 sm:$0xff]
  %s934 = scalar_lea.vmem [#allocation2], 960
  %v935 = vld [vmem:[%s934] ss:$2 sm:$0xff]
  %s936 = scalar_lea.vmem [#allocation2], 976
  %v937 = vld [vmem:[%s936] ss:$2 sm:$0xff]
  %s938 = scalar_lea.vmem [#allocation2], 1040
  %v939 = vld [vmem:[%s938] ss:$2 sm:$0xff]
  %s940 = scalar_lea.vmem [#allocation2], 1056
  %v941 = vld [vmem:[%s940] ss:$2 sm:$0xff]
  %s942 = scalar_lea.vmem [#allocation2], 1120
  %v943 = vld [vmem:[%s942] ss:$2 sm:$0xff]
  %s944 = scalar_lea.vmem [#allocation2], 1136
  %v945 = vld [vmem:[%s944] ss:$2 sm:$0xff]
  %s946 = scalar_lea.vmem [#allocation2], 1200
  %v947 = vld [vmem:[%s946] ss:$2 sm:$0xff]
  %s948 = scalar_lea.vmem [#allocation2], 1216
  %v949 = vld [vmem:[%s948] ss:$2 sm:$0xff]
  %s950 = scalar_lea.vmem [#allocation2], 1360
  %v951 = vld [vmem:[%s950] ss:$2 sm:$0xff]
  %s952 = scalar_lea.vmem [#allocation2], 1376
  %v953 = vld [vmem:[%s952] ss:$2 sm:$0xff]
  %s954 = scalar_lea.vmem [#allocation2], 1440
  %v955 = vld [vmem:[%s954] ss:$2 sm:$0xff]
  %s956 = scalar_lea.vmem [#allocation2], 1456
  %v957 = vld [vmem:[%s956] ss:$2 sm:$0xff]
  %s958 = scalar_lea.vmem [#allocation2], 1520
  %v959 = vld [vmem:[%s958] ss:$2 sm:$0xff]
  %s960 = scalar_lea.vmem [#allocation2], 1536
  %v961 = vld [vmem:[%s960] ss:$2 sm:$0xff]
  %s962 = scalar_lea.vmem [#allocation2], 1600
  %v963 = vld [vmem:[%s962] ss:$2 sm:$0xff]
  %s964 = scalar_lea.vmem [#allocation2], 1616
  %v965 = vld [vmem:[%s964] ss:$2 sm:$0xff]
  %s966 = scalar_lea.vmem [#allocation2], 1680
  %v967 = vld [vmem:[%s966] ss:$2 sm:$0xff]
  %s968 = scalar_lea.vmem [#allocation2], 1696
  %v969 = vld [vmem:[%s968] ss:$2 sm:$0xff]
  %s970 = scalar_lea.vmem [#allocation2], 1760
  %v971 = vld [vmem:[%s970] ss:$2 sm:$0xff]
  %s972 = scalar_lea.vmem [#allocation2], 1776
  %v973 = vld [vmem:[%s972] ss:$2 sm:$0xff]
  %s974 = scalar_lea.vmem [#allocation2], 1840
  %v975 = vld [vmem:[%s974] ss:$2 sm:$0xff]
  %s976 = scalar_lea.vmem [#allocation2], 1856
  %v977 = vld [vmem:[%s976] ss:$2 sm:$0xff]
  %s978 = scalar_lea.vmem [#allocation2], 1920
  %v979 = vld [vmem:[%s978] ss:$2 sm:$0xff]
  %s980 = scalar_lea.vmem [#allocation2], 1936
  %v981 = vld [vmem:[%s980] ss:$2 sm:$0xff]
  %s982 = scalar_lea.vmem [#allocation2], 2000
  %v983 = vld [vmem:[%s982] ss:$2 sm:$0xff]
  %s984 = scalar_lea.vmem [#allocation2], 2016
  %v985 = vld [vmem:[%s984] ss:$2 sm:$0xff]
  %s986 = scalar_lea.vmem [#allocation2], 2080
  %v987 = vld [vmem:[%s986] ss:$2 sm:$0xff]
  %s988 = scalar_lea.vmem [#allocation2], 2096
  %v989 = vld [vmem:[%s988] ss:$2 sm:$0xff]
  %s990 = scalar_lea.vmem [#allocation2], 2160
  %v991 = vld [vmem:[%s990] ss:$2 sm:$0xff]
  %s992 = scalar_lea.vmem [#allocation2], 2176
  %v993 = vld [vmem:[%s992] ss:$2 sm:$0xff]
  %s994 = scalar_lea.vmem [#allocation2], 2240
  %v995 = vld [vmem:[%s994] ss:$2 sm:$0xff]
  %s996 = scalar_lea.vmem [#allocation2], 2256
  %v997 = vld [vmem:[%s996] ss:$2 sm:$0xff]
  %s998 = scalar_lea.vmem [#allocation2], 2320
  %v999 = vld [vmem:[%s998] ss:$2 sm:$0xff]
  %s1000 = scalar_lea.vmem [#allocation2], 2336
  %v1001 = vld [vmem:[%s1000] ss:$2 sm:$0xff]
  %s1002 = scalar_lea.vmem [#allocation2], 2400
  %v1003 = vld [vmem:[%s1002] ss:$2 sm:$0xff]
  %s1004 = scalar_lea.vmem [#allocation2], 2416
  %v1005 = vld [vmem:[%s1004] ss:$2 sm:$0xff]
  %s1006 = scalar_lea.vmem [#allocation2], 2480
  %v1007 = vld [vmem:[%s1006] ss:$2 sm:$0xff]
  %s1008 = scalar_lea.vmem [#allocation2], 2496
  %v1009 = vld [vmem:[%s1008] ss:$2 sm:$0xff]
  %s1010 = scalar_lea.vmem [#allocation2], 2560
  %v1011 = vld [vmem:[%s1010] ss:$2 sm:$0xff]
  %s1012 = scalar_lea.vmem [#allocation2], 2576
  %v1013 = vld [vmem:[%s1012] ss:$2 sm:$0xff]
  %s1014 = scalar_lea.vmem [#allocation2], 1
  %v1015 = vld [vmem:[%s1014] ss:$2 sm:$0xff]
  %s1016 = scalar_lea.vmem [#allocation2], 17
  %v1017 = vld [vmem:[%s1016] ss:$2 sm:$0xff]
  %s1018 = scalar_lea.vmem [#allocation2], 81
  %v1019 = vld [vmem:[%s1018] ss:$2 sm:$0xff]
  %s1020 = scalar_lea.vmem [#allocation2], 97
  %v1021 = vld [vmem:[%s1020] ss:$2 sm:$0xff]
  %s1022 = scalar_lea.vmem [#allocation2], 161
  %v1023 = vld [vmem:[%s1022] ss:$2 sm:$0xff]
  %s1024 = scalar_lea.vmem [#allocation2], 177
  %v1025 = vld [vmem:[%s1024] ss:$2 sm:$0xff]
  %s1026 = scalar_lea.vmem [#allocation2], 241
  %v1027 = vld [vmem:[%s1026] ss:$2 sm:$0xff]
  %s1028 = scalar_lea.vmem [#allocation2], 257
  %v1029 = vld [vmem:[%s1028] ss:$2 sm:$0xff]
  %s1030 = scalar_lea.vmem [#allocation2], 321
  %v1031 = vld [vmem:[%s1030] ss:$2 sm:$0xff]
  %s1032 = scalar_lea.vmem [#allocation2], 337
  %v1033 = vld [vmem:[%s1032] ss:$2 sm:$0xff]
  %s1034 = scalar_lea.vmem [#allocation2], 401
  %v1035 = vld [vmem:[%s1034] ss:$2 sm:$0xff]
  %s1036 = scalar_lea.vmem [#allocation2], 417
  %v1037 = vld [vmem:[%s1036] ss:$2 sm:$0xff]
  %s1038 = scalar_lea.vmem [#allocation2], 481
  %v1039 = vld [vmem:[%s1038] ss:$2 sm:$0xff]
  %s1040 = scalar_lea.vmem [#allocation2], 497
  %v1041 = vld [vmem:[%s1040] ss:$2 sm:$0xff]
  %s1042 = scalar_lea.vmem [#allocation2], 561
  %v1043 = vld [vmem:[%s1042] ss:$2 sm:$0xff]
  %s1044 = scalar_lea.vmem [#allocation2], 577
  %v1045 = vld [vmem:[%s1044] ss:$2 sm:$0xff]
  %s1046 = scalar_lea.vmem [#allocation2], 641
  %v1047 = vld [vmem:[%s1046] ss:$2 sm:$0xff]
  %s1048 = scalar_lea.vmem [#allocation2], 657
  %v1049 = vld [vmem:[%s1048] ss:$2 sm:$0xff]
  %s1050 = scalar_lea.vmem [#allocation2], 721
  %v1051 = vld [vmem:[%s1050] ss:$2 sm:$0xff]
  %s1052 = scalar_lea.vmem [#allocation2], 737
  %v1053 = vld [vmem:[%s1052] ss:$2 sm:$0xff]
  %s1054 = scalar_lea.vmem [#allocation2], 801
  %v1055 = vld [vmem:[%s1054] ss:$2 sm:$0xff]
  %s1056 = scalar_lea.vmem [#allocation2], 817
  %v1057 = vld [vmem:[%s1056] ss:$2 sm:$0xff]
  %s1058 = scalar_lea.vmem [#allocation2], 881
  %v1059 = vld [vmem:[%s1058] ss:$2 sm:$0xff]
  %s1060 = scalar_lea.vmem [#allocation2], 897
  %v1061 = vld [vmem:[%s1060] ss:$2 sm:$0xff]
  %s1062 = scalar_lea.vmem [#allocation2], 961
  %v1063 = vld [vmem:[%s1062] ss:$2 sm:$0xff]
  %s1064 = scalar_lea.vmem [#allocation2], 977
  %v1065 = vld [vmem:[%s1064] ss:$2 sm:$0xff]
  %s1066 = scalar_lea.vmem [#allocation2], 1041
  %v1067 = vld [vmem:[%s1066] ss:$2 sm:$0xff]
  %s1068 = scalar_lea.vmem [#allocation2], 1057
  %v1069 = vld [vmem:[%s1068] ss:$2 sm:$0xff]
  %s1070 = scalar_lea.vmem [#allocation2], 1121
  %v1071 = vld [vmem:[%s1070] ss:$2 sm:$0xff]
  %s1072 = scalar_lea.vmem [#allocation2], 1137
  %v1073 = vld [vmem:[%s1072] ss:$2 sm:$0xff]
  %s1074 = scalar_lea.vmem [#allocation2], 1201
  %v1075 = vld [vmem:[%s1074] ss:$2 sm:$0xff]
  %s1076 = scalar_lea.vmem [#allocation2], 1217
  %v1077 = vld [vmem:[%s1076] ss:$2 sm:$0xff]
  %s1078 = scalar_lea.vmem [#allocation2], 1361
  %v1079 = vld [vmem:[%s1078] ss:$2 sm:$0xff]
  %s1080 = scalar_lea.vmem [#allocation2], 1377
  %v1081 = vld [vmem:[%s1080] ss:$2 sm:$0xff]
  %s1082 = scalar_lea.vmem [#allocation2], 1441
  %v1083 = vld [vmem:[%s1082] ss:$2 sm:$0xff]
  %s1084 = scalar_lea.vmem [#allocation2], 1457
  %v1085 = vld [vmem:[%s1084] ss:$2 sm:$0xff]
  %s1086 = scalar_lea.vmem [#allocation2], 1521
  %v1087 = vld [vmem:[%s1086] ss:$2 sm:$0xff]
  %s1088 = scalar_lea.vmem [#allocation2], 1537
  %v1089 = vld [vmem:[%s1088] ss:$2 sm:$0xff]
  %s1090 = scalar_lea.vmem [#allocation2], 1601
  %v1091 = vld [vmem:[%s1090] ss:$2 sm:$0xff]
  %s1092 = scalar_lea.vmem [#allocation2], 1617
  %v1093 = vld [vmem:[%s1092] ss:$2 sm:$0xff]
  %s1094 = scalar_lea.vmem [#allocation2], 1681
  %v1095 = vld [vmem:[%s1094] ss:$2 sm:$0xff]
  %s1096 = scalar_lea.vmem [#allocation2], 1697
  %v1097 = vld [vmem:[%s1096] ss:$2 sm:$0xff]
  %s1098 = scalar_lea.vmem [#allocation2], 1761
  %v1099 = vld [vmem:[%s1098] ss:$2 sm:$0xff]
  %s1100 = scalar_lea.vmem [#allocation2], 1777
  %v1101 = vld [vmem:[%s1100] ss:$2 sm:$0xff]
  %s1102 = scalar_lea.vmem [#allocation2], 1841
  %v1103 = vld [vmem:[%s1102] ss:$2 sm:$0xff]
  %s1104 = scalar_lea.vmem [#allocation2], 1857
  %v1105 = vld [vmem:[%s1104] ss:$2 sm:$0xff]
  %s1106 = scalar_lea.vmem [#allocation2], 1921
  %v1107 = vld [vmem:[%s1106] ss:$2 sm:$0xff]
  %s1108 = scalar_lea.vmem [#allocation2], 1937
  %v1109 = vld [vmem:[%s1108] ss:$2 sm:$0xff]
  %s1110 = scalar_lea.vmem [#allocation2], 2001
  %v1111 = vld [vmem:[%s1110] ss:$2 sm:$0xff]
  %s1112 = scalar_lea.vmem [#allocation2], 2017
  %v1113 = vld [vmem:[%s1112] ss:$2 sm:$0xff]
  %s1114 = scalar_lea.vmem [#allocation2], 2081
  %v1115 = vld [vmem:[%s1114] ss:$2 sm:$0xff]
  %s1116 = scalar_lea.vmem [#allocation2], 2097
  %v1117 = vld [vmem:[%s1116] ss:$2 sm:$0xff]
  %s1118 = scalar_lea.vmem [#allocation2], 2161
  %v1119 = vld [vmem:[%s1118] ss:$2 sm:$0xff]
  %s1120 = scalar_lea.vmem [#allocation2], 2177
  %v1121 = vld [vmem:[%s1120] ss:$2 sm:$0xff]
  %s1122 = scalar_lea.vmem [#allocation2], 2241
  %v1123 = vld [vmem:[%s1122] ss:$2 sm:$0xff]
  %s1124 = scalar_lea.vmem [#allocation2], 2257
  %v1125 = vld [vmem:[%s1124] ss:$2 sm:$0xff]
  %s1126 = scalar_lea.vmem [#allocation2], 2321
  %v1127 = vld [vmem:[%s1126] ss:$2 sm:$0xff]
  %s1128 = scalar_lea.vmem [#allocation2], 2337
  %v1129 = vld [vmem:[%s1128] ss:$2 sm:$0xff]
  %s1130 = scalar_lea.vmem [#allocation2], 2401
  %v1131 = vld [vmem:[%s1130] ss:$2 sm:$0xff]
  %s1132 = scalar_lea.vmem [#allocation2], 2417
  %v1133 = vld [vmem:[%s1132] ss:$2 sm:$0xff]
  %s1134 = scalar_lea.vmem [#allocation2], 2481
  %v1135 = vld [vmem:[%s1134] ss:$2 sm:$0xff]
  %s1136 = scalar_lea.vmem [#allocation2], 2497
  %v1137 = vld [vmem:[%s1136] ss:$2 sm:$0xff]
  %s1138 = scalar_lea.vmem [#allocation2], 2561
  %v1139 = vld [vmem:[%s1138] ss:$2 sm:$0xff]
  %s1140 = scalar_lea.vmem [#allocation2], 2577
  %v1141 = vld [vmem:[%s1140] ss:$2 sm:$0xff]
  %s1142 = scalar_lea.vmem [#allocation2], 2
  %v1143 = vld [vmem:[%s1142] ss:$2 sm:$0xff]
  %s1144 = scalar_lea.vmem [#allocation2], 18
  %v1145 = vld [vmem:[%s1144] ss:$2 sm:$0xff]
  %s1146 = scalar_lea.vmem [#allocation2], 82
  %v1147 = vld [vmem:[%s1146] ss:$2 sm:$0xff]
  %s1148 = scalar_lea.vmem [#allocation2], 98
  %v1149 = vld [vmem:[%s1148] ss:$2 sm:$0xff]
  %s1150 = scalar_lea.vmem [#allocation2], 162
  %v1151 = vld [vmem:[%s1150] ss:$2 sm:$0xff]
  %s1152 = scalar_lea.vmem [#allocation2], 178
  %v1153 = vld [vmem:[%s1152] ss:$2 sm:$0xff]
  %s1154 = scalar_lea.vmem [#allocation2], 242
  %v1155 = vld [vmem:[%s1154] ss:$2 sm:$0xff]
  %s1156 = scalar_lea.vmem [#allocation2], 258
  %v1157 = vld [vmem:[%s1156] ss:$2 sm:$0xff]
  %s1158 = scalar_lea.vmem [#allocation2], 322
  %v1159 = vld [vmem:[%s1158] ss:$2 sm:$0xff]
  %s1160 = scalar_lea.vmem [#allocation2], 338
  %v1161 = vld [vmem:[%s1160] ss:$2 sm:$0xff]
  %s1162 = scalar_lea.vmem [#allocation2], 402
  %v1163 = vld [vmem:[%s1162] ss:$2 sm:$0xff]
  %s1164 = scalar_lea.vmem [#allocation2], 418
  %v1165 = vld [vmem:[%s1164] ss:$2 sm:$0xff]
  %s1166 = scalar_lea.vmem [#allocation2], 482
  %v1167 = vld [vmem:[%s1166] ss:$2 sm:$0xff]
  %s1168 = scalar_lea.vmem [#allocation2], 498
  %v1169 = vld [vmem:[%s1168] ss:$2 sm:$0xff]
  %s1170 = scalar_lea.vmem [#allocation2], 562
  %v1171 = vld [vmem:[%s1170] ss:$2 sm:$0xff]
  %s1172 = scalar_lea.vmem [#allocation2], 578
  %v1173 = vld [vmem:[%s1172] ss:$2 sm:$0xff]
  %s1174 = scalar_lea.vmem [#allocation2], 642
  %v1175 = vld [vmem:[%s1174] ss:$2 sm:$0xff]
  %s1176 = scalar_lea.vmem [#allocation2], 658
  %v1177 = vld [vmem:[%s1176] ss:$2 sm:$0xff]
  %s1178 = scalar_lea.vmem [#allocation2], 722
  %v1179 = vld [vmem:[%s1178] ss:$2 sm:$0xff]
  %s1180 = scalar_lea.vmem [#allocation2], 738
  %v1181 = vld [vmem:[%s1180] ss:$2 sm:$0xff]
  %s1182 = scalar_lea.vmem [#allocation2], 802
  %v1183 = vld [vmem:[%s1182] ss:$2 sm:$0xff]
  %s1184 = scalar_lea.vmem [#allocation2], 818
  %v1185 = vld [vmem:[%s1184] ss:$2 sm:$0xff]
  %s1186 = scalar_lea.vmem [#allocation2], 882
  %v1187 = vld [vmem:[%s1186] ss:$2 sm:$0xff]
  %s1188 = scalar_lea.vmem [#allocation2], 898
  %v1189 = vld [vmem:[%s1188] ss:$2 sm:$0xff]
  %s1190 = scalar_lea.vmem [#allocation2], 962
  %v1191 = vld [vmem:[%s1190] ss:$2 sm:$0xff]
  %s1192 = scalar_lea.vmem [#allocation2], 978
  %v1193 = vld [vmem:[%s1192] ss:$2 sm:$0xff]
  %s1194 = scalar_lea.vmem [#allocation2], 1042
  %v1195 = vld [vmem:[%s1194] ss:$2 sm:$0xff]
  %s1196 = scalar_lea.vmem [#allocation2], 1058
  %v1197 = vld [vmem:[%s1196] ss:$2 sm:$0xff]
  %s1198 = scalar_lea.vmem [#allocation2], 1122
  %v1199 = vld [vmem:[%s1198] ss:$2 sm:$0xff]
  %s1200 = scalar_lea.vmem [#allocation2], 1138
  %v1201 = vld [vmem:[%s1200] ss:$2 sm:$0xff]
  %s1202 = scalar_lea.vmem [#allocation2], 1202
  %v1203 = vld [vmem:[%s1202] ss:$2 sm:$0xff]
  %s1204 = scalar_lea.vmem [#allocation2], 1218
  %v1205 = vld [vmem:[%s1204] ss:$2 sm:$0xff]
  %s1206 = scalar_lea.vmem [#allocation2], 1362
  %v1207 = vld [vmem:[%s1206] ss:$2 sm:$0xff]
  %s1208 = scalar_lea.vmem [#allocation2], 1378
  %v1209 = vld [vmem:[%s1208] ss:$2 sm:$0xff]
  %s1210 = scalar_lea.vmem [#allocation2], 1442
  %v1211 = vld [vmem:[%s1210] ss:$2 sm:$0xff]
  %s1212 = scalar_lea.vmem [#allocation2], 1458
  %v1213 = vld [vmem:[%s1212] ss:$2 sm:$0xff]
  %s1214 = scalar_lea.vmem [#allocation2], 1522
  %v1215 = vld [vmem:[%s1214] ss:$2 sm:$0xff]
  %s1216 = scalar_lea.vmem [#allocation2], 1538
  %v1217 = vld [vmem:[%s1216] ss:$2 sm:$0xff]
  %s1218 = scalar_lea.vmem [#allocation2], 1602
  %v1219 = vld [vmem:[%s1218] ss:$2 sm:$0xff]
  %s1220 = scalar_lea.vmem [#allocation2], 1618
  %v1221 = vld [vmem:[%s1220] ss:$2 sm:$0xff]
  %s1222 = scalar_lea.vmem [#allocation2], 1682
  %v1223 = vld [vmem:[%s1222] ss:$2 sm:$0xff]
  %s1224 = scalar_lea.vmem [#allocation2], 1698
  %v1225 = vld [vmem:[%s1224] ss:$2 sm:$0xff]
  %s1226 = scalar_lea.vmem [#allocation2], 1762
  %v1227 = vld [vmem:[%s1226] ss:$2 sm:$0xff]
  %s1228 = scalar_lea.vmem [#allocation2], 1778
  %v1229 = vld [vmem:[%s1228] ss:$2 sm:$0xff]
  %s1230 = scalar_lea.vmem [#allocation2], 1842
  %v1231 = vld [vmem:[%s1230] ss:$2 sm:$0xff]
  %s1232 = scalar_lea.vmem [#allocation2], 1858
  %v1233 = vld [vmem:[%s1232] ss:$2 sm:$0xff]
  %s1234 = scalar_lea.vmem [#allocation2], 1922
  %v1235 = vld [vmem:[%s1234] ss:$2 sm:$0xff]
  %s1236 = scalar_lea.vmem [#allocation2], 1938
  %v1237 = vld [vmem:[%s1236] ss:$2 sm:$0xff]
  %s1238 = scalar_lea.vmem [#allocation2], 2002
  %v1239 = vld [vmem:[%s1238] ss:$2 sm:$0xff]
  %s1240 = scalar_lea.vmem [#allocation2], 2018
  %v1241 = vld [vmem:[%s1240] ss:$2 sm:$0xff]
  %s1242 = scalar_lea.vmem [#allocation2], 2082
  %v1243 = vld [vmem:[%s1242] ss:$2 sm:$0xff]
  %s1244 = scalar_lea.vmem [#allocation2], 2098
  %v1245 = vld [vmem:[%s1244] ss:$2 sm:$0xff]
  %s1246 = scalar_lea.vmem [#allocation2], 2162
  %v1247 = vld [vmem:[%s1246] ss:$2 sm:$0xff]
  %s1248 = scalar_lea.vmem [#allocation2], 2178
  %v1249 = vld [vmem:[%s1248] ss:$2 sm:$0xff]
  %s1250 = scalar_lea.vmem [#allocation2], 2242
  %v1251 = vld [vmem:[%s1250] ss:$2 sm:$0xff]
  %s1252 = scalar_lea.vmem [#allocation2], 2258
  %v1253 = vld [vmem:[%s1252] ss:$2 sm:$0xff]
  %s1254 = scalar_lea.vmem [#allocation2], 2322
  %v1255 = vld [vmem:[%s1254] ss:$2 sm:$0xff]
  %s1256 = scalar_lea.vmem [#allocation2], 2338
  %v1257 = vld [vmem:[%s1256] ss:$2 sm:$0xff]
  %s1258 = scalar_lea.vmem [#allocation2], 2402
  %v1259 = vld [vmem:[%s1258] ss:$2 sm:$0xff]
  %s1260 = scalar_lea.vmem [#allocation2], 2418
  %v1261 = vld [vmem:[%s1260] ss:$2 sm:$0xff]
  %s1262 = scalar_lea.vmem [#allocation2], 2482
  %v1263 = vld [vmem:[%s1262] ss:$2 sm:$0xff]
  %s1264 = scalar_lea.vmem [#allocation2], 2498
  %v1265 = vld [vmem:[%s1264] ss:$2 sm:$0xff]
  %s1266 = scalar_lea.vmem [#allocation2], 2562
  %v1267 = vld [vmem:[%s1266] ss:$2 sm:$0xff]
  %s1268 = scalar_lea.vmem [#allocation2], 2578
  %v1269 = vld [vmem:[%s1268] ss:$2 sm:$0xff]
  %s1270 = scalar_lea.vmem [#allocation2], 3
  %v1271 = vld [vmem:[%s1270] ss:$2 sm:$0xff]
  %s1272 = scalar_lea.vmem [#allocation2], 19
  %v1273 = vld [vmem:[%s1272] ss:$2 sm:$0xff]
  %s1274 = scalar_lea.vmem [#allocation2], 83
  %v1275 = vld [vmem:[%s1274] ss:$2 sm:$0xff]
  %s1276 = scalar_lea.vmem [#allocation2], 99
  %v1277 = vld [vmem:[%s1276] ss:$2 sm:$0xff]
  %s1278 = scalar_lea.vmem [#allocation2], 163
  %v1279 = vld [vmem:[%s1278] ss:$2 sm:$0xff]
  %s1280 = scalar_lea.vmem [#allocation2], 179
  %v1281 = vld [vmem:[%s1280] ss:$2 sm:$0xff]
  %s1282 = scalar_lea.vmem [#allocation2], 243
  %v1283 = vld [vmem:[%s1282] ss:$2 sm:$0xff]
  %s1284 = scalar_lea.vmem [#allocation2], 259
  %v1285 = vld [vmem:[%s1284] ss:$2 sm:$0xff]
  %s1286 = scalar_lea.vmem [#allocation2], 323
  %v1287 = vld [vmem:[%s1286] ss:$2 sm:$0xff]
  %s1288 = scalar_lea.vmem [#allocation2], 339
  %v1289 = vld [vmem:[%s1288] ss:$2 sm:$0xff]
  %s1290 = scalar_lea.vmem [#allocation2], 403
  %v1291 = vld [vmem:[%s1290] ss:$2 sm:$0xff]
  %s1292 = scalar_lea.vmem [#allocation2], 419
  %v1293 = vld [vmem:[%s1292] ss:$2 sm:$0xff]
  %s1294 = scalar_lea.vmem [#allocation2], 483
  %v1295 = vld [vmem:[%s1294] ss:$2 sm:$0xff]
  %s1296 = scalar_lea.vmem [#allocation2], 499
  %v1297 = vld [vmem:[%s1296] ss:$2 sm:$0xff]
  %s1298 = scalar_lea.vmem [#allocation2], 563
  %v1299 = vld [vmem:[%s1298] ss:$2 sm:$0xff]
  %s1300 = scalar_lea.vmem [#allocation2], 579
  %v1301 = vld [vmem:[%s1300] ss:$2 sm:$0xff]
  %s1302 = scalar_lea.vmem [#allocation2], 643
  %v1303 = vld [vmem:[%s1302] ss:$2 sm:$0xff]
  %s1304 = scalar_lea.vmem [#allocation2], 659
  %v1305 = vld [vmem:[%s1304] ss:$2 sm:$0xff]
  %s1306 = scalar_lea.vmem [#allocation2], 723
  %v1307 = vld [vmem:[%s1306] ss:$2 sm:$0xff]
  %s1308 = scalar_lea.vmem [#allocation2], 739
  %v1309 = vld [vmem:[%s1308] ss:$2 sm:$0xff]
  %s1310 = scalar_lea.vmem [#allocation2], 803
  %v1311 = vld [vmem:[%s1310] ss:$2 sm:$0xff]
  %s1312 = scalar_lea.vmem [#allocation2], 819
  %v1313 = vld [vmem:[%s1312] ss:$2 sm:$0xff]
  %s1314 = scalar_lea.vmem [#allocation2], 883
  %v1315 = vld [vmem:[%s1314] ss:$2 sm:$0xff]
  %s1316 = scalar_lea.vmem [#allocation2], 899
  %v1317 = vld [vmem:[%s1316] ss:$2 sm:$0xff]
  %s1318 = scalar_lea.vmem [#allocation2], 963
  %v1319 = vld [vmem:[%s1318] ss:$2 sm:$0xff]
  %s1320 = scalar_lea.vmem [#allocation2], 979
  %v1321 = vld [vmem:[%s1320] ss:$2 sm:$0xff]
  %s1322 = scalar_lea.vmem [#allocation2], 1043
  %v1323 = vld [vmem:[%s1322] ss:$2 sm:$0xff]
  %s1324 = scalar_lea.vmem [#allocation2], 1059
  %v1325 = vld [vmem:[%s1324] ss:$2 sm:$0xff]
  %s1326 = scalar_lea.vmem [#allocation2], 1123
  %v1327 = vld [vmem:[%s1326] ss:$2 sm:$0xff]
  %s1328 = scalar_lea.vmem [#allocation2], 1139
  %v1329 = vld [vmem:[%s1328] ss:$2 sm:$0xff]
  %s1330 = scalar_lea.vmem [#allocation2], 1203
  %v1331 = vld [vmem:[%s1330] ss:$2 sm:$0xff]
  %s1332 = scalar_lea.vmem [#allocation2], 1219
  %v1333 = vld [vmem:[%s1332] ss:$2 sm:$0xff]
  %s1334 = scalar_lea.vmem [#allocation2], 1363
  %v1335 = vld [vmem:[%s1334] ss:$2 sm:$0xff]
  %s1336 = scalar_lea.vmem [#allocation2], 1379
  %v1337 = vld [vmem:[%s1336] ss:$2 sm:$0xff]
  %s1338 = scalar_lea.vmem [#allocation2], 1443
  %v1339 = vld [vmem:[%s1338] ss:$2 sm:$0xff]
  %s1340 = scalar_lea.vmem [#allocation2], 1459
  %v1341 = vld [vmem:[%s1340] ss:$2 sm:$0xff]
  %s1342 = scalar_lea.vmem [#allocation2], 1523
  %v1343 = vld [vmem:[%s1342] ss:$2 sm:$0xff]
  %s1344 = scalar_lea.vmem [#allocation2], 1539
  %v1345 = vld [vmem:[%s1344] ss:$2 sm:$0xff]
  %s1346 = scalar_lea.vmem [#allocation2], 1603
  %v1347 = vld [vmem:[%s1346] ss:$2 sm:$0xff]
  %s1348 = scalar_lea.vmem [#allocation2], 1619
  %v1349 = vld [vmem:[%s1348] ss:$2 sm:$0xff]
  %s1350 = scalar_lea.vmem [#allocation2], 1683
  %v1351 = vld [vmem:[%s1350] ss:$2 sm:$0xff]
  %s1352 = scalar_lea.vmem [#allocation2], 1699
  %v1353 = vld [vmem:[%s1352] ss:$2 sm:$0xff]
  %s1354 = scalar_lea.vmem [#allocation2], 1763
  %v1355 = vld [vmem:[%s1354] ss:$2 sm:$0xff]
  %s1356 = scalar_lea.vmem [#allocation2], 1779
  %v1357 = vld [vmem:[%s1356] ss:$2 sm:$0xff]
  %s1358 = scalar_lea.vmem [#allocation2], 1843
  %v1359 = vld [vmem:[%s1358] ss:$2 sm:$0xff]
  %s1360 = scalar_lea.vmem [#allocation2], 1859
  %v1361 = vld [vmem:[%s1360] ss:$2 sm:$0xff]
  %s1362 = scalar_lea.vmem [#allocation2], 1923
  %v1363 = vld [vmem:[%s1362] ss:$2 sm:$0xff]
  %s1364 = scalar_lea.vmem [#allocation2], 1939
  %v1365 = vld [vmem:[%s1364] ss:$2 sm:$0xff]
  %s1366 = scalar_lea.vmem [#allocation2], 2003
  %v1367 = vld [vmem:[%s1366] ss:$2 sm:$0xff]
  %s1368 = scalar_lea.vmem [#allocation2], 2019
  %v1369 = vld [vmem:[%s1368] ss:$2 sm:$0xff]
  %s1370 = scalar_lea.vmem [#allocation2], 2083
  %v1371 = vld [vmem:[%s1370] ss:$2 sm:$0xff]
  %s1372 = scalar_lea.vmem [#allocation2], 2099
  %v1373 = vld [vmem:[%s1372] ss:$2 sm:$0xff]
  %s1374 = scalar_lea.vmem [#allocation2], 2163
  %v1375 = vld [vmem:[%s1374] ss:$2 sm:$0xff]
  %s1376 = scalar_lea.vmem [#allocation2], 2179
  %v1377 = vld [vmem:[%s1376] ss:$2 sm:$0xff]
  %s1378 = scalar_lea.vmem [#allocation2], 2243
  %v1379 = vld [vmem:[%s1378] ss:$2 sm:$0xff]
  %s1380 = scalar_lea.vmem [#allocation2], 2259
  %v1381 = vld [vmem:[%s1380] ss:$2 sm:$0xff]
  %s1382 = scalar_lea.vmem [#allocation2], 2323
  %v1383 = vld [vmem:[%s1382] ss:$2 sm:$0xff]
  %s1384 = scalar_lea.vmem [#allocation2], 2339
  %v1385 = vld [vmem:[%s1384] ss:$2 sm:$0xff]
  %s1386 = scalar_lea.vmem [#allocation2], 2403
  %v1387 = vld [vmem:[%s1386] ss:$2 sm:$0xff]
  %s1388 = scalar_lea.vmem [#allocation2], 2419
  %v1389 = vld [vmem:[%s1388] ss:$2 sm:$0xff]
  %s1390 = scalar_lea.vmem [#allocation2], 2483
  %v1391 = vld [vmem:[%s1390] ss:$2 sm:$0xff]
  %s1392 = scalar_lea.vmem [#allocation2], 2499
  %v1393 = vld [vmem:[%s1392] ss:$2 sm:$0xff]
  %s1394 = scalar_lea.vmem [#allocation2], 2563
  %v1395 = vld [vmem:[%s1394] ss:$2 sm:$0xff]
  %s1396 = scalar_lea.vmem [#allocation2], 2579
  %v1397 = vld [vmem:[%s1396] ss:$2 sm:$0xff]
  %v1398 = vld [vmem:[%s630] ss:$2 sm:$0xff]
  %s1399 = scalar_lea.vmem %s630, 16 [#allocation2]
  %v1400 = vld [vmem:[%s1399] ss:$2 sm:$0xff]
  %s1401 = scalar_lea.vmem %s630, 80 [#allocation2]
  %v1402 = vld [vmem:[%s1401] ss:$2 sm:$0xff]
  %s1403 = scalar_lea.vmem %s630, 96 [#allocation2]
  %v1404 = vld [vmem:[%s1403] ss:$2 sm:$0xff]
  %s1405 = scalar_lea.vmem %s630, 160 [#allocation2]
  %v1406 = vld [vmem:[%s1405] ss:$2 sm:$0xff]
  %s1407 = scalar_lea.vmem %s630, 176 [#allocation2]
  %v1408 = vld [vmem:[%s1407] ss:$2 sm:$0xff]
  %s1409 = scalar_lea.vmem %s630, 240 [#allocation2]
  %v1410 = vld [vmem:[%s1409] ss:$2 sm:$0xff]
  %s1411 = scalar_lea.vmem %s630, 256 [#allocation2]
  %v1412 = vld [vmem:[%s1411] ss:$2 sm:$0xff]
  %s1413 = scalar_lea.vmem %s630, 320 [#allocation2]
  %v1414 = vld [vmem:[%s1413] ss:$2 sm:$0xff]
  %s1415 = scalar_lea.vmem %s630, 336 [#allocation2]
  %v1416 = vld [vmem:[%s1415] ss:$2 sm:$0xff]
  %s1417 = scalar_lea.vmem %s630, 400 [#allocation2]
  %v1418 = vld [vmem:[%s1417] ss:$2 sm:$0xff]
  %s1419 = scalar_lea.vmem %s630, 416 [#allocation2]
  %v1420 = vld [vmem:[%s1419] ss:$2 sm:$0xff]
  %s1421 = scalar_lea.vmem %s630, 480 [#allocation2]
  %v1422 = vld [vmem:[%s1421] ss:$2 sm:$0xff]
  %s1423 = scalar_lea.vmem %s630, 496 [#allocation2]
  %v1424 = vld [vmem:[%s1423] ss:$2 sm:$0xff]
  %s1425 = scalar_lea.vmem %s630, 560 [#allocation2]
  %v1426 = vld [vmem:[%s1425] ss:$2 sm:$0xff]
  %s1427 = scalar_lea.vmem %s630, 576 [#allocation2]
  %v1428 = vld [vmem:[%s1427] ss:$2 sm:$0xff]
  %s1429 = scalar_lea.vmem %s630, 640 [#allocation2]
  %v1430 = vld [vmem:[%s1429] ss:$2 sm:$0xff]
  %s1431 = scalar_lea.vmem %s630, 656 [#allocation2]
  %v1432 = vld [vmem:[%s1431] ss:$2 sm:$0xff]
  %s1433 = scalar_lea.vmem %s630, 720 [#allocation2]
  %v1434 = vld [vmem:[%s1433] ss:$2 sm:$0xff]
  %s1435 = scalar_lea.vmem %s630, 736 [#allocation2]
  %v1436 = vld [vmem:[%s1435] ss:$2 sm:$0xff]
  %s1437 = scalar_lea.vmem %s630, 800 [#allocation2]
  %v1438 = vld [vmem:[%s1437] ss:$2 sm:$0xff]
  %s1439 = scalar_lea.vmem %s630, 816 [#allocation2]
  %v1440 = vld [vmem:[%s1439] ss:$2 sm:$0xff]
  %s1441 = scalar_lea.vmem %s630, 880 [#allocation2]
  %v1442 = vld [vmem:[%s1441] ss:$2 sm:$0xff]
  %s1443 = scalar_lea.vmem %s630, 896 [#allocation2]
  %v1444 = vld [vmem:[%s1443] ss:$2 sm:$0xff]
  %s1445 = scalar_lea.vmem %s630, 960 [#allocation2]
  %v1446 = vld [vmem:[%s1445] ss:$2 sm:$0xff]
  %s1447 = scalar_lea.vmem %s630, 976 [#allocation2]
  %v1448 = vld [vmem:[%s1447] ss:$2 sm:$0xff]
  %s1449 = scalar_lea.vmem %s630, 1040 [#allocation2]
  %v1450 = vld [vmem:[%s1449] ss:$2 sm:$0xff]
  %s1451 = scalar_lea.vmem %s630, 1056 [#allocation2]
  %v1452 = vld [vmem:[%s1451] ss:$2 sm:$0xff]
  %s1453 = scalar_lea.vmem %s630, 1120 [#allocation2]
  %v1454 = vld [vmem:[%s1453] ss:$2 sm:$0xff]
  %s1455 = scalar_lea.vmem %s630, 1136 [#allocation2]
  %v1456 = vld [vmem:[%s1455] ss:$2 sm:$0xff]
  %s1457 = scalar_lea.vmem %s630, 1200 [#allocation2]
  %v1458 = vld [vmem:[%s1457] ss:$2 sm:$0xff]
  %s1459 = scalar_lea.vmem %s630, 1216 [#allocation2]
  %v1460 = vld [vmem:[%s1459] ss:$2 sm:$0xff]
  %s1461 = scalar_lea.vmem %s630, 1360 [#allocation2]
  %v1462 = vld [vmem:[%s1461] ss:$2 sm:$0xff]
  %s1463 = scalar_lea.vmem %s630, 1376 [#allocation2]
  %v1464 = vld [vmem:[%s1463] ss:$2 sm:$0xff]
  %s1465 = scalar_lea.vmem %s630, 1440 [#allocation2]
  %v1466 = vld [vmem:[%s1465] ss:$2 sm:$0xff]
  %s1467 = scalar_lea.vmem %s630, 1456 [#allocation2]
  %v1468 = vld [vmem:[%s1467] ss:$2 sm:$0xff]
  %s1469 = scalar_lea.vmem %s630, 1520 [#allocation2]
  %v1470 = vld [vmem:[%s1469] ss:$2 sm:$0xff]
  %s1471 = scalar_lea.vmem %s630, 1536 [#allocation2]
  %v1472 = vld [vmem:[%s1471] ss:$2 sm:$0xff]
  %s1473 = scalar_lea.vmem %s630, 1600 [#allocation2]
  %v1474 = vld [vmem:[%s1473] ss:$2 sm:$0xff]
  %s1475 = scalar_lea.vmem %s630, 1616 [#allocation2]
  %v1476 = vld [vmem:[%s1475] ss:$2 sm:$0xff]
  %s1477 = scalar_lea.vmem %s630, 1680 [#allocation2]
  %v1478 = vld [vmem:[%s1477] ss:$2 sm:$0xff]
  %s1479 = scalar_lea.vmem %s630, 1696 [#allocation2]
  %v1480 = vld [vmem:[%s1479] ss:$2 sm:$0xff]
  %s1481 = scalar_lea.vmem %s630, 1760 [#allocation2]
  %v1482 = vld [vmem:[%s1481] ss:$2 sm:$0xff]
  %s1483 = scalar_lea.vmem %s630, 1776 [#allocation2]
  %v1484 = vld [vmem:[%s1483] ss:$2 sm:$0xff]
  %s1485 = scalar_lea.vmem %s630, 1840 [#allocation2]
  %v1486 = vld [vmem:[%s1485] ss:$2 sm:$0xff]
  %s1487 = scalar_lea.vmem %s630, 1856 [#allocation2]
  %v1488 = vld [vmem:[%s1487] ss:$2 sm:$0xff]
  %s1489 = scalar_lea.vmem %s630, 1920 [#allocation2]
  %v1490 = vld [vmem:[%s1489] ss:$2 sm:$0xff]
  %s1491 = scalar_lea.vmem %s630, 1936 [#allocation2]
  %v1492 = vld [vmem:[%s1491] ss:$2 sm:$0xff]
  %s1493 = scalar_lea.vmem %s630, 2000 [#allocation2]
  %v1494 = vld [vmem:[%s1493] ss:$2 sm:$0xff]
  %s1495 = scalar_lea.vmem %s630, 2016 [#allocation2]
  %v1496 = vld [vmem:[%s1495] ss:$2 sm:$0xff]
  %s1497 = scalar_lea.vmem %s630, 2080 [#allocation2]
  %v1498 = vld [vmem:[%s1497] ss:$2 sm:$0xff]
  %s1499 = scalar_lea.vmem %s630, 2096 [#allocation2]
  %v1500 = vld [vmem:[%s1499] ss:$2 sm:$0xff]
  %s1501 = scalar_lea.vmem %s630, 2160 [#allocation2]
  %v1502 = vld [vmem:[%s1501] ss:$2 sm:$0xff]
  %s1503 = scalar_lea.vmem %s630, 2176 [#allocation2]
  %v1504 = vld [vmem:[%s1503] ss:$2 sm:$0xff]
  %s1505 = scalar_lea.vmem %s630, 2240 [#allocation2]
  %v1506 = vld [vmem:[%s1505] ss:$2 sm:$0xff]
  %s1507 = scalar_lea.vmem %s630, 2256 [#allocation2]
  %v1508 = vld [vmem:[%s1507] ss:$2 sm:$0xff]
  %s1509 = scalar_lea.vmem %s630, 2320 [#allocation2]
  %v1510 = vld [vmem:[%s1509] ss:$2 sm:$0xff]
  %s1511 = scalar_lea.vmem %s630, 2336 [#allocation2]
  %v1512 = vld [vmem:[%s1511] ss:$2 sm:$0xff]
  %s1513 = scalar_lea.vmem %s630, 2400 [#allocation2]
  %v1514 = vld [vmem:[%s1513] ss:$2 sm:$0xff]
  %s1515 = scalar_lea.vmem %s630, 2416 [#allocation2]
  %v1516 = vld [vmem:[%s1515] ss:$2 sm:$0xff]
  %s1517 = scalar_lea.vmem %s630, 2480 [#allocation2]
  %v1518 = vld [vmem:[%s1517] ss:$2 sm:$0xff]
  %s1519 = scalar_lea.vmem %s630, 2496 [#allocation2]
  %v1520 = vld [vmem:[%s1519] ss:$2 sm:$0xff]
  %s1521 = scalar_lea.vmem %s630, 2560 [#allocation2]
  %v1522 = vld [vmem:[%s1521] ss:$2 sm:$0xff]
  %s1523 = scalar_lea.vmem %s630, 2576 [#allocation2]
  %v1524 = vld [vmem:[%s1523] ss:$2 sm:$0xff]
  %s1525 = scalar_lea.vmem %s630, 1 [#allocation2]
  %v1526 = vld [vmem:[%s1525] ss:$2 sm:$0xff]
  %s1527 = scalar_lea.vmem %s630, 17 [#allocation2]
  %v1528 = vld [vmem:[%s1527] ss:$2 sm:$0xff]
  %s1529 = scalar_lea.vmem %s630, 81 [#allocation2]
  %v1530 = vld [vmem:[%s1529] ss:$2 sm:$0xff]
  %s1531 = scalar_lea.vmem %s630, 97 [#allocation2]
  %v1532 = vld [vmem:[%s1531] ss:$2 sm:$0xff]
  %s1533 = scalar_lea.vmem %s630, 161 [#allocation2]
  %v1534 = vld [vmem:[%s1533] ss:$2 sm:$0xff]
  %s1535 = scalar_lea.vmem %s630, 177 [#allocation2]
  %v1536 = vld [vmem:[%s1535] ss:$2 sm:$0xff]
  %s1537 = scalar_lea.vmem %s630, 241 [#allocation2]
  %v1538 = vld [vmem:[%s1537] ss:$2 sm:$0xff]
  %s1539 = scalar_lea.vmem %s630, 257 [#allocation2]
  %v1540 = vld [vmem:[%s1539] ss:$2 sm:$0xff]
  %s1541 = scalar_lea.vmem %s630, 321 [#allocation2]
  %v1542 = vld [vmem:[%s1541] ss:$2 sm:$0xff]
  %s1543 = scalar_lea.vmem %s630, 337 [#allocation2]
  %v1544 = vld [vmem:[%s1543] ss:$2 sm:$0xff]
  %s1545 = scalar_lea.vmem %s630, 401 [#allocation2]
  %v1546 = vld [vmem:[%s1545] ss:$2 sm:$0xff]
  %s1547 = scalar_lea.vmem %s630, 417 [#allocation2]
  %v1548 = vld [vmem:[%s1547] ss:$2 sm:$0xff]
  %s1549 = scalar_lea.vmem %s630, 481 [#allocation2]
  %v1550 = vld [vmem:[%s1549] ss:$2 sm:$0xff]
  %s1551 = scalar_lea.vmem %s630, 497 [#allocation2]
  %v1552 = vld [vmem:[%s1551] ss:$2 sm:$0xff]
  %s1553 = scalar_lea.vmem %s630, 561 [#allocation2]
  %v1554 = vld [vmem:[%s1553] ss:$2 sm:$0xff]
  %s1555 = scalar_lea.vmem %s630, 577 [#allocation2]
  %v1556 = vld [vmem:[%s1555] ss:$2 sm:$0xff]
  %s1557 = scalar_lea.vmem %s630, 641 [#allocation2]
  %v1558 = vld [vmem:[%s1557] ss:$2 sm:$0xff]
  %s1559 = scalar_lea.vmem %s630, 657 [#allocation2]
  %v1560 = vld [vmem:[%s1559] ss:$2 sm:$0xff]
  %s1561 = scalar_lea.vmem %s630, 721 [#allocation2]
  %v1562 = vld [vmem:[%s1561] ss:$2 sm:$0xff]
  %s1563 = scalar_lea.vmem %s630, 737 [#allocation2]
  %v1564 = vld [vmem:[%s1563] ss:$2 sm:$0xff]
  %s1565 = scalar_lea.vmem %s630, 801 [#allocation2]
  %v1566 = vld [vmem:[%s1565] ss:$2 sm:$0xff]
  %s1567 = scalar_lea.vmem %s630, 817 [#allocation2]
  %v1568 = vld [vmem:[%s1567] ss:$2 sm:$0xff]
  %s1569 = scalar_lea.vmem %s630, 881 [#allocation2]
  %v1570 = vld [vmem:[%s1569] ss:$2 sm:$0xff]
  %s1571 = scalar_lea.vmem %s630, 897 [#allocation2]
  %v1572 = vld [vmem:[%s1571] ss:$2 sm:$0xff]
  %s1573 = scalar_lea.vmem %s630, 961 [#allocation2]
  %v1574 = vld [vmem:[%s1573] ss:$2 sm:$0xff]
  %s1575 = scalar_lea.vmem %s630, 977 [#allocation2]
  %v1576 = vld [vmem:[%s1575] ss:$2 sm:$0xff]
  %s1577 = scalar_lea.vmem %s630, 1041 [#allocation2]
  %v1578 = vld [vmem:[%s1577] ss:$2 sm:$0xff]
  %s1579 = scalar_lea.vmem %s630, 1057 [#allocation2]
  %v1580 = vld [vmem:[%s1579] ss:$2 sm:$0xff]
  %s1581 = scalar_lea.vmem %s630, 1121 [#allocation2]
  %v1582 = vld [vmem:[%s1581] ss:$2 sm:$0xff]
  %s1583 = scalar_lea.vmem %s630, 1137 [#allocation2]
  %v1584 = vld [vmem:[%s1583] ss:$2 sm:$0xff]
  %s1585 = scalar_lea.vmem %s630, 1201 [#allocation2]
  %v1586 = vld [vmem:[%s1585] ss:$2 sm:$0xff]
  %s1587 = scalar_lea.vmem %s630, 1217 [#allocation2]
  %v1588 = vld [vmem:[%s1587] ss:$2 sm:$0xff]
  %s1589 = scalar_lea.vmem %s630, 1361 [#allocation2]
  %v1590 = vld [vmem:[%s1589] ss:$2 sm:$0xff]
  %s1591 = scalar_lea.vmem %s630, 1377 [#allocation2]
  %v1592 = vld [vmem:[%s1591] ss:$2 sm:$0xff]
  %s1593 = scalar_lea.vmem %s630, 1441 [#allocation2]
  %v1594 = vld [vmem:[%s1593] ss:$2 sm:$0xff]
  %s1595 = scalar_lea.vmem %s630, 1457 [#allocation2]
  %v1596 = vld [vmem:[%s1595] ss:$2 sm:$0xff]
  %s1597 = scalar_lea.vmem %s630, 1521 [#allocation2]
  %v1598 = vld [vmem:[%s1597] ss:$2 sm:$0xff]
  %s1599 = scalar_lea.vmem %s630, 1537 [#allocation2]
  %v1600 = vld [vmem:[%s1599] ss:$2 sm:$0xff]
  %s1601 = scalar_lea.vmem %s630, 1601 [#allocation2]
  %v1602 = vld [vmem:[%s1601] ss:$2 sm:$0xff]
  %s1603 = scalar_lea.vmem %s630, 1617 [#allocation2]
  %v1604 = vld [vmem:[%s1603] ss:$2 sm:$0xff]
  %s1605 = scalar_lea.vmem %s630, 1681 [#allocation2]
  %v1606 = vld [vmem:[%s1605] ss:$2 sm:$0xff]
  %s1607 = scalar_lea.vmem %s630, 1697 [#allocation2]
  %v1608 = vld [vmem:[%s1607] ss:$2 sm:$0xff]
  %s1609 = scalar_lea.vmem %s630, 1761 [#allocation2]
  %v1610 = vld [vmem:[%s1609] ss:$2 sm:$0xff]
  %s1611 = scalar_lea.vmem %s630, 1777 [#allocation2]
  %v1612 = vld [vmem:[%s1611] ss:$2 sm:$0xff]
  %s1613 = scalar_lea.vmem %s630, 1841 [#allocation2]
  %v1614 = vld [vmem:[%s1613] ss:$2 sm:$0xff]
  %s1615 = scalar_lea.vmem %s630, 1857 [#allocation2]
  %v1616 = vld [vmem:[%s1615] ss:$2 sm:$0xff]
  %s1617 = scalar_lea.vmem %s630, 1921 [#allocation2]
  %v1618 = vld [vmem:[%s1617] ss:$2 sm:$0xff]
  %s1619 = scalar_lea.vmem %s630, 1937 [#allocation2]
  %v1620 = vld [vmem:[%s1619] ss:$2 sm:$0xff]
  %s1621 = scalar_lea.vmem %s630, 2001 [#allocation2]
  %v1622 = vld [vmem:[%s1621] ss:$2 sm:$0xff]
  %s1623 = scalar_lea.vmem %s630, 2017 [#allocation2]
  %v1624 = vld [vmem:[%s1623] ss:$2 sm:$0xff]
  %s1625 = scalar_lea.vmem %s630, 2081 [#allocation2]
  %v1626 = vld [vmem:[%s1625] ss:$2 sm:$0xff]
  %s1627 = scalar_lea.vmem %s630, 2097 [#allocation2]
  %v1628 = vld [vmem:[%s1627] ss:$2 sm:$0xff]
  %s1629 = scalar_lea.vmem %s630, 2161 [#allocation2]
  %v1630 = vld [vmem:[%s1629] ss:$2 sm:$0xff]
  %s1631 = scalar_lea.vmem %s630, 2177 [#allocation2]
  %v1632 = vld [vmem:[%s1631] ss:$2 sm:$0xff]
  %s1633 = scalar_lea.vmem %s630, 2241 [#allocation2]
  %v1634 = vld [vmem:[%s1633] ss:$2 sm:$0xff]
  %s1635 = scalar_lea.vmem %s630, 2257 [#allocation2]
  %v1636 = vld [vmem:[%s1635] ss:$2 sm:$0xff]
  %s1637 = scalar_lea.vmem %s630, 2321 [#allocation2]
  %v1638 = vld [vmem:[%s1637] ss:$2 sm:$0xff]
  %s1639 = scalar_lea.vmem %s630, 2337 [#allocation2]
  %v1640 = vld [vmem:[%s1639] ss:$2 sm:$0xff]
  %s1641 = scalar_lea.vmem %s630, 2401 [#allocation2]
  %v1642 = vld [vmem:[%s1641] ss:$2 sm:$0xff]
  %s1643 = scalar_lea.vmem %s630, 2417 [#allocation2]
  %v1644 = vld [vmem:[%s1643] ss:$2 sm:$0xff]
  %s1645 = scalar_lea.vmem %s630, 2481 [#allocation2]
  %v1646 = vld [vmem:[%s1645] ss:$2 sm:$0xff]
  %s1647 = scalar_lea.vmem %s630, 2497 [#allocation2]
  %v1648 = vld [vmem:[%s1647] ss:$2 sm:$0xff]
  %s1649 = scalar_lea.vmem %s630, 2561 [#allocation2]
  %v1650 = vld [vmem:[%s1649] ss:$2 sm:$0xff]
  %s1651 = scalar_lea.vmem %s630, 2577 [#allocation2]
  %v1652 = vld [vmem:[%s1651] ss:$2 sm:$0xff]
  %s1653 = scalar_lea.vmem %s630, 2 [#allocation2]
  %v1654 = vld [vmem:[%s1653] ss:$2 sm:$0xff]
  %s1655 = scalar_lea.vmem %s630, 18 [#allocation2]
  %v1656 = vld [vmem:[%s1655] ss:$2 sm:$0xff]
  %s1657 = scalar_lea.vmem %s630, 82 [#allocation2]
  %v1658 = vld [vmem:[%s1657] ss:$2 sm:$0xff]
  %s1659 = scalar_lea.vmem %s630, 98 [#allocation2]
  %v1660 = vld [vmem:[%s1659] ss:$2 sm:$0xff]
  %s1661 = scalar_lea.vmem %s630, 162 [#allocation2]
  %v1662 = vld [vmem:[%s1661] ss:$2 sm:$0xff]
  %s1663 = scalar_lea.vmem %s630, 178 [#allocation2]
  %v1664 = vld [vmem:[%s1663] ss:$2 sm:$0xff]
  %s1665 = scalar_lea.vmem %s630, 242 [#allocation2]
  %v1666 = vld [vmem:[%s1665] ss:$2 sm:$0xff]
  %s1667 = scalar_lea.vmem %s630, 258 [#allocation2]
  %v1668 = vld [vmem:[%s1667] ss:$2 sm:$0xff]
  %s1669 = scalar_lea.vmem %s630, 322 [#allocation2]
  %v1670 = vld [vmem:[%s1669] ss:$2 sm:$0xff]
  %s1671 = scalar_lea.vmem %s630, 338 [#allocation2]
  %v1672 = vld [vmem:[%s1671] ss:$2 sm:$0xff]
  %s1673 = scalar_lea.vmem %s630, 402 [#allocation2]
  %v1674 = vld [vmem:[%s1673] ss:$2 sm:$0xff]
  %s1675 = scalar_lea.vmem %s630, 418 [#allocation2]
  %v1676 = vld [vmem:[%s1675] ss:$2 sm:$0xff]
  %s1677 = scalar_lea.vmem %s630, 482 [#allocation2]
  %v1678 = vld [vmem:[%s1677] ss:$2 sm:$0xff]
  %s1679 = scalar_lea.vmem %s630, 498 [#allocation2]
  %v1680 = vld [vmem:[%s1679] ss:$2 sm:$0xff]
  %s1681 = scalar_lea.vmem %s630, 562 [#allocation2]
  %v1682 = vld [vmem:[%s1681] ss:$2 sm:$0xff]
  %s1683 = scalar_lea.vmem %s630, 578 [#allocation2]
  %v1684 = vld [vmem:[%s1683] ss:$2 sm:$0xff]
  %s1685 = scalar_lea.vmem %s630, 642 [#allocation2]
  %v1686 = vld [vmem:[%s1685] ss:$2 sm:$0xff]
  %s1687 = scalar_lea.vmem %s630, 658 [#allocation2]
  %v1688 = vld [vmem:[%s1687] ss:$2 sm:$0xff]
  %s1689 = scalar_lea.vmem %s630, 722 [#allocation2]
  %v1690 = vld [vmem:[%s1689] ss:$2 sm:$0xff]
  %s1691 = scalar_lea.vmem %s630, 738 [#allocation2]
  %v1692 = vld [vmem:[%s1691] ss:$2 sm:$0xff]
  %s1693 = scalar_lea.vmem %s630, 802 [#allocation2]
  %v1694 = vld [vmem:[%s1693] ss:$2 sm:$0xff]
  %s1695 = scalar_lea.vmem %s630, 818 [#allocation2]
  %v1696 = vld [vmem:[%s1695] ss:$2 sm:$0xff]
  %s1697 = scalar_lea.vmem %s630, 882 [#allocation2]
  %v1698 = vld [vmem:[%s1697] ss:$2 sm:$0xff]
  %s1699 = scalar_lea.vmem %s630, 898 [#allocation2]
  %v1700 = vld [vmem:[%s1699] ss:$2 sm:$0xff]
  %s1701 = scalar_lea.vmem %s630, 962 [#allocation2]
  %v1702 = vld [vmem:[%s1701] ss:$2 sm:$0xff]
  %s1703 = scalar_lea.vmem %s630, 978 [#allocation2]
  %v1704 = vld [vmem:[%s1703] ss:$2 sm:$0xff]
  %s1705 = scalar_lea.vmem %s630, 1042 [#allocation2]
  %v1706 = vld [vmem:[%s1705] ss:$2 sm:$0xff]
  %s1707 = scalar_lea.vmem %s630, 1058 [#allocation2]
  %v1708 = vld [vmem:[%s1707] ss:$2 sm:$0xff]
  %s1709 = scalar_lea.vmem %s630, 1122 [#allocation2]
  %v1710 = vld [vmem:[%s1709] ss:$2 sm:$0xff]
  %s1711 = scalar_lea.vmem %s630, 1138 [#allocation2]
  %v1712 = vld [vmem:[%s1711] ss:$2 sm:$0xff]
  %s1713 = scalar_lea.vmem %s630, 1202 [#allocation2]
  %v1714 = vld [vmem:[%s1713] ss:$2 sm:$0xff]
  %s1715 = scalar_lea.vmem %s630, 1218 [#allocation2]
  %v1716 = vld [vmem:[%s1715] ss:$2 sm:$0xff]
  %s1717 = scalar_lea.vmem %s630, 1362 [#allocation2]
  %v1718 = vld [vmem:[%s1717] ss:$2 sm:$0xff]
  %s1719 = scalar_lea.vmem %s630, 1378 [#allocation2]
  %v1720 = vld [vmem:[%s1719] ss:$2 sm:$0xff]
  %s1721 = scalar_lea.vmem %s630, 1442 [#allocation2]
  %v1722 = vld [vmem:[%s1721] ss:$2 sm:$0xff]
  %s1723 = scalar_lea.vmem %s630, 1458 [#allocation2]
  %v1724 = vld [vmem:[%s1723] ss:$2 sm:$0xff]
  %s1725 = scalar_lea.vmem %s630, 1522 [#allocation2]
  %v1726 = vld [vmem:[%s1725] ss:$2 sm:$0xff]
  %s1727 = scalar_lea.vmem %s630, 1538 [#allocation2]
  %v1728 = vld [vmem:[%s1727] ss:$2 sm:$0xff]
  %s1729 = scalar_lea.vmem %s630, 1602 [#allocation2]
  %v1730 = vld [vmem:[%s1729] ss:$2 sm:$0xff]
  %s1731 = scalar_lea.vmem %s630, 1618 [#allocation2]
  %v1732 = vld [vmem:[%s1731] ss:$2 sm:$0xff]
  %s1733 = scalar_lea.vmem %s630, 1682 [#allocation2]
  %v1734 = vld [vmem:[%s1733] ss:$2 sm:$0xff]
  %s1735 = scalar_lea.vmem %s630, 1698 [#allocation2]
  %v1736 = vld [vmem:[%s1735] ss:$2 sm:$0xff]
  %s1737 = scalar_lea.vmem %s630, 1762 [#allocation2]
  %v1738 = vld [vmem:[%s1737] ss:$2 sm:$0xff]
  %s1739 = scalar_lea.vmem %s630, 1778 [#allocation2]
  %v1740 = vld [vmem:[%s1739] ss:$2 sm:$0xff]
  %s1741 = scalar_lea.vmem %s630, 1842 [#allocation2]
  %v1742 = vld [vmem:[%s1741] ss:$2 sm:$0xff]
  %s1743 = scalar_lea.vmem %s630, 1858 [#allocation2]
  %v1744 = vld [vmem:[%s1743] ss:$2 sm:$0xff]
  %s1745 = scalar_lea.vmem %s630, 1922 [#allocation2]
  %v1746 = vld [vmem:[%s1745] ss:$2 sm:$0xff]
  %s1747 = scalar_lea.vmem %s630, 1938 [#allocation2]
  %v1748 = vld [vmem:[%s1747] ss:$2 sm:$0xff]
  %s1749 = scalar_lea.vmem %s630, 2002 [#allocation2]
  %v1750 = vld [vmem:[%s1749] ss:$2 sm:$0xff]
  %s1751 = scalar_lea.vmem %s630, 2018 [#allocation2]
  %v1752 = vld [vmem:[%s1751] ss:$2 sm:$0xff]
  %s1753 = scalar_lea.vmem %s630, 2082 [#allocation2]
  %v1754 = vld [vmem:[%s1753] ss:$2 sm:$0xff]
  %s1755 = scalar_lea.vmem %s630, 2098 [#allocation2]
  %v1756 = vld [vmem:[%s1755] ss:$2 sm:$0xff]
  %s1757 = scalar_lea.vmem %s630, 2162 [#allocation2]
  %v1758 = vld [vmem:[%s1757] ss:$2 sm:$0xff]
  %s1759 = scalar_lea.vmem %s630, 2178 [#allocation2]
  %v1760 = vld [vmem:[%s1759] ss:$2 sm:$0xff]
  %s1761 = scalar_lea.vmem %s630, 2242 [#allocation2]
  %v1762 = vld [vmem:[%s1761] ss:$2 sm:$0xff]
  %s1763 = scalar_lea.vmem %s630, 2258 [#allocation2]
  %v1764 = vld [vmem:[%s1763] ss:$2 sm:$0xff]
  %s1765 = scalar_lea.vmem %s630, 2322 [#allocation2]
  %v1766 = vld [vmem:[%s1765] ss:$2 sm:$0xff]
  %s1767 = scalar_lea.vmem %s630, 2338 [#allocation2]
  %v1768 = vld [vmem:[%s1767] ss:$2 sm:$0xff]
  %s1769 = scalar_lea.vmem %s630, 2402 [#allocation2]
  %v1770 = vld [vmem:[%s1769] ss:$2 sm:$0xff]
  %s1771 = scalar_lea.vmem %s630, 2418 [#allocation2]
  %v1772 = vld [vmem:[%s1771] ss:$2 sm:$0xff]
  %s1773 = scalar_lea.vmem %s630, 2482 [#allocation2]
  %v1774 = vld [vmem:[%s1773] ss:$2 sm:$0xff]
  %s1775 = scalar_lea.vmem %s630, 2498 [#allocation2]
  %v1776 = vld [vmem:[%s1775] ss:$2 sm:$0xff]
  %s1777 = scalar_lea.vmem %s630, 2562 [#allocation2]
  %v1778 = vld [vmem:[%s1777] ss:$2 sm:$0xff]
  %s1779 = scalar_lea.vmem %s630, 2578 [#allocation2]
  %v1780 = vld [vmem:[%s1779] ss:$2 sm:$0xff]
  %s1781 = scalar_lea.vmem %s630, 3 [#allocation2]
  %v1782 = vld [vmem:[%s1781] ss:$2 sm:$0xff]
  %s1783 = scalar_lea.vmem %s630, 19 [#allocation2]
  %v1784 = vld [vmem:[%s1783] ss:$2 sm:$0xff]
  %s1785 = scalar_lea.vmem %s630, 83 [#allocation2]
  %v1786 = vld [vmem:[%s1785] ss:$2 sm:$0xff]
  %s1787 = scalar_lea.vmem %s630, 99 [#allocation2]
  %v1788 = vld [vmem:[%s1787] ss:$2 sm:$0xff]
  %s1789 = scalar_lea.vmem %s630, 163 [#allocation2]
  %v1790 = vld [vmem:[%s1789] ss:$2 sm:$0xff]
  %s1791 = scalar_lea.vmem %s630, 179 [#allocation2]
  %v1792 = vld [vmem:[%s1791] ss:$2 sm:$0xff]
  %s1793 = scalar_lea.vmem %s630, 243 [#allocation2]
  %v1794 = vld [vmem:[%s1793] ss:$2 sm:$0xff]
  %s1795 = scalar_lea.vmem %s630, 259 [#allocation2]
  %v1796 = vld [vmem:[%s1795] ss:$2 sm:$0xff]
  %s1797 = scalar_lea.vmem %s630, 323 [#allocation2]
  %v1798 = vld [vmem:[%s1797] ss:$2 sm:$0xff]
  %s1799 = scalar_lea.vmem %s630, 339 [#allocation2]
  %v1800 = vld [vmem:[%s1799] ss:$2 sm:$0xff]
  %s1801 = scalar_lea.vmem %s630, 403 [#allocation2]
  %v1802 = vld [vmem:[%s1801] ss:$2 sm:$0xff]
  %s1803 = scalar_lea.vmem %s630, 419 [#allocation2]
  %v1804 = vld [vmem:[%s1803] ss:$2 sm:$0xff]
  %s1805 = scalar_lea.vmem %s630, 483 [#allocation2]
  %v1806 = vld [vmem:[%s1805] ss:$2 sm:$0xff]
  %s1807 = scalar_lea.vmem %s630, 499 [#allocation2]
  %v1808 = vld [vmem:[%s1807] ss:$2 sm:$0xff]
  %s1809 = scalar_lea.vmem %s630, 563 [#allocation2]
  %v1810 = vld [vmem:[%s1809] ss:$2 sm:$0xff]
  %s1811 = scalar_lea.vmem %s630, 579 [#allocation2]
  %v1812 = vld [vmem:[%s1811] ss:$2 sm:$0xff]
  %s1813 = scalar_lea.vmem %s630, 643 [#allocation2]
  %v1814 = vld [vmem:[%s1813] ss:$2 sm:$0xff]
  %s1815 = scalar_lea.vmem %s630, 659 [#allocation2]
  %v1816 = vld [vmem:[%s1815] ss:$2 sm:$0xff]
  %s1817 = scalar_lea.vmem %s630, 723 [#allocation2]
  %v1818 = vld [vmem:[%s1817] ss:$2 sm:$0xff]
  %s1819 = scalar_lea.vmem %s630, 739 [#allocation2]
  %v1820 = vld [vmem:[%s1819] ss:$2 sm:$0xff]
  %s1821 = scalar_lea.vmem %s630, 803 [#allocation2]
  %v1822 = vld [vmem:[%s1821] ss:$2 sm:$0xff]
  %s1823 = scalar_lea.vmem %s630, 819 [#allocation2]
  %v1824 = vld [vmem:[%s1823] ss:$2 sm:$0xff]
  %s1825 = scalar_lea.vmem %s630, 883 [#allocation2]
  %v1826 = vld [vmem:[%s1825] ss:$2 sm:$0xff]
  %s1827 = scalar_lea.vmem %s630, 899 [#allocation2]
  %v1828 = vld [vmem:[%s1827] ss:$2 sm:$0xff]
  %s1829 = scalar_lea.vmem %s630, 963 [#allocation2]
  %v1830 = vld [vmem:[%s1829] ss:$2 sm:$0xff]
  %s1831 = scalar_lea.vmem %s630, 979 [#allocation2]
  %v1832 = vld [vmem:[%s1831] ss:$2 sm:$0xff]
  %s1833 = scalar_lea.vmem %s630, 1043 [#allocation2]
  %v1834 = vld [vmem:[%s1833] ss:$2 sm:$0xff]
  %s1835 = scalar_lea.vmem %s630, 1059 [#allocation2]
  %v1836 = vld [vmem:[%s1835] ss:$2 sm:$0xff]
  %s1837 = scalar_lea.vmem %s630, 1123 [#allocation2]
  %v1838 = vld [vmem:[%s1837] ss:$2 sm:$0xff]
  %s1839 = scalar_lea.vmem %s630, 1139 [#allocation2]
  %v1840 = vld [vmem:[%s1839] ss:$2 sm:$0xff]
  %s1841 = scalar_lea.vmem %s630, 1203 [#allocation2]
  %v1842 = vld [vmem:[%s1841] ss:$2 sm:$0xff]
  %s1843 = scalar_lea.vmem %s630, 1219 [#allocation2]
  %v1844 = vld [vmem:[%s1843] ss:$2 sm:$0xff]
  %s1845 = scalar_lea.vmem %s630, 1363 [#allocation2]
  %v1846 = vld [vmem:[%s1845] ss:$2 sm:$0xff]
  %s1847 = scalar_lea.vmem %s630, 1379 [#allocation2]
  %v1848 = vld [vmem:[%s1847] ss:$2 sm:$0xff]
  %s1849 = scalar_lea.vmem %s630, 1443 [#allocation2]
  %v1850 = vld [vmem:[%s1849] ss:$2 sm:$0xff]
  %s1851 = scalar_lea.vmem %s630, 1459 [#allocation2]
  %v1852 = vld [vmem:[%s1851] ss:$2 sm:$0xff]
  %s1853 = scalar_lea.vmem %s630, 1523 [#allocation2]
  %v1854 = vld [vmem:[%s1853] ss:$2 sm:$0xff]
  %s1855 = scalar_lea.vmem %s630, 1539 [#allocation2]
  %v1856 = vld [vmem:[%s1855] ss:$2 sm:$0xff]
  %s1857 = scalar_lea.vmem %s630, 1603 [#allocation2]
  %v1858 = vld [vmem:[%s1857] ss:$2 sm:$0xff]
  %s1859 = scalar_lea.vmem %s630, 1619 [#allocation2]
  %v1860 = vld [vmem:[%s1859] ss:$2 sm:$0xff]
  %s1861 = scalar_lea.vmem %s630, 1683 [#allocation2]
  %v1862 = vld [vmem:[%s1861] ss:$2 sm:$0xff]
  %s1863 = scalar_lea.vmem %s630, 1699 [#allocation2]
  %v1864 = vld [vmem:[%s1863] ss:$2 sm:$0xff]
  %s1865 = scalar_lea.vmem %s630, 1763 [#allocation2]
  %v1866 = vld [vmem:[%s1865] ss:$2 sm:$0xff]
  %s1867 = scalar_lea.vmem %s630, 1779 [#allocation2]
  %v1868 = vld [vmem:[%s1867] ss:$2 sm:$0xff]
  %s1869 = scalar_lea.vmem %s630, 1843 [#allocation2]
  %v1870 = vld [vmem:[%s1869] ss:$2 sm:$0xff]
  %s1871 = scalar_lea.vmem %s630, 1859 [#allocation2]
  %v1872 = vld [vmem:[%s1871] ss:$2 sm:$0xff]
  %s1873 = scalar_lea.vmem %s630, 1923 [#allocation2]
  %v1874 = vld [vmem:[%s1873] ss:$2 sm:$0xff]
  %s1875 = scalar_lea.vmem %s630, 1939 [#allocation2]
  %v1876 = vld [vmem:[%s1875] ss:$2 sm:$0xff]
  %s1877 = scalar_lea.vmem %s630, 2003 [#allocation2]
  %v1878 = vld [vmem:[%s1877] ss:$2 sm:$0xff]
  %s1879 = scalar_lea.vmem %s630, 2019 [#allocation2]
  %v1880 = vld [vmem:[%s1879] ss:$2 sm:$0xff]
  %s1881 = scalar_lea.vmem %s630, 2083 [#allocation2]
  %v1882 = vld [vmem:[%s1881] ss:$2 sm:$0xff]
  %s1883 = scalar_lea.vmem %s630, 2099 [#allocation2]
  %v1884 = vld [vmem:[%s1883] ss:$2 sm:$0xff]
  %s1885 = scalar_lea.vmem %s630, 2163 [#allocation2]
  %v1886 = vld [vmem:[%s1885] ss:$2 sm:$0xff]
  %s1887 = scalar_lea.vmem %s630, 2179 [#allocation2]
  %v1888 = vld [vmem:[%s1887] ss:$2 sm:$0xff]
  %s1889 = scalar_lea.vmem %s630, 2243 [#allocation2]
  %v1890 = vld [vmem:[%s1889] ss:$2 sm:$0xff]
  %s1891 = scalar_lea.vmem %s630, 2259 [#allocation2]
  %v1892 = vld [vmem:[%s1891] ss:$2 sm:$0xff]
  %s1893 = scalar_lea.vmem %s630, 2323 [#allocation2]
  %v1894 = vld [vmem:[%s1893] ss:$2 sm:$0xff]
  %s1895 = scalar_lea.vmem %s630, 2339 [#allocation2]
  %v1896 = vld [vmem:[%s1895] ss:$2 sm:$0xff]
  %s1897 = scalar_lea.vmem %s630, 2403 [#allocation2]
  %v1898 = vld [vmem:[%s1897] ss:$2 sm:$0xff]
  %s1899 = scalar_lea.vmem %s630, 2419 [#allocation2]
  %v1900 = vld [vmem:[%s1899] ss:$2 sm:$0xff]
  %s1901 = scalar_lea.vmem %s630, 2483 [#allocation2]
  %v1902 = vld [vmem:[%s1901] ss:$2 sm:$0xff]
  %s1903 = scalar_lea.vmem %s630, 2499 [#allocation2]
  %v1904 = vld [vmem:[%s1903] ss:$2 sm:$0xff]
  %s1905 = scalar_lea.vmem %s630, 2563 [#allocation2]
  %v1906 = vld [vmem:[%s1905] ss:$2 sm:$0xff]
  %s1907 = scalar_lea.vmem %s630, 2579 [#allocation2]
  %v1908 = vld [vmem:[%s1907] ss:$2 sm:$0xff]
  %s1909 = scalar_lea.vmem [#allocation2], 80
  %v1910 = vld [vmem:[%s1909] ss:$2 sm:$0xff]
  %s1911 = scalar_lea.vmem %s1909, 16 [#allocation2]
  %v1912 = vld [vmem:[%s1911] ss:$2 sm:$0xff]
  %s1913 = scalar_lea.vmem %s1909, 80 [#allocation2]
  %v1914 = vld [vmem:[%s1913] ss:$2 sm:$0xff]
  %s1915 = scalar_lea.vmem %s1909, 96 [#allocation2]
  %v1916 = vld [vmem:[%s1915] ss:$2 sm:$0xff]
  %s1917 = scalar_lea.vmem %s1909, 160 [#allocation2]
  %v1918 = vld [vmem:[%s1917] ss:$2 sm:$0xff]
  %s1919 = scalar_lea.vmem %s1909, 176 [#allocation2]
  %v1920 = vld [vmem:[%s1919] ss:$2 sm:$0xff]
  %s1921 = scalar_lea.vmem %s1909, 240 [#allocation2]
  %v1922 = vld [vmem:[%s1921] ss:$2 sm:$0xff]
  %s1923 = scalar_lea.vmem %s1909, 256 [#allocation2]
  %v1924 = vld [vmem:[%s1923] ss:$2 sm:$0xff]
  %s1925 = scalar_lea.vmem %s1909, 320 [#allocation2]
  %v1926 = vld [vmem:[%s1925] ss:$2 sm:$0xff]
  %s1927 = scalar_lea.vmem %s1909, 336 [#allocation2]
  %v1928 = vld [vmem:[%s1927] ss:$2 sm:$0xff]
  %s1929 = scalar_lea.vmem %s1909, 400 [#allocation2]
  %v1930 = vld [vmem:[%s1929] ss:$2 sm:$0xff]
  %s1931 = scalar_lea.vmem %s1909, 416 [#allocation2]
  %v1932 = vld [vmem:[%s1931] ss:$2 sm:$0xff]
  %s1933 = scalar_lea.vmem %s1909, 480 [#allocation2]
  %v1934 = vld [vmem:[%s1933] ss:$2 sm:$0xff]
  %s1935 = scalar_lea.vmem %s1909, 496 [#allocation2]
  %v1936 = vld [vmem:[%s1935] ss:$2 sm:$0xff]
  %s1937 = scalar_lea.vmem %s1909, 560 [#allocation2]
  %v1938 = vld [vmem:[%s1937] ss:$2 sm:$0xff]
  %s1939 = scalar_lea.vmem %s1909, 576 [#allocation2]
  %v1940 = vld [vmem:[%s1939] ss:$2 sm:$0xff]
  %s1941 = scalar_lea.vmem %s1909, 640 [#allocation2]
  %v1942 = vld [vmem:[%s1941] ss:$2 sm:$0xff]
  %s1943 = scalar_lea.vmem %s1909, 656 [#allocation2]
  %v1944 = vld [vmem:[%s1943] ss:$2 sm:$0xff]
  %s1945 = scalar_lea.vmem %s1909, 720 [#allocation2]
  %v1946 = vld [vmem:[%s1945] ss:$2 sm:$0xff]
  %s1947 = scalar_lea.vmem %s1909, 736 [#allocation2]
  %v1948 = vld [vmem:[%s1947] ss:$2 sm:$0xff]
  %s1949 = scalar_lea.vmem %s1909, 800 [#allocation2]
  %v1950 = vld [vmem:[%s1949] ss:$2 sm:$0xff]
  %s1951 = scalar_lea.vmem %s1909, 816 [#allocation2]
  %v1952 = vld [vmem:[%s1951] ss:$2 sm:$0xff]
  %s1953 = scalar_lea.vmem %s1909, 880 [#allocation2]
  %v1954 = vld [vmem:[%s1953] ss:$2 sm:$0xff]
  %s1955 = scalar_lea.vmem %s1909, 896 [#allocation2]
  %v1956 = vld [vmem:[%s1955] ss:$2 sm:$0xff]
  %s1957 = scalar_lea.vmem %s1909, 960 [#allocation2]
  %v1958 = vld [vmem:[%s1957] ss:$2 sm:$0xff]
  %s1959 = scalar_lea.vmem %s1909, 976 [#allocation2]
  %v1960 = vld [vmem:[%s1959] ss:$2 sm:$0xff]
  %s1961 = scalar_lea.vmem %s1909, 1040 [#allocation2]
  %v1962 = vld [vmem:[%s1961] ss:$2 sm:$0xff]
  %s1963 = scalar_lea.vmem %s1909, 1056 [#allocation2]
  %v1964 = vld [vmem:[%s1963] ss:$2 sm:$0xff]
  %s1965 = scalar_lea.vmem %s1909, 1120 [#allocation2]
  %v1966 = vld [vmem:[%s1965] ss:$2 sm:$0xff]
  %s1967 = scalar_lea.vmem %s1909, 1136 [#allocation2]
  %v1968 = vld [vmem:[%s1967] ss:$2 sm:$0xff]
  %s1969 = scalar_lea.vmem %s1909, 1200 [#allocation2]
  %v1970 = vld [vmem:[%s1969] ss:$2 sm:$0xff]
  %s1971 = scalar_lea.vmem %s1909, 1216 [#allocation2]
  %v1972 = vld [vmem:[%s1971] ss:$2 sm:$0xff]
  %s1973 = scalar_lea.vmem %s1909, 1360 [#allocation2]
  %v1974 = vld [vmem:[%s1973] ss:$2 sm:$0xff]
  %s1975 = scalar_lea.vmem %s1909, 1376 [#allocation2]
  %v1976 = vld [vmem:[%s1975] ss:$2 sm:$0xff]
  %s1977 = scalar_lea.vmem %s1909, 1440 [#allocation2]
  %v1978 = vld [vmem:[%s1977] ss:$2 sm:$0xff]
  %s1979 = scalar_lea.vmem %s1909, 1456 [#allocation2]
  %v1980 = vld [vmem:[%s1979] ss:$2 sm:$0xff]
  %s1981 = scalar_lea.vmem %s1909, 1520 [#allocation2]
  %v1982 = vld [vmem:[%s1981] ss:$2 sm:$0xff]
  %s1983 = scalar_lea.vmem %s1909, 1536 [#allocation2]
  %v1984 = vld [vmem:[%s1983] ss:$2 sm:$0xff]
  %s1985 = scalar_lea.vmem %s1909, 1600 [#allocation2]
  %v1986 = vld [vmem:[%s1985] ss:$2 sm:$0xff]
  %s1987 = scalar_lea.vmem %s1909, 1616 [#allocation2]
  %v1988 = vld [vmem:[%s1987] ss:$2 sm:$0xff]
  %s1989 = scalar_lea.vmem %s1909, 1680 [#allocation2]
  %v1990 = vld [vmem:[%s1989] ss:$2 sm:$0xff]
  %s1991 = scalar_lea.vmem %s1909, 1696 [#allocation2]
  %v1992 = vld [vmem:[%s1991] ss:$2 sm:$0xff]
  %s1993 = scalar_lea.vmem %s1909, 1760 [#allocation2]
  %v1994 = vld [vmem:[%s1993] ss:$2 sm:$0xff]
  %s1995 = scalar_lea.vmem %s1909, 1776 [#allocation2]
  %v1996 = vld [vmem:[%s1995] ss:$2 sm:$0xff]
  %s1997 = scalar_lea.vmem %s1909, 1840 [#allocation2]
  %v1998 = vld [vmem:[%s1997] ss:$2 sm:$0xff]
  %s1999 = scalar_lea.vmem %s1909, 1856 [#allocation2]
  %v2000 = vld [vmem:[%s1999] ss:$2 sm:$0xff]
  %s2001 = scalar_lea.vmem %s1909, 1920 [#allocation2]
  %v2002 = vld [vmem:[%s2001] ss:$2 sm:$0xff]
  %s2003 = scalar_lea.vmem %s1909, 1936 [#allocation2]
  %v2004 = vld [vmem:[%s2003] ss:$2 sm:$0xff]
  %s2005 = scalar_lea.vmem %s1909, 2000 [#allocation2]
  %v2006 = vld [vmem:[%s2005] ss:$2 sm:$0xff]
  %s2007 = scalar_lea.vmem %s1909, 2016 [#allocation2]
  %v2008 = vld [vmem:[%s2007] ss:$2 sm:$0xff]
  %s2009 = scalar_lea.vmem %s1909, 2080 [#allocation2]
  %v2010 = vld [vmem:[%s2009] ss:$2 sm:$0xff]
  %s2011 = scalar_lea.vmem %s1909, 2096 [#allocation2]
  %v2012 = vld [vmem:[%s2011] ss:$2 sm:$0xff]
  %s2013 = scalar_lea.vmem %s1909, 2160 [#allocation2]
  %v2014 = vld [vmem:[%s2013] ss:$2 sm:$0xff]
  %s2015 = scalar_lea.vmem %s1909, 2176 [#allocation2]
  %v2016 = vld [vmem:[%s2015] ss:$2 sm:$0xff]
  %s2017 = scalar_lea.vmem %s1909, 2240 [#allocation2]
  %v2018 = vld [vmem:[%s2017] ss:$2 sm:$0xff]
  %s2019 = scalar_lea.vmem %s1909, 2256 [#allocation2]
  %v2020 = vld [vmem:[%s2019] ss:$2 sm:$0xff]
  %s2021 = scalar_lea.vmem %s1909, 2320 [#allocation2]
  %v2022 = vld [vmem:[%s2021] ss:$2 sm:$0xff]
  %s2023 = scalar_lea.vmem %s1909, 2336 [#allocation2]
  %v2024 = vld [vmem:[%s2023] ss:$2 sm:$0xff]
  %s2025 = scalar_lea.vmem %s1909, 2400 [#allocation2]
  %v2026 = vld [vmem:[%s2025] ss:$2 sm:$0xff]
  %s2027 = scalar_lea.vmem %s1909, 2416 [#allocation2]
  %v2028 = vld [vmem:[%s2027] ss:$2 sm:$0xff]
  %s2029 = scalar_lea.vmem %s1909, 2480 [#allocation2]
  %v2030 = vld [vmem:[%s2029] ss:$2 sm:$0xff]
  %s2031 = scalar_lea.vmem %s1909, 2496 [#allocation2]
  %v2032 = vld [vmem:[%s2031] ss:$2 sm:$0xff]
  %s2033 = scalar_lea.vmem %s1909, 2560 [#allocation2]
  %v2034 = vld [vmem:[%s2033] ss:$2 sm:$0xff]
  %s2035 = scalar_lea.vmem %s1909, 2576 [#allocation2]
  %v2036 = vld [vmem:[%s2035] ss:$2 sm:$0xff]
  %s2037 = scalar_lea.vmem %s1909, 1 [#allocation2]
  %v2038 = vld [vmem:[%s2037] ss:$2 sm:$0xff]
  %s2039 = scalar_lea.vmem %s1909, 17 [#allocation2]
  %v2040 = vld [vmem:[%s2039] ss:$2 sm:$0xff]
  %s2041 = scalar_lea.vmem %s1909, 81 [#allocation2]
  %v2042 = vld [vmem:[%s2041] ss:$2 sm:$0xff]
  %s2043 = scalar_lea.vmem %s1909, 97 [#allocation2]
  %v2044 = vld [vmem:[%s2043] ss:$2 sm:$0xff]
  %s2045 = scalar_lea.vmem %s1909, 161 [#allocation2]
  %v2046 = vld [vmem:[%s2045] ss:$2 sm:$0xff]
  %s2047 = scalar_lea.vmem %s1909, 177 [#allocation2]
  %v2048 = vld [vmem:[%s2047] ss:$2 sm:$0xff]
  %s2049 = scalar_lea.vmem %s1909, 241 [#allocation2]
  %v2050 = vld [vmem:[%s2049] ss:$2 sm:$0xff]
  %s2051 = scalar_lea.vmem %s1909, 257 [#allocation2]
  %v2052 = vld [vmem:[%s2051] ss:$2 sm:$0xff]
  %s2053 = scalar_lea.vmem %s1909, 321 [#allocation2]
  %v2054 = vld [vmem:[%s2053] ss:$2 sm:$0xff]
  %s2055 = scalar_lea.vmem %s1909, 337 [#allocation2]
  %v2056 = vld [vmem:[%s2055] ss:$2 sm:$0xff]
  %s2057 = scalar_lea.vmem %s1909, 401 [#allocation2]
  %v2058 = vld [vmem:[%s2057] ss:$2 sm:$0xff]
  %s2059 = scalar_lea.vmem %s1909, 417 [#allocation2]
  %v2060 = vld [vmem:[%s2059] ss:$2 sm:$0xff]
  %s2061 = scalar_lea.vmem %s1909, 481 [#allocation2]
  %v2062 = vld [vmem:[%s2061] ss:$2 sm:$0xff]
  %s2063 = scalar_lea.vmem %s1909, 497 [#allocation2]
  %v2064 = vld [vmem:[%s2063] ss:$2 sm:$0xff]
  %s2065 = scalar_lea.vmem %s1909, 561 [#allocation2]
  %v2066 = vld [vmem:[%s2065] ss:$2 sm:$0xff]
  %s2067 = scalar_lea.vmem %s1909, 577 [#allocation2]
  %v2068 = vld [vmem:[%s2067] ss:$2 sm:$0xff]
  %s2069 = scalar_lea.vmem %s1909, 641 [#allocation2]
  %v2070 = vld [vmem:[%s2069] ss:$2 sm:$0xff]
  %s2071 = scalar_lea.vmem %s1909, 657 [#allocation2]
  %v2072 = vld [vmem:[%s2071] ss:$2 sm:$0xff]
  %s2073 = scalar_lea.vmem %s1909, 721 [#allocation2]
  %v2074 = vld [vmem:[%s2073] ss:$2 sm:$0xff]
  %s2075 = scalar_lea.vmem %s1909, 737 [#allocation2]
  %v2076 = vld [vmem:[%s2075] ss:$2 sm:$0xff]
  %s2077 = scalar_lea.vmem %s1909, 801 [#allocation2]
  %v2078 = vld [vmem:[%s2077] ss:$2 sm:$0xff]
  %s2079 = scalar_lea.vmem %s1909, 817 [#allocation2]
  %v2080 = vld [vmem:[%s2079] ss:$2 sm:$0xff]
  %s2081 = scalar_lea.vmem %s1909, 881 [#allocation2]
  %v2082 = vld [vmem:[%s2081] ss:$2 sm:$0xff]
  %s2083 = scalar_lea.vmem %s1909, 897 [#allocation2]
  %v2084 = vld [vmem:[%s2083] ss:$2 sm:$0xff]
  %s2085 = scalar_lea.vmem %s1909, 961 [#allocation2]
  %v2086 = vld [vmem:[%s2085] ss:$2 sm:$0xff]
  %s2087 = scalar_lea.vmem %s1909, 977 [#allocation2]
  %v2088 = vld [vmem:[%s2087] ss:$2 sm:$0xff]
  %s2089 = scalar_lea.vmem %s1909, 1041 [#allocation2]
  %v2090 = vld [vmem:[%s2089] ss:$2 sm:$0xff]
  %s2091 = scalar_lea.vmem %s1909, 1057 [#allocation2]
  %v2092 = vld [vmem:[%s2091] ss:$2 sm:$0xff]
  %s2093 = scalar_lea.vmem %s1909, 1121 [#allocation2]
  %v2094 = vld [vmem:[%s2093] ss:$2 sm:$0xff]
  %s2095 = scalar_lea.vmem %s1909, 1137 [#allocation2]
  %v2096 = vld [vmem:[%s2095] ss:$2 sm:$0xff]
  %s2097 = scalar_lea.vmem %s1909, 1201 [#allocation2]
  %v2098 = vld [vmem:[%s2097] ss:$2 sm:$0xff]
  %s2099 = scalar_lea.vmem %s1909, 1217 [#allocation2]
  %v2100 = vld [vmem:[%s2099] ss:$2 sm:$0xff]
  %s2101 = scalar_lea.vmem %s1909, 1361 [#allocation2]
  %v2102 = vld [vmem:[%s2101] ss:$2 sm:$0xff]
  %s2103 = scalar_lea.vmem %s1909, 1377 [#allocation2]
  %v2104 = vld [vmem:[%s2103] ss:$2 sm:$0xff]
  %s2105 = scalar_lea.vmem %s1909, 1441 [#allocation2]
  %v2106 = vld [vmem:[%s2105] ss:$2 sm:$0xff]
  %s2107 = scalar_lea.vmem %s1909, 1457 [#allocation2]
  %v2108 = vld [vmem:[%s2107] ss:$2 sm:$0xff]
  %s2109 = scalar_lea.vmem %s1909, 1521 [#allocation2]
  %v2110 = vld [vmem:[%s2109] ss:$2 sm:$0xff]
  %s2111 = scalar_lea.vmem %s1909, 1537 [#allocation2]
  %v2112 = vld [vmem:[%s2111] ss:$2 sm:$0xff]
  %s2113 = scalar_lea.vmem %s1909, 1601 [#allocation2]
  %v2114 = vld [vmem:[%s2113] ss:$2 sm:$0xff]
  %s2115 = scalar_lea.vmem %s1909, 1617 [#allocation2]
  %v2116 = vld [vmem:[%s2115] ss:$2 sm:$0xff]
  %s2117 = scalar_lea.vmem %s1909, 1681 [#allocation2]
  %v2118 = vld [vmem:[%s2117] ss:$2 sm:$0xff]
  %s2119 = scalar_lea.vmem %s1909, 1697 [#allocation2]
  %v2120 = vld [vmem:[%s2119] ss:$2 sm:$0xff]
  %s2121 = scalar_lea.vmem %s1909, 1761 [#allocation2]
  %v2122 = vld [vmem:[%s2121] ss:$2 sm:$0xff]
  %s2123 = scalar_lea.vmem %s1909, 1777 [#allocation2]
  %v2124 = vld [vmem:[%s2123] ss:$2 sm:$0xff]
  %s2125 = scalar_lea.vmem %s1909, 1841 [#allocation2]
  %v2126 = vld [vmem:[%s2125] ss:$2 sm:$0xff]
  %s2127 = scalar_lea.vmem %s1909, 1857 [#allocation2]
  %v2128 = vld [vmem:[%s2127] ss:$2 sm:$0xff]
  %s2129 = scalar_lea.vmem %s1909, 1921 [#allocation2]
  %v2130 = vld [vmem:[%s2129] ss:$2 sm:$0xff]
  %s2131 = scalar_lea.vmem %s1909, 1937 [#allocation2]
  %v2132 = vld [vmem:[%s2131] ss:$2 sm:$0xff]
  %s2133 = scalar_lea.vmem %s1909, 2001 [#allocation2]
  %v2134 = vld [vmem:[%s2133] ss:$2 sm:$0xff]
  %s2135 = scalar_lea.vmem %s1909, 2017 [#allocation2]
  %v2136 = vld [vmem:[%s2135] ss:$2 sm:$0xff]
  %s2137 = scalar_lea.vmem %s1909, 2081 [#allocation2]
  %v2138 = vld [vmem:[%s2137] ss:$2 sm:$0xff]
  %s2139 = scalar_lea.vmem %s1909, 2097 [#allocation2]
  %v2140 = vld [vmem:[%s2139] ss:$2 sm:$0xff]
  %s2141 = scalar_lea.vmem %s1909, 2161 [#allocation2]
  %v2142 = vld [vmem:[%s2141] ss:$2 sm:$0xff]
  %s2143 = scalar_lea.vmem %s1909, 2177 [#allocation2]
  %v2144 = vld [vmem:[%s2143] ss:$2 sm:$0xff]
  %s2145 = scalar_lea.vmem %s1909, 2241 [#allocation2]
  %v2146 = vld [vmem:[%s2145] ss:$2 sm:$0xff]
  %s2147 = scalar_lea.vmem %s1909, 2257 [#allocation2]
  %v2148 = vld [vmem:[%s2147] ss:$2 sm:$0xff]
  %s2149 = scalar_lea.vmem %s1909, 2321 [#allocation2]
  %v2150 = vld [vmem:[%s2149] ss:$2 sm:$0xff]
  %s2151 = scalar_lea.vmem %s1909, 2337 [#allocation2]
  %v2152 = vld [vmem:[%s2151] ss:$2 sm:$0xff]
  %s2153 = scalar_lea.vmem %s1909, 2401 [#allocation2]
  %v2154 = vld [vmem:[%s2153] ss:$2 sm:$0xff]
  %s2155 = scalar_lea.vmem %s1909, 2417 [#allocation2]
  %v2156 = vld [vmem:[%s2155] ss:$2 sm:$0xff]
  %s2157 = scalar_lea.vmem %s1909, 2481 [#allocation2]
  %v2158 = vld [vmem:[%s2157] ss:$2 sm:$0xff]
  %s2159 = scalar_lea.vmem %s1909, 2497 [#allocation2]
  %v2160 = vld [vmem:[%s2159] ss:$2 sm:$0xff]
  %s2161 = scalar_lea.vmem %s1909, 2561 [#allocation2]
  %v2162 = vld [vmem:[%s2161] ss:$2 sm:$0xff]
  %s2163 = scalar_lea.vmem %s1909, 2577 [#allocation2]
  %v2164 = vld [vmem:[%s2163] ss:$2 sm:$0xff]
  %s2165 = scalar_lea.vmem %s1909, 2 [#allocation2]
  %v2166 = vld [vmem:[%s2165] ss:$2 sm:$0xff]
  %s2167 = scalar_lea.vmem %s1909, 18 [#allocation2]
  %v2168 = vld [vmem:[%s2167] ss:$2 sm:$0xff]
  %s2169 = scalar_lea.vmem %s1909, 82 [#allocation2]
  %v2170 = vld [vmem:[%s2169] ss:$2 sm:$0xff]
  %s2171 = scalar_lea.vmem %s1909, 98 [#allocation2]
  %v2172 = vld [vmem:[%s2171] ss:$2 sm:$0xff]
  %s2173 = scalar_lea.vmem %s1909, 162 [#allocation2]
  %v2174 = vld [vmem:[%s2173] ss:$2 sm:$0xff]
  %s2175 = scalar_lea.vmem %s1909, 178 [#allocation2]
  %v2176 = vld [vmem:[%s2175] ss:$2 sm:$0xff]
  %s2177 = scalar_lea.vmem %s1909, 242 [#allocation2]
  %v2178 = vld [vmem:[%s2177] ss:$2 sm:$0xff]
  %s2179 = scalar_lea.vmem %s1909, 258 [#allocation2]
  %v2180 = vld [vmem:[%s2179] ss:$2 sm:$0xff]
  %s2181 = scalar_lea.vmem %s1909, 322 [#allocation2]
  %v2182 = vld [vmem:[%s2181] ss:$2 sm:$0xff]
  %s2183 = scalar_lea.vmem %s1909, 338 [#allocation2]
  %v2184 = vld [vmem:[%s2183] ss:$2 sm:$0xff]
  %s2185 = scalar_lea.vmem %s1909, 402 [#allocation2]
  %v2186 = vld [vmem:[%s2185] ss:$2 sm:$0xff]
  %s2187 = scalar_lea.vmem %s1909, 418 [#allocation2]
  %v2188 = vld [vmem:[%s2187] ss:$2 sm:$0xff]
  %s2189 = scalar_lea.vmem %s1909, 482 [#allocation2]
  %v2190 = vld [vmem:[%s2189] ss:$2 sm:$0xff]
  %s2191 = scalar_lea.vmem %s1909, 498 [#allocation2]
  %v2192 = vld [vmem:[%s2191] ss:$2 sm:$0xff]
  %s2193 = scalar_lea.vmem %s1909, 562 [#allocation2]
  %v2194 = vld [vmem:[%s2193] ss:$2 sm:$0xff]
  %s2195 = scalar_lea.vmem %s1909, 578 [#allocation2]
  %v2196 = vld [vmem:[%s2195] ss:$2 sm:$0xff]
  %s2197 = scalar_lea.vmem %s1909, 642 [#allocation2]
  %v2198 = vld [vmem:[%s2197] ss:$2 sm:$0xff]
  %s2199 = scalar_lea.vmem %s1909, 658 [#allocation2]
  %v2200 = vld [vmem:[%s2199] ss:$2 sm:$0xff]
  %s2201 = scalar_lea.vmem %s1909, 722 [#allocation2]
  %v2202 = vld [vmem:[%s2201] ss:$2 sm:$0xff]
  %s2203 = scalar_lea.vmem %s1909, 738 [#allocation2]
  %v2204 = vld [vmem:[%s2203] ss:$2 sm:$0xff]
  %s2205 = scalar_lea.vmem %s1909, 802 [#allocation2]
  %v2206 = vld [vmem:[%s2205] ss:$2 sm:$0xff]
  %s2207 = scalar_lea.vmem %s1909, 818 [#allocation2]
  %v2208 = vld [vmem:[%s2207] ss:$2 sm:$0xff]
  %s2209 = scalar_lea.vmem %s1909, 882 [#allocation2]
  %v2210 = vld [vmem:[%s2209] ss:$2 sm:$0xff]
  %s2211 = scalar_lea.vmem %s1909, 898 [#allocation2]
  %v2212 = vld [vmem:[%s2211] ss:$2 sm:$0xff]
  %s2213 = scalar_lea.vmem %s1909, 962 [#allocation2]
  %v2214 = vld [vmem:[%s2213] ss:$2 sm:$0xff]
  %s2215 = scalar_lea.vmem %s1909, 978 [#allocation2]
  %v2216 = vld [vmem:[%s2215] ss:$2 sm:$0xff]
  %s2217 = scalar_lea.vmem %s1909, 1042 [#allocation2]
  %v2218 = vld [vmem:[%s2217] ss:$2 sm:$0xff]
  %s2219 = scalar_lea.vmem %s1909, 1058 [#allocation2]
  %v2220 = vld [vmem:[%s2219] ss:$2 sm:$0xff]
  %s2221 = scalar_lea.vmem %s1909, 1122 [#allocation2]
  %v2222 = vld [vmem:[%s2221] ss:$2 sm:$0xff]
  %s2223 = scalar_lea.vmem %s1909, 1138 [#allocation2]
  %v2224 = vld [vmem:[%s2223] ss:$2 sm:$0xff]
  %s2225 = scalar_lea.vmem %s1909, 1202 [#allocation2]
  %v2226 = vld [vmem:[%s2225] ss:$2 sm:$0xff]
  %s2227 = scalar_lea.vmem %s1909, 1218 [#allocation2]
  %v2228 = vld [vmem:[%s2227] ss:$2 sm:$0xff]
  %s2229 = scalar_lea.vmem %s1909, 1362 [#allocation2]
  %v2230 = vld [vmem:[%s2229] ss:$2 sm:$0xff]
  %s2231 = scalar_lea.vmem %s1909, 1378 [#allocation2]
  %v2232 = vld [vmem:[%s2231] ss:$2 sm:$0xff]
  %s2233 = scalar_lea.vmem %s1909, 1442 [#allocation2]
  %v2234 = vld [vmem:[%s2233] ss:$2 sm:$0xff]
  %s2235 = scalar_lea.vmem %s1909, 1458 [#allocation2]
  %v2236 = vld [vmem:[%s2235] ss:$2 sm:$0xff]
  %s2237 = scalar_lea.vmem %s1909, 1522 [#allocation2]
  %v2238 = vld [vmem:[%s2237] ss:$2 sm:$0xff]
  %s2239 = scalar_lea.vmem %s1909, 1538 [#allocation2]
  %v2240 = vld [vmem:[%s2239] ss:$2 sm:$0xff]
  %s2241 = scalar_lea.vmem %s1909, 1602 [#allocation2]
  %v2242 = vld [vmem:[%s2241] ss:$2 sm:$0xff]
  %s2243 = scalar_lea.vmem %s1909, 1618 [#allocation2]
  %v2244 = vld [vmem:[%s2243] ss:$2 sm:$0xff]
  %s2245 = scalar_lea.vmem %s1909, 1682 [#allocation2]
  %v2246 = vld [vmem:[%s2245] ss:$2 sm:$0xff]
  %s2247 = scalar_lea.vmem %s1909, 1698 [#allocation2]
  %v2248 = vld [vmem:[%s2247] ss:$2 sm:$0xff]
  %s2249 = scalar_lea.vmem %s1909, 1762 [#allocation2]
  %v2250 = vld [vmem:[%s2249] ss:$2 sm:$0xff]
  %s2251 = scalar_lea.vmem %s1909, 1778 [#allocation2]
  %v2252 = vld [vmem:[%s2251] ss:$2 sm:$0xff]
  %s2253 = scalar_lea.vmem %s1909, 1842 [#allocation2]
  %v2254 = vld [vmem:[%s2253] ss:$2 sm:$0xff]
  %s2255 = scalar_lea.vmem %s1909, 1858 [#allocation2]
  %v2256 = vld [vmem:[%s2255] ss:$2 sm:$0xff]
  %s2257 = scalar_lea.vmem %s1909, 1922 [#allocation2]
  %v2258 = vld [vmem:[%s2257] ss:$2 sm:$0xff]
  %s2259 = scalar_lea.vmem %s1909, 1938 [#allocation2]
  %v2260 = vld [vmem:[%s2259] ss:$2 sm:$0xff]
  %s2261 = scalar_lea.vmem %s1909, 2002 [#allocation2]
  %v2262 = vld [vmem:[%s2261] ss:$2 sm:$0xff]
  %s2263 = scalar_lea.vmem %s1909, 2018 [#allocation2]
  %v2264 = vld [vmem:[%s2263] ss:$2 sm:$0xff]
  %s2265 = scalar_lea.vmem %s1909, 2082 [#allocation2]
  %v2266 = vld [vmem:[%s2265] ss:$2 sm:$0xff]
  %s2267 = scalar_lea.vmem %s1909, 2098 [#allocation2]
  %v2268 = vld [vmem:[%s2267] ss:$2 sm:$0xff]
  %s2269 = scalar_lea.vmem %s1909, 2162 [#allocation2]
  %v2270 = vld [vmem:[%s2269] ss:$2 sm:$0xff]
  %s2271 = scalar_lea.vmem %s1909, 2178 [#allocation2]
  %v2272 = vld [vmem:[%s2271] ss:$2 sm:$0xff]
  %s2273 = scalar_lea.vmem %s1909, 2242 [#allocation2]
  %v2274 = vld [vmem:[%s2273] ss:$2 sm:$0xff]
  %s2275 = scalar_lea.vmem %s1909, 2258 [#allocation2]
  %v2276 = vld [vmem:[%s2275] ss:$2 sm:$0xff]
  %s2277 = scalar_lea.vmem %s1909, 2322 [#allocation2]
  %v2278 = vld [vmem:[%s2277] ss:$2 sm:$0xff]
  %s2279 = scalar_lea.vmem %s1909, 2338 [#allocation2]
  %v2280 = vld [vmem:[%s2279] ss:$2 sm:$0xff]
  %s2281 = scalar_lea.vmem %s1909, 2402 [#allocation2]
  %v2282 = vld [vmem:[%s2281] ss:$2 sm:$0xff]
  %s2283 = scalar_lea.vmem %s1909, 2418 [#allocation2]
  %v2284 = vld [vmem:[%s2283] ss:$2 sm:$0xff]
  %s2285 = scalar_lea.vmem %s1909, 2482 [#allocation2]
  %v2286 = vld [vmem:[%s2285] ss:$2 sm:$0xff]
  %s2287 = scalar_lea.vmem %s1909, 2498 [#allocation2]
  %v2288 = vld [vmem:[%s2287] ss:$2 sm:$0xff]
  %s2289 = scalar_lea.vmem %s1909, 2562 [#allocation2]
  %v2290 = vld [vmem:[%s2289] ss:$2 sm:$0xff]
  %s2291 = scalar_lea.vmem %s1909, 2578 [#allocation2]
  %v2292 = vld [vmem:[%s2291] ss:$2 sm:$0xff]
  %s2293 = scalar_lea.vmem %s1909, 3 [#allocation2]
  %v2294 = vld [vmem:[%s2293] ss:$2 sm:$0xff]
  %s2295 = scalar_lea.vmem %s1909, 19 [#allocation2]
  %v2296 = vld [vmem:[%s2295] ss:$2 sm:$0xff]
  %s2297 = scalar_lea.vmem %s1909, 83 [#allocation2]
  %v2298 = vld [vmem:[%s2297] ss:$2 sm:$0xff]
  %s2299 = scalar_lea.vmem %s1909, 99 [#allocation2]
  %v2300 = vld [vmem:[%s2299] ss:$2 sm:$0xff]
  %s2301 = scalar_lea.vmem %s1909, 163 [#allocation2]
  %v2302 = vld [vmem:[%s2301] ss:$2 sm:$0xff]
  %s2303 = scalar_lea.vmem %s1909, 179 [#allocation2]
  %v2304 = vld [vmem:[%s2303] ss:$2 sm:$0xff]
  %s2305 = scalar_lea.vmem %s1909, 243 [#allocation2]
  %v2306 = vld [vmem:[%s2305] ss:$2 sm:$0xff]
  %s2307 = scalar_lea.vmem %s1909, 259 [#allocation2]
  %v2308 = vld [vmem:[%s2307] ss:$2 sm:$0xff]
  %s2309 = scalar_lea.vmem %s1909, 323 [#allocation2]
  %v2310 = vld [vmem:[%s2309] ss:$2 sm:$0xff]
  %s2311 = scalar_lea.vmem %s1909, 339 [#allocation2]
  %v2312 = vld [vmem:[%s2311] ss:$2 sm:$0xff]
  %s2313 = scalar_lea.vmem %s1909, 403 [#allocation2]
  %v2314 = vld [vmem:[%s2313] ss:$2 sm:$0xff]
  %s2315 = scalar_lea.vmem %s1909, 419 [#allocation2]
  %v2316 = vld [vmem:[%s2315] ss:$2 sm:$0xff]
  %s2317 = scalar_lea.vmem %s1909, 483 [#allocation2]
  %v2318 = vld [vmem:[%s2317] ss:$2 sm:$0xff]
  %s2319 = scalar_lea.vmem %s1909, 499 [#allocation2]
  %v2320 = vld [vmem:[%s2319] ss:$2 sm:$0xff]
  %s2321 = scalar_lea.vmem %s1909, 563 [#allocation2]
  %v2322 = vld [vmem:[%s2321] ss:$2 sm:$0xff]
  %s2323 = scalar_lea.vmem %s1909, 579 [#allocation2]
  %v2324 = vld [vmem:[%s2323] ss:$2 sm:$0xff]
  %s2325 = scalar_lea.vmem %s1909, 643 [#allocation2]
  %v2326 = vld [vmem:[%s2325] ss:$2 sm:$0xff]
  %s2327 = scalar_lea.vmem %s1909, 659 [#allocation2]
  %v2328 = vld [vmem:[%s2327] ss:$2 sm:$0xff]
  %s2329 = scalar_lea.vmem %s1909, 723 [#allocation2]
  %v2330 = vld [vmem:[%s2329] ss:$2 sm:$0xff]
  %s2331 = scalar_lea.vmem %s1909, 739 [#allocation2]
  %v2332 = vld [vmem:[%s2331] ss:$2 sm:$0xff]
  %s2333 = scalar_lea.vmem %s1909, 803 [#allocation2]
  %v2334 = vld [vmem:[%s2333] ss:$2 sm:$0xff]
  %s2335 = scalar_lea.vmem %s1909, 819 [#allocation2]
  %v2336 = vld [vmem:[%s2335] ss:$2 sm:$0xff]
  %s2337 = scalar_lea.vmem %s1909, 883 [#allocation2]
  %v2338 = vld [vmem:[%s2337] ss:$2 sm:$0xff]
  %s2339 = scalar_lea.vmem %s1909, 899 [#allocation2]
  %v2340 = vld [vmem:[%s2339] ss:$2 sm:$0xff]
  %s2341 = scalar_lea.vmem %s1909, 963 [#allocation2]
  %v2342 = vld [vmem:[%s2341] ss:$2 sm:$0xff]
  %s2343 = scalar_lea.vmem %s1909, 979 [#allocation2]
  %v2344 = vld [vmem:[%s2343] ss:$2 sm:$0xff]
  %s2345 = scalar_lea.vmem %s1909, 1043 [#allocation2]
  %v2346 = vld [vmem:[%s2345] ss:$2 sm:$0xff]
  %s2347 = scalar_lea.vmem %s1909, 1059 [#allocation2]
  %v2348 = vld [vmem:[%s2347] ss:$2 sm:$0xff]
  %s2349 = scalar_lea.vmem %s1909, 1123 [#allocation2]
  %v2350 = vld [vmem:[%s2349] ss:$2 sm:$0xff]
  %s2351 = scalar_lea.vmem %s1909, 1139 [#allocation2]
  %v2352 = vld [vmem:[%s2351] ss:$2 sm:$0xff]
  %s2353 = scalar_lea.vmem %s1909, 1203 [#allocation2]
  %v2354 = vld [vmem:[%s2353] ss:$2 sm:$0xff]
  %s2355 = scalar_lea.vmem %s1909, 1219 [#allocation2]
  %v2356 = vld [vmem:[%s2355] ss:$2 sm:$0xff]
  %s2357 = scalar_lea.vmem %s1909, 1363 [#allocation2]
  %v2358 = vld [vmem:[%s2357] ss:$2 sm:$0xff]
  %s2359 = scalar_lea.vmem %s1909, 1379 [#allocation2]
  %v2360 = vld [vmem:[%s2359] ss:$2 sm:$0xff]
  %s2361 = scalar_lea.vmem %s1909, 1443 [#allocation2]
  %v2362 = vld [vmem:[%s2361] ss:$2 sm:$0xff]
  %s2363 = scalar_lea.vmem %s1909, 1459 [#allocation2]
  %v2364 = vld [vmem:[%s2363] ss:$2 sm:$0xff]
  %s2365 = scalar_lea.vmem %s1909, 1523 [#allocation2]
  %v2366 = vld [vmem:[%s2365] ss:$2 sm:$0xff]
  %s2367 = scalar_lea.vmem %s1909, 1539 [#allocation2]
  %v2368 = vld [vmem:[%s2367] ss:$2 sm:$0xff]
  %s2369 = scalar_lea.vmem %s1909, 1603 [#allocation2]
  %v2370 = vld [vmem:[%s2369] ss:$2 sm:$0xff]
  %s2371 = scalar_lea.vmem %s1909, 1619 [#allocation2]
  %v2372 = vld [vmem:[%s2371] ss:$2 sm:$0xff]
  %s2373 = scalar_lea.vmem %s1909, 1683 [#allocation2]
  %v2374 = vld [vmem:[%s2373] ss:$2 sm:$0xff]
  %s2375 = scalar_lea.vmem %s1909, 1699 [#allocation2]
  %v2376 = vld [vmem:[%s2375] ss:$2 sm:$0xff]
  %s2377 = scalar_lea.vmem %s1909, 1763 [#allocation2]
  %v2378 = vld [vmem:[%s2377] ss:$2 sm:$0xff]
  %s2379 = scalar_lea.vmem %s1909, 1779 [#allocation2]
  %v2380 = vld [vmem:[%s2379] ss:$2 sm:$0xff]
  %s2381 = scalar_lea.vmem %s1909, 1843 [#allocation2]
  %v2382 = vld [vmem:[%s2381] ss:$2 sm:$0xff]
  %s2383 = scalar_lea.vmem %s1909, 1859 [#allocation2]
  %v2384 = vld [vmem:[%s2383] ss:$2 sm:$0xff]
  %s2385 = scalar_lea.vmem %s1909, 1923 [#allocation2]
  %v2386 = vld [vmem:[%s2385] ss:$2 sm:$0xff]
  %s2387 = scalar_lea.vmem %s1909, 1939 [#allocation2]
  %v2388 = vld [vmem:[%s2387] ss:$2 sm:$0xff]
  %s2389 = scalar_lea.vmem %s1909, 2003 [#allocation2]
  %v2390 = vld [vmem:[%s2389] ss:$2 sm:$0xff]
  %s2391 = scalar_lea.vmem %s1909, 2019 [#allocation2]
  %v2392 = vld [vmem:[%s2391] ss:$2 sm:$0xff]
  %s2393 = scalar_lea.vmem %s1909, 2083 [#allocation2]
  %v2394 = vld [vmem:[%s2393] ss:$2 sm:$0xff]
  %s2395 = scalar_lea.vmem %s1909, 2099 [#allocation2]
  %v2396 = vld [vmem:[%s2395] ss:$2 sm:$0xff]
  %s2397 = scalar_lea.vmem %s1909, 2163 [#allocation2]
  %v2398 = vld [vmem:[%s2397] ss:$2 sm:$0xff]
  %s2399 = scalar_lea.vmem %s1909, 2179 [#allocation2]
  %v2400 = vld [vmem:[%s2399] ss:$2 sm:$0xff]
  %s2401 = scalar_lea.vmem %s1909, 2243 [#allocation2]
  %v2402 = vld [vmem:[%s2401] ss:$2 sm:$0xff]
  %s2403 = scalar_lea.vmem %s1909, 2259 [#allocation2]
  %v2404 = vld [vmem:[%s2403] ss:$2 sm:$0xff]
  %s2405 = scalar_lea.vmem %s1909, 2323 [#allocation2]
  %v2406 = vld [vmem:[%s2405] ss:$2 sm:$0xff]
  %s2407 = scalar_lea.vmem %s1909, 2339 [#allocation2]
  %v2408 = vld [vmem:[%s2407] ss:$2 sm:$0xff]
  %s2409 = scalar_lea.vmem %s1909, 2403 [#allocation2]
  %v2410 = vld [vmem:[%s2409] ss:$2 sm:$0xff]
  %s2411 = scalar_lea.vmem %s1909, 2419 [#allocation2]
  %v2412 = vld [vmem:[%s2411] ss:$2 sm:$0xff]
  %s2413 = scalar_lea.vmem %s1909, 2483 [#allocation2]
  %v2414 = vld [vmem:[%s2413] ss:$2 sm:$0xff]
  %s2415 = scalar_lea.vmem %s1909, 2499 [#allocation2]
  %v2416 = vld [vmem:[%s2415] ss:$2 sm:$0xff]
  %s2417 = scalar_lea.vmem %s1909, 2563 [#allocation2]
  %v2418 = vld [vmem:[%s2417] ss:$2 sm:$0xff]
  %s2419 = scalar_lea.vmem %s1909, 2579 [#allocation2]
  %v2420 = vld [vmem:[%s2419] ss:$2 sm:$0xff]
  %s2421 = scalar_lea.vmem [#allocation2], 120
  %v2422 = vld [vmem:[%s2421] ss:$2 sm:$0xff]
  %s2423 = scalar_lea.vmem %s2421, 16 [#allocation2]
  %v2424 = vld [vmem:[%s2423] ss:$2 sm:$0xff]
  %s2425 = scalar_lea.vmem %s2421, 80 [#allocation2]
  %v2426 = vld [vmem:[%s2425] ss:$2 sm:$0xff]
  %s2427 = scalar_lea.vmem %s2421, 96 [#allocation2]
  %v2428 = vld [vmem:[%s2427] ss:$2 sm:$0xff]
  %s2429 = scalar_lea.vmem %s2421, 160 [#allocation2]
  %v2430 = vld [vmem:[%s2429] ss:$2 sm:$0xff]
  %s2431 = scalar_lea.vmem %s2421, 176 [#allocation2]
  %v2432 = vld [vmem:[%s2431] ss:$2 sm:$0xff]
  %s2433 = scalar_lea.vmem %s2421, 240 [#allocation2]
  %v2434 = vld [vmem:[%s2433] ss:$2 sm:$0xff]
  %s2435 = scalar_lea.vmem %s2421, 256 [#allocation2]
  %v2436 = vld [vmem:[%s2435] ss:$2 sm:$0xff]
  %s2437 = scalar_lea.vmem %s2421, 320 [#allocation2]
  %v2438 = vld [vmem:[%s2437] ss:$2 sm:$0xff]
  %s2439 = scalar_lea.vmem %s2421, 336 [#allocation2]
  %v2440 = vld [vmem:[%s2439] ss:$2 sm:$0xff]
  %s2441 = scalar_lea.vmem %s2421, 400 [#allocation2]
  %v2442 = vld [vmem:[%s2441] ss:$2 sm:$0xff]
  %s2443 = scalar_lea.vmem %s2421, 416 [#allocation2]
  %v2444 = vld [vmem:[%s2443] ss:$2 sm:$0xff]
  %s2445 = scalar_lea.vmem %s2421, 480 [#allocation2]
  %v2446 = vld [vmem:[%s2445] ss:$2 sm:$0xff]
  %s2447 = scalar_lea.vmem %s2421, 496 [#allocation2]
  %v2448 = vld [vmem:[%s2447] ss:$2 sm:$0xff]
  %s2449 = scalar_lea.vmem %s2421, 560 [#allocation2]
  %v2450 = vld [vmem:[%s2449] ss:$2 sm:$0xff]
  %s2451 = scalar_lea.vmem %s2421, 576 [#allocation2]
  %v2452 = vld [vmem:[%s2451] ss:$2 sm:$0xff]
  %s2453 = scalar_lea.vmem %s2421, 640 [#allocation2]
  %v2454 = vld [vmem:[%s2453] ss:$2 sm:$0xff]
  %s2455 = scalar_lea.vmem %s2421, 656 [#allocation2]
  %v2456 = vld [vmem:[%s2455] ss:$2 sm:$0xff]
  %s2457 = scalar_lea.vmem %s2421, 720 [#allocation2]
  %v2458 = vld [vmem:[%s2457] ss:$2 sm:$0xff]
  %s2459 = scalar_lea.vmem %s2421, 736 [#allocation2]
  %v2460 = vld [vmem:[%s2459] ss:$2 sm:$0xff]
  %s2461 = scalar_lea.vmem %s2421, 800 [#allocation2]
  %v2462 = vld [vmem:[%s2461] ss:$2 sm:$0xff]
  %s2463 = scalar_lea.vmem %s2421, 816 [#allocation2]
  %v2464 = vld [vmem:[%s2463] ss:$2 sm:$0xff]
  %s2465 = scalar_lea.vmem %s2421, 880 [#allocation2]
  %v2466 = vld [vmem:[%s2465] ss:$2 sm:$0xff]
  %s2467 = scalar_lea.vmem %s2421, 896 [#allocation2]
  %v2468 = vld [vmem:[%s2467] ss:$2 sm:$0xff]
  %s2469 = scalar_lea.vmem %s2421, 960 [#allocation2]
  %v2470 = vld [vmem:[%s2469] ss:$2 sm:$0xff]
  %s2471 = scalar_lea.vmem %s2421, 976 [#allocation2]
  %v2472 = vld [vmem:[%s2471] ss:$2 sm:$0xff]
  %s2473 = scalar_lea.vmem %s2421, 1040 [#allocation2]
  %v2474 = vld [vmem:[%s2473] ss:$2 sm:$0xff]
  %s2475 = scalar_lea.vmem %s2421, 1056 [#allocation2]
  %v2476 = vld [vmem:[%s2475] ss:$2 sm:$0xff]
  %s2477 = scalar_lea.vmem %s2421, 1120 [#allocation2]
  %v2478 = vld [vmem:[%s2477] ss:$2 sm:$0xff]
  %s2479 = scalar_lea.vmem %s2421, 1136 [#allocation2]
  %v2480 = vld [vmem:[%s2479] ss:$2 sm:$0xff]
  %s2481 = scalar_lea.vmem %s2421, 1200 [#allocation2]
  %v2482 = vld [vmem:[%s2481] ss:$2 sm:$0xff]
  %s2483 = scalar_lea.vmem %s2421, 1216 [#allocation2]
  %v2484 = vld [vmem:[%s2483] ss:$2 sm:$0xff]
  %s2485 = scalar_lea.vmem %s2421, 1360 [#allocation2]
  %v2486 = vld [vmem:[%s2485] ss:$2 sm:$0xff]
  %s2487 = scalar_lea.vmem %s2421, 1376 [#allocation2]
  %v2488 = vld [vmem:[%s2487] ss:$2 sm:$0xff]
  %s2489 = scalar_lea.vmem %s2421, 1440 [#allocation2]
  %v2490 = vld [vmem:[%s2489] ss:$2 sm:$0xff]
  %s2491 = scalar_lea.vmem %s2421, 1456 [#allocation2]
  %v2492 = vld [vmem:[%s2491] ss:$2 sm:$0xff]
  %s2493 = scalar_lea.vmem %s2421, 1520 [#allocation2]
  %v2494 = vld [vmem:[%s2493] ss:$2 sm:$0xff]
  %s2495 = scalar_lea.vmem %s2421, 1536 [#allocation2]
  %v2496 = vld [vmem:[%s2495] ss:$2 sm:$0xff]
  %s2497 = scalar_lea.vmem %s2421, 1600 [#allocation2]
  %v2498 = vld [vmem:[%s2497] ss:$2 sm:$0xff]
  %s2499 = scalar_lea.vmem %s2421, 1616 [#allocation2]
  %v2500 = vld [vmem:[%s2499] ss:$2 sm:$0xff]
  %s2501 = scalar_lea.vmem %s2421, 1680 [#allocation2]
  %v2502 = vld [vmem:[%s2501] ss:$2 sm:$0xff]
  %s2503 = scalar_lea.vmem %s2421, 1696 [#allocation2]
  %v2504 = vld [vmem:[%s2503] ss:$2 sm:$0xff]
  %s2505 = scalar_lea.vmem %s2421, 1760 [#allocation2]
  %v2506 = vld [vmem:[%s2505] ss:$2 sm:$0xff]
  %s2507 = scalar_lea.vmem %s2421, 1776 [#allocation2]
  %v2508 = vld [vmem:[%s2507] ss:$2 sm:$0xff]
  %s2509 = scalar_lea.vmem %s2421, 1840 [#allocation2]
  %v2510 = vld [vmem:[%s2509] ss:$2 sm:$0xff]
  %s2511 = scalar_lea.vmem %s2421, 1856 [#allocation2]
  %v2512 = vld [vmem:[%s2511] ss:$2 sm:$0xff]
  %s2513 = scalar_lea.vmem %s2421, 1920 [#allocation2]
  %v2514 = vld [vmem:[%s2513] ss:$2 sm:$0xff]
  %s2515 = scalar_lea.vmem %s2421, 1936 [#allocation2]
  %v2516 = vld [vmem:[%s2515] ss:$2 sm:$0xff]
  %s2517 = scalar_lea.vmem %s2421, 2000 [#allocation2]
  %v2518 = vld [vmem:[%s2517] ss:$2 sm:$0xff]
  %s2519 = scalar_lea.vmem %s2421, 2016 [#allocation2]
  %v2520 = vld [vmem:[%s2519] ss:$2 sm:$0xff]
  %s2521 = scalar_lea.vmem %s2421, 2080 [#allocation2]
  %v2522 = vld [vmem:[%s2521] ss:$2 sm:$0xff]
  %s2523 = scalar_lea.vmem %s2421, 2096 [#allocation2]
  %v2524 = vld [vmem:[%s2523] ss:$2 sm:$0xff]
  %s2525 = scalar_lea.vmem %s2421, 2160 [#allocation2]
  %v2526 = vld [vmem:[%s2525] ss:$2 sm:$0xff]
  %s2527 = scalar_lea.vmem %s2421, 2176 [#allocation2]
  %v2528 = vld [vmem:[%s2527] ss:$2 sm:$0xff]
  %s2529 = scalar_lea.vmem %s2421, 2240 [#allocation2]
  %v2530 = vld [vmem:[%s2529] ss:$2 sm:$0xff]
  %s2531 = scalar_lea.vmem %s2421, 2256 [#allocation2]
  %v2532 = vld [vmem:[%s2531] ss:$2 sm:$0xff]
  %s2533 = scalar_lea.vmem %s2421, 2320 [#allocation2]
  %v2534 = vld [vmem:[%s2533] ss:$2 sm:$0xff]
  %s2535 = scalar_lea.vmem %s2421, 2336 [#allocation2]
  %v2536 = vld [vmem:[%s2535] ss:$2 sm:$0xff]
  %s2537 = scalar_lea.vmem %s2421, 2400 [#allocation2]
  %v2538 = vld [vmem:[%s2537] ss:$2 sm:$0xff]
  %s2539 = scalar_lea.vmem %s2421, 2416 [#allocation2]
  %v2540 = vld [vmem:[%s2539] ss:$2 sm:$0xff]
  %s2541 = scalar_lea.vmem %s2421, 2480 [#allocation2]
  %v2542 = vld [vmem:[%s2541] ss:$2 sm:$0xff]
  %s2543 = scalar_lea.vmem %s2421, 2496 [#allocation2]
  %v2544 = vld [vmem:[%s2543] ss:$2 sm:$0xff]
  %s2545 = scalar_lea.vmem %s2421, 2560 [#allocation2]
  %v2546 = vld [vmem:[%s2545] ss:$2 sm:$0xff]
  %s2547 = scalar_lea.vmem %s2421, 2576 [#allocation2]
  %v2548 = vld [vmem:[%s2547] ss:$2 sm:$0xff]
  %s2549 = scalar_lea.vmem %s2421, 1 [#allocation2]
  %v2550 = vld [vmem:[%s2549] ss:$2 sm:$0xff]
  %s2551 = scalar_lea.vmem %s2421, 17 [#allocation2]
  %v2552 = vld [vmem:[%s2551] ss:$2 sm:$0xff]
  %s2553 = scalar_lea.vmem %s2421, 81 [#allocation2]
  %v2554 = vld [vmem:[%s2553] ss:$2 sm:$0xff]
  %s2555 = scalar_lea.vmem %s2421, 97 [#allocation2]
  %v2556 = vld [vmem:[%s2555] ss:$2 sm:$0xff]
  %s2557 = scalar_lea.vmem %s2421, 161 [#allocation2]
  %v2558 = vld [vmem:[%s2557] ss:$2 sm:$0xff]
  %s2559 = scalar_lea.vmem %s2421, 177 [#allocation2]
  %v2560 = vld [vmem:[%s2559] ss:$2 sm:$0xff]
  %s2561 = scalar_lea.vmem %s2421, 241 [#allocation2]
  %v2562 = vld [vmem:[%s2561] ss:$2 sm:$0xff]
  %s2563 = scalar_lea.vmem %s2421, 257 [#allocation2]
  %v2564 = vld [vmem:[%s2563] ss:$2 sm:$0xff]
  %s2565 = scalar_lea.vmem %s2421, 321 [#allocation2]
  %v2566 = vld [vmem:[%s2565] ss:$2 sm:$0xff]
  %s2567 = scalar_lea.vmem %s2421, 337 [#allocation2]
  %v2568 = vld [vmem:[%s2567] ss:$2 sm:$0xff]
  %s2569 = scalar_lea.vmem %s2421, 401 [#allocation2]
  %v2570 = vld [vmem:[%s2569] ss:$2 sm:$0xff]
  %s2571 = scalar_lea.vmem %s2421, 417 [#allocation2]
  %v2572 = vld [vmem:[%s2571] ss:$2 sm:$0xff]
  %s2573 = scalar_lea.vmem %s2421, 481 [#allocation2]
  %v2574 = vld [vmem:[%s2573] ss:$2 sm:$0xff]
  %s2575 = scalar_lea.vmem %s2421, 497 [#allocation2]
  %v2576 = vld [vmem:[%s2575] ss:$2 sm:$0xff]
  %s2577 = scalar_lea.vmem %s2421, 561 [#allocation2]
  %v2578 = vld [vmem:[%s2577] ss:$2 sm:$0xff]
  %s2579 = scalar_lea.vmem %s2421, 577 [#allocation2]
  %v2580 = vld [vmem:[%s2579] ss:$2 sm:$0xff]
  %s2581 = scalar_lea.vmem %s2421, 641 [#allocation2]
  %v2582 = vld [vmem:[%s2581] ss:$2 sm:$0xff]
  %s2583 = scalar_lea.vmem %s2421, 657 [#allocation2]
  %v2584 = vld [vmem:[%s2583] ss:$2 sm:$0xff]
  %s2585 = scalar_lea.vmem %s2421, 721 [#allocation2]
  %v2586 = vld [vmem:[%s2585] ss:$2 sm:$0xff]
  %s2587 = scalar_lea.vmem %s2421, 737 [#allocation2]
  %v2588 = vld [vmem:[%s2587] ss:$2 sm:$0xff]
  %s2589 = scalar_lea.vmem %s2421, 801 [#allocation2]
  %v2590 = vld [vmem:[%s2589] ss:$2 sm:$0xff]
  %s2591 = scalar_lea.vmem %s2421, 817 [#allocation2]
  %v2592 = vld [vmem:[%s2591] ss:$2 sm:$0xff]
  %s2593 = scalar_lea.vmem %s2421, 881 [#allocation2]
  %v2594 = vld [vmem:[%s2593] ss:$2 sm:$0xff]
  %s2595 = scalar_lea.vmem %s2421, 897 [#allocation2]
  %v2596 = vld [vmem:[%s2595] ss:$2 sm:$0xff]
  %s2597 = scalar_lea.vmem %s2421, 961 [#allocation2]
  %v2598 = vld [vmem:[%s2597] ss:$2 sm:$0xff]
  %s2599 = scalar_lea.vmem %s2421, 977 [#allocation2]
  %v2600 = vld [vmem:[%s2599] ss:$2 sm:$0xff]
  %s2601 = scalar_lea.vmem %s2421, 1041 [#allocation2]
  %v2602 = vld [vmem:[%s2601] ss:$2 sm:$0xff]
  %s2603 = scalar_lea.vmem %s2421, 1057 [#allocation2]
  %v2604 = vld [vmem:[%s2603] ss:$2 sm:$0xff]
  %s2605 = scalar_lea.vmem %s2421, 1121 [#allocation2]
  %v2606 = vld [vmem:[%s2605] ss:$2 sm:$0xff]
  %s2607 = scalar_lea.vmem %s2421, 1137 [#allocation2]
  %v2608 = vld [vmem:[%s2607] ss:$2 sm:$0xff]
  %s2609 = scalar_lea.vmem %s2421, 1201 [#allocation2]
  %v2610 = vld [vmem:[%s2609] ss:$2 sm:$0xff]
  %s2611 = scalar_lea.vmem %s2421, 1217 [#allocation2]
  %v2612 = vld [vmem:[%s2611] ss:$2 sm:$0xff]
  %s2613 = scalar_lea.vmem %s2421, 1361 [#allocation2]
  %v2614 = vld [vmem:[%s2613] ss:$2 sm:$0xff]
  %s2615 = scalar_lea.vmem %s2421, 1377 [#allocation2]
  %v2616 = vld [vmem:[%s2615] ss:$2 sm:$0xff]
  %s2617 = scalar_lea.vmem %s2421, 1441 [#allocation2]
  %v2618 = vld [vmem:[%s2617] ss:$2 sm:$0xff]
  %s2619 = scalar_lea.vmem %s2421, 1457 [#allocation2]
  %v2620 = vld [vmem:[%s2619] ss:$2 sm:$0xff]
  %s2621 = scalar_lea.vmem %s2421, 1521 [#allocation2]
  %v2622 = vld [vmem:[%s2621] ss:$2 sm:$0xff]
  %s2623 = scalar_lea.vmem %s2421, 1537 [#allocation2]
  %v2624 = vld [vmem:[%s2623] ss:$2 sm:$0xff]
  %s2625 = scalar_lea.vmem %s2421, 1601 [#allocation2]
  %v2626 = vld [vmem:[%s2625] ss:$2 sm:$0xff]
  %s2627 = scalar_lea.vmem %s2421, 1617 [#allocation2]
  %v2628 = vld [vmem:[%s2627] ss:$2 sm:$0xff]
  %s2629 = scalar_lea.vmem %s2421, 1681 [#allocation2]
  %v2630 = vld [vmem:[%s2629] ss:$2 sm:$0xff]
  %s2631 = scalar_lea.vmem %s2421, 1697 [#allocation2]
  %v2632 = vld [vmem:[%s2631] ss:$2 sm:$0xff]
  %s2633 = scalar_lea.vmem %s2421, 1761 [#allocation2]
  %v2634 = vld [vmem:[%s2633] ss:$2 sm:$0xff]
  %s2635 = scalar_lea.vmem %s2421, 1777 [#allocation2]
  %v2636 = vld [vmem:[%s2635] ss:$2 sm:$0xff]
  %s2637 = scalar_lea.vmem %s2421, 1841 [#allocation2]
  %v2638 = vld [vmem:[%s2637] ss:$2 sm:$0xff]
  %s2639 = scalar_lea.vmem %s2421, 1857 [#allocation2]
  %v2640 = vld [vmem:[%s2639] ss:$2 sm:$0xff]
  %s2641 = scalar_lea.vmem %s2421, 1921 [#allocation2]
  %v2642 = vld [vmem:[%s2641] ss:$2 sm:$0xff]
  %s2643 = scalar_lea.vmem %s2421, 1937 [#allocation2]
  %v2644 = vld [vmem:[%s2643] ss:$2 sm:$0xff]
  %s2645 = scalar_lea.vmem %s2421, 2001 [#allocation2]
  %v2646 = vld [vmem:[%s2645] ss:$2 sm:$0xff]
  %s2647 = scalar_lea.vmem %s2421, 2017 [#allocation2]
  %v2648 = vld [vmem:[%s2647] ss:$2 sm:$0xff]
  %s2649 = scalar_lea.vmem %s2421, 2081 [#allocation2]
  %v2650 = vld [vmem:[%s2649] ss:$2 sm:$0xff]
  %s2651 = scalar_lea.vmem %s2421, 2097 [#allocation2]
  %v2652 = vld [vmem:[%s2651] ss:$2 sm:$0xff]
  %s2653 = scalar_lea.vmem %s2421, 2161 [#allocation2]
  %v2654 = vld [vmem:[%s2653] ss:$2 sm:$0xff]
  %s2655 = scalar_lea.vmem %s2421, 2177 [#allocation2]
  %v2656 = vld [vmem:[%s2655] ss:$2 sm:$0xff]
  %s2657 = scalar_lea.vmem %s2421, 2241 [#allocation2]
  %v2658 = vld [vmem:[%s2657] ss:$2 sm:$0xff]
  %s2659 = scalar_lea.vmem %s2421, 2257 [#allocation2]
  %v2660 = vld [vmem:[%s2659] ss:$2 sm:$0xff]
  %s2661 = scalar_lea.vmem %s2421, 2321 [#allocation2]
  %v2662 = vld [vmem:[%s2661] ss:$2 sm:$0xff]
  %s2663 = scalar_lea.vmem %s2421, 2337 [#allocation2]
  %v2664 = vld [vmem:[%s2663] ss:$2 sm:$0xff]
  %s2665 = scalar_lea.vmem %s2421, 2401 [#allocation2]
  %v2666 = vld [vmem:[%s2665] ss:$2 sm:$0xff]
  %s2667 = scalar_lea.vmem %s2421, 2417 [#allocation2]
  %v2668 = vld [vmem:[%s2667] ss:$2 sm:$0xff]
  %s2669 = scalar_lea.vmem %s2421, 2481 [#allocation2]
  %v2670 = vld [vmem:[%s2669] ss:$2 sm:$0xff]
  %s2671 = scalar_lea.vmem %s2421, 2497 [#allocation2]
  %v2672 = vld [vmem:[%s2671] ss:$2 sm:$0xff]
  %s2673 = scalar_lea.vmem %s2421, 2561 [#allocation2]
  %v2674 = vld [vmem:[%s2673] ss:$2 sm:$0xff]
  %s2675 = scalar_lea.vmem %s2421, 2577 [#allocation2]
  %v2676 = vld [vmem:[%s2675] ss:$2 sm:$0xff]
  %s2677 = scalar_lea.vmem %s2421, 2 [#allocation2]
  %v2678 = vld [vmem:[%s2677] ss:$2 sm:$0xff]
  %s2679 = scalar_lea.vmem %s2421, 18 [#allocation2]
  %v2680 = vld [vmem:[%s2679] ss:$2 sm:$0xff]
  %s2681 = scalar_lea.vmem %s2421, 82 [#allocation2]
  %v2682 = vld [vmem:[%s2681] ss:$2 sm:$0xff]
  %s2683 = scalar_lea.vmem %s2421, 98 [#allocation2]
  %v2684 = vld [vmem:[%s2683] ss:$2 sm:$0xff]
  %s2685 = scalar_lea.vmem %s2421, 162 [#allocation2]
  %v2686 = vld [vmem:[%s2685] ss:$2 sm:$0xff]
  %s2687 = scalar_lea.vmem %s2421, 178 [#allocation2]
  %v2688 = vld [vmem:[%s2687] ss:$2 sm:$0xff]
  %s2689 = scalar_lea.vmem %s2421, 242 [#allocation2]
  %v2690 = vld [vmem:[%s2689] ss:$2 sm:$0xff]
  %s2691 = scalar_lea.vmem %s2421, 258 [#allocation2]
  %v2692 = vld [vmem:[%s2691] ss:$2 sm:$0xff]
  %s2693 = scalar_lea.vmem %s2421, 322 [#allocation2]
  %v2694 = vld [vmem:[%s2693] ss:$2 sm:$0xff]
  %s2695 = scalar_lea.vmem %s2421, 338 [#allocation2]
  %v2696 = vld [vmem:[%s2695] ss:$2 sm:$0xff]
  %s2697 = scalar_lea.vmem %s2421, 402 [#allocation2]
  %v2698 = vld [vmem:[%s2697] ss:$2 sm:$0xff]
  %s2699 = scalar_lea.vmem %s2421, 418 [#allocation2]
  %v2700 = vld [vmem:[%s2699] ss:$2 sm:$0xff]
  %s2701 = scalar_lea.vmem %s2421, 482 [#allocation2]
  %v2702 = vld [vmem:[%s2701] ss:$2 sm:$0xff]
  %s2703 = scalar_lea.vmem %s2421, 498 [#allocation2]
  %v2704 = vld [vmem:[%s2703] ss:$2 sm:$0xff]
  %s2705 = scalar_lea.vmem %s2421, 562 [#allocation2]
  %v2706 = vld [vmem:[%s2705] ss:$2 sm:$0xff]
  %s2707 = scalar_lea.vmem %s2421, 578 [#allocation2]
  %v2708 = vld [vmem:[%s2707] ss:$2 sm:$0xff]
  %s2709 = scalar_lea.vmem %s2421, 642 [#allocation2]
  %v2710 = vld [vmem:[%s2709] ss:$2 sm:$0xff]
  %s2711 = scalar_lea.vmem %s2421, 658 [#allocation2]
  %v2712 = vld [vmem:[%s2711] ss:$2 sm:$0xff]
  %s2713 = scalar_lea.vmem %s2421, 722 [#allocation2]
  %v2714 = vld [vmem:[%s2713] ss:$2 sm:$0xff]
  %s2715 = scalar_lea.vmem %s2421, 738 [#allocation2]
  %v2716 = vld [vmem:[%s2715] ss:$2 sm:$0xff]
  %s2717 = scalar_lea.vmem %s2421, 802 [#allocation2]
  %v2718 = vld [vmem:[%s2717] ss:$2 sm:$0xff]
  %s2719 = scalar_lea.vmem %s2421, 818 [#allocation2]
  %v2720 = vld [vmem:[%s2719] ss:$2 sm:$0xff]
  %s2721 = scalar_lea.vmem %s2421, 882 [#allocation2]
  %v2722 = vld [vmem:[%s2721] ss:$2 sm:$0xff]
  %s2723 = scalar_lea.vmem %s2421, 898 [#allocation2]
  %v2724 = vld [vmem:[%s2723] ss:$2 sm:$0xff]
  %s2725 = scalar_lea.vmem %s2421, 962 [#allocation2]
  %v2726 = vld [vmem:[%s2725] ss:$2 sm:$0xff]
  %s2727 = scalar_lea.vmem %s2421, 978 [#allocation2]
  %v2728 = vld [vmem:[%s2727] ss:$2 sm:$0xff]
  %s2729 = scalar_lea.vmem %s2421, 1042 [#allocation2]
  %v2730 = vld [vmem:[%s2729] ss:$2 sm:$0xff]
  %s2731 = scalar_lea.vmem %s2421, 1058 [#allocation2]
  %v2732 = vld [vmem:[%s2731] ss:$2 sm:$0xff]
  %s2733 = scalar_lea.vmem %s2421, 1122 [#allocation2]
  %v2734 = vld [vmem:[%s2733] ss:$2 sm:$0xff]
  %s2735 = scalar_lea.vmem %s2421, 1138 [#allocation2]
  %v2736 = vld [vmem:[%s2735] ss:$2 sm:$0xff]
  %s2737 = scalar_lea.vmem %s2421, 1202 [#allocation2]
  %v2738 = vld [vmem:[%s2737] ss:$2 sm:$0xff]
  %s2739 = scalar_lea.vmem %s2421, 1218 [#allocation2]
  %v2740 = vld [vmem:[%s2739] ss:$2 sm:$0xff]
  %s2741 = scalar_lea.vmem %s2421, 1362 [#allocation2]
  %v2742 = vld [vmem:[%s2741] ss:$2 sm:$0xff]
  %s2743 = scalar_lea.vmem %s2421, 1378 [#allocation2]
  %v2744 = vld [vmem:[%s2743] ss:$2 sm:$0xff]
  %s2745 = scalar_lea.vmem %s2421, 1442 [#allocation2]
  %v2746 = vld [vmem:[%s2745] ss:$2 sm:$0xff]
  %s2747 = scalar_lea.vmem %s2421, 1458 [#allocation2]
  %v2748 = vld [vmem:[%s2747] ss:$2 sm:$0xff]
  %s2749 = scalar_lea.vmem %s2421, 1522 [#allocation2]
  %v2750 = vld [vmem:[%s2749] ss:$2 sm:$0xff]
  %s2751 = scalar_lea.vmem %s2421, 1538 [#allocation2]
  %v2752 = vld [vmem:[%s2751] ss:$2 sm:$0xff]
  %s2753 = scalar_lea.vmem %s2421, 1602 [#allocation2]
  %v2754 = vld [vmem:[%s2753] ss:$2 sm:$0xff]
  %s2755 = scalar_lea.vmem %s2421, 1618 [#allocation2]
  %v2756 = vld [vmem:[%s2755] ss:$2 sm:$0xff]
  %s2757 = scalar_lea.vmem %s2421, 1682 [#allocation2]
  %v2758 = vld [vmem:[%s2757] ss:$2 sm:$0xff]
  %s2759 = scalar_lea.vmem %s2421, 1698 [#allocation2]
  %v2760 = vld [vmem:[%s2759] ss:$2 sm:$0xff]
  %s2761 = scalar_lea.vmem %s2421, 1762 [#allocation2]
  %v2762 = vld [vmem:[%s2761] ss:$2 sm:$0xff]
  %s2763 = scalar_lea.vmem %s2421, 1778 [#allocation2]
  %v2764 = vld [vmem:[%s2763] ss:$2 sm:$0xff]
  %s2765 = scalar_lea.vmem %s2421, 1842 [#allocation2]
  %v2766 = vld [vmem:[%s2765] ss:$2 sm:$0xff]
  %s2767 = scalar_lea.vmem %s2421, 1858 [#allocation2]
  %v2768 = vld [vmem:[%s2767] ss:$2 sm:$0xff]
  %s2769 = scalar_lea.vmem %s2421, 1922 [#allocation2]
  %v2770 = vld [vmem:[%s2769] ss:$2 sm:$0xff]
  %s2771 = scalar_lea.vmem %s2421, 1938 [#allocation2]
  %v2772 = vld [vmem:[%s2771] ss:$2 sm:$0xff]
  %s2773 = scalar_lea.vmem %s2421, 2002 [#allocation2]
  %v2774 = vld [vmem:[%s2773] ss:$2 sm:$0xff]
  %s2775 = scalar_lea.vmem %s2421, 2018 [#allocation2]
  %v2776 = vld [vmem:[%s2775] ss:$2 sm:$0xff]
  %s2777 = scalar_lea.vmem %s2421, 2082 [#allocation2]
  %v2778 = vld [vmem:[%s2777] ss:$2 sm:$0xff]
  %s2779 = scalar_lea.vmem %s2421, 2098 [#allocation2]
  %v2780 = vld [vmem:[%s2779] ss:$2 sm:$0xff]
  %s2781 = scalar_lea.vmem %s2421, 2162 [#allocation2]
  %v2782 = vld [vmem:[%s2781] ss:$2 sm:$0xff]
  %s2783 = scalar_lea.vmem %s2421, 2178 [#allocation2]
  %v2784 = vld [vmem:[%s2783] ss:$2 sm:$0xff]
  %s2785 = scalar_lea.vmem %s2421, 2242 [#allocation2]
  %v2786 = vld [vmem:[%s2785] ss:$2 sm:$0xff]
  %s2787 = scalar_lea.vmem %s2421, 2258 [#allocation2]
  %v2788 = vld [vmem:[%s2787] ss:$2 sm:$0xff]
  %s2789 = scalar_lea.vmem %s2421, 2322 [#allocation2]
  %v2790 = vld [vmem:[%s2789] ss:$2 sm:$0xff]
  %s2791 = scalar_lea.vmem %s2421, 2338 [#allocation2]
  %v2792 = vld [vmem:[%s2791] ss:$2 sm:$0xff]
  %s2793 = scalar_lea.vmem %s2421, 2402 [#allocation2]
  %v2794 = vld [vmem:[%s2793] ss:$2 sm:$0xff]
  %s2795 = scalar_lea.vmem %s2421, 2418 [#allocation2]
  %v2796 = vld [vmem:[%s2795] ss:$2 sm:$0xff]
  %s2797 = scalar_lea.vmem %s2421, 2482 [#allocation2]
  %v2798 = vld [vmem:[%s2797] ss:$2 sm:$0xff]
  %s2799 = scalar_lea.vmem %s2421, 2498 [#allocation2]
  %v2800 = vld [vmem:[%s2799] ss:$2 sm:$0xff]
  %s2801 = scalar_lea.vmem %s2421, 2562 [#allocation2]
  %v2802 = vld [vmem:[%s2801] ss:$2 sm:$0xff]
  %s2803 = scalar_lea.vmem %s2421, 2578 [#allocation2]
  %v2804 = vld [vmem:[%s2803] ss:$2 sm:$0xff]
  %s2805 = scalar_lea.vmem %s2421, 3 [#allocation2]
  %v2806 = vld [vmem:[%s2805] ss:$2 sm:$0xff]
  %s2807 = scalar_lea.vmem %s2421, 19 [#allocation2]
  %v2808 = vld [vmem:[%s2807] ss:$2 sm:$0xff]
  %s2809 = scalar_lea.vmem %s2421, 83 [#allocation2]
  %v2810 = vld [vmem:[%s2809] ss:$2 sm:$0xff]
  %s2811 = scalar_lea.vmem %s2421, 99 [#allocation2]
  %v2812 = vld [vmem:[%s2811] ss:$2 sm:$0xff]
  %s2813 = scalar_lea.vmem %s2421, 163 [#allocation2]
  %v2814 = vld [vmem:[%s2813] ss:$2 sm:$0xff]
  %s2815 = scalar_lea.vmem %s2421, 179 [#allocation2]
  %v2816 = vld [vmem:[%s2815] ss:$2 sm:$0xff]
  %s2817 = scalar_lea.vmem %s2421, 243 [#allocation2]
  %v2818 = vld [vmem:[%s2817] ss:$2 sm:$0xff]
  %s2819 = scalar_lea.vmem %s2421, 259 [#allocation2]
  %v2820 = vld [vmem:[%s2819] ss:$2 sm:$0xff]
  %s2821 = scalar_lea.vmem %s2421, 323 [#allocation2]
  %v2822 = vld [vmem:[%s2821] ss:$2 sm:$0xff]
  %s2823 = scalar_lea.vmem %s2421, 339 [#allocation2]
  %v2824 = vld [vmem:[%s2823] ss:$2 sm:$0xff]
  %s2825 = scalar_lea.vmem %s2421, 403 [#allocation2]
  %v2826 = vld [vmem:[%s2825] ss:$2 sm:$0xff]
  %s2827 = scalar_lea.vmem %s2421, 419 [#allocation2]
  %v2828 = vld [vmem:[%s2827] ss:$2 sm:$0xff]
  %s2829 = scalar_lea.vmem %s2421, 483 [#allocation2]
  %v2830 = vld [vmem:[%s2829] ss:$2 sm:$0xff]
  %s2831 = scalar_lea.vmem %s2421, 499 [#allocation2]
  %v2832 = vld [vmem:[%s2831] ss:$2 sm:$0xff]
  %s2833 = scalar_lea.vmem %s2421, 563 [#allocation2]
  %v2834 = vld [vmem:[%s2833] ss:$2 sm:$0xff]
  %s2835 = scalar_lea.vmem %s2421, 579 [#allocation2]
  %v2836 = vld [vmem:[%s2835] ss:$2 sm:$0xff]
  %s2837 = scalar_lea.vmem %s2421, 643 [#allocation2]
  %v2838 = vld [vmem:[%s2837] ss:$2 sm:$0xff]
  %s2839 = scalar_lea.vmem %s2421, 659 [#allocation2]
  %v2840 = vld [vmem:[%s2839] ss:$2 sm:$0xff]
  %s2841 = scalar_lea.vmem %s2421, 723 [#allocation2]
  %v2842 = vld [vmem:[%s2841] ss:$2 sm:$0xff]
  %s2843 = scalar_lea.vmem %s2421, 739 [#allocation2]
  %v2844 = vld [vmem:[%s2843] ss:$2 sm:$0xff]
  %s2845 = scalar_lea.vmem %s2421, 803 [#allocation2]
  %v2846 = vld [vmem:[%s2845] ss:$2 sm:$0xff]
  %s2847 = scalar_lea.vmem %s2421, 819 [#allocation2]
  %v2848 = vld [vmem:[%s2847] ss:$2 sm:$0xff]
  %s2849 = scalar_lea.vmem %s2421, 883 [#allocation2]
  %v2850 = vld [vmem:[%s2849] ss:$2 sm:$0xff]
  %s2851 = scalar_lea.vmem %s2421, 899 [#allocation2]
  %v2852 = vld [vmem:[%s2851] ss:$2 sm:$0xff]
  %s2853 = scalar_lea.vmem %s2421, 963 [#allocation2]
  %v2854 = vld [vmem:[%s2853] ss:$2 sm:$0xff]
  %s2855 = scalar_lea.vmem %s2421, 979 [#allocation2]
  %v2856 = vld [vmem:[%s2855] ss:$2 sm:$0xff]
  %s2857 = scalar_lea.vmem %s2421, 1043 [#allocation2]
  %v2858 = vld [vmem:[%s2857] ss:$2 sm:$0xff]
  %s2859 = scalar_lea.vmem %s2421, 1059 [#allocation2]
  %v2860 = vld [vmem:[%s2859] ss:$2 sm:$0xff]
  %s2861 = scalar_lea.vmem %s2421, 1123 [#allocation2]
  %v2862 = vld [vmem:[%s2861] ss:$2 sm:$0xff]
  %s2863 = scalar_lea.vmem %s2421, 1139 [#allocation2]
  %v2864 = vld [vmem:[%s2863] ss:$2 sm:$0xff]
  %s2865 = scalar_lea.vmem %s2421, 1203 [#allocation2]
  %v2866 = vld [vmem:[%s2865] ss:$2 sm:$0xff]
  %s2867 = scalar_lea.vmem %s2421, 1219 [#allocation2]
  %v2868 = vld [vmem:[%s2867] ss:$2 sm:$0xff]
  %s2869 = scalar_lea.vmem %s2421, 1363 [#allocation2]
  %v2870 = vld [vmem:[%s2869] ss:$2 sm:$0xff]
  %s2871 = scalar_lea.vmem %s2421, 1379 [#allocation2]
  %v2872 = vld [vmem:[%s2871] ss:$2 sm:$0xff]
  %s2873 = scalar_lea.vmem %s2421, 1443 [#allocation2]
  %v2874 = vld [vmem:[%s2873] ss:$2 sm:$0xff]
  %s2875 = scalar_lea.vmem %s2421, 1459 [#allocation2]
  %v2876 = vld [vmem:[%s2875] ss:$2 sm:$0xff]
  %s2877 = scalar_lea.vmem %s2421, 1523 [#allocation2]
  %v2878 = vld [vmem:[%s2877] ss:$2 sm:$0xff]
  %s2879 = scalar_lea.vmem %s2421, 1539 [#allocation2]
  %v2880 = vld [vmem:[%s2879] ss:$2 sm:$0xff]
  %s2881 = scalar_lea.vmem %s2421, 1603 [#allocation2]
  %v2882 = vld [vmem:[%s2881] ss:$2 sm:$0xff]
  %s2883 = scalar_lea.vmem %s2421, 1619 [#allocation2]
  %v2884 = vld [vmem:[%s2883] ss:$2 sm:$0xff]
  %s2885 = scalar_lea.vmem %s2421, 1683 [#allocation2]
  %v2886 = vld [vmem:[%s2885] ss:$2 sm:$0xff]
  %s2887 = scalar_lea.vmem %s2421, 1699 [#allocation2]
  %v2888 = vld [vmem:[%s2887] ss:$2 sm:$0xff]
  %s2889 = scalar_lea.vmem %s2421, 1763 [#allocation2]
  %v2890 = vld [vmem:[%s2889] ss:$2 sm:$0xff]
  %s2891 = scalar_lea.vmem %s2421, 1779 [#allocation2]
  %v2892 = vld [vmem:[%s2891] ss:$2 sm:$0xff]
  %s2893 = scalar_lea.vmem %s2421, 1843 [#allocation2]
  %v2894 = vld [vmem:[%s2893] ss:$2 sm:$0xff]
  %s2895 = scalar_lea.vmem %s2421, 1859 [#allocation2]
  %v2896 = vld [vmem:[%s2895] ss:$2 sm:$0xff]
  %s2897 = scalar_lea.vmem %s2421, 1923 [#allocation2]
  %v2898 = vld [vmem:[%s2897] ss:$2 sm:$0xff]
  %s2899 = scalar_lea.vmem %s2421, 1939 [#allocation2]
  %v2900 = vld [vmem:[%s2899] ss:$2 sm:$0xff]
  %s2901 = scalar_lea.vmem %s2421, 2003 [#allocation2]
  %v2902 = vld [vmem:[%s2901] ss:$2 sm:$0xff]
  %s2903 = scalar_lea.vmem %s2421, 2019 [#allocation2]
  %v2904 = vld [vmem:[%s2903] ss:$2 sm:$0xff]
  %s2905 = scalar_lea.vmem %s2421, 2083 [#allocation2]
  %v2906 = vld [vmem:[%s2905] ss:$2 sm:$0xff]
  %s2907 = scalar_lea.vmem %s2421, 2099 [#allocation2]
  %v2908 = vld [vmem:[%s2907] ss:$2 sm:$0xff]
  %s2909 = scalar_lea.vmem %s2421, 2163 [#allocation2]
  %v2910 = vld [vmem:[%s2909] ss:$2 sm:$0xff]
  %s2911 = scalar_lea.vmem %s2421, 2179 [#allocation2]
  %v2912 = vld [vmem:[%s2911] ss:$2 sm:$0xff]
  %s2913 = scalar_lea.vmem %s2421, 2243 [#allocation2]
  %v2914 = vld [vmem:[%s2913] ss:$2 sm:$0xff]
  %s2915 = scalar_lea.vmem %s2421, 2259 [#allocation2]
  %v2916 = vld [vmem:[%s2915] ss:$2 sm:$0xff]
  %s2917 = scalar_lea.vmem %s2421, 2323 [#allocation2]
  %v2918 = vld [vmem:[%s2917] ss:$2 sm:$0xff]
  %s2919 = scalar_lea.vmem %s2421, 2339 [#allocation2]
  %v2920 = vld [vmem:[%s2919] ss:$2 sm:$0xff]
  %s2921 = scalar_lea.vmem %s2421, 2403 [#allocation2]
  %v2922 = vld [vmem:[%s2921] ss:$2 sm:$0xff]
  %s2923 = scalar_lea.vmem %s2421, 2419 [#allocation2]
  %v2924 = vld [vmem:[%s2923] ss:$2 sm:$0xff]
  %s2925 = scalar_lea.vmem %s2421, 2483 [#allocation2]
  %v2926 = vld [vmem:[%s2925] ss:$2 sm:$0xff]
  %s2927 = scalar_lea.vmem %s2421, 2499 [#allocation2]
  %v2928 = vld [vmem:[%s2927] ss:$2 sm:$0xff]
  %s2929 = scalar_lea.vmem %s2421, 2563 [#allocation2]
  %v2930 = vld [vmem:[%s2929] ss:$2 sm:$0xff]
  %s2931 = scalar_lea.vmem %s2421, 2579 [#allocation2]
  %v2932 = vld [vmem:[%s2931] ss:$2 sm:$0xff]
  %2997 = vrot.lane.b32.xlu0 %v1015, 3
  %v2998 = vpop.permute.xlu0 %2997
  %2999 = vrot.lane.b32.xlu0 %v1017, 3
  %v3000 = vpop.permute.xlu0 %2999
  %3001 = vrot.lane.b32.xlu0 %v1019, 3
  %v3002 = vpop.permute.xlu0 %3001
  %3003 = vrot.lane.b32.xlu0 %v1021, 3
  %v3004 = vpop.permute.xlu0 %3003
  %3005 = vrot.lane.b32.xlu0 %v1023, 3
  %v3006 = vpop.permute.xlu0 %3005
  %3007 = vrot.lane.b32.xlu0 %v1025, 3
  %v3008 = vpop.permute.xlu0 %3007
  %3009 = vrot.lane.b32.xlu0 %v1027, 3
  %v3010 = vpop.permute.xlu0 %3009
  %3011 = vrot.lane.b32.xlu0 %v1029, 3
  %v3012 = vpop.permute.xlu0 %3011
  %3013 = vrot.lane.b32.xlu0 %v1031, 3
  %v3014 = vpop.permute.xlu0 %3013
  %3015 = vrot.lane.b32.xlu0 %v1033, 3
  %v3016 = vpop.permute.xlu0 %3015
  %3017 = vrot.lane.b32.xlu0 %v1035, 3
  %v3018 = vpop.permute.xlu0 %3017
  %3019 = vrot.lane.b32.xlu0 %v1037, 3
  %v3020 = vpop.permute.xlu0 %3019
  %3021 = vrot.lane.b32.xlu0 %v1039, 3
  %v3022 = vpop.permute.xlu0 %3021
  %3023 = vrot.lane.b32.xlu0 %v1041, 3
  %v3024 = vpop.permute.xlu0 %3023
  %3025 = vrot.lane.b32.xlu0 %v1043, 3
  %v3026 = vpop.permute.xlu0 %3025
  %3027 = vrot.lane.b32.xlu0 %v1045, 3
  %v3028 = vpop.permute.xlu0 %3027
  %3029 = vrot.lane.b32.xlu0 %v1047, 3
  %v3030 = vpop.permute.xlu0 %3029
  %3031 = vrot.lane.b32.xlu0 %v1049, 3
  %v3032 = vpop.permute.xlu0 %3031
  %3033 = vrot.lane.b32.xlu0 %v1051, 3
  %v3034 = vpop.permute.xlu0 %3033
  %3035 = vrot.lane.b32.xlu0 %v1053, 3
  %v3036 = vpop.permute.xlu0 %3035
  %3037 = vrot.lane.b32.xlu0 %v1055, 3
  %v3038 = vpop.permute.xlu0 %3037
  %3039 = vrot.lane.b32.xlu0 %v1057, 3
  %v3040 = vpop.permute.xlu0 %3039
  %3041 = vrot.lane.b32.xlu0 %v1059, 3
  %v3042 = vpop.permute.xlu0 %3041
  %3043 = vrot.lane.b32.xlu0 %v1061, 3
  %v3044 = vpop.permute.xlu0 %3043
  %3045 = vrot.lane.b32.xlu0 %v1063, 3
  %v3046 = vpop.permute.xlu0 %3045
  %3047 = vrot.lane.b32.xlu0 %v1065, 3
  %v3048 = vpop.permute.xlu0 %3047
  %3049 = vrot.lane.b32.xlu0 %v1067, 3
  %v3050 = vpop.permute.xlu0 %3049
  %3051 = vrot.lane.b32.xlu0 %v1069, 3
  %v3052 = vpop.permute.xlu0 %3051
  %3053 = vrot.lane.b32.xlu0 %v1071, 3
  %v3054 = vpop.permute.xlu0 %3053
  %3055 = vrot.lane.b32.xlu0 %v1073, 3
  %v3056 = vpop.permute.xlu0 %3055
  %3057 = vrot.lane.b32.xlu0 %v1075, 3
  %v3058 = vpop.permute.xlu0 %3057
  %3059 = vrot.lane.b32.xlu0 %v1077, 3
  %v3060 = vpop.permute.xlu0 %3059
  %3061 = vrot.lane.b32.xlu0 %v1079, 3
  %v3062 = vpop.permute.xlu0 %3061
  %3063 = vrot.lane.b32.xlu0 %v1081, 3
  %v3064 = vpop.permute.xlu0 %3063
  %3065 = vrot.lane.b32.xlu0 %v1083, 3
  %v3066 = vpop.permute.xlu0 %3065
  %3067 = vrot.lane.b32.xlu0 %v1085, 3
  %v3068 = vpop.permute.xlu0 %3067
  %3069 = vrot.lane.b32.xlu0 %v1087, 3
  %v3070 = vpop.permute.xlu0 %3069
  %3071 = vrot.lane.b32.xlu0 %v1089, 3
  %v3072 = vpop.permute.xlu0 %3071
  %3073 = vrot.lane.b32.xlu0 %v1091, 3
  %v3074 = vpop.permute.xlu0 %3073
  %3075 = vrot.lane.b32.xlu0 %v1093, 3
  %v3076 = vpop.permute.xlu0 %3075
  %3077 = vrot.lane.b32.xlu0 %v1095, 3
  %v3078 = vpop.permute.xlu0 %3077
  %3079 = vrot.lane.b32.xlu0 %v1097, 3
  %v3080 = vpop.permute.xlu0 %3079
  %3081 = vrot.lane.b32.xlu0 %v1099, 3
  %v3082 = vpop.permute.xlu0 %3081
  %3083 = vrot.lane.b32.xlu0 %v1101, 3
  %v3084 = vpop.permute.xlu0 %3083
  %3085 = vrot.lane.b32.xlu0 %v1103, 3
  %v3086 = vpop.permute.xlu0 %3085
  %3087 = vrot.lane.b32.xlu0 %v1105, 3
  %v3088 = vpop.permute.xlu0 %3087
  %3089 = vrot.lane.b32.xlu0 %v1107, 3
  %v3090 = vpop.permute.xlu0 %3089
  %3091 = vrot.lane.b32.xlu0 %v1109, 3
  %v3092 = vpop.permute.xlu0 %3091
  %3093 = vrot.lane.b32.xlu0 %v1111, 3
  %v3094 = vpop.permute.xlu0 %3093
  %3095 = vrot.lane.b32.xlu0 %v1113, 3
  %v3096 = vpop.permute.xlu0 %3095
  %3097 = vrot.lane.b32.xlu0 %v1115, 3
  %v3098 = vpop.permute.xlu0 %3097
  %3099 = vrot.lane.b32.xlu0 %v1117, 3
  %v3100 = vpop.permute.xlu0 %3099
  %3101 = vrot.lane.b32.xlu0 %v1119, 3
  %v3102 = vpop.permute.xlu0 %3101
  %3103 = vrot.lane.b32.xlu0 %v1121, 3
  %v3104 = vpop.permute.xlu0 %3103
  %3105 = vrot.lane.b32.xlu0 %v1123, 3
  %v3106 = vpop.permute.xlu0 %3105
  %3107 = vrot.lane.b32.xlu0 %v1125, 3
  %v3108 = vpop.permute.xlu0 %3107
  %3109 = vrot.lane.b32.xlu0 %v1127, 3
  %v3110 = vpop.permute.xlu0 %3109
  %3111 = vrot.lane.b32.xlu0 %v1129, 3
  %v3112 = vpop.permute.xlu0 %3111
  %3113 = vrot.lane.b32.xlu0 %v1131, 3
  %v3114 = vpop.permute.xlu0 %3113
  %3115 = vrot.lane.b32.xlu0 %v1133, 3
  %v3116 = vpop.permute.xlu0 %3115
  %3117 = vrot.lane.b32.xlu0 %v1135, 3
  %v3118 = vpop.permute.xlu0 %3117
  %3119 = vrot.lane.b32.xlu0 %v1137, 3
  %v3120 = vpop.permute.xlu0 %3119
  %3121 = vrot.lane.b32.xlu0 %v1139, 3
  %v3122 = vpop.permute.xlu0 %3121
  %3123 = vrot.lane.b32.xlu0 %v1141, 3
  %v3124 = vpop.permute.xlu0 %3123
  %v3189 = vsel %vm288, %v887, %v2998
  %v3190 = vsel %vm288, %v889, %v3000
  %v3191 = vsel %vm288, %v891, %v3002
  %v3192 = vsel %vm288, %v893, %v3004
  %v3193 = vsel %vm288, %v895, %v3006
  %v3194 = vsel %vm288, %v897, %v3008
  %v3195 = vsel %vm288, %v899, %v3010
  %v3196 = vsel %vm288, %v901, %v3012
  %v3197 = vsel %vm288, %v903, %v3014
  %v3198 = vsel %vm288, %v905, %v3016
  %v3199 = vsel %vm288, %v907, %v3018
  %v3200 = vsel %vm288, %v909, %v3020
  %v3201 = vsel %vm288, %v911, %v3022
  %v3202 = vsel %vm288, %v913, %v3024
  %v3203 = vsel %vm288, %v915, %v3026
  %v3204 = vsel %vm288, %v917, %v3028
  %v3205 = vsel %vm288, %v919, %v3030
  %v3206 = vsel %vm288, %v921, %v3032
  %v3207 = vsel %vm288, %v923, %v3034
  %v3208 = vsel %vm288, %v925, %v3036
  %v3209 = vsel %vm288, %v927, %v3038
  %v3210 = vsel %vm288, %v929, %v3040
  %v3211 = vsel %vm288, %v931, %v3042
  %v3212 = vsel %vm288, %v933, %v3044
  %v3213 = vsel %vm288, %v935, %v3046
  %v3214 = vsel %vm288, %v937, %v3048
  %v3215 = vsel %vm288, %v939, %v3050
  %v3216 = vsel %vm288, %v941, %v3052
  %v3217 = vsel %vm288, %v943, %v3054
  %v3218 = vsel %vm288, %v945, %v3056
  %v3219 = vsel %vm288, %v947, %v3058
  %v3220 = vsel %vm288, %v949, %v3060
  %v3221 = vsel %vm288, %v951, %v3062
  %v3222 = vsel %vm288, %v953, %v3064
  %v3223 = vsel %vm288, %v955, %v3066
  %v3224 = vsel %vm288, %v957, %v3068
  %v3225 = vsel %vm288, %v959, %v3070
  %v3226 = vsel %vm288, %v961, %v3072
  %v3227 = vsel %vm288, %v963, %v3074
  %v3228 = vsel %vm288, %v965, %v3076
  %v3229 = vsel %vm288, %v967, %v3078
  %v3230 = vsel %vm288, %v969, %v3080
  %v3231 = vsel %vm288, %v971, %v3082
  %v3232 = vsel %vm288, %v973, %v3084
  %v3233 = vsel %vm288, %v975, %v3086
  %v3234 = vsel %vm288, %v977, %v3088
  %v3235 = vsel %vm288, %v979, %v3090
  %v3236 = vsel %vm288, %v981, %v3092
  %v3237 = vsel %vm288, %v983, %v3094
  %v3238 = vsel %vm288, %v985, %v3096
  %v3239 = vsel %vm288, %v987, %v3098
  %v3240 = vsel %vm288, %v989, %v3100
  %v3241 = vsel %vm288, %v991, %v3102
  %v3242 = vsel %vm288, %v993, %v3104
  %v3243 = vsel %vm288, %v995, %v3106
  %v3244 = vsel %vm288, %v997, %v3108
  %v3245 = vsel %vm288, %v999, %v3110
  %v3246 = vsel %vm288, %v1001, %v3112
  %v3247 = vsel %vm288, %v1003, %v3114
  %v3248 = vsel %vm288, %v1005, %v3116
  %v3249 = vsel %vm288, %v1007, %v3118
  %v3250 = vsel %vm288, %v1009, %v3120
  %v3251 = vsel %vm288, %v1011, %v3122
  %v3252 = vsel %vm288, %v1013, %v3124
  %3317 = vrot.lane.b32.xlu0 %v1271, 3
  %v3318 = vpop.permute.xlu0 %3317
  %3319 = vrot.lane.b32.xlu0 %v1273, 3
  %v3320 = vpop.permute.xlu0 %3319
  %3321 = vrot.lane.b32.xlu0 %v1275, 3
  %v3322 = vpop.permute.xlu0 %3321
  %3323 = vrot.lane.b32.xlu0 %v1277, 3
  %v3324 = vpop.permute.xlu0 %3323
  %3325 = vrot.lane.b32.xlu0 %v1279, 3
  %v3326 = vpop.permute.xlu0 %3325
  %3327 = vrot.lane.b32.xlu0 %v1281, 3
  %v3328 = vpop.permute.xlu0 %3327
  %3329 = vrot.lane.b32.xlu0 %v1283, 3
  %v3330 = vpop.permute.xlu0 %3329
  %3331 = vrot.lane.b32.xlu0 %v1285, 3
  %v3332 = vpop.permute.xlu0 %3331
  %3333 = vrot.lane.b32.xlu0 %v1287, 3
  %v3334 = vpop.permute.xlu0 %3333
  %3335 = vrot.lane.b32.xlu0 %v1289, 3
  %v3336 = vpop.permute.xlu0 %3335
  %3337 = vrot.lane.b32.xlu0 %v1291, 3
  %v3338 = vpop.permute.xlu0 %3337
  %3339 = vrot.lane.b32.xlu0 %v1293, 3
  %v3340 = vpop.permute.xlu0 %3339
  %3341 = vrot.lane.b32.xlu0 %v1295, 3
  %v3342 = vpop.permute.xlu0 %3341
  %3343 = vrot.lane.b32.xlu0 %v1297, 3
  %v3344 = vpop.permute.xlu0 %3343
  %3345 = vrot.lane.b32.xlu0 %v1299, 3
  %v3346 = vpop.permute.xlu0 %3345
  %3347 = vrot.lane.b32.xlu0 %v1301, 3
  %v3348 = vpop.permute.xlu0 %3347
  %3349 = vrot.lane.b32.xlu0 %v1303, 3
  %v3350 = vpop.permute.xlu0 %3349
  %3351 = vrot.lane.b32.xlu0 %v1305, 3
  %v3352 = vpop.permute.xlu0 %3351
  %3353 = vrot.lane.b32.xlu0 %v1307, 3
  %v3354 = vpop.permute.xlu0 %3353
  %3355 = vrot.lane.b32.xlu0 %v1309, 3
  %v3356 = vpop.permute.xlu0 %3355
  %3357 = vrot.lane.b32.xlu0 %v1311, 3
  %v3358 = vpop.permute.xlu0 %3357
  %3359 = vrot.lane.b32.xlu0 %v1313, 3
  %v3360 = vpop.permute.xlu0 %3359
  %3361 = vrot.lane.b32.xlu0 %v1315, 3
  %v3362 = vpop.permute.xlu0 %3361
  %3363 = vrot.lane.b32.xlu0 %v1317, 3
  %v3364 = vpop.permute.xlu0 %3363
  %3365 = vrot.lane.b32.xlu0 %v1319, 3
  %v3366 = vpop.permute.xlu0 %3365
  %3367 = vrot.lane.b32.xlu0 %v1321, 3
  %v3368 = vpop.permute.xlu0 %3367
  %3369 = vrot.lane.b32.xlu0 %v1323, 3
  %v3370 = vpop.permute.xlu0 %3369
  %3371 = vrot.lane.b32.xlu0 %v1325, 3
  %v3372 = vpop.permute.xlu0 %3371
  %3373 = vrot.lane.b32.xlu0 %v1327, 3
  %v3374 = vpop.permute.xlu0 %3373
  %3375 = vrot.lane.b32.xlu0 %v1329, 3
  %v3376 = vpop.permute.xlu0 %3375
  %3377 = vrot.lane.b32.xlu0 %v1331, 3
  %v3378 = vpop.permute.xlu0 %3377
  %3379 = vrot.lane.b32.xlu0 %v1333, 3
  %v3380 = vpop.permute.xlu0 %3379
  %3381 = vrot.lane.b32.xlu0 %v1335, 3
  %v3382 = vpop.permute.xlu0 %3381
  %3383 = vrot.lane.b32.xlu0 %v1337, 3
  %v3384 = vpop.permute.xlu0 %3383
  %3385 = vrot.lane.b32.xlu0 %v1339, 3
  %v3386 = vpop.permute.xlu0 %3385
  %3387 = vrot.lane.b32.xlu0 %v1341, 3
  %v3388 = vpop.permute.xlu0 %3387
  %3389 = vrot.lane.b32.xlu0 %v1343, 3
  %v3390 = vpop.permute.xlu0 %3389
  %3391 = vrot.lane.b32.xlu0 %v1345, 3
  %v3392 = vpop.permute.xlu0 %3391
  %3393 = vrot.lane.b32.xlu0 %v1347, 3
  %v3394 = vpop.permute.xlu0 %3393
  %3395 = vrot.lane.b32.xlu0 %v1349, 3
  %v3396 = vpop.permute.xlu0 %3395
  %3397 = vrot.lane.b32.xlu0 %v1351, 3
  %v3398 = vpop.permute.xlu0 %3397
  %3399 = vrot.lane.b32.xlu0 %v1353, 3
  %v3400 = vpop.permute.xlu0 %3399
  %3401 = vrot.lane.b32.xlu0 %v1355, 3
  %v3402 = vpop.permute.xlu0 %3401
  %3403 = vrot.lane.b32.xlu0 %v1357, 3
  %v3404 = vpop.permute.xlu0 %3403
  %3405 = vrot.lane.b32.xlu0 %v1359, 3
  %v3406 = vpop.permute.xlu0 %3405
  %3407 = vrot.lane.b32.xlu0 %v1361, 3
  %v3408 = vpop.permute.xlu0 %3407
  %3409 = vrot.lane.b32.xlu0 %v1363, 3
  %v3410 = vpop.permute.xlu0 %3409
  %3411 = vrot.lane.b32.xlu0 %v1365, 3
  %v3412 = vpop.permute.xlu0 %3411
  %3413 = vrot.lane.b32.xlu0 %v1367, 3
  %v3414 = vpop.permute.xlu0 %3413
  %3415 = vrot.lane.b32.xlu0 %v1369, 3
  %v3416 = vpop.permute.xlu0 %3415
  %3417 = vrot.lane.b32.xlu0 %v1371, 3
  %v3418 = vpop.permute.xlu0 %3417
  %3419 = vrot.lane.b32.xlu0 %v1373, 3
  %v3420 = vpop.permute.xlu0 %3419
  %3421 = vrot.lane.b32.xlu0 %v1375, 3
  %v3422 = vpop.permute.xlu0 %3421
  %3423 = vrot.lane.b32.xlu0 %v1377, 3
  %v3424 = vpop.permute.xlu0 %3423
  %3425 = vrot.lane.b32.xlu0 %v1379, 3
  %v3426 = vpop.permute.xlu0 %3425
  %3427 = vrot.lane.b32.xlu0 %v1381, 3
  %v3428 = vpop.permute.xlu0 %3427
  %3429 = vrot.lane.b32.xlu0 %v1383, 3
  %v3430 = vpop.permute.xlu0 %3429
  %3431 = vrot.lane.b32.xlu0 %v1385, 3
  %v3432 = vpop.permute.xlu0 %3431
  %3433 = vrot.lane.b32.xlu0 %v1387, 3
  %v3434 = vpop.permute.xlu0 %3433
  %3435 = vrot.lane.b32.xlu0 %v1389, 3
  %v3436 = vpop.permute.xlu0 %3435
  %3437 = vrot.lane.b32.xlu0 %v1391, 3
  %v3438 = vpop.permute.xlu0 %3437
  %3439 = vrot.lane.b32.xlu0 %v1393, 3
  %v3440 = vpop.permute.xlu0 %3439
  %3441 = vrot.lane.b32.xlu0 %v1395, 3
  %v3442 = vpop.permute.xlu0 %3441
  %3443 = vrot.lane.b32.xlu0 %v1397, 3
  %v3444 = vpop.permute.xlu0 %3443
  %v3509 = vsel %vm288, %v1143, %v3318
  %v3510 = vsel %vm288, %v1145, %v3320
  %v3511 = vsel %vm288, %v1147, %v3322
  %v3512 = vsel %vm288, %v1149, %v3324
  %v3513 = vsel %vm288, %v1151, %v3326
  %v3514 = vsel %vm288, %v1153, %v3328
  %v3515 = vsel %vm288, %v1155, %v3330
  %v3516 = vsel %vm288, %v1157, %v3332
  %v3517 = vsel %vm288, %v1159, %v3334
  %v3518 = vsel %vm288, %v1161, %v3336
  %v3519 = vsel %vm288, %v1163, %v3338
  %v3520 = vsel %vm288, %v1165, %v3340
  %v3521 = vsel %vm288, %v1167, %v3342
  %v3522 = vsel %vm288, %v1169, %v3344
  %v3523 = vsel %vm288, %v1171, %v3346
  %v3524 = vsel %vm288, %v1173, %v3348
  %v3525 = vsel %vm288, %v1175, %v3350
  %v3526 = vsel %vm288, %v1177, %v3352
  %v3527 = vsel %vm288, %v1179, %v3354
  %v3528 = vsel %vm288, %v1181, %v3356
  %v3529 = vsel %vm288, %v1183, %v3358
  %v3530 = vsel %vm288, %v1185, %v3360
  %v3531 = vsel %vm288, %v1187, %v3362
  %v3532 = vsel %vm288, %v1189, %v3364
  %v3533 = vsel %vm288, %v1191, %v3366
  %v3534 = vsel %vm288, %v1193, %v3368
  %v3535 = vsel %vm288, %v1195, %v3370
  %v3536 = vsel %vm288, %v1197, %v3372
  %v3537 = vsel %vm288, %v1199, %v3374
  %v3538 = vsel %vm288, %v1201, %v3376
  %v3539 = vsel %vm288, %v1203, %v3378
  %v3540 = vsel %vm288, %v1205, %v3380
  %v3541 = vsel %vm288, %v1207, %v3382
  %v3542 = vsel %vm288, %v1209, %v3384
  %v3543 = vsel %vm288, %v1211, %v3386
  %v3544 = vsel %vm288, %v1213, %v3388
  %v3545 = vsel %vm288, %v1215, %v3390
  %v3546 = vsel %vm288, %v1217, %v3392
  %v3547 = vsel %vm288, %v1219, %v3394
  %v3548 = vsel %vm288, %v1221, %v3396
  %v3549 = vsel %vm288, %v1223, %v3398
  %v3550 = vsel %vm288, %v1225, %v3400
  %v3551 = vsel %vm288, %v1227, %v3402
  %v3552 = vsel %vm288, %v1229, %v3404
  %v3553 = vsel %vm288, %v1231, %v3406
  %v3554 = vsel %vm288, %v1233, %v3408
  %v3555 = vsel %vm288, %v1235, %v3410
  %v3556 = vsel %vm288, %v1237, %v3412
  %v3557 = vsel %vm288, %v1239, %v3414
  %v3558 = vsel %vm288, %v1241, %v3416
  %v3559 = vsel %vm288, %v1243, %v3418
  %v3560 = vsel %vm288, %v1245, %v3420
  %v3561 = vsel %vm288, %v1247, %v3422
  %v3562 = vsel %vm288, %v1249, %v3424
  %v3563 = vsel %vm288, %v1251, %v3426
  %v3564 = vsel %vm288, %v1253, %v3428
  %v3565 = vsel %vm288, %v1255, %v3430
  %v3566 = vsel %vm288, %v1257, %v3432
  %v3567 = vsel %vm288, %v1259, %v3434
  %v3568 = vsel %vm288, %v1261, %v3436
  %v3569 = vsel %vm288, %v1263, %v3438
  %v3570 = vsel %vm288, %v1265, %v3440
  %v3571 = vsel %vm288, %v1267, %v3442
  %v3572 = vsel %vm288, %v1269, %v3444
  %3637 = vrot.lane.b32.xlu0 %v1526, 3
  %v3638 = vpop.permute.xlu0 %3637
  %3639 = vrot.lane.b32.xlu0 %v1528, 3
  %v3640 = vpop.permute.xlu0 %3639
  %3641 = vrot.lane.b32.xlu0 %v1530, 3
  %v3642 = vpop.permute.xlu0 %3641
  %3643 = vrot.lane.b32.xlu0 %v1532, 3
  %v3644 = vpop.permute.xlu0 %3643
  %3645 = vrot.lane.b32.xlu0 %v1534, 3
  %v3646 = vpop.permute.xlu0 %3645
  %3647 = vrot.lane.b32.xlu0 %v1536, 3
  %v3648 = vpop.permute.xlu0 %3647
  %3649 = vrot.lane.b32.xlu0 %v1538, 3
  %v3650 = vpop.permute.xlu0 %3649
  %3651 = vrot.lane.b32.xlu0 %v1540, 3
  %v3652 = vpop.permute.xlu0 %3651
  %3653 = vrot.lane.b32.xlu0 %v1542, 3
  %v3654 = vpop.permute.xlu0 %3653
  %3655 = vrot.lane.b32.xlu0 %v1544, 3
  %v3656 = vpop.permute.xlu0 %3655
  %3657 = vrot.lane.b32.xlu0 %v1546, 3
  %v3658 = vpop.permute.xlu0 %3657
  %3659 = vrot.lane.b32.xlu0 %v1548, 3
  %v3660 = vpop.permute.xlu0 %3659
  %3661 = vrot.lane.b32.xlu0 %v1550, 3
  %v3662 = vpop.permute.xlu0 %3661
  %3663 = vrot.lane.b32.xlu0 %v1552, 3
  %v3664 = vpop.permute.xlu0 %3663
  %3665 = vrot.lane.b32.xlu0 %v1554, 3
  %v3666 = vpop.permute.xlu0 %3665
  %3667 = vrot.lane.b32.xlu0 %v1556, 3
  %v3668 = vpop.permute.xlu0 %3667
  %3669 = vrot.lane.b32.xlu0 %v1558, 3
  %v3670 = vpop.permute.xlu0 %3669
  %3671 = vrot.lane.b32.xlu0 %v1560, 3
  %v3672 = vpop.permute.xlu0 %3671
  %3673 = vrot.lane.b32.xlu0 %v1562, 3
  %v3674 = vpop.permute.xlu0 %3673
  %3675 = vrot.lane.b32.xlu0 %v1564, 3
  %v3676 = vpop.permute.xlu0 %3675
  %3677 = vrot.lane.b32.xlu0 %v1566, 3
  %v3678 = vpop.permute.xlu0 %3677
  %3679 = vrot.lane.b32.xlu0 %v1568, 3
  %v3680 = vpop.permute.xlu0 %3679
  %3681 = vrot.lane.b32.xlu0 %v1570, 3
  %v3682 = vpop.permute.xlu0 %3681
  %3683 = vrot.lane.b32.xlu0 %v1572, 3
  %v3684 = vpop.permute.xlu0 %3683
  %3685 = vrot.lane.b32.xlu0 %v1574, 3
  %v3686 = vpop.permute.xlu0 %3685
  %3687 = vrot.lane.b32.xlu0 %v1576, 3
  %v3688 = vpop.permute.xlu0 %3687
  %3689 = vrot.lane.b32.xlu0 %v1578, 3
  %v3690 = vpop.permute.xlu0 %3689
  %3691 = vrot.lane.b32.xlu0 %v1580, 3
  %v3692 = vpop.permute.xlu0 %3691
  %3693 = vrot.lane.b32.xlu0 %v1582, 3
  %v3694 = vpop.permute.xlu0 %3693
  %3695 = vrot.lane.b32.xlu0 %v1584, 3
  %v3696 = vpop.permute.xlu0 %3695
  %3697 = vrot.lane.b32.xlu0 %v1586, 3
  %v3698 = vpop.permute.xlu0 %3697
  %3699 = vrot.lane.b32.xlu0 %v1588, 3
  %v3700 = vpop.permute.xlu0 %3699
  %3701 = vrot.lane.b32.xlu0 %v1590, 3
  %v3702 = vpop.permute.xlu0 %3701
  %3703 = vrot.lane.b32.xlu0 %v1592, 3
  %v3704 = vpop.permute.xlu0 %3703
  %3705 = vrot.lane.b32.xlu0 %v1594, 3
  %v3706 = vpop.permute.xlu0 %3705
  %3707 = vrot.lane.b32.xlu0 %v1596, 3
  %v3708 = vpop.permute.xlu0 %3707
  %3709 = vrot.lane.b32.xlu0 %v1598, 3
  %v3710 = vpop.permute.xlu0 %3709
  %3711 = vrot.lane.b32.xlu0 %v1600, 3
  %v3712 = vpop.permute.xlu0 %3711
  %3713 = vrot.lane.b32.xlu0 %v1602, 3
  %v3714 = vpop.permute.xlu0 %3713
  %3715 = vrot.lane.b32.xlu0 %v1604, 3
  %v3716 = vpop.permute.xlu0 %3715
  %3717 = vrot.lane.b32.xlu0 %v1606, 3
  %v3718 = vpop.permute.xlu0 %3717
  %3719 = vrot.lane.b32.xlu0 %v1608, 3
  %v3720 = vpop.permute.xlu0 %3719
  %3721 = vrot.lane.b32.xlu0 %v1610, 3
  %v3722 = vpop.permute.xlu0 %3721
  %3723 = vrot.lane.b32.xlu0 %v1612, 3
  %v3724 = vpop.permute.xlu0 %3723
  %3725 = vrot.lane.b32.xlu0 %v1614, 3
  %v3726 = vpop.permute.xlu0 %3725
  %3727 = vrot.lane.b32.xlu0 %v1616, 3
  %v3728 = vpop.permute.xlu0 %3727
  %3729 = vrot.lane.b32.xlu0 %v1618, 3
  %v3730 = vpop.permute.xlu0 %3729
  %3731 = vrot.lane.b32.xlu0 %v1620, 3
  %v3732 = vpop.permute.xlu0 %3731
  %3733 = vrot.lane.b32.xlu0 %v1622, 3
  %v3734 = vpop.permute.xlu0 %3733
  %3735 = vrot.lane.b32.xlu0 %v1624, 3
  %v3736 = vpop.permute.xlu0 %3735
  %3737 = vrot.lane.b32.xlu0 %v1626, 3
  %v3738 = vpop.permute.xlu0 %3737
  %3739 = vrot.lane.b32.xlu0 %v1628, 3
  %v3740 = vpop.permute.xlu0 %3739
  %3741 = vrot.lane.b32.xlu0 %v1630, 3
  %v3742 = vpop.permute.xlu0 %3741
  %3743 = vrot.lane.b32.xlu0 %v1632, 3
  %v3744 = vpop.permute.xlu0 %3743
  %3745 = vrot.lane.b32.xlu0 %v1634, 3
  %v3746 = vpop.permute.xlu0 %3745
  %3747 = vrot.lane.b32.xlu0 %v1636, 3
  %v3748 = vpop.permute.xlu0 %3747
  %3749 = vrot.lane.b32.xlu0 %v1638, 3
  %v3750 = vpop.permute.xlu0 %3749
  %3751 = vrot.lane.b32.xlu0 %v1640, 3
  %v3752 = vpop.permute.xlu0 %3751
  %3753 = vrot.lane.b32.xlu0 %v1642, 3
  %v3754 = vpop.permute.xlu0 %3753
  %3755 = vrot.lane.b32.xlu0 %v1644, 3
  %v3756 = vpop.permute.xlu0 %3755
  %3757 = vrot.lane.b32.xlu0 %v1646, 3
  %v3758 = vpop.permute.xlu0 %3757
  %3759 = vrot.lane.b32.xlu0 %v1648, 3
  %v3760 = vpop.permute.xlu0 %3759
  %3761 = vrot.lane.b32.xlu0 %v1650, 3
  %v3762 = vpop.permute.xlu0 %3761
  %3763 = vrot.lane.b32.xlu0 %v1652, 3
  %v3764 = vpop.permute.xlu0 %3763
  %v3829 = vsel %vm288, %v1398, %v3638
  %v3830 = vsel %vm288, %v1400, %v3640
  %v3831 = vsel %vm288, %v1402, %v3642
  %v3832 = vsel %vm288, %v1404, %v3644
  %v3833 = vsel %vm288, %v1406, %v3646
  %v3834 = vsel %vm288, %v1408, %v3648
  %v3835 = vsel %vm288, %v1410, %v3650
  %v3836 = vsel %vm288, %v1412, %v3652
  %v3837 = vsel %vm288, %v1414, %v3654
  %v3838 = vsel %vm288, %v1416, %v3656
  %v3839 = vsel %vm288, %v1418, %v3658
  %v3840 = vsel %vm288, %v1420, %v3660
  %v3841 = vsel %vm288, %v1422, %v3662
  %v3842 = vsel %vm288, %v1424, %v3664
  %v3843 = vsel %vm288, %v1426, %v3666
  %v3844 = vsel %vm288, %v1428, %v3668
  %v3845 = vsel %vm288, %v1430, %v3670
  %v3846 = vsel %vm288, %v1432, %v3672
  %v3847 = vsel %vm288, %v1434, %v3674
  %v3848 = vsel %vm288, %v1436, %v3676
  %v3849 = vsel %vm288, %v1438, %v3678
  %v3850 = vsel %vm288, %v1440, %v3680
  %v3851 = vsel %vm288, %v1442, %v3682
  %v3852 = vsel %vm288, %v1444, %v3684
  %v3853 = vsel %vm288, %v1446, %v3686
  %v3854 = vsel %vm288, %v1448, %v3688
  %v3855 = vsel %vm288, %v1450, %v3690
  %v3856 = vsel %vm288, %v1452, %v3692
  %v3857 = vsel %vm288, %v1454, %v3694
  %v3858 = vsel %vm288, %v1456, %v3696
  %v3859 = vsel %vm288, %v1458, %v3698
  %v3860 = vsel %vm288, %v1460, %v3700
  %v3861 = vsel %vm288, %v1462, %v3702
  %v3862 = vsel %vm288, %v1464, %v3704
  %v3863 = vsel %vm288, %v1466, %v3706
  %v3864 = vsel %vm288, %v1468, %v3708
  %v3865 = vsel %vm288, %v1470, %v3710
  %v3866 = vsel %vm288, %v1472, %v3712
  %v3867 = vsel %vm288, %v1474, %v3714
  %v3868 = vsel %vm288, %v1476, %v3716
  %v3869 = vsel %vm288, %v1478, %v3718
  %v3870 = vsel %vm288, %v1480, %v3720
  %v3871 = vsel %vm288, %v1482, %v3722
  %v3872 = vsel %vm288, %v1484, %v3724
  %v3873 = vsel %vm288, %v1486, %v3726
  %v3874 = vsel %vm288, %v1488, %v3728
  %v3875 = vsel %vm288, %v1490, %v3730
  %v3876 = vsel %vm288, %v1492, %v3732
  %v3877 = vsel %vm288, %v1494, %v3734
  %v3878 = vsel %vm288, %v1496, %v3736
  %v3879 = vsel %vm288, %v1498, %v3738
  %v3880 = vsel %vm288, %v1500, %v3740
  %v3881 = vsel %vm288, %v1502, %v3742
  %v3882 = vsel %vm288, %v1504, %v3744
  %v3883 = vsel %vm288, %v1506, %v3746
  %v3884 = vsel %vm288, %v1508, %v3748
  %v3885 = vsel %vm288, %v1510, %v3750
  %v3886 = vsel %vm288, %v1512, %v3752
  %v3887 = vsel %vm288, %v1514, %v3754
  %v3888 = vsel %vm288, %v1516, %v3756
  %v3889 = vsel %vm288, %v1518, %v3758
  %v3890 = vsel %vm288, %v1520, %v3760
  %v3891 = vsel %vm288, %v1522, %v3762
  %v3892 = vsel %vm288, %v1524, %v3764
  %3957 = vrot.lane.b32.xlu0 %v1782, 3
  %v3958 = vpop.permute.xlu0 %3957
  %3959 = vrot.lane.b32.xlu0 %v1784, 3
  %v3960 = vpop.permute.xlu0 %3959
  %3961 = vrot.lane.b32.xlu0 %v1786, 3
  %v3962 = vpop.permute.xlu0 %3961
  %3963 = vrot.lane.b32.xlu0 %v1788, 3
  %v3964 = vpop.permute.xlu0 %3963
  %3965 = vrot.lane.b32.xlu0 %v1790, 3
  %v3966 = vpop.permute.xlu0 %3965
  %3967 = vrot.lane.b32.xlu0 %v1792, 3
  %v3968 = vpop.permute.xlu0 %3967
  %3969 = vrot.lane.b32.xlu0 %v1794, 3
  %v3970 = vpop.permute.xlu0 %3969
  %3971 = vrot.lane.b32.xlu0 %v1796, 3
  %v3972 = vpop.permute.xlu0 %3971
  %3973 = vrot.lane.b32.xlu0 %v1798, 3
  %v3974 = vpop.permute.xlu0 %3973
  %3975 = vrot.lane.b32.xlu0 %v1800, 3
  %v3976 = vpop.permute.xlu0 %3975
  %3977 = vrot.lane.b32.xlu0 %v1802, 3
  %v3978 = vpop.permute.xlu0 %3977
  %3979 = vrot.lane.b32.xlu0 %v1804, 3
  %v3980 = vpop.permute.xlu0 %3979
  %3981 = vrot.lane.b32.xlu0 %v1806, 3
  %v3982 = vpop.permute.xlu0 %3981
  %3983 = vrot.lane.b32.xlu0 %v1808, 3
  %v3984 = vpop.permute.xlu0 %3983
  %3985 = vrot.lane.b32.xlu0 %v1810, 3
  %v3986 = vpop.permute.xlu0 %3985
  %3987 = vrot.lane.b32.xlu0 %v1812, 3
  %v3988 = vpop.permute.xlu0 %3987
  %3989 = vrot.lane.b32.xlu0 %v1814, 3
  %v3990 = vpop.permute.xlu0 %3989
  %3991 = vrot.lane.b32.xlu0 %v1816, 3
  %v3992 = vpop.permute.xlu0 %3991
  %3993 = vrot.lane.b32.xlu0 %v1818, 3
  %v3994 = vpop.permute.xlu0 %3993
  %3995 = vrot.lane.b32.xlu0 %v1820, 3
  %v3996 = vpop.permute.xlu0 %3995
  %3997 = vrot.lane.b32.xlu0 %v1822, 3
  %v3998 = vpop.permute.xlu0 %3997
  %3999 = vrot.lane.b32.xlu0 %v1824, 3
  %v4000 = vpop.permute.xlu0 %3999
  %4001 = vrot.lane.b32.xlu0 %v1826, 3
  %v4002 = vpop.permute.xlu0 %4001
  %4003 = vrot.lane.b32.xlu0 %v1828, 3
  %v4004 = vpop.permute.xlu0 %4003
  %4005 = vrot.lane.b32.xlu0 %v1830, 3
  %v4006 = vpop.permute.xlu0 %4005
  %4007 = vrot.lane.b32.xlu0 %v1832, 3
  %v4008 = vpop.permute.xlu0 %4007
  %4009 = vrot.lane.b32.xlu0 %v1834, 3
  %v4010 = vpop.permute.xlu0 %4009
  %4011 = vrot.lane.b32.xlu0 %v1836, 3
  %v4012 = vpop.permute.xlu0 %4011
  %4013 = vrot.lane.b32.xlu0 %v1838, 3
  %v4014 = vpop.permute.xlu0 %4013
  %4015 = vrot.lane.b32.xlu0 %v1840, 3
  %v4016 = vpop.permute.xlu0 %4015
  %4017 = vrot.lane.b32.xlu0 %v1842, 3
  %v4018 = vpop.permute.xlu0 %4017
  %4019 = vrot.lane.b32.xlu0 %v1844, 3
  %v4020 = vpop.permute.xlu0 %4019
  %4021 = vrot.lane.b32.xlu0 %v1846, 3
  %v4022 = vpop.permute.xlu0 %4021
  %4023 = vrot.lane.b32.xlu0 %v1848, 3
  %v4024 = vpop.permute.xlu0 %4023
  %4025 = vrot.lane.b32.xlu0 %v1850, 3
  %v4026 = vpop.permute.xlu0 %4025
  %4027 = vrot.lane.b32.xlu0 %v1852, 3
  %v4028 = vpop.permute.xlu0 %4027
  %4029 = vrot.lane.b32.xlu0 %v1854, 3
  %v4030 = vpop.permute.xlu0 %4029
  %4031 = vrot.lane.b32.xlu0 %v1856, 3
  %v4032 = vpop.permute.xlu0 %4031
  %4033 = vrot.lane.b32.xlu0 %v1858, 3
  %v4034 = vpop.permute.xlu0 %4033
  %4035 = vrot.lane.b32.xlu0 %v1860, 3
  %v4036 = vpop.permute.xlu0 %4035
  %4037 = vrot.lane.b32.xlu0 %v1862, 3
  %v4038 = vpop.permute.xlu0 %4037
  %4039 = vrot.lane.b32.xlu0 %v1864, 3
  %v4040 = vpop.permute.xlu0 %4039
  %4041 = vrot.lane.b32.xlu0 %v1866, 3
  %v4042 = vpop.permute.xlu0 %4041
  %4043 = vrot.lane.b32.xlu0 %v1868, 3
  %v4044 = vpop.permute.xlu0 %4043
  %4045 = vrot.lane.b32.xlu0 %v1870, 3
  %v4046 = vpop.permute.xlu0 %4045
  %4047 = vrot.lane.b32.xlu0 %v1872, 3
  %v4048 = vpop.permute.xlu0 %4047
  %4049 = vrot.lane.b32.xlu0 %v1874, 3
  %v4050 = vpop.permute.xlu0 %4049
  %4051 = vrot.lane.b32.xlu0 %v1876, 3
  %v4052 = vpop.permute.xlu0 %4051
  %4053 = vrot.lane.b32.xlu0 %v1878, 3
  %v4054 = vpop.permute.xlu0 %4053
  %4055 = vrot.lane.b32.xlu0 %v1880, 3
  %v4056 = vpop.permute.xlu0 %4055
  %4057 = vrot.lane.b32.xlu0 %v1882, 3
  %v4058 = vpop.permute.xlu0 %4057
  %4059 = vrot.lane.b32.xlu0 %v1884, 3
  %v4060 = vpop.permute.xlu0 %4059
  %4061 = vrot.lane.b32.xlu0 %v1886, 3
  %v4062 = vpop.permute.xlu0 %4061
  %4063 = vrot.lane.b32.xlu0 %v1888, 3
  %v4064 = vpop.permute.xlu0 %4063
  %4065 = vrot.lane.b32.xlu0 %v1890, 3
  %v4066 = vpop.permute.xlu0 %4065
  %4067 = vrot.lane.b32.xlu0 %v1892, 3
  %v4068 = vpop.permute.xlu0 %4067
  %4069 = vrot.lane.b32.xlu0 %v1894, 3
  %v4070 = vpop.permute.xlu0 %4069
  %4071 = vrot.lane.b32.xlu0 %v1896, 3
  %v4072 = vpop.permute.xlu0 %4071
  %4073 = vrot.lane.b32.xlu0 %v1898, 3
  %v4074 = vpop.permute.xlu0 %4073
  %4075 = vrot.lane.b32.xlu0 %v1900, 3
  %v4076 = vpop.permute.xlu0 %4075
  %4077 = vrot.lane.b32.xlu0 %v1902, 3
  %v4078 = vpop.permute.xlu0 %4077
  %4079 = vrot.lane.b32.xlu0 %v1904, 3
  %v4080 = vpop.permute.xlu0 %4079
  %4081 = vrot.lane.b32.xlu0 %v1906, 3
  %v4082 = vpop.permute.xlu0 %4081
  %4083 = vrot.lane.b32.xlu0 %v1908, 3
  %v4084 = vpop.permute.xlu0 %4083
  %v4149 = vsel %vm288, %v1654, %v3958
  %v4150 = vsel %vm288, %v1656, %v3960
  %v4151 = vsel %vm288, %v1658, %v3962
  %v4152 = vsel %vm288, %v1660, %v3964
  %v4153 = vsel %vm288, %v1662, %v3966
  %v4154 = vsel %vm288, %v1664, %v3968
  %v4155 = vsel %vm288, %v1666, %v3970
  %v4156 = vsel %vm288, %v1668, %v3972
  %v4157 = vsel %vm288, %v1670, %v3974
  %v4158 = vsel %vm288, %v1672, %v3976
  %v4159 = vsel %vm288, %v1674, %v3978
  %v4160 = vsel %vm288, %v1676, %v3980
  %v4161 = vsel %vm288, %v1678, %v3982
  %v4162 = vsel %vm288, %v1680, %v3984
  %v4163 = vsel %vm288, %v1682, %v3986
  %v4164 = vsel %vm288, %v1684, %v3988
  %v4165 = vsel %vm288, %v1686, %v3990
  %v4166 = vsel %vm288, %v1688, %v3992
  %v4167 = vsel %vm288, %v1690, %v3994
  %v4168 = vsel %vm288, %v1692, %v3996
  %v4169 = vsel %vm288, %v1694, %v3998
  %v4170 = vsel %vm288, %v1696, %v4000
  %v4171 = vsel %vm288, %v1698, %v4002
  %v4172 = vsel %vm288, %v1700, %v4004
  %v4173 = vsel %vm288, %v1702, %v4006
  %v4174 = vsel %vm288, %v1704, %v4008
  %v4175 = vsel %vm288, %v1706, %v4010
  %v4176 = vsel %vm288, %v1708, %v4012
  %v4177 = vsel %vm288, %v1710, %v4014
  %v4178 = vsel %vm288, %v1712, %v4016
  %v4179 = vsel %vm288, %v1714, %v4018
  %v4180 = vsel %vm288, %v1716, %v4020
  %v4181 = vsel %vm288, %v1718, %v4022
  %v4182 = vsel %vm288, %v1720, %v4024
  %v4183 = vsel %vm288, %v1722, %v4026
  %v4184 = vsel %vm288, %v1724, %v4028
  %v4185 = vsel %vm288, %v1726, %v4030
  %v4186 = vsel %vm288, %v1728, %v4032
  %v4187 = vsel %vm288, %v1730, %v4034
  %v4188 = vsel %vm288, %v1732, %v4036
  %v4189 = vsel %vm288, %v1734, %v4038
  %v4190 = vsel %vm288, %v1736, %v4040
  %v4191 = vsel %vm288, %v1738, %v4042
  %v4192 = vsel %vm288, %v1740, %v4044
  %v4193 = vsel %vm288, %v1742, %v4046
  %v4194 = vsel %vm288, %v1744, %v4048
  %v4195 = vsel %vm288, %v1746, %v4050
  %v4196 = vsel %vm288, %v1748, %v4052
  %v4197 = vsel %vm288, %v1750, %v4054
  %v4198 = vsel %vm288, %v1752, %v4056
  %v4199 = vsel %vm288, %v1754, %v4058
  %v4200 = vsel %vm288, %v1756, %v4060
  %v4201 = vsel %vm288, %v1758, %v4062
  %v4202 = vsel %vm288, %v1760, %v4064
  %v4203 = vsel %vm288, %v1762, %v4066
  %v4204 = vsel %vm288, %v1764, %v4068
  %v4205 = vsel %vm288, %v1766, %v4070
  %v4206 = vsel %vm288, %v1768, %v4072
  %v4207 = vsel %vm288, %v1770, %v4074
  %v4208 = vsel %vm288, %v1772, %v4076
  %v4209 = vsel %vm288, %v1774, %v4078
  %v4210 = vsel %vm288, %v1776, %v4080
  %v4211 = vsel %vm288, %v1778, %v4082
  %v4212 = vsel %vm288, %v1780, %v4084
  %4277 = vrot.lane.b32.xlu0 %v2038, 3
  %v4278 = vpop.permute.xlu0 %4277
  %4279 = vrot.lane.b32.xlu0 %v2040, 3
  %v4280 = vpop.permute.xlu0 %4279
  %4281 = vrot.lane.b32.xlu0 %v2042, 3
  %v4282 = vpop.permute.xlu0 %4281
  %4283 = vrot.lane.b32.xlu0 %v2044, 3
  %v4284 = vpop.permute.xlu0 %4283
  %4285 = vrot.lane.b32.xlu0 %v2046, 3
  %v4286 = vpop.permute.xlu0 %4285
  %4287 = vrot.lane.b32.xlu0 %v2048, 3
  %v4288 = vpop.permute.xlu0 %4287
  %4289 = vrot.lane.b32.xlu0 %v2050, 3
  %v4290 = vpop.permute.xlu0 %4289
  %4291 = vrot.lane.b32.xlu0 %v2052, 3
  %v4292 = vpop.permute.xlu0 %4291
  %4293 = vrot.lane.b32.xlu0 %v2054, 3
  %v4294 = vpop.permute.xlu0 %4293
  %4295 = vrot.lane.b32.xlu0 %v2056, 3
  %v4296 = vpop.permute.xlu0 %4295
  %4297 = vrot.lane.b32.xlu0 %v2058, 3
  %v4298 = vpop.permute.xlu0 %4297
  %4299 = vrot.lane.b32.xlu0 %v2060, 3
  %v4300 = vpop.permute.xlu0 %4299
  %4301 = vrot.lane.b32.xlu0 %v2062, 3
  %v4302 = vpop.permute.xlu0 %4301
  %4303 = vrot.lane.b32.xlu0 %v2064, 3
  %v4304 = vpop.permute.xlu0 %4303
  %4305 = vrot.lane.b32.xlu0 %v2066, 3
  %v4306 = vpop.permute.xlu0 %4305
  %4307 = vrot.lane.b32.xlu0 %v2068, 3
  %v4308 = vpop.permute.xlu0 %4307
  %4309 = vrot.lane.b32.xlu0 %v2070, 3
  %v4310 = vpop.permute.xlu0 %4309
  %4311 = vrot.lane.b32.xlu0 %v2072, 3
  %v4312 = vpop.permute.xlu0 %4311
  %4313 = vrot.lane.b32.xlu0 %v2074, 3
  %v4314 = vpop.permute.xlu0 %4313
  %4315 = vrot.lane.b32.xlu0 %v2076, 3
  %v4316 = vpop.permute.xlu0 %4315
  %4317 = vrot.lane.b32.xlu0 %v2078, 3
  %v4318 = vpop.permute.xlu0 %4317
  %4319 = vrot.lane.b32.xlu0 %v2080, 3
  %v4320 = vpop.permute.xlu0 %4319
  %4321 = vrot.lane.b32.xlu0 %v2082, 3
  %v4322 = vpop.permute.xlu0 %4321
  %4323 = vrot.lane.b32.xlu0 %v2084, 3
  %v4324 = vpop.permute.xlu0 %4323
  %4325 = vrot.lane.b32.xlu0 %v2086, 3
  %v4326 = vpop.permute.xlu0 %4325
  %4327 = vrot.lane.b32.xlu0 %v2088, 3
  %v4328 = vpop.permute.xlu0 %4327
  %4329 = vrot.lane.b32.xlu0 %v2090, 3
  %v4330 = vpop.permute.xlu0 %4329
  %4331 = vrot.lane.b32.xlu0 %v2092, 3
  %v4332 = vpop.permute.xlu0 %4331
  %4333 = vrot.lane.b32.xlu0 %v2094, 3
  %v4334 = vpop.permute.xlu0 %4333
  %4335 = vrot.lane.b32.xlu0 %v2096, 3
  %v4336 = vpop.permute.xlu0 %4335
  %4337 = vrot.lane.b32.xlu0 %v2098, 3
  %v4338 = vpop.permute.xlu0 %4337
  %4339 = vrot.lane.b32.xlu0 %v2100, 3
  %v4340 = vpop.permute.xlu0 %4339
  %4341 = vrot.lane.b32.xlu0 %v2102, 3
  %v4342 = vpop.permute.xlu0 %4341
  %4343 = vrot.lane.b32.xlu0 %v2104, 3
  %v4344 = vpop.permute.xlu0 %4343
  %4345 = vrot.lane.b32.xlu0 %v2106, 3
  %v4346 = vpop.permute.xlu0 %4345
  %4347 = vrot.lane.b32.xlu0 %v2108, 3
  %v4348 = vpop.permute.xlu0 %4347
  %4349 = vrot.lane.b32.xlu0 %v2110, 3
  %v4350 = vpop.permute.xlu0 %4349
  %4351 = vrot.lane.b32.xlu0 %v2112, 3
  %v4352 = vpop.permute.xlu0 %4351
  %4353 = vrot.lane.b32.xlu0 %v2114, 3
  %v4354 = vpop.permute.xlu0 %4353
  %4355 = vrot.lane.b32.xlu0 %v2116, 3
  %v4356 = vpop.permute.xlu0 %4355
  %4357 = vrot.lane.b32.xlu0 %v2118, 3
  %v4358 = vpop.permute.xlu0 %4357
  %4359 = vrot.lane.b32.xlu0 %v2120, 3
  %v4360 = vpop.permute.xlu0 %4359
  %4361 = vrot.lane.b32.xlu0 %v2122, 3
  %v4362 = vpop.permute.xlu0 %4361
  %4363 = vrot.lane.b32.xlu0 %v2124, 3
  %v4364 = vpop.permute.xlu0 %4363
  %4365 = vrot.lane.b32.xlu0 %v2126, 3
  %v4366 = vpop.permute.xlu0 %4365
  %4367 = vrot.lane.b32.xlu0 %v2128, 3
  %v4368 = vpop.permute.xlu0 %4367
  %4369 = vrot.lane.b32.xlu0 %v2130, 3
  %v4370 = vpop.permute.xlu0 %4369
  %4371 = vrot.lane.b32.xlu0 %v2132, 3
  %v4372 = vpop.permute.xlu0 %4371
  %4373 = vrot.lane.b32.xlu0 %v2134, 3
  %v4374 = vpop.permute.xlu0 %4373
  %4375 = vrot.lane.b32.xlu0 %v2136, 3
  %v4376 = vpop.permute.xlu0 %4375
  %4377 = vrot.lane.b32.xlu0 %v2138, 3
  %v4378 = vpop.permute.xlu0 %4377
  %4379 = vrot.lane.b32.xlu0 %v2140, 3
  %v4380 = vpop.permute.xlu0 %4379
  %4381 = vrot.lane.b32.xlu0 %v2142, 3
  %v4382 = vpop.permute.xlu0 %4381
  %4383 = vrot.lane.b32.xlu0 %v2144, 3
  %v4384 = vpop.permute.xlu0 %4383
  %4385 = vrot.lane.b32.xlu0 %v2146, 3
  %v4386 = vpop.permute.xlu0 %4385
  %4387 = vrot.lane.b32.xlu0 %v2148, 3
  %v4388 = vpop.permute.xlu0 %4387
  %4389 = vrot.lane.b32.xlu0 %v2150, 3
  %v4390 = vpop.permute.xlu0 %4389
  %4391 = vrot.lane.b32.xlu0 %v2152, 3
  %v4392 = vpop.permute.xlu0 %4391
  %4393 = vrot.lane.b32.xlu0 %v2154, 3
  %v4394 = vpop.permute.xlu0 %4393
  %4395 = vrot.lane.b32.xlu0 %v2156, 3
  %v4396 = vpop.permute.xlu0 %4395
  %4397 = vrot.lane.b32.xlu0 %v2158, 3
  %v4398 = vpop.permute.xlu0 %4397
  %4399 = vrot.lane.b32.xlu0 %v2160, 3
  %v4400 = vpop.permute.xlu0 %4399
  %4401 = vrot.lane.b32.xlu0 %v2162, 3
  %v4402 = vpop.permute.xlu0 %4401
  %4403 = vrot.lane.b32.xlu0 %v2164, 3
  %v4404 = vpop.permute.xlu0 %4403
  %v4469 = vsel %vm288, %v1910, %v4278
  %v4470 = vsel %vm288, %v1912, %v4280
  %v4471 = vsel %vm288, %v1914, %v4282
  %v4472 = vsel %vm288, %v1916, %v4284
  %v4473 = vsel %vm288, %v1918, %v4286
  %v4474 = vsel %vm288, %v1920, %v4288
  %v4475 = vsel %vm288, %v1922, %v4290
  %v4476 = vsel %vm288, %v1924, %v4292
  %v4477 = vsel %vm288, %v1926, %v4294
  %v4478 = vsel %vm288, %v1928, %v4296
  %v4479 = vsel %vm288, %v1930, %v4298
  %v4480 = vsel %vm288, %v1932, %v4300
  %v4481 = vsel %vm288, %v1934, %v4302
  %v4482 = vsel %vm288, %v1936, %v4304
  %v4483 = vsel %vm288, %v1938, %v4306
  %v4484 = vsel %vm288, %v1940, %v4308
  %v4485 = vsel %vm288, %v1942, %v4310
  %v4486 = vsel %vm288, %v1944, %v4312
  %v4487 = vsel %vm288, %v1946, %v4314
  %v4488 = vsel %vm288, %v1948, %v4316
  %v4489 = vsel %vm288, %v1950, %v4318
  %v4490 = vsel %vm288, %v1952, %v4320
  %v4491 = vsel %vm288, %v1954, %v4322
  %v4492 = vsel %vm288, %v1956, %v4324
  %v4493 = vsel %vm288, %v1958, %v4326
  %v4494 = vsel %vm288, %v1960, %v4328
  %v4495 = vsel %vm288, %v1962, %v4330
  %v4496 = vsel %vm288, %v1964, %v4332
  %v4497 = vsel %vm288, %v1966, %v4334
  %v4498 = vsel %vm288, %v1968, %v4336
  %v4499 = vsel %vm288, %v1970, %v4338
  %v4500 = vsel %vm288, %v1972, %v4340
  %v4501 = vsel %vm288, %v1974, %v4342
  %v4502 = vsel %vm288, %v1976, %v4344
  %v4503 = vsel %vm288, %v1978, %v4346
  %v4504 = vsel %vm288, %v1980, %v4348
  %v4505 = vsel %vm288, %v1982, %v4350
  %v4506 = vsel %vm288, %v1984, %v4352
  %v4507 = vsel %vm288, %v1986, %v4354
  %v4508 = vsel %vm288, %v1988, %v4356
  %v4509 = vsel %vm288, %v1990, %v4358
  %v4510 = vsel %vm288, %v1992, %v4360
  %v4511 = vsel %vm288, %v1994, %v4362
  %v4512 = vsel %vm288, %v1996, %v4364
  %v4513 = vsel %vm288, %v1998, %v4366
  %v4514 = vsel %vm288, %v2000, %v4368
  %v4515 = vsel %vm288, %v2002, %v4370
  %v4516 = vsel %vm288, %v2004, %v4372
  %v4517 = vsel %vm288, %v2006, %v4374
  %v4518 = vsel %vm288, %v2008, %v4376
  %v4519 = vsel %vm288, %v2010, %v4378
  %v4520 = vsel %vm288, %v2012, %v4380
  %v4521 = vsel %vm288, %v2014, %v4382
  %v4522 = vsel %vm288, %v2016, %v4384
  %v4523 = vsel %vm288, %v2018, %v4386
  %v4524 = vsel %vm288, %v2020, %v4388
  %v4525 = vsel %vm288, %v2022, %v4390
  %v4526 = vsel %vm288, %v2024, %v4392
  %v4527 = vsel %vm288, %v2026, %v4394
  %v4528 = vsel %vm288, %v2028, %v4396
  %v4529 = vsel %vm288, %v2030, %v4398
  %v4530 = vsel %vm288, %v2032, %v4400
  %v4531 = vsel %vm288, %v2034, %v4402
  %v4532 = vsel %vm288, %v2036, %v4404
  %4597 = vrot.lane.b32.xlu0 %v2294, 3
  %v4598 = vpop.permute.xlu0 %4597
  %4599 = vrot.lane.b32.xlu0 %v2296, 3
  %v4600 = vpop.permute.xlu0 %4599
  %4601 = vrot.lane.b32.xlu0 %v2298, 3
  %v4602 = vpop.permute.xlu0 %4601
  %4603 = vrot.lane.b32.xlu0 %v2300, 3
  %v4604 = vpop.permute.xlu0 %4603
  %4605 = vrot.lane.b32.xlu0 %v2302, 3
  %v4606 = vpop.permute.xlu0 %4605
  %4607 = vrot.lane.b32.xlu0 %v2304, 3
  %v4608 = vpop.permute.xlu0 %4607
  %4609 = vrot.lane.b32.xlu0 %v2306, 3
  %v4610 = vpop.permute.xlu0 %4609
  %4611 = vrot.lane.b32.xlu0 %v2308, 3
  %v4612 = vpop.permute.xlu0 %4611
  %4613 = vrot.lane.b32.xlu0 %v2310, 3
  %v4614 = vpop.permute.xlu0 %4613
  %4615 = vrot.lane.b32.xlu0 %v2312, 3
  %v4616 = vpop.permute.xlu0 %4615
  %4617 = vrot.lane.b32.xlu0 %v2314, 3
  %v4618 = vpop.permute.xlu0 %4617
  %4619 = vrot.lane.b32.xlu0 %v2316, 3
  %v4620 = vpop.permute.xlu0 %4619
  %4621 = vrot.lane.b32.xlu0 %v2318, 3
  %v4622 = vpop.permute.xlu0 %4621
  %4623 = vrot.lane.b32.xlu0 %v2320, 3
  %v4624 = vpop.permute.xlu0 %4623
  %4625 = vrot.lane.b32.xlu0 %v2322, 3
  %v4626 = vpop.permute.xlu0 %4625
  %4627 = vrot.lane.b32.xlu0 %v2324, 3
  %v4628 = vpop.permute.xlu0 %4627
  %4629 = vrot.lane.b32.xlu0 %v2326, 3
  %v4630 = vpop.permute.xlu0 %4629
  %4631 = vrot.lane.b32.xlu0 %v2328, 3
  %v4632 = vpop.permute.xlu0 %4631
  %4633 = vrot.lane.b32.xlu0 %v2330, 3
  %v4634 = vpop.permute.xlu0 %4633
  %4635 = vrot.lane.b32.xlu0 %v2332, 3
  %v4636 = vpop.permute.xlu0 %4635
  %4637 = vrot.lane.b32.xlu0 %v2334, 3
  %v4638 = vpop.permute.xlu0 %4637
  %4639 = vrot.lane.b32.xlu0 %v2336, 3
  %v4640 = vpop.permute.xlu0 %4639
  %4641 = vrot.lane.b32.xlu0 %v2338, 3
  %v4642 = vpop.permute.xlu0 %4641
  %4643 = vrot.lane.b32.xlu0 %v2340, 3
  %v4644 = vpop.permute.xlu0 %4643
  %4645 = vrot.lane.b32.xlu0 %v2342, 3
  %v4646 = vpop.permute.xlu0 %4645
  %4647 = vrot.lane.b32.xlu0 %v2344, 3
  %v4648 = vpop.permute.xlu0 %4647
  %4649 = vrot.lane.b32.xlu0 %v2346, 3
  %v4650 = vpop.permute.xlu0 %4649
  %4651 = vrot.lane.b32.xlu0 %v2348, 3
  %v4652 = vpop.permute.xlu0 %4651
  %4653 = vrot.lane.b32.xlu0 %v2350, 3
  %v4654 = vpop.permute.xlu0 %4653
  %4655 = vrot.lane.b32.xlu0 %v2352, 3
  %v4656 = vpop.permute.xlu0 %4655
  %4657 = vrot.lane.b32.xlu0 %v2354, 3
  %v4658 = vpop.permute.xlu0 %4657
  %4659 = vrot.lane.b32.xlu0 %v2356, 3
  %v4660 = vpop.permute.xlu0 %4659
  %4661 = vrot.lane.b32.xlu0 %v2358, 3
  %v4662 = vpop.permute.xlu0 %4661
  %4663 = vrot.lane.b32.xlu0 %v2360, 3
  %v4664 = vpop.permute.xlu0 %4663
  %4665 = vrot.lane.b32.xlu0 %v2362, 3
  %v4666 = vpop.permute.xlu0 %4665
  %4667 = vrot.lane.b32.xlu0 %v2364, 3
  %v4668 = vpop.permute.xlu0 %4667
  %4669 = vrot.lane.b32.xlu0 %v2366, 3
  %v4670 = vpop.permute.xlu0 %4669
  %4671 = vrot.lane.b32.xlu0 %v2368, 3
  %v4672 = vpop.permute.xlu0 %4671
  %4673 = vrot.lane.b32.xlu0 %v2370, 3
  %v4674 = vpop.permute.xlu0 %4673
  %4675 = vrot.lane.b32.xlu0 %v2372, 3
  %v4676 = vpop.permute.xlu0 %4675
  %4677 = vrot.lane.b32.xlu0 %v2374, 3
  %v4678 = vpop.permute.xlu0 %4677
  %4679 = vrot.lane.b32.xlu0 %v2376, 3
  %v4680 = vpop.permute.xlu0 %4679
  %4681 = vrot.lane.b32.xlu0 %v2378, 3
  %v4682 = vpop.permute.xlu0 %4681
  %4683 = vrot.lane.b32.xlu0 %v2380, 3
  %v4684 = vpop.permute.xlu0 %4683
  %4685 = vrot.lane.b32.xlu0 %v2382, 3
  %v4686 = vpop.permute.xlu0 %4685
  %4687 = vrot.lane.b32.xlu0 %v2384, 3
  %v4688 = vpop.permute.xlu0 %4687
  %4689 = vrot.lane.b32.xlu0 %v2386, 3
  %v4690 = vpop.permute.xlu0 %4689
  %4691 = vrot.lane.b32.xlu0 %v2388, 3
  %v4692 = vpop.permute.xlu0 %4691
  %4693 = vrot.lane.b32.xlu0 %v2390, 3
  %v4694 = vpop.permute.xlu0 %4693
  %4695 = vrot.lane.b32.xlu0 %v2392, 3
  %v4696 = vpop.permute.xlu0 %4695
  %4697 = vrot.lane.b32.xlu0 %v2394, 3
  %v4698 = vpop.permute.xlu0 %4697
  %4699 = vrot.lane.b32.xlu0 %v2396, 3
  %v4700 = vpop.permute.xlu0 %4699
  %4701 = vrot.lane.b32.xlu0 %v2398, 3
  %v4702 = vpop.permute.xlu0 %4701
  %4703 = vrot.lane.b32.xlu0 %v2400, 3
  %v4704 = vpop.permute.xlu0 %4703
  %4705 = vrot.lane.b32.xlu0 %v2402, 3
  %v4706 = vpop.permute.xlu0 %4705
  %4707 = vrot.lane.b32.xlu0 %v2404, 3
  %v4708 = vpop.permute.xlu0 %4707
  %4709 = vrot.lane.b32.xlu0 %v2406, 3
  %v4710 = vpop.permute.xlu0 %4709
  %4711 = vrot.lane.b32.xlu0 %v2408, 3
  %v4712 = vpop.permute.xlu0 %4711
  %4713 = vrot.lane.b32.xlu0 %v2410, 3
  %v4714 = vpop.permute.xlu0 %4713
  %4715 = vrot.lane.b32.xlu0 %v2412, 3
  %v4716 = vpop.permute.xlu0 %4715
  %4717 = vrot.lane.b32.xlu0 %v2414, 3
  %v4718 = vpop.permute.xlu0 %4717
  %4719 = vrot.lane.b32.xlu0 %v2416, 3
  %v4720 = vpop.permute.xlu0 %4719
  %4721 = vrot.lane.b32.xlu0 %v2418, 3
  %v4722 = vpop.permute.xlu0 %4721
  %4723 = vrot.lane.b32.xlu0 %v2420, 3
  %v4724 = vpop.permute.xlu0 %4723
  %v4789 = vsel %vm288, %v2166, %v4598
  %v4790 = vsel %vm288, %v2168, %v4600
  %v4791 = vsel %vm288, %v2170, %v4602
  %v4792 = vsel %vm288, %v2172, %v4604
  %v4793 = vsel %vm288, %v2174, %v4606
  %v4794 = vsel %vm288, %v2176, %v4608
  %v4795 = vsel %vm288, %v2178, %v4610
  %v4796 = vsel %vm288, %v2180, %v4612
  %v4797 = vsel %vm288, %v2182, %v4614
  %v4798 = vsel %vm288, %v2184, %v4616
  %v4799 = vsel %vm288, %v2186, %v4618
  %v4800 = vsel %vm288, %v2188, %v4620
  %v4801 = vsel %vm288, %v2190, %v4622
  %v4802 = vsel %vm288, %v2192, %v4624
  %v4803 = vsel %vm288, %v2194, %v4626
  %v4804 = vsel %vm288, %v2196, %v4628
  %v4805 = vsel %vm288, %v2198, %v4630
  %v4806 = vsel %vm288, %v2200, %v4632
  %v4807 = vsel %vm288, %v2202, %v4634
  %v4808 = vsel %vm288, %v2204, %v4636
  %v4809 = vsel %vm288, %v2206, %v4638
  %v4810 = vsel %vm288, %v2208, %v4640
  %v4811 = vsel %vm288, %v2210, %v4642
  %v4812 = vsel %vm288, %v2212, %v4644
  %v4813 = vsel %vm288, %v2214, %v4646
  %v4814 = vsel %vm288, %v2216, %v4648
  %v4815 = vsel %vm288, %v2218, %v4650
  %v4816 = vsel %vm288, %v2220, %v4652
  %v4817 = vsel %vm288, %v2222, %v4654
  %v4818 = vsel %vm288, %v2224, %v4656
  %v4819 = vsel %vm288, %v2226, %v4658
  %v4820 = vsel %vm288, %v2228, %v4660
  %v4821 = vsel %vm288, %v2230, %v4662
  %v4822 = vsel %vm288, %v2232, %v4664
  %v4823 = vsel %vm288, %v2234, %v4666
  %v4824 = vsel %vm288, %v2236, %v4668
  %v4825 = vsel %vm288, %v2238, %v4670
  %v4826 = vsel %vm288, %v2240, %v4672
  %v4827 = vsel %vm288, %v2242, %v4674
  %v4828 = vsel %vm288, %v2244, %v4676
  %v4829 = vsel %vm288, %v2246, %v4678
  %v4830 = vsel %vm288, %v2248, %v4680
  %v4831 = vsel %vm288, %v2250, %v4682
  %v4832 = vsel %vm288, %v2252, %v4684
  %v4833 = vsel %vm288, %v2254, %v4686
  %v4834 = vsel %vm288, %v2256, %v4688
  %v4835 = vsel %vm288, %v2258, %v4690
  %v4836 = vsel %vm288, %v2260, %v4692
  %v4837 = vsel %vm288, %v2262, %v4694
  %v4838 = vsel %vm288, %v2264, %v4696
  %v4839 = vsel %vm288, %v2266, %v4698
  %v4840 = vsel %vm288, %v2268, %v4700
  %v4841 = vsel %vm288, %v2270, %v4702
  %v4842 = vsel %vm288, %v2272, %v4704
  %v4843 = vsel %vm288, %v2274, %v4706
  %v4844 = vsel %vm288, %v2276, %v4708
  %v4845 = vsel %vm288, %v2278, %v4710
  %v4846 = vsel %vm288, %v2280, %v4712
  %v4847 = vsel %vm288, %v2282, %v4714
  %v4848 = vsel %vm288, %v2284, %v4716
  %v4849 = vsel %vm288, %v2286, %v4718
  %v4850 = vsel %vm288, %v2288, %v4720
  %v4851 = vsel %vm288, %v2290, %v4722
  %v4852 = vsel %vm288, %v2292, %v4724
  %4917 = vrot.lane.b32.xlu0 %v2550, 3
  %v4918 = vpop.permute.xlu0 %4917
  %4919 = vrot.lane.b32.xlu0 %v2552, 3
  %v4920 = vpop.permute.xlu0 %4919
  %4921 = vrot.lane.b32.xlu0 %v2554, 3
  %v4922 = vpop.permute.xlu0 %4921
  %4923 = vrot.lane.b32.xlu0 %v2556, 3
  %v4924 = vpop.permute.xlu0 %4923
  %4925 = vrot.lane.b32.xlu0 %v2558, 3
  %v4926 = vpop.permute.xlu0 %4925
  %4927 = vrot.lane.b32.xlu0 %v2560, 3
  %v4928 = vpop.permute.xlu0 %4927
  %4929 = vrot.lane.b32.xlu0 %v2562, 3
  %v4930 = vpop.permute.xlu0 %4929
  %4931 = vrot.lane.b32.xlu0 %v2564, 3
  %v4932 = vpop.permute.xlu0 %4931
  %4933 = vrot.lane.b32.xlu0 %v2566, 3
  %v4934 = vpop.permute.xlu0 %4933
  %4935 = vrot.lane.b32.xlu0 %v2568, 3
  %v4936 = vpop.permute.xlu0 %4935
  %4937 = vrot.lane.b32.xlu0 %v2570, 3
  %v4938 = vpop.permute.xlu0 %4937
  %4939 = vrot.lane.b32.xlu0 %v2572, 3
  %v4940 = vpop.permute.xlu0 %4939
  %4941 = vrot.lane.b32.xlu0 %v2574, 3
  %v4942 = vpop.permute.xlu0 %4941
  %4943 = vrot.lane.b32.xlu0 %v2576, 3
  %v4944 = vpop.permute.xlu0 %4943
  %4945 = vrot.lane.b32.xlu0 %v2578, 3
  %v4946 = vpop.permute.xlu0 %4945
  %4947 = vrot.lane.b32.xlu0 %v2580, 3
  %v4948 = vpop.permute.xlu0 %4947
  %4949 = vrot.lane.b32.xlu0 %v2582, 3
  %v4950 = vpop.permute.xlu0 %4949
  %4951 = vrot.lane.b32.xlu0 %v2584, 3
  %v4952 = vpop.permute.xlu0 %4951
  %4953 = vrot.lane.b32.xlu0 %v2586, 3
  %v4954 = vpop.permute.xlu0 %4953
  %4955 = vrot.lane.b32.xlu0 %v2588, 3
  %v4956 = vpop.permute.xlu0 %4955
  %4957 = vrot.lane.b32.xlu0 %v2590, 3
  %v4958 = vpop.permute.xlu0 %4957
  %4959 = vrot.lane.b32.xlu0 %v2592, 3
  %v4960 = vpop.permute.xlu0 %4959
  %4961 = vrot.lane.b32.xlu0 %v2594, 3
  %v4962 = vpop.permute.xlu0 %4961
  %4963 = vrot.lane.b32.xlu0 %v2596, 3
  %v4964 = vpop.permute.xlu0 %4963
  %4965 = vrot.lane.b32.xlu0 %v2598, 3
  %v4966 = vpop.permute.xlu0 %4965
  %4967 = vrot.lane.b32.xlu0 %v2600, 3
  %v4968 = vpop.permute.xlu0 %4967
  %4969 = vrot.lane.b32.xlu0 %v2602, 3
  %v4970 = vpop.permute.xlu0 %4969
  %4971 = vrot.lane.b32.xlu0 %v2604, 3
  %v4972 = vpop.permute.xlu0 %4971
  %4973 = vrot.lane.b32.xlu0 %v2606, 3
  %v4974 = vpop.permute.xlu0 %4973
  %4975 = vrot.lane.b32.xlu0 %v2608, 3
  %v4976 = vpop.permute.xlu0 %4975
  %4977 = vrot.lane.b32.xlu0 %v2610, 3
  %v4978 = vpop.permute.xlu0 %4977
  %4979 = vrot.lane.b32.xlu0 %v2612, 3
  %v4980 = vpop.permute.xlu0 %4979
  %4981 = vrot.lane.b32.xlu0 %v2614, 3
  %v4982 = vpop.permute.xlu0 %4981
  %4983 = vrot.lane.b32.xlu0 %v2616, 3
  %v4984 = vpop.permute.xlu0 %4983
  %4985 = vrot.lane.b32.xlu0 %v2618, 3
  %v4986 = vpop.permute.xlu0 %4985
  %4987 = vrot.lane.b32.xlu0 %v2620, 3
  %v4988 = vpop.permute.xlu0 %4987
  %4989 = vrot.lane.b32.xlu0 %v2622, 3
  %v4990 = vpop.permute.xlu0 %4989
  %4991 = vrot.lane.b32.xlu0 %v2624, 3
  %v4992 = vpop.permute.xlu0 %4991
  %4993 = vrot.lane.b32.xlu0 %v2626, 3
  %v4994 = vpop.permute.xlu0 %4993
  %4995 = vrot.lane.b32.xlu0 %v2628, 3
  %v4996 = vpop.permute.xlu0 %4995
  %4997 = vrot.lane.b32.xlu0 %v2630, 3
  %v4998 = vpop.permute.xlu0 %4997
  %4999 = vrot.lane.b32.xlu0 %v2632, 3
  %v5000 = vpop.permute.xlu0 %4999
  %5001 = vrot.lane.b32.xlu0 %v2634, 3
  %v5002 = vpop.permute.xlu0 %5001
  %5003 = vrot.lane.b32.xlu0 %v2636, 3
  %v5004 = vpop.permute.xlu0 %5003
  %5005 = vrot.lane.b32.xlu0 %v2638, 3
  %v5006 = vpop.permute.xlu0 %5005
  %5007 = vrot.lane.b32.xlu0 %v2640, 3
  %v5008 = vpop.permute.xlu0 %5007
  %5009 = vrot.lane.b32.xlu0 %v2642, 3
  %v5010 = vpop.permute.xlu0 %5009
  %5011 = vrot.lane.b32.xlu0 %v2644, 3
  %v5012 = vpop.permute.xlu0 %5011
  %5013 = vrot.lane.b32.xlu0 %v2646, 3
  %v5014 = vpop.permute.xlu0 %5013
  %5015 = vrot.lane.b32.xlu0 %v2648, 3
  %v5016 = vpop.permute.xlu0 %5015
  %5017 = vrot.lane.b32.xlu0 %v2650, 3
  %v5018 = vpop.permute.xlu0 %5017
  %5019 = vrot.lane.b32.xlu0 %v2652, 3
  %v5020 = vpop.permute.xlu0 %5019
  %5021 = vrot.lane.b32.xlu0 %v2654, 3
  %v5022 = vpop.permute.xlu0 %5021
  %5023 = vrot.lane.b32.xlu0 %v2656, 3
  %v5024 = vpop.permute.xlu0 %5023
  %5025 = vrot.lane.b32.xlu0 %v2658, 3
  %v5026 = vpop.permute.xlu0 %5025
  %5027 = vrot.lane.b32.xlu0 %v2660, 3
  %v5028 = vpop.permute.xlu0 %5027
  %5029 = vrot.lane.b32.xlu0 %v2662, 3
  %v5030 = vpop.permute.xlu0 %5029
  %5031 = vrot.lane.b32.xlu0 %v2664, 3
  %v5032 = vpop.permute.xlu0 %5031
  %5033 = vrot.lane.b32.xlu0 %v2666, 3
  %v5034 = vpop.permute.xlu0 %5033
  %5035 = vrot.lane.b32.xlu0 %v2668, 3
  %v5036 = vpop.permute.xlu0 %5035
  %5037 = vrot.lane.b32.xlu0 %v2670, 3
  %v5038 = vpop.permute.xlu0 %5037
  %5039 = vrot.lane.b32.xlu0 %v2672, 3
  %v5040 = vpop.permute.xlu0 %5039
  %5041 = vrot.lane.b32.xlu0 %v2674, 3
  %v5042 = vpop.permute.xlu0 %5041
  %5043 = vrot.lane.b32.xlu0 %v2676, 3
  %v5044 = vpop.permute.xlu0 %5043
  %v5109 = vsel %vm288, %v2422, %v4918
  %v5110 = vsel %vm288, %v2424, %v4920
  %v5111 = vsel %vm288, %v2426, %v4922
  %v5112 = vsel %vm288, %v2428, %v4924
  %v5113 = vsel %vm288, %v2430, %v4926
  %v5114 = vsel %vm288, %v2432, %v4928
  %v5115 = vsel %vm288, %v2434, %v4930
  %v5116 = vsel %vm288, %v2436, %v4932
  %v5117 = vsel %vm288, %v2438, %v4934
  %v5118 = vsel %vm288, %v2440, %v4936
  %v5119 = vsel %vm288, %v2442, %v4938
  %v5120 = vsel %vm288, %v2444, %v4940
  %v5121 = vsel %vm288, %v2446, %v4942
  %v5122 = vsel %vm288, %v2448, %v4944
  %v5123 = vsel %vm288, %v2450, %v4946
  %v5124 = vsel %vm288, %v2452, %v4948
  %v5125 = vsel %vm288, %v2454, %v4950
  %v5126 = vsel %vm288, %v2456, %v4952
  %v5127 = vsel %vm288, %v2458, %v4954
  %v5128 = vsel %vm288, %v2460, %v4956
  %v5129 = vsel %vm288, %v2462, %v4958
  %v5130 = vsel %vm288, %v2464, %v4960
  %v5131 = vsel %vm288, %v2466, %v4962
  %v5132 = vsel %vm288, %v2468, %v4964
  %v5133 = vsel %vm288, %v2470, %v4966
  %v5134 = vsel %vm288, %v2472, %v4968
  %v5135 = vsel %vm288, %v2474, %v4970
  %v5136 = vsel %vm288, %v2476, %v4972
  %v5137 = vsel %vm288, %v2478, %v4974
  %v5138 = vsel %vm288, %v2480, %v4976
  %v5139 = vsel %vm288, %v2482, %v4978
  %v5140 = vsel %vm288, %v2484, %v4980
  %v5141 = vsel %vm288, %v2486, %v4982
  %v5142 = vsel %vm288, %v2488, %v4984
  %v5143 = vsel %vm288, %v2490, %v4986
  %v5144 = vsel %vm288, %v2492, %v4988
  %v5145 = vsel %vm288, %v2494, %v4990
  %v5146 = vsel %vm288, %v2496, %v4992
  %v5147 = vsel %vm288, %v2498, %v4994
  %v5148 = vsel %vm288, %v2500, %v4996
  %v5149 = vsel %vm288, %v2502, %v4998
  %v5150 = vsel %vm288, %v2504, %v5000
  %v5151 = vsel %vm288, %v2506, %v5002
  %v5152 = vsel %vm288, %v2508, %v5004
  %v5153 = vsel %vm288, %v2510, %v5006
  %v5154 = vsel %vm288, %v2512, %v5008
  %v5155 = vsel %vm288, %v2514, %v5010
  %v5156 = vsel %vm288, %v2516, %v5012
  %v5157 = vsel %vm288, %v2518, %v5014
  %v5158 = vsel %vm288, %v2520, %v5016
  %v5159 = vsel %vm288, %v2522, %v5018
  %v5160 = vsel %vm288, %v2524, %v5020
  %v5161 = vsel %vm288, %v2526, %v5022
  %v5162 = vsel %vm288, %v2528, %v5024
  %v5163 = vsel %vm288, %v2530, %v5026
  %v5164 = vsel %vm288, %v2532, %v5028
  %v5165 = vsel %vm288, %v2534, %v5030
  %v5166 = vsel %vm288, %v2536, %v5032
  %v5167 = vsel %vm288, %v2538, %v5034
  %v5168 = vsel %vm288, %v2540, %v5036
  %v5169 = vsel %vm288, %v2542, %v5038
  %v5170 = vsel %vm288, %v2544, %v5040
  %v5171 = vsel %vm288, %v2546, %v5042
  %v5172 = vsel %vm288, %v2548, %v5044
  %5237 = vrot.lane.b32.xlu0 %v2806, 3
  %v5238 = vpop.permute.xlu0 %5237
  %5239 = vrot.lane.b32.xlu0 %v2808, 3
  %v5240 = vpop.permute.xlu0 %5239
  %5241 = vrot.lane.b32.xlu0 %v2810, 3
  %v5242 = vpop.permute.xlu0 %5241
  %5243 = vrot.lane.b32.xlu0 %v2812, 3
  %v5244 = vpop.permute.xlu0 %5243
  %5245 = vrot.lane.b32.xlu0 %v2814, 3
  %v5246 = vpop.permute.xlu0 %5245
  %5247 = vrot.lane.b32.xlu0 %v2816, 3
  %v5248 = vpop.permute.xlu0 %5247
  %5249 = vrot.lane.b32.xlu0 %v2818, 3
  %v5250 = vpop.permute.xlu0 %5249
  %5251 = vrot.lane.b32.xlu0 %v2820, 3
  %v5252 = vpop.permute.xlu0 %5251
  %5253 = vrot.lane.b32.xlu0 %v2822, 3
  %v5254 = vpop.permute.xlu0 %5253
  %5255 = vrot.lane.b32.xlu0 %v2824, 3
  %v5256 = vpop.permute.xlu0 %5255
  %5257 = vrot.lane.b32.xlu0 %v2826, 3
  %v5258 = vpop.permute.xlu0 %5257
  %5259 = vrot.lane.b32.xlu0 %v2828, 3
  %v5260 = vpop.permute.xlu0 %5259
  %5261 = vrot.lane.b32.xlu0 %v2830, 3
  %v5262 = vpop.permute.xlu0 %5261
  %5263 = vrot.lane.b32.xlu0 %v2832, 3
  %v5264 = vpop.permute.xlu0 %5263
  %5265 = vrot.lane.b32.xlu0 %v2834, 3
  %v5266 = vpop.permute.xlu0 %5265
  %5267 = vrot.lane.b32.xlu0 %v2836, 3
  %v5268 = vpop.permute.xlu0 %5267
  %5269 = vrot.lane.b32.xlu0 %v2838, 3
  %v5270 = vpop.permute.xlu0 %5269
  %5271 = vrot.lane.b32.xlu0 %v2840, 3
  %v5272 = vpop.permute.xlu0 %5271
  %5273 = vrot.lane.b32.xlu0 %v2842, 3
  %v5274 = vpop.permute.xlu0 %5273
  %5275 = vrot.lane.b32.xlu0 %v2844, 3
  %v5276 = vpop.permute.xlu0 %5275
  %5277 = vrot.lane.b32.xlu0 %v2846, 3
  %v5278 = vpop.permute.xlu0 %5277
  %5279 = vrot.lane.b32.xlu0 %v2848, 3
  %v5280 = vpop.permute.xlu0 %5279
  %5281 = vrot.lane.b32.xlu0 %v2850, 3
  %v5282 = vpop.permute.xlu0 %5281
  %5283 = vrot.lane.b32.xlu0 %v2852, 3
  %v5284 = vpop.permute.xlu0 %5283
  %5285 = vrot.lane.b32.xlu0 %v2854, 3
  %v5286 = vpop.permute.xlu0 %5285
  %5287 = vrot.lane.b32.xlu0 %v2856, 3
  %v5288 = vpop.permute.xlu0 %5287
  %5289 = vrot.lane.b32.xlu0 %v2858, 3
  %v5290 = vpop.permute.xlu0 %5289
  %5291 = vrot.lane.b32.xlu0 %v2860, 3
  %v5292 = vpop.permute.xlu0 %5291
  %5293 = vrot.lane.b32.xlu0 %v2862, 3
  %v5294 = vpop.permute.xlu0 %5293
  %5295 = vrot.lane.b32.xlu0 %v2864, 3
  %v5296 = vpop.permute.xlu0 %5295
  %5297 = vrot.lane.b32.xlu0 %v2866, 3
  %v5298 = vpop.permute.xlu0 %5297
  %5299 = vrot.lane.b32.xlu0 %v2868, 3
  %v5300 = vpop.permute.xlu0 %5299
  %5301 = vrot.lane.b32.xlu0 %v2870, 3
  %v5302 = vpop.permute.xlu0 %5301
  %5303 = vrot.lane.b32.xlu0 %v2872, 3
  %v5304 = vpop.permute.xlu0 %5303
  %5305 = vrot.lane.b32.xlu0 %v2874, 3
  %v5306 = vpop.permute.xlu0 %5305
  %5307 = vrot.lane.b32.xlu0 %v2876, 3
  %v5308 = vpop.permute.xlu0 %5307
  %5309 = vrot.lane.b32.xlu0 %v2878, 3
  %v5310 = vpop.permute.xlu0 %5309
  %5311 = vrot.lane.b32.xlu0 %v2880, 3
  %v5312 = vpop.permute.xlu0 %5311
  %5313 = vrot.lane.b32.xlu0 %v2882, 3
  %v5314 = vpop.permute.xlu0 %5313
  %5315 = vrot.lane.b32.xlu0 %v2884, 3
  %v5316 = vpop.permute.xlu0 %5315
  %5317 = vrot.lane.b32.xlu0 %v2886, 3
  %v5318 = vpop.permute.xlu0 %5317
  %5319 = vrot.lane.b32.xlu0 %v2888, 3
  %v5320 = vpop.permute.xlu0 %5319
  %5321 = vrot.lane.b32.xlu0 %v2890, 3
  %v5322 = vpop.permute.xlu0 %5321
  %5323 = vrot.lane.b32.xlu0 %v2892, 3
  %v5324 = vpop.permute.xlu0 %5323
  %5325 = vrot.lane.b32.xlu0 %v2894, 3
  %v5326 = vpop.permute.xlu0 %5325
  %5327 = vrot.lane.b32.xlu0 %v2896, 3
  %v5328 = vpop.permute.xlu0 %5327
  %5329 = vrot.lane.b32.xlu0 %v2898, 3
  %v5330 = vpop.permute.xlu0 %5329
  %5331 = vrot.lane.b32.xlu0 %v2900, 3
  %v5332 = vpop.permute.xlu0 %5331
  %5333 = vrot.lane.b32.xlu0 %v2902, 3
  %v5334 = vpop.permute.xlu0 %5333
  %5335 = vrot.lane.b32.xlu0 %v2904, 3
  %v5336 = vpop.permute.xlu0 %5335
  %5337 = vrot.lane.b32.xlu0 %v2906, 3
  %v5338 = vpop.permute.xlu0 %5337
  %5339 = vrot.lane.b32.xlu0 %v2908, 3
  %v5340 = vpop.permute.xlu0 %5339
  %5341 = vrot.lane.b32.xlu0 %v2910, 3
  %v5342 = vpop.permute.xlu0 %5341
  %5343 = vrot.lane.b32.xlu0 %v2912, 3
  %v5344 = vpop.permute.xlu0 %5343
  %5345 = vrot.lane.b32.xlu0 %v2914, 3
  %v5346 = vpop.permute.xlu0 %5345
  %5347 = vrot.lane.b32.xlu0 %v2916, 3
  %v5348 = vpop.permute.xlu0 %5347
  %5349 = vrot.lane.b32.xlu0 %v2918, 3
  %v5350 = vpop.permute.xlu0 %5349
  %5351 = vrot.lane.b32.xlu0 %v2920, 3
  %v5352 = vpop.permute.xlu0 %5351
  %5353 = vrot.lane.b32.xlu0 %v2922, 3
  %v5354 = vpop.permute.xlu0 %5353
  %5355 = vrot.lane.b32.xlu0 %v2924, 3
  %v5356 = vpop.permute.xlu0 %5355
  %5357 = vrot.lane.b32.xlu0 %v2926, 3
  %v5358 = vpop.permute.xlu0 %5357
  %5359 = vrot.lane.b32.xlu0 %v2928, 3
  %v5360 = vpop.permute.xlu0 %5359
  %5361 = vrot.lane.b32.xlu0 %v2930, 3
  %v5362 = vpop.permute.xlu0 %5361
  %5363 = vrot.lane.b32.xlu0 %v2932, 3
  %v5364 = vpop.permute.xlu0 %5363
  %v5429 = vsel %vm288, %v2678, %v5238
  %v5430 = vsel %vm288, %v2680, %v5240
  %v5431 = vsel %vm288, %v2682, %v5242
  %v5432 = vsel %vm288, %v2684, %v5244
  %v5433 = vsel %vm288, %v2686, %v5246
  %v5434 = vsel %vm288, %v2688, %v5248
  %v5435 = vsel %vm288, %v2690, %v5250
  %v5436 = vsel %vm288, %v2692, %v5252
  %v5437 = vsel %vm288, %v2694, %v5254
  %v5438 = vsel %vm288, %v2696, %v5256
  %v5439 = vsel %vm288, %v2698, %v5258
  %v5440 = vsel %vm288, %v2700, %v5260
  %v5441 = vsel %vm288, %v2702, %v5262
  %v5442 = vsel %vm288, %v2704, %v5264
  %v5443 = vsel %vm288, %v2706, %v5266
  %v5444 = vsel %vm288, %v2708, %v5268
  %v5445 = vsel %vm288, %v2710, %v5270
  %v5446 = vsel %vm288, %v2712, %v5272
  %v5447 = vsel %vm288, %v2714, %v5274
  %v5448 = vsel %vm288, %v2716, %v5276
  %v5449 = vsel %vm288, %v2718, %v5278
  %v5450 = vsel %vm288, %v2720, %v5280
  %v5451 = vsel %vm288, %v2722, %v5282
  %v5452 = vsel %vm288, %v2724, %v5284
  %v5453 = vsel %vm288, %v2726, %v5286
  %v5454 = vsel %vm288, %v2728, %v5288
  %v5455 = vsel %vm288, %v2730, %v5290
  %v5456 = vsel %vm288, %v2732, %v5292
  %v5457 = vsel %vm288, %v2734, %v5294
  %v5458 = vsel %vm288, %v2736, %v5296
  %v5459 = vsel %vm288, %v2738, %v5298
  %v5460 = vsel %vm288, %v2740, %v5300
  %v5461 = vsel %vm288, %v2742, %v5302
  %v5462 = vsel %vm288, %v2744, %v5304
  %v5463 = vsel %vm288, %v2746, %v5306
  %v5464 = vsel %vm288, %v2748, %v5308
  %v5465 = vsel %vm288, %v2750, %v5310
  %v5466 = vsel %vm288, %v2752, %v5312
  %v5467 = vsel %vm288, %v2754, %v5314
  %v5468 = vsel %vm288, %v2756, %v5316
  %v5469 = vsel %vm288, %v2758, %v5318
  %v5470 = vsel %vm288, %v2760, %v5320
  %v5471 = vsel %vm288, %v2762, %v5322
  %v5472 = vsel %vm288, %v2764, %v5324
  %v5473 = vsel %vm288, %v2766, %v5326
  %v5474 = vsel %vm288, %v2768, %v5328
  %v5475 = vsel %vm288, %v2770, %v5330
  %v5476 = vsel %vm288, %v2772, %v5332
  %v5477 = vsel %vm288, %v2774, %v5334
  %v5478 = vsel %vm288, %v2776, %v5336
  %v5479 = vsel %vm288, %v2778, %v5338
  %v5480 = vsel %vm288, %v2780, %v5340
  %v5481 = vsel %vm288, %v2782, %v5342
  %v5482 = vsel %vm288, %v2784, %v5344
  %v5483 = vsel %vm288, %v2786, %v5346
  %v5484 = vsel %vm288, %v2788, %v5348
  %v5485 = vsel %vm288, %v2790, %v5350
  %v5486 = vsel %vm288, %v2792, %v5352
  %v5487 = vsel %vm288, %v2794, %v5354
  %v5488 = vsel %vm288, %v2796, %v5356
  %v5489 = vsel %vm288, %v2798, %v5358
  %v5490 = vsel %vm288, %v2800, %v5360
  %v5491 = vsel %vm288, %v2802, %v5362
  %v5492 = vsel %vm288, %v2804, %v5364
  %5557 = vrot.lane.b32.xlu0 %v3509, 6
  %v5558 = vpop.permute.xlu0 %5557
  %5559 = vrot.lane.b32.xlu0 %v3510, 6
  %v5560 = vpop.permute.xlu0 %5559
  %5561 = vrot.lane.b32.xlu0 %v3511, 6
  %v5562 = vpop.permute.xlu0 %5561
  %5563 = vrot.lane.b32.xlu0 %v3512, 6
  %v5564 = vpop.permute.xlu0 %5563
  %5565 = vrot.lane.b32.xlu0 %v3513, 6
  %v5566 = vpop.permute.xlu0 %5565
  %5567 = vrot.lane.b32.xlu0 %v3514, 6
  %v5568 = vpop.permute.xlu0 %5567
  %5569 = vrot.lane.b32.xlu0 %v3515, 6
  %v5570 = vpop.permute.xlu0 %5569
  %5571 = vrot.lane.b32.xlu0 %v3516, 6
  %v5572 = vpop.permute.xlu0 %5571
  %5573 = vrot.lane.b32.xlu0 %v3517, 6
  %v5574 = vpop.permute.xlu0 %5573
  %5575 = vrot.lane.b32.xlu0 %v3518, 6
  %v5576 = vpop.permute.xlu0 %5575
  %5577 = vrot.lane.b32.xlu0 %v3519, 6
  %v5578 = vpop.permute.xlu0 %5577
  %5579 = vrot.lane.b32.xlu0 %v3520, 6
  %v5580 = vpop.permute.xlu0 %5579
  %5581 = vrot.lane.b32.xlu0 %v3521, 6
  %v5582 = vpop.permute.xlu0 %5581
  %5583 = vrot.lane.b32.xlu0 %v3522, 6
  %v5584 = vpop.permute.xlu0 %5583
  %5585 = vrot.lane.b32.xlu0 %v3523, 6
  %v5586 = vpop.permute.xlu0 %5585
  %5587 = vrot.lane.b32.xlu0 %v3524, 6
  %v5588 = vpop.permute.xlu0 %5587
  %5589 = vrot.lane.b32.xlu0 %v3525, 6
  %v5590 = vpop.permute.xlu0 %5589
  %5591 = vrot.lane.b32.xlu0 %v3526, 6
  %v5592 = vpop.permute.xlu0 %5591
  %5593 = vrot.lane.b32.xlu0 %v3527, 6
  %v5594 = vpop.permute.xlu0 %5593
  %5595 = vrot.lane.b32.xlu0 %v3528, 6
  %v5596 = vpop.permute.xlu0 %5595
  %5597 = vrot.lane.b32.xlu0 %v3529, 6
  %v5598 = vpop.permute.xlu0 %5597
  %5599 = vrot.lane.b32.xlu0 %v3530, 6
  %v5600 = vpop.permute.xlu0 %5599
  %5601 = vrot.lane.b32.xlu0 %v3531, 6
  %v5602 = vpop.permute.xlu0 %5601
  %5603 = vrot.lane.b32.xlu0 %v3532, 6
  %v5604 = vpop.permute.xlu0 %5603
  %5605 = vrot.lane.b32.xlu0 %v3533, 6
  %v5606 = vpop.permute.xlu0 %5605
  %5607 = vrot.lane.b32.xlu0 %v3534, 6
  %v5608 = vpop.permute.xlu0 %5607
  %5609 = vrot.lane.b32.xlu0 %v3535, 6
  %v5610 = vpop.permute.xlu0 %5609
  %5611 = vrot.lane.b32.xlu0 %v3536, 6
  %v5612 = vpop.permute.xlu0 %5611
  %5613 = vrot.lane.b32.xlu0 %v3537, 6
  %v5614 = vpop.permute.xlu0 %5613
  %5615 = vrot.lane.b32.xlu0 %v3538, 6
  %v5616 = vpop.permute.xlu0 %5615
  %5617 = vrot.lane.b32.xlu0 %v3539, 6
  %v5618 = vpop.permute.xlu0 %5617
  %5619 = vrot.lane.b32.xlu0 %v3540, 6
  %v5620 = vpop.permute.xlu0 %5619
  %5621 = vrot.lane.b32.xlu0 %v3541, 6
  %v5622 = vpop.permute.xlu0 %5621
  %5623 = vrot.lane.b32.xlu0 %v3542, 6
  %v5624 = vpop.permute.xlu0 %5623
  %5625 = vrot.lane.b32.xlu0 %v3543, 6
  %v5626 = vpop.permute.xlu0 %5625
  %5627 = vrot.lane.b32.xlu0 %v3544, 6
  %v5628 = vpop.permute.xlu0 %5627
  %5629 = vrot.lane.b32.xlu0 %v3545, 6
  %v5630 = vpop.permute.xlu0 %5629
  %5631 = vrot.lane.b32.xlu0 %v3546, 6
  %v5632 = vpop.permute.xlu0 %5631
  %5633 = vrot.lane.b32.xlu0 %v3547, 6
  %v5634 = vpop.permute.xlu0 %5633
  %5635 = vrot.lane.b32.xlu0 %v3548, 6
  %v5636 = vpop.permute.xlu0 %5635
  %5637 = vrot.lane.b32.xlu0 %v3549, 6
  %v5638 = vpop.permute.xlu0 %5637
  %5639 = vrot.lane.b32.xlu0 %v3550, 6
  %v5640 = vpop.permute.xlu0 %5639
  %5641 = vrot.lane.b32.xlu0 %v3551, 6
  %v5642 = vpop.permute.xlu0 %5641
  %5643 = vrot.lane.b32.xlu0 %v3552, 6
  %v5644 = vpop.permute.xlu0 %5643
  %5645 = vrot.lane.b32.xlu0 %v3553, 6
  %v5646 = vpop.permute.xlu0 %5645
  %5647 = vrot.lane.b32.xlu0 %v3554, 6
  %v5648 = vpop.permute.xlu0 %5647
  %5649 = vrot.lane.b32.xlu0 %v3555, 6
  %v5650 = vpop.permute.xlu0 %5649
  %5651 = vrot.lane.b32.xlu0 %v3556, 6
  %v5652 = vpop.permute.xlu0 %5651
  %5653 = vrot.lane.b32.xlu0 %v3557, 6
  %v5654 = vpop.permute.xlu0 %5653
  %5655 = vrot.lane.b32.xlu0 %v3558, 6
  %v5656 = vpop.permute.xlu0 %5655
  %5657 = vrot.lane.b32.xlu0 %v3559, 6
  %v5658 = vpop.permute.xlu0 %5657
  %5659 = vrot.lane.b32.xlu0 %v3560, 6
  %v5660 = vpop.permute.xlu0 %5659
  %5661 = vrot.lane.b32.xlu0 %v3561, 6
  %v5662 = vpop.permute.xlu0 %5661
  %5663 = vrot.lane.b32.xlu0 %v3562, 6
  %v5664 = vpop.permute.xlu0 %5663
  %5665 = vrot.lane.b32.xlu0 %v3563, 6
  %v5666 = vpop.permute.xlu0 %5665
  %5667 = vrot.lane.b32.xlu0 %v3564, 6
  %v5668 = vpop.permute.xlu0 %5667
  %5669 = vrot.lane.b32.xlu0 %v3565, 6
  %v5670 = vpop.permute.xlu0 %5669
  %5671 = vrot.lane.b32.xlu0 %v3566, 6
  %v5672 = vpop.permute.xlu0 %5671
  %5673 = vrot.lane.b32.xlu0 %v3567, 6
  %v5674 = vpop.permute.xlu0 %5673
  %5675 = vrot.lane.b32.xlu0 %v3568, 6
  %v5676 = vpop.permute.xlu0 %5675
  %5677 = vrot.lane.b32.xlu0 %v3569, 6
  %v5678 = vpop.permute.xlu0 %5677
  %5679 = vrot.lane.b32.xlu0 %v3570, 6
  %v5680 = vpop.permute.xlu0 %5679
  %5681 = vrot.lane.b32.xlu0 %v3571, 6
  %v5682 = vpop.permute.xlu0 %5681
  %5683 = vrot.lane.b32.xlu0 %v3572, 6
  %v5684 = vpop.permute.xlu0 %5683
  %vm5749 = vcmask 48128
  %v5750 = vsel %vm5749, %v3189, %v5558
  %v5751 = vsel %vm5749, %v3190, %v5560
  %v5752 = vsel %vm5749, %v3191, %v5562
  %v5753 = vsel %vm5749, %v3192, %v5564
  %v5754 = vsel %vm5749, %v3193, %v5566
  %v5755 = vsel %vm5749, %v3194, %v5568
  %v5756 = vsel %vm5749, %v3195, %v5570
  %v5757 = vsel %vm5749, %v3196, %v5572
  %v5758 = vsel %vm5749, %v3197, %v5574
  %v5759 = vsel %vm5749, %v3198, %v5576
  %v5760 = vsel %vm5749, %v3199, %v5578
  %v5761 = vsel %vm5749, %v3200, %v5580
  %v5762 = vsel %vm5749, %v3201, %v5582
  %v5763 = vsel %vm5749, %v3202, %v5584
  %v5764 = vsel %vm5749, %v3203, %v5586
  %v5765 = vsel %vm5749, %v3204, %v5588
  %v5766 = vsel %vm5749, %v3205, %v5590
  %v5767 = vsel %vm5749, %v3206, %v5592
  %v5768 = vsel %vm5749, %v3207, %v5594
  %v5769 = vsel %vm5749, %v3208, %v5596
  %v5770 = vsel %vm5749, %v3209, %v5598
  %v5771 = vsel %vm5749, %v3210, %v5600
  %v5772 = vsel %vm5749, %v3211, %v5602
  %v5773 = vsel %vm5749, %v3212, %v5604
  %v5774 = vsel %vm5749, %v3213, %v5606
  %v5775 = vsel %vm5749, %v3214, %v5608
  %v5776 = vsel %vm5749, %v3215, %v5610
  %v5777 = vsel %vm5749, %v3216, %v5612
  %v5778 = vsel %vm5749, %v3217, %v5614
  %v5779 = vsel %vm5749, %v3218, %v5616
  %v5780 = vsel %vm5749, %v3219, %v5618
  %v5781 = vsel %vm5749, %v3220, %v5620
  %v5782 = vsel %vm5749, %v3221, %v5622
  %v5783 = vsel %vm5749, %v3222, %v5624
  %v5784 = vsel %vm5749, %v3223, %v5626
  %v5785 = vsel %vm5749, %v3224, %v5628
  %v5786 = vsel %vm5749, %v3225, %v5630
  %v5787 = vsel %vm5749, %v3226, %v5632
  %v5788 = vsel %vm5749, %v3227, %v5634
  %v5789 = vsel %vm5749, %v3228, %v5636
  %v5790 = vsel %vm5749, %v3229, %v5638
  %v5791 = vsel %vm5749, %v3230, %v5640
  %v5792 = vsel %vm5749, %v3231, %v5642
  %v5793 = vsel %vm5749, %v3232, %v5644
  %v5794 = vsel %vm5749, %v3233, %v5646
  %v5795 = vsel %vm5749, %v3234, %v5648
  %v5796 = vsel %vm5749, %v3235, %v5650
  %v5797 = vsel %vm5749, %v3236, %v5652
  %v5798 = vsel %vm5749, %v3237, %v5654
  %v5799 = vsel %vm5749, %v3238, %v5656
  %v5800 = vsel %vm5749, %v3239, %v5658
  %v5801 = vsel %vm5749, %v3240, %v5660
  %v5802 = vsel %vm5749, %v3241, %v5662
  %v5803 = vsel %vm5749, %v3242, %v5664
  %v5804 = vsel %vm5749, %v3243, %v5666
  %v5805 = vsel %vm5749, %v3244, %v5668
  %v5806 = vsel %vm5749, %v3245, %v5670
  %v5807 = vsel %vm5749, %v3246, %v5672
  %v5808 = vsel %vm5749, %v3247, %v5674
  %v5809 = vsel %vm5749, %v3248, %v5676
  %v5810 = vsel %vm5749, %v3249, %v5678
  %v5811 = vsel %vm5749, %v3250, %v5680
  %v5812 = vsel %vm5749, %v3251, %v5682
  %v5813 = vsel %vm5749, %v3252, %v5684
  %5878 = vrot.lane.b32.xlu0 %v4149, 6
  %v5879 = vpop.permute.xlu0 %5878
  %5880 = vrot.lane.b32.xlu0 %v4150, 6
  %v5881 = vpop.permute.xlu0 %5880
  %5882 = vrot.lane.b32.xlu0 %v4151, 6
  %v5883 = vpop.permute.xlu0 %5882
  %5884 = vrot.lane.b32.xlu0 %v4152, 6
  %v5885 = vpop.permute.xlu0 %5884
  %5886 = vrot.lane.b32.xlu0 %v4153, 6
  %v5887 = vpop.permute.xlu0 %5886
  %5888 = vrot.lane.b32.xlu0 %v4154, 6
  %v5889 = vpop.permute.xlu0 %5888
  %5890 = vrot.lane.b32.xlu0 %v4155, 6
  %v5891 = vpop.permute.xlu0 %5890
  %5892 = vrot.lane.b32.xlu0 %v4156, 6
  %v5893 = vpop.permute.xlu0 %5892
  %5894 = vrot.lane.b32.xlu0 %v4157, 6
  %v5895 = vpop.permute.xlu0 %5894
  %5896 = vrot.lane.b32.xlu0 %v4158, 6
  %v5897 = vpop.permute.xlu0 %5896
  %5898 = vrot.lane.b32.xlu0 %v4159, 6
  %v5899 = vpop.permute.xlu0 %5898
  %5900 = vrot.lane.b32.xlu0 %v4160, 6
  %v5901 = vpop.permute.xlu0 %5900
  %5902 = vrot.lane.b32.xlu0 %v4161, 6
  %v5903 = vpop.permute.xlu0 %5902
  %5904 = vrot.lane.b32.xlu0 %v4162, 6
  %v5905 = vpop.permute.xlu0 %5904
  %5906 = vrot.lane.b32.xlu0 %v4163, 6
  %v5907 = vpop.permute.xlu0 %5906
  %5908 = vrot.lane.b32.xlu0 %v4164, 6
  %v5909 = vpop.permute.xlu0 %5908
  %5910 = vrot.lane.b32.xlu0 %v4165, 6
  %v5911 = vpop.permute.xlu0 %5910
  %5912 = vrot.lane.b32.xlu0 %v4166, 6
  %v5913 = vpop.permute.xlu0 %5912
  %5914 = vrot.lane.b32.xlu0 %v4167, 6
  %v5915 = vpop.permute.xlu0 %5914
  %5916 = vrot.lane.b32.xlu0 %v4168, 6
  %v5917 = vpop.permute.xlu0 %5916
  %5918 = vrot.lane.b32.xlu0 %v4169, 6
  %v5919 = vpop.permute.xlu0 %5918
  %5920 = vrot.lane.b32.xlu0 %v4170, 6
  %v5921 = vpop.permute.xlu0 %5920
  %5922 = vrot.lane.b32.xlu0 %v4171, 6
  %v5923 = vpop.permute.xlu0 %5922
  %5924 = vrot.lane.b32.xlu0 %v4172, 6
  %v5925 = vpop.permute.xlu0 %5924
  %5926 = vrot.lane.b32.xlu0 %v4173, 6
  %v5927 = vpop.permute.xlu0 %5926
  %5928 = vrot.lane.b32.xlu0 %v4174, 6
  %v5929 = vpop.permute.xlu0 %5928
  %5930 = vrot.lane.b32.xlu0 %v4175, 6
  %v5931 = vpop.permute.xlu0 %5930
  %5932 = vrot.lane.b32.xlu0 %v4176, 6
  %v5933 = vpop.permute.xlu0 %5932
  %5934 = vrot.lane.b32.xlu0 %v4177, 6
  %v5935 = vpop.permute.xlu0 %5934
  %5936 = vrot.lane.b32.xlu0 %v4178, 6
  %v5937 = vpop.permute.xlu0 %5936
  %5938 = vrot.lane.b32.xlu0 %v4179, 6
  %v5939 = vpop.permute.xlu0 %5938
  %5940 = vrot.lane.b32.xlu0 %v4180, 6
  %v5941 = vpop.permute.xlu0 %5940
  %5942 = vrot.lane.b32.xlu0 %v4181, 6
  %v5943 = vpop.permute.xlu0 %5942
  %5944 = vrot.lane.b32.xlu0 %v4182, 6
  %v5945 = vpop.permute.xlu0 %5944
  %5946 = vrot.lane.b32.xlu0 %v4183, 6
  %v5947 = vpop.permute.xlu0 %5946
  %5948 = vrot.lane.b32.xlu0 %v4184, 6
  %v5949 = vpop.permute.xlu0 %5948
  %5950 = vrot.lane.b32.xlu0 %v4185, 6
  %v5951 = vpop.permute.xlu0 %5950
  %5952 = vrot.lane.b32.xlu0 %v4186, 6
  %v5953 = vpop.permute.xlu0 %5952
  %5954 = vrot.lane.b32.xlu0 %v4187, 6
  %v5955 = vpop.permute.xlu0 %5954
  %5956 = vrot.lane.b32.xlu0 %v4188, 6
  %v5957 = vpop.permute.xlu0 %5956
  %5958 = vrot.lane.b32.xlu0 %v4189, 6
  %v5959 = vpop.permute.xlu0 %5958
  %5960 = vrot.lane.b32.xlu0 %v4190, 6
  %v5961 = vpop.permute.xlu0 %5960
  %5962 = vrot.lane.b32.xlu0 %v4191, 6
  %v5963 = vpop.permute.xlu0 %5962
  %5964 = vrot.lane.b32.xlu0 %v4192, 6
  %v5965 = vpop.permute.xlu0 %5964
  %5966 = vrot.lane.b32.xlu0 %v4193, 6
  %v5967 = vpop.permute.xlu0 %5966
  %5968 = vrot.lane.b32.xlu0 %v4194, 6
  %v5969 = vpop.permute.xlu0 %5968
  %5970 = vrot.lane.b32.xlu0 %v4195, 6
  %v5971 = vpop.permute.xlu0 %5970
  %5972 = vrot.lane.b32.xlu0 %v4196, 6
  %v5973 = vpop.permute.xlu0 %5972
  %5974 = vrot.lane.b32.xlu0 %v4197, 6
  %v5975 = vpop.permute.xlu0 %5974
  %5976 = vrot.lane.b32.xlu0 %v4198, 6
  %v5977 = vpop.permute.xlu0 %5976
  %5978 = vrot.lane.b32.xlu0 %v4199, 6
  %v5979 = vpop.permute.xlu0 %5978
  %5980 = vrot.lane.b32.xlu0 %v4200, 6
  %v5981 = vpop.permute.xlu0 %5980
  %5982 = vrot.lane.b32.xlu0 %v4201, 6
  %v5983 = vpop.permute.xlu0 %5982
  %5984 = vrot.lane.b32.xlu0 %v4202, 6
  %v5985 = vpop.permute.xlu0 %5984
  %5986 = vrot.lane.b32.xlu0 %v4203, 6
  %v5987 = vpop.permute.xlu0 %5986
  %5988 = vrot.lane.b32.xlu0 %v4204, 6
  %v5989 = vpop.permute.xlu0 %5988
  %5990 = vrot.lane.b32.xlu0 %v4205, 6
  %v5991 = vpop.permute.xlu0 %5990
  %5992 = vrot.lane.b32.xlu0 %v4206, 6
  %v5993 = vpop.permute.xlu0 %5992
  %5994 = vrot.lane.b32.xlu0 %v4207, 6
  %v5995 = vpop.permute.xlu0 %5994
  %5996 = vrot.lane.b32.xlu0 %v4208, 6
  %v5997 = vpop.permute.xlu0 %5996
  %5998 = vrot.lane.b32.xlu0 %v4209, 6
  %v5999 = vpop.permute.xlu0 %5998
  %6000 = vrot.lane.b32.xlu0 %v4210, 6
  %v6001 = vpop.permute.xlu0 %6000
  %6002 = vrot.lane.b32.xlu0 %v4211, 6
  %v6003 = vpop.permute.xlu0 %6002
  %6004 = vrot.lane.b32.xlu0 %v4212, 6
  %v6005 = vpop.permute.xlu0 %6004
  %v6070 = vsel %vm5749, %v3829, %v5879
  %v6071 = vsel %vm5749, %v3830, %v5881
  %v6072 = vsel %vm5749, %v3831, %v5883
  %v6073 = vsel %vm5749, %v3832, %v5885
  %v6074 = vsel %vm5749, %v3833, %v5887
  %v6075 = vsel %vm5749, %v3834, %v5889
  %v6076 = vsel %vm5749, %v3835, %v5891
  %v6077 = vsel %vm5749, %v3836, %v5893
  %v6078 = vsel %vm5749, %v3837, %v5895
  %v6079 = vsel %vm5749, %v3838, %v5897
  %v6080 = vsel %vm5749, %v3839, %v5899
  %v6081 = vsel %vm5749, %v3840, %v5901
  %v6082 = vsel %vm5749, %v3841, %v5903
  %v6083 = vsel %vm5749, %v3842, %v5905
  %v6084 = vsel %vm5749, %v3843, %v5907
  %v6085 = vsel %vm5749, %v3844, %v5909
  %v6086 = vsel %vm5749, %v3845, %v5911
  %v6087 = vsel %vm5749, %v3846, %v5913
  %v6088 = vsel %vm5749, %v3847, %v5915
  %v6089 = vsel %vm5749, %v3848, %v5917
  %v6090 = vsel %vm5749, %v3849, %v5919
  %v6091 = vsel %vm5749, %v3850, %v5921
  %v6092 = vsel %vm5749, %v3851, %v5923
  %v6093 = vsel %vm5749, %v3852, %v5925
  %v6094 = vsel %vm5749, %v3853, %v5927
  %v6095 = vsel %vm5749, %v3854, %v5929
  %v6096 = vsel %vm5749, %v3855, %v5931
  %v6097 = vsel %vm5749, %v3856, %v5933
  %v6098 = vsel %vm5749, %v3857, %v5935
  %v6099 = vsel %vm5749, %v3858, %v5937
  %v6100 = vsel %vm5749, %v3859, %v5939
  %v6101 = vsel %vm5749, %v3860, %v5941
  %v6102 = vsel %vm5749, %v3861, %v5943
  %v6103 = vsel %vm5749, %v3862, %v5945
  %v6104 = vsel %vm5749, %v3863, %v5947
  %v6105 = vsel %vm5749, %v3864, %v5949
  %v6106 = vsel %vm5749, %v3865, %v5951
  %v6107 = vsel %vm5749, %v3866, %v5953
  %v6108 = vsel %vm5749, %v3867, %v5955
  %v6109 = vsel %vm5749, %v3868, %v5957
  %v6110 = vsel %vm5749, %v3869, %v5959
  %v6111 = vsel %vm5749, %v3870, %v5961
  %v6112 = vsel %vm5749, %v3871, %v5963
  %v6113 = vsel %vm5749, %v3872, %v5965
  %v6114 = vsel %vm5749, %v3873, %v5967
  %v6115 = vsel %vm5749, %v3874, %v5969
  %v6116 = vsel %vm5749, %v3875, %v5971
  %v6117 = vsel %vm5749, %v3876, %v5973
  %v6118 = vsel %vm5749, %v3877, %v5975
  %v6119 = vsel %vm5749, %v3878, %v5977
  %v6120 = vsel %vm5749, %v3879, %v5979
  %v6121 = vsel %vm5749, %v3880, %v5981
  %v6122 = vsel %vm5749, %v3881, %v5983
  %v6123 = vsel %vm5749, %v3882, %v5985
  %v6124 = vsel %vm5749, %v3883, %v5987
  %v6125 = vsel %vm5749, %v3884, %v5989
  %v6126 = vsel %vm5749, %v3885, %v5991
  %v6127 = vsel %vm5749, %v3886, %v5993
  %v6128 = vsel %vm5749, %v3887, %v5995
  %v6129 = vsel %vm5749, %v3888, %v5997
  %v6130 = vsel %vm5749, %v3889, %v5999
  %v6131 = vsel %vm5749, %v3890, %v6001
  %v6132 = vsel %vm5749, %v3891, %v6003
  %v6133 = vsel %vm5749, %v3892, %v6005
  %6198 = vrot.lane.b32.xlu0 %v4789, 6
  %v6199 = vpop.permute.xlu0 %6198
  %6200 = vrot.lane.b32.xlu0 %v4790, 6
  %v6201 = vpop.permute.xlu0 %6200
  %6202 = vrot.lane.b32.xlu0 %v4791, 6
  %v6203 = vpop.permute.xlu0 %6202
  %6204 = vrot.lane.b32.xlu0 %v4792, 6
  %v6205 = vpop.permute.xlu0 %6204
  %6206 = vrot.lane.b32.xlu0 %v4793, 6
  %v6207 = vpop.permute.xlu0 %6206
  %6208 = vrot.lane.b32.xlu0 %v4794, 6
  %v6209 = vpop.permute.xlu0 %6208
  %6210 = vrot.lane.b32.xlu0 %v4795, 6
  %v6211 = vpop.permute.xlu0 %6210
  %6212 = vrot.lane.b32.xlu0 %v4796, 6
  %v6213 = vpop.permute.xlu0 %6212
  %6214 = vrot.lane.b32.xlu0 %v4797, 6
  %v6215 = vpop.permute.xlu0 %6214
  %6216 = vrot.lane.b32.xlu0 %v4798, 6
  %v6217 = vpop.permute.xlu0 %6216
  %6218 = vrot.lane.b32.xlu0 %v4799, 6
  %v6219 = vpop.permute.xlu0 %6218
  %6220 = vrot.lane.b32.xlu0 %v4800, 6
  %v6221 = vpop.permute.xlu0 %6220
  %6222 = vrot.lane.b32.xlu0 %v4801, 6
  %v6223 = vpop.permute.xlu0 %6222
  %6224 = vrot.lane.b32.xlu0 %v4802, 6
  %v6225 = vpop.permute.xlu0 %6224
  %6226 = vrot.lane.b32.xlu0 %v4803, 6
  %v6227 = vpop.permute.xlu0 %6226
  %6228 = vrot.lane.b32.xlu0 %v4804, 6
  %v6229 = vpop.permute.xlu0 %6228
  %6230 = vrot.lane.b32.xlu0 %v4805, 6
  %v6231 = vpop.permute.xlu0 %6230
  %6232 = vrot.lane.b32.xlu0 %v4806, 6
  %v6233 = vpop.permute.xlu0 %6232
  %6234 = vrot.lane.b32.xlu0 %v4807, 6
  %v6235 = vpop.permute.xlu0 %6234
  %6236 = vrot.lane.b32.xlu0 %v4808, 6
  %v6237 = vpop.permute.xlu0 %6236
  %6238 = vrot.lane.b32.xlu0 %v4809, 6
  %v6239 = vpop.permute.xlu0 %6238
  %6240 = vrot.lane.b32.xlu0 %v4810, 6
  %v6241 = vpop.permute.xlu0 %6240
  %6242 = vrot.lane.b32.xlu0 %v4811, 6
  %v6243 = vpop.permute.xlu0 %6242
  %6244 = vrot.lane.b32.xlu0 %v4812, 6
  %v6245 = vpop.permute.xlu0 %6244
  %6246 = vrot.lane.b32.xlu0 %v4813, 6
  %v6247 = vpop.permute.xlu0 %6246
  %6248 = vrot.lane.b32.xlu0 %v4814, 6
  %v6249 = vpop.permute.xlu0 %6248
  %6250 = vrot.lane.b32.xlu0 %v4815, 6
  %v6251 = vpop.permute.xlu0 %6250
  %6252 = vrot.lane.b32.xlu0 %v4816, 6
  %v6253 = vpop.permute.xlu0 %6252
  %6254 = vrot.lane.b32.xlu0 %v4817, 6
  %v6255 = vpop.permute.xlu0 %6254
  %6256 = vrot.lane.b32.xlu0 %v4818, 6
  %v6257 = vpop.permute.xlu0 %6256
  %6258 = vrot.lane.b32.xlu0 %v4819, 6
  %v6259 = vpop.permute.xlu0 %6258
  %6260 = vrot.lane.b32.xlu0 %v4820, 6
  %v6261 = vpop.permute.xlu0 %6260
  %6262 = vrot.lane.b32.xlu0 %v4821, 6
  %v6263 = vpop.permute.xlu0 %6262
  %6264 = vrot.lane.b32.xlu0 %v4822, 6
  %v6265 = vpop.permute.xlu0 %6264
  %6266 = vrot.lane.b32.xlu0 %v4823, 6
  %v6267 = vpop.permute.xlu0 %6266
  %6268 = vrot.lane.b32.xlu0 %v4824, 6
  %v6269 = vpop.permute.xlu0 %6268
  %6270 = vrot.lane.b32.xlu0 %v4825, 6
  %v6271 = vpop.permute.xlu0 %6270
  %6272 = vrot.lane.b32.xlu0 %v4826, 6
  %v6273 = vpop.permute.xlu0 %6272
  %6274 = vrot.lane.b32.xlu0 %v4827, 6
  %v6275 = vpop.permute.xlu0 %6274
  %6276 = vrot.lane.b32.xlu0 %v4828, 6
  %v6277 = vpop.permute.xlu0 %6276
  %6278 = vrot.lane.b32.xlu0 %v4829, 6
  %v6279 = vpop.permute.xlu0 %6278
  %6280 = vrot.lane.b32.xlu0 %v4830, 6
  %v6281 = vpop.permute.xlu0 %6280
  %6282 = vrot.lane.b32.xlu0 %v4831, 6
  %v6283 = vpop.permute.xlu0 %6282
  %6284 = vrot.lane.b32.xlu0 %v4832, 6
  %v6285 = vpop.permute.xlu0 %6284
  %6286 = vrot.lane.b32.xlu0 %v4833, 6
  %v6287 = vpop.permute.xlu0 %6286
  %6288 = vrot.lane.b32.xlu0 %v4834, 6
  %v6289 = vpop.permute.xlu0 %6288
  %6290 = vrot.lane.b32.xlu0 %v4835, 6
  %v6291 = vpop.permute.xlu0 %6290
  %6292 = vrot.lane.b32.xlu0 %v4836, 6
  %v6293 = vpop.permute.xlu0 %6292
  %6294 = vrot.lane.b32.xlu0 %v4837, 6
  %v6295 = vpop.permute.xlu0 %6294
  %6296 = vrot.lane.b32.xlu0 %v4838, 6
  %v6297 = vpop.permute.xlu0 %6296
  %6298 = vrot.lane.b32.xlu0 %v4839, 6
  %v6299 = vpop.permute.xlu0 %6298
  %6300 = vrot.lane.b32.xlu0 %v4840, 6
  %v6301 = vpop.permute.xlu0 %6300
  %6302 = vrot.lane.b32.xlu0 %v4841, 6
  %v6303 = vpop.permute.xlu0 %6302
  %6304 = vrot.lane.b32.xlu0 %v4842, 6
  %v6305 = vpop.permute.xlu0 %6304
  %6306 = vrot.lane.b32.xlu0 %v4843, 6
  %v6307 = vpop.permute.xlu0 %6306
  %6308 = vrot.lane.b32.xlu0 %v4844, 6
  %v6309 = vpop.permute.xlu0 %6308
  %6310 = vrot.lane.b32.xlu0 %v4845, 6
  %v6311 = vpop.permute.xlu0 %6310
  %6312 = vrot.lane.b32.xlu0 %v4846, 6
  %v6313 = vpop.permute.xlu0 %6312
  %6314 = vrot.lane.b32.xlu0 %v4847, 6
  %v6315 = vpop.permute.xlu0 %6314
  %6316 = vrot.lane.b32.xlu0 %v4848, 6
  %v6317 = vpop.permute.xlu0 %6316
  %6318 = vrot.lane.b32.xlu0 %v4849, 6
  %v6319 = vpop.permute.xlu0 %6318
  %6320 = vrot.lane.b32.xlu0 %v4850, 6
  %v6321 = vpop.permute.xlu0 %6320
  %6322 = vrot.lane.b32.xlu0 %v4851, 6
  %v6323 = vpop.permute.xlu0 %6322
  %6324 = vrot.lane.b32.xlu0 %v4852, 6
  %v6325 = vpop.permute.xlu0 %6324
  %v6390 = vsel %vm5749, %v4469, %v6199
  %v6391 = vsel %vm5749, %v4470, %v6201
  %v6392 = vsel %vm5749, %v4471, %v6203
  %v6393 = vsel %vm5749, %v4472, %v6205
  %v6394 = vsel %vm5749, %v4473, %v6207
  %v6395 = vsel %vm5749, %v4474, %v6209
  %v6396 = vsel %vm5749, %v4475, %v6211
  %v6397 = vsel %vm5749, %v4476, %v6213
  %v6398 = vsel %vm5749, %v4477, %v6215
  %v6399 = vsel %vm5749, %v4478, %v6217
  %v6400 = vsel %vm5749, %v4479, %v6219
  %v6401 = vsel %vm5749, %v4480, %v6221
  %v6402 = vsel %vm5749, %v4481, %v6223
  %v6403 = vsel %vm5749, %v4482, %v6225
  %v6404 = vsel %vm5749, %v4483, %v6227
  %v6405 = vsel %vm5749, %v4484, %v6229
  %v6406 = vsel %vm5749, %v4485, %v6231
  %v6407 = vsel %vm5749, %v4486, %v6233
  %v6408 = vsel %vm5749, %v4487, %v6235
  %v6409 = vsel %vm5749, %v4488, %v6237
  %v6410 = vsel %vm5749, %v4489, %v6239
  %v6411 = vsel %vm5749, %v4490, %v6241
  %v6412 = vsel %vm5749, %v4491, %v6243
  %v6413 = vsel %vm5749, %v4492, %v6245
  %v6414 = vsel %vm5749, %v4493, %v6247
  %v6415 = vsel %vm5749, %v4494, %v6249
  %v6416 = vsel %vm5749, %v4495, %v6251
  %v6417 = vsel %vm5749, %v4496, %v6253
  %v6418 = vsel %vm5749, %v4497, %v6255
  %v6419 = vsel %vm5749, %v4498, %v6257
  %v6420 = vsel %vm5749, %v4499, %v6259
  %v6421 = vsel %vm5749, %v4500, %v6261
  %v6422 = vsel %vm5749, %v4501, %v6263
  %v6423 = vsel %vm5749, %v4502, %v6265
  %v6424 = vsel %vm5749, %v4503, %v6267
  %v6425 = vsel %vm5749, %v4504, %v6269
  %v6426 = vsel %vm5749, %v4505, %v6271
  %v6427 = vsel %vm5749, %v4506, %v6273
  %v6428 = vsel %vm5749, %v4507, %v6275
  %v6429 = vsel %vm5749, %v4508, %v6277
  %v6430 = vsel %vm5749, %v4509, %v6279
  %v6431 = vsel %vm5749, %v4510, %v6281
  %v6432 = vsel %vm5749, %v4511, %v6283
  %v6433 = vsel %vm5749, %v4512, %v6285
  %v6434 = vsel %vm5749, %v4513, %v6287
  %v6435 = vsel %vm5749, %v4514, %v6289
  %v6436 = vsel %vm5749, %v4515, %v6291
  %v6437 = vsel %vm5749, %v4516, %v6293
  %v6438 = vsel %vm5749, %v4517, %v6295
  %v6439 = vsel %vm5749, %v4518, %v6297
  %v6440 = vsel %vm5749, %v4519, %v6299
  %v6441 = vsel %vm5749, %v4520, %v6301
  %v6442 = vsel %vm5749, %v4521, %v6303
  %v6443 = vsel %vm5749, %v4522, %v6305
  %v6444 = vsel %vm5749, %v4523, %v6307
  %v6445 = vsel %vm5749, %v4524, %v6309
  %v6446 = vsel %vm5749, %v4525, %v6311
  %v6447 = vsel %vm5749, %v4526, %v6313
  %v6448 = vsel %vm5749, %v4527, %v6315
  %v6449 = vsel %vm5749, %v4528, %v6317
  %v6450 = vsel %vm5749, %v4529, %v6319
  %v6451 = vsel %vm5749, %v4530, %v6321
  %v6452 = vsel %vm5749, %v4531, %v6323
  %v6453 = vsel %vm5749, %v4532, %v6325
  %6518 = vrot.lane.b32.xlu0 %v5429, 6
  %v6519 = vpop.permute.xlu0 %6518
  %6520 = vrot.lane.b32.xlu0 %v5430, 6
  %v6521 = vpop.permute.xlu0 %6520
  %6522 = vrot.lane.b32.xlu0 %v5431, 6
  %v6523 = vpop.permute.xlu0 %6522
  %6524 = vrot.lane.b32.xlu0 %v5432, 6
  %v6525 = vpop.permute.xlu0 %6524
  %6526 = vrot.lane.b32.xlu0 %v5433, 6
  %v6527 = vpop.permute.xlu0 %6526
  %6528 = vrot.lane.b32.xlu0 %v5434, 6
  %v6529 = vpop.permute.xlu0 %6528
  %6530 = vrot.lane.b32.xlu0 %v5435, 6
  %v6531 = vpop.permute.xlu0 %6530
  %6532 = vrot.lane.b32.xlu0 %v5436, 6
  %v6533 = vpop.permute.xlu0 %6532
  %6534 = vrot.lane.b32.xlu0 %v5437, 6
  %v6535 = vpop.permute.xlu0 %6534
  %6536 = vrot.lane.b32.xlu0 %v5438, 6
  %v6537 = vpop.permute.xlu0 %6536
  %6538 = vrot.lane.b32.xlu0 %v5439, 6
  %v6539 = vpop.permute.xlu0 %6538
  %6540 = vrot.lane.b32.xlu0 %v5440, 6
  %v6541 = vpop.permute.xlu0 %6540
  %6542 = vrot.lane.b32.xlu0 %v5441, 6
  %v6543 = vpop.permute.xlu0 %6542
  %6544 = vrot.lane.b32.xlu0 %v5442, 6
  %v6545 = vpop.permute.xlu0 %6544
  %6546 = vrot.lane.b32.xlu0 %v5443, 6
  %v6547 = vpop.permute.xlu0 %6546
  %6548 = vrot.lane.b32.xlu0 %v5444, 6
  %v6549 = vpop.permute.xlu0 %6548
  %6550 = vrot.lane.b32.xlu0 %v5445, 6
  %v6551 = vpop.permute.xlu0 %6550
  %6552 = vrot.lane.b32.xlu0 %v5446, 6
  %v6553 = vpop.permute.xlu0 %6552
  %6554 = vrot.lane.b32.xlu0 %v5447, 6
  %v6555 = vpop.permute.xlu0 %6554
  %6556 = vrot.lane.b32.xlu0 %v5448, 6
  %v6557 = vpop.permute.xlu0 %6556
  %6558 = vrot.lane.b32.xlu0 %v5449, 6
  %v6559 = vpop.permute.xlu0 %6558
  %6560 = vrot.lane.b32.xlu0 %v5450, 6
  %v6561 = vpop.permute.xlu0 %6560
  %6562 = vrot.lane.b32.xlu0 %v5451, 6
  %v6563 = vpop.permute.xlu0 %6562
  %6564 = vrot.lane.b32.xlu0 %v5452, 6
  %v6565 = vpop.permute.xlu0 %6564
  %6566 = vrot.lane.b32.xlu0 %v5453, 6
  %v6567 = vpop.permute.xlu0 %6566
  %6568 = vrot.lane.b32.xlu0 %v5454, 6
  %v6569 = vpop.permute.xlu0 %6568
  %6570 = vrot.lane.b32.xlu0 %v5455, 6
  %v6571 = vpop.permute.xlu0 %6570
  %6572 = vrot.lane.b32.xlu0 %v5456, 6
  %v6573 = vpop.permute.xlu0 %6572
  %6574 = vrot.lane.b32.xlu0 %v5457, 6
  %v6575 = vpop.permute.xlu0 %6574
  %6576 = vrot.lane.b32.xlu0 %v5458, 6
  %v6577 = vpop.permute.xlu0 %6576
  %6578 = vrot.lane.b32.xlu0 %v5459, 6
  %v6579 = vpop.permute.xlu0 %6578
  %6580 = vrot.lane.b32.xlu0 %v5460, 6
  %v6581 = vpop.permute.xlu0 %6580
  %6582 = vrot.lane.b32.xlu0 %v5461, 6
  %v6583 = vpop.permute.xlu0 %6582
  %6584 = vrot.lane.b32.xlu0 %v5462, 6
  %v6585 = vpop.permute.xlu0 %6584
  %6586 = vrot.lane.b32.xlu0 %v5463, 6
  %v6587 = vpop.permute.xlu0 %6586
  %6588 = vrot.lane.b32.xlu0 %v5464, 6
  %v6589 = vpop.permute.xlu0 %6588
  %6590 = vrot.lane.b32.xlu0 %v5465, 6
  %v6591 = vpop.permute.xlu0 %6590
  %6592 = vrot.lane.b32.xlu0 %v5466, 6
  %v6593 = vpop.permute.xlu0 %6592
  %6594 = vrot.lane.b32.xlu0 %v5467, 6
  %v6595 = vpop.permute.xlu0 %6594
  %6596 = vrot.lane.b32.xlu0 %v5468, 6
  %v6597 = vpop.permute.xlu0 %6596
  %6598 = vrot.lane.b32.xlu0 %v5469, 6
  %v6599 = vpop.permute.xlu0 %6598
  %6600 = vrot.lane.b32.xlu0 %v5470, 6
  %v6601 = vpop.permute.xlu0 %6600
  %6602 = vrot.lane.b32.xlu0 %v5471, 6
  %v6603 = vpop.permute.xlu0 %6602
  %6604 = vrot.lane.b32.xlu0 %v5472, 6
  %v6605 = vpop.permute.xlu0 %6604
  %6606 = vrot.lane.b32.xlu0 %v5473, 6
  %v6607 = vpop.permute.xlu0 %6606
  %6608 = vrot.lane.b32.xlu0 %v5474, 6
  %v6609 = vpop.permute.xlu0 %6608
  %6610 = vrot.lane.b32.xlu0 %v5475, 6
  %v6611 = vpop.permute.xlu0 %6610
  %6612 = vrot.lane.b32.xlu0 %v5476, 6
  %v6613 = vpop.permute.xlu0 %6612
  %6614 = vrot.lane.b32.xlu0 %v5477, 6
  %v6615 = vpop.permute.xlu0 %6614
  %6616 = vrot.lane.b32.xlu0 %v5478, 6
  %v6617 = vpop.permute.xlu0 %6616
  %6618 = vrot.lane.b32.xlu0 %v5479, 6
  %v6619 = vpop.permute.xlu0 %6618
  %6620 = vrot.lane.b32.xlu0 %v5480, 6
  %v6621 = vpop.permute.xlu0 %6620
  %6622 = vrot.lane.b32.xlu0 %v5481, 6
  %v6623 = vpop.permute.xlu0 %6622
  %6624 = vrot.lane.b32.xlu0 %v5482, 6
  %v6625 = vpop.permute.xlu0 %6624
  %6626 = vrot.lane.b32.xlu0 %v5483, 6
  %v6627 = vpop.permute.xlu0 %6626
  %6628 = vrot.lane.b32.xlu0 %v5484, 6
  %v6629 = vpop.permute.xlu0 %6628
  %6630 = vrot.lane.b32.xlu0 %v5485, 6
  %v6631 = vpop.permute.xlu0 %6630
  %6632 = vrot.lane.b32.xlu0 %v5486, 6
  %v6633 = vpop.permute.xlu0 %6632
  %6634 = vrot.lane.b32.xlu0 %v5487, 6
  %v6635 = vpop.permute.xlu0 %6634
  %6636 = vrot.lane.b32.xlu0 %v5488, 6
  %v6637 = vpop.permute.xlu0 %6636
  %6638 = vrot.lane.b32.xlu0 %v5489, 6
  %v6639 = vpop.permute.xlu0 %6638
  %6640 = vrot.lane.b32.xlu0 %v5490, 6
  %v6641 = vpop.permute.xlu0 %6640
  %6642 = vrot.lane.b32.xlu0 %v5491, 6
  %v6643 = vpop.permute.xlu0 %6642
  %6644 = vrot.lane.b32.xlu0 %v5492, 6
  %v6645 = vpop.permute.xlu0 %6644
  %v6710 = vsel %vm5749, %v5109, %v6519
  %v6711 = vsel %vm5749, %v5110, %v6521
  %v6712 = vsel %vm5749, %v5111, %v6523
  %v6713 = vsel %vm5749, %v5112, %v6525
  %v6714 = vsel %vm5749, %v5113, %v6527
  %v6715 = vsel %vm5749, %v5114, %v6529
  %v6716 = vsel %vm5749, %v5115, %v6531
  %v6717 = vsel %vm5749, %v5116, %v6533
  %v6718 = vsel %vm5749, %v5117, %v6535
  %v6719 = vsel %vm5749, %v5118, %v6537
  %v6720 = vsel %vm5749, %v5119, %v6539
  %v6721 = vsel %vm5749, %v5120, %v6541
  %v6722 = vsel %vm5749, %v5121, %v6543
  %v6723 = vsel %vm5749, %v5122, %v6545
  %v6724 = vsel %vm5749, %v5123, %v6547
  %v6725 = vsel %vm5749, %v5124, %v6549
  %v6726 = vsel %vm5749, %v5125, %v6551
  %v6727 = vsel %vm5749, %v5126, %v6553
  %v6728 = vsel %vm5749, %v5127, %v6555
  %v6729 = vsel %vm5749, %v5128, %v6557
  %v6730 = vsel %vm5749, %v5129, %v6559
  %v6731 = vsel %vm5749, %v5130, %v6561
  %v6732 = vsel %vm5749, %v5131, %v6563
  %v6733 = vsel %vm5749, %v5132, %v6565
  %v6734 = vsel %vm5749, %v5133, %v6567
  %v6735 = vsel %vm5749, %v5134, %v6569
  %v6736 = vsel %vm5749, %v5135, %v6571
  %v6737 = vsel %vm5749, %v5136, %v6573
  %v6738 = vsel %vm5749, %v5137, %v6575
  %v6739 = vsel %vm5749, %v5138, %v6577
  %v6740 = vsel %vm5749, %v5139, %v6579
  %v6741 = vsel %vm5749, %v5140, %v6581
  %v6742 = vsel %vm5749, %v5141, %v6583
  %v6743 = vsel %vm5749, %v5142, %v6585
  %v6744 = vsel %vm5749, %v5143, %v6587
  %v6745 = vsel %vm5749, %v5144, %v6589
  %v6746 = vsel %vm5749, %v5145, %v6591
  %v6747 = vsel %vm5749, %v5146, %v6593
  %v6748 = vsel %vm5749, %v5147, %v6595
  %v6749 = vsel %vm5749, %v5148, %v6597
  %v6750 = vsel %vm5749, %v5149, %v6599
  %v6751 = vsel %vm5749, %v5150, %v6601
  %v6752 = vsel %vm5749, %v5151, %v6603
  %v6753 = vsel %vm5749, %v5152, %v6605
  %v6754 = vsel %vm5749, %v5153, %v6607
  %v6755 = vsel %vm5749, %v5154, %v6609
  %v6756 = vsel %vm5749, %v5155, %v6611
  %v6757 = vsel %vm5749, %v5156, %v6613
  %v6758 = vsel %vm5749, %v5157, %v6615
  %v6759 = vsel %vm5749, %v5158, %v6617
  %v6760 = vsel %vm5749, %v5159, %v6619
  %v6761 = vsel %vm5749, %v5160, %v6621
  %v6762 = vsel %vm5749, %v5161, %v6623
  %v6763 = vsel %vm5749, %v5162, %v6625
  %v6764 = vsel %vm5749, %v5163, %v6627
  %v6765 = vsel %vm5749, %v5164, %v6629
  %v6766 = vsel %vm5749, %v5165, %v6631
  %v6767 = vsel %vm5749, %v5166, %v6633
  %v6768 = vsel %vm5749, %v5167, %v6635
  %v6769 = vsel %vm5749, %v5168, %v6637
  %v6770 = vsel %vm5749, %v5169, %v6639
  %v6771 = vsel %vm5749, %v5170, %v6641
  %v6772 = vsel %vm5749, %v5171, %v6643
  %v6773 = vsel %vm5749, %v5172, %v6645
  %6838 = vrot.lane.b32.xlu0 %v6070, 12
  %v6839 = vpop.permute.xlu0 %6838
  %6840 = vrot.lane.b32.xlu0 %v6071, 12
  %v6841 = vpop.permute.xlu0 %6840
  %6842 = vrot.lane.b32.xlu0 %v6072, 12
  %v6843 = vpop.permute.xlu0 %6842
  %6844 = vrot.lane.b32.xlu0 %v6073, 12
  %v6845 = vpop.permute.xlu0 %6844
  %6846 = vrot.lane.b32.xlu0 %v6074, 12
  %v6847 = vpop.permute.xlu0 %6846
  %6848 = vrot.lane.b32.xlu0 %v6075, 12
  %v6849 = vpop.permute.xlu0 %6848
  %6850 = vrot.lane.b32.xlu0 %v6076, 12
  %v6851 = vpop.permute.xlu0 %6850
  %6852 = vrot.lane.b32.xlu0 %v6077, 12
  %v6853 = vpop.permute.xlu0 %6852
  %6854 = vrot.lane.b32.xlu0 %v6078, 12
  %v6855 = vpop.permute.xlu0 %6854
  %6856 = vrot.lane.b32.xlu0 %v6079, 12
  %v6857 = vpop.permute.xlu0 %6856
  %6858 = vrot.lane.b32.xlu0 %v6080, 12
  %v6859 = vpop.permute.xlu0 %6858
  %6860 = vrot.lane.b32.xlu0 %v6081, 12
  %v6861 = vpop.permute.xlu0 %6860
  %6862 = vrot.lane.b32.xlu0 %v6082, 12
  %v6863 = vpop.permute.xlu0 %6862
  %6864 = vrot.lane.b32.xlu0 %v6083, 12
  %v6865 = vpop.permute.xlu0 %6864
  %6866 = vrot.lane.b32.xlu0 %v6084, 12
  %v6867 = vpop.permute.xlu0 %6866
  %6868 = vrot.lane.b32.xlu0 %v6085, 12
  %v6869 = vpop.permute.xlu0 %6868
  %6870 = vrot.lane.b32.xlu0 %v6086, 12
  %v6871 = vpop.permute.xlu0 %6870
  %6872 = vrot.lane.b32.xlu0 %v6087, 12
  %v6873 = vpop.permute.xlu0 %6872
  %6874 = vrot.lane.b32.xlu0 %v6088, 12
  %v6875 = vpop.permute.xlu0 %6874
  %6876 = vrot.lane.b32.xlu0 %v6089, 12
  %v6877 = vpop.permute.xlu0 %6876
  %6878 = vrot.lane.b32.xlu0 %v6090, 12
  %v6879 = vpop.permute.xlu0 %6878
  %6880 = vrot.lane.b32.xlu0 %v6091, 12
  %v6881 = vpop.permute.xlu0 %6880
  %6882 = vrot.lane.b32.xlu0 %v6092, 12
  %v6883 = vpop.permute.xlu0 %6882
  %6884 = vrot.lane.b32.xlu0 %v6093, 12
  %v6885 = vpop.permute.xlu0 %6884
  %6886 = vrot.lane.b32.xlu0 %v6094, 12
  %v6887 = vpop.permute.xlu0 %6886
  %6888 = vrot.lane.b32.xlu0 %v6095, 12
  %v6889 = vpop.permute.xlu0 %6888
  %6890 = vrot.lane.b32.xlu0 %v6096, 12
  %v6891 = vpop.permute.xlu0 %6890
  %6892 = vrot.lane.b32.xlu0 %v6097, 12
  %v6893 = vpop.permute.xlu0 %6892
  %6894 = vrot.lane.b32.xlu0 %v6098, 12
  %v6895 = vpop.permute.xlu0 %6894
  %6896 = vrot.lane.b32.xlu0 %v6099, 12
  %v6897 = vpop.permute.xlu0 %6896
  %6898 = vrot.lane.b32.xlu0 %v6100, 12
  %v6899 = vpop.permute.xlu0 %6898
  %6900 = vrot.lane.b32.xlu0 %v6101, 12
  %v6901 = vpop.permute.xlu0 %6900
  %6902 = vrot.lane.b32.xlu0 %v6102, 12
  %v6903 = vpop.permute.xlu0 %6902
  %6904 = vrot.lane.b32.xlu0 %v6103, 12
  %v6905 = vpop.permute.xlu0 %6904
  %6906 = vrot.lane.b32.xlu0 %v6104, 12
  %v6907 = vpop.permute.xlu0 %6906
  %6908 = vrot.lane.b32.xlu0 %v6105, 12
  %v6909 = vpop.permute.xlu0 %6908
  %6910 = vrot.lane.b32.xlu0 %v6106, 12
  %v6911 = vpop.permute.xlu0 %6910
  %6912 = vrot.lane.b32.xlu0 %v6107, 12
  %v6913 = vpop.permute.xlu0 %6912
  %6914 = vrot.lane.b32.xlu0 %v6108, 12
  %v6915 = vpop.permute.xlu0 %6914
  %6916 = vrot.lane.b32.xlu0 %v6109, 12
  %v6917 = vpop.permute.xlu0 %6916
  %6918 = vrot.lane.b32.xlu0 %v6110, 12
  %v6919 = vpop.permute.xlu0 %6918
  %6920 = vrot.lane.b32.xlu0 %v6111, 12
  %v6921 = vpop.permute.xlu0 %6920
  %6922 = vrot.lane.b32.xlu0 %v6112, 12
  %v6923 = vpop.permute.xlu0 %6922
  %6924 = vrot.lane.b32.xlu0 %v6113, 12
  %v6925 = vpop.permute.xlu0 %6924
  %6926 = vrot.lane.b32.xlu0 %v6114, 12
  %v6927 = vpop.permute.xlu0 %6926
  %6928 = vrot.lane.b32.xlu0 %v6115, 12
  %v6929 = vpop.permute.xlu0 %6928
  %6930 = vrot.lane.b32.xlu0 %v6116, 12
  %v6931 = vpop.permute.xlu0 %6930
  %6932 = vrot.lane.b32.xlu0 %v6117, 12
  %v6933 = vpop.permute.xlu0 %6932
  %6934 = vrot.lane.b32.xlu0 %v6118, 12
  %v6935 = vpop.permute.xlu0 %6934
  %6936 = vrot.lane.b32.xlu0 %v6119, 12
  %v6937 = vpop.permute.xlu0 %6936
  %6938 = vrot.lane.b32.xlu0 %v6120, 12
  %v6939 = vpop.permute.xlu0 %6938
  %6940 = vrot.lane.b32.xlu0 %v6121, 12
  %v6941 = vpop.permute.xlu0 %6940
  %6942 = vrot.lane.b32.xlu0 %v6122, 12
  %v6943 = vpop.permute.xlu0 %6942
  %6944 = vrot.lane.b32.xlu0 %v6123, 12
  %v6945 = vpop.permute.xlu0 %6944
  %6946 = vrot.lane.b32.xlu0 %v6124, 12
  %v6947 = vpop.permute.xlu0 %6946
  %6948 = vrot.lane.b32.xlu0 %v6125, 12
  %v6949 = vpop.permute.xlu0 %6948
  %6950 = vrot.lane.b32.xlu0 %v6126, 12
  %v6951 = vpop.permute.xlu0 %6950
  %6952 = vrot.lane.b32.xlu0 %v6127, 12
  %v6953 = vpop.permute.xlu0 %6952
  %6954 = vrot.lane.b32.xlu0 %v6128, 12
  %v6955 = vpop.permute.xlu0 %6954
  %6956 = vrot.lane.b32.xlu0 %v6129, 12
  %v6957 = vpop.permute.xlu0 %6956
  %6958 = vrot.lane.b32.xlu0 %v6130, 12
  %v6959 = vpop.permute.xlu0 %6958
  %6960 = vrot.lane.b32.xlu0 %v6131, 12
  %v6961 = vpop.permute.xlu0 %6960
  %6962 = vrot.lane.b32.xlu0 %v6132, 12
  %v6963 = vpop.permute.xlu0 %6962
  %6964 = vrot.lane.b32.xlu0 %v6133, 12
  %v6965 = vpop.permute.xlu0 %6964
  %vm7030 = vcmask 97280
  %v7031 = vsel %vm7030, %v5750, %v6839
  %v7032 = vsel %vm7030, %v5751, %v6841
  %v7033 = vsel %vm7030, %v5752, %v6843
  %v7034 = vsel %vm7030, %v5753, %v6845
  %v7035 = vsel %vm7030, %v5754, %v6847
  %v7036 = vsel %vm7030, %v5755, %v6849
  %v7037 = vsel %vm7030, %v5756, %v6851
  %v7038 = vsel %vm7030, %v5757, %v6853
  %v7039 = vsel %vm7030, %v5758, %v6855
  %v7040 = vsel %vm7030, %v5759, %v6857
  %v7041 = vsel %vm7030, %v5760, %v6859
  %v7042 = vsel %vm7030, %v5761, %v6861
  %v7043 = vsel %vm7030, %v5762, %v6863
  %v7044 = vsel %vm7030, %v5763, %v6865
  %v7045 = vsel %vm7030, %v5764, %v6867
  %v7046 = vsel %vm7030, %v5765, %v6869
  %v7047 = vsel %vm7030, %v5766, %v6871
  %v7048 = vsel %vm7030, %v5767, %v6873
  %v7049 = vsel %vm7030, %v5768, %v6875
  %v7050 = vsel %vm7030, %v5769, %v6877
  %v7051 = vsel %vm7030, %v5770, %v6879
  %v7052 = vsel %vm7030, %v5771, %v6881
  %v7053 = vsel %vm7030, %v5772, %v6883
  %v7054 = vsel %vm7030, %v5773, %v6885
  %v7055 = vsel %vm7030, %v5774, %v6887
  %v7056 = vsel %vm7030, %v5775, %v6889
  %v7057 = vsel %vm7030, %v5776, %v6891
  %v7058 = vsel %vm7030, %v5777, %v6893
  %v7059 = vsel %vm7030, %v5778, %v6895
  %v7060 = vsel %vm7030, %v5779, %v6897
  %v7061 = vsel %vm7030, %v5780, %v6899
  %v7062 = vsel %vm7030, %v5781, %v6901
  %v7063 = vsel %vm7030, %v5782, %v6903
  %v7064 = vsel %vm7030, %v5783, %v6905
  %v7065 = vsel %vm7030, %v5784, %v6907
  %v7066 = vsel %vm7030, %v5785, %v6909
  %v7067 = vsel %vm7030, %v5786, %v6911
  %v7068 = vsel %vm7030, %v5787, %v6913
  %v7069 = vsel %vm7030, %v5788, %v6915
  %v7070 = vsel %vm7030, %v5789, %v6917
  %v7071 = vsel %vm7030, %v5790, %v6919
  %v7072 = vsel %vm7030, %v5791, %v6921
  %v7073 = vsel %vm7030, %v5792, %v6923
  %v7074 = vsel %vm7030, %v5793, %v6925
  %v7075 = vsel %vm7030, %v5794, %v6927
  %v7076 = vsel %vm7030, %v5795, %v6929
  %v7077 = vsel %vm7030, %v5796, %v6931
  %v7078 = vsel %vm7030, %v5797, %v6933
  %v7079 = vsel %vm7030, %v5798, %v6935
  %v7080 = vsel %vm7030, %v5799, %v6937
  %v7081 = vsel %vm7030, %v5800, %v6939
  %v7082 = vsel %vm7030, %v5801, %v6941
  %v7083 = vsel %vm7030, %v5802, %v6943
  %v7084 = vsel %vm7030, %v5803, %v6945
  %v7085 = vsel %vm7030, %v5804, %v6947
  %v7086 = vsel %vm7030, %v5805, %v6949
  %v7087 = vsel %vm7030, %v5806, %v6951
  %v7088 = vsel %vm7030, %v5807, %v6953
  %v7089 = vsel %vm7030, %v5808, %v6955
  %v7090 = vsel %vm7030, %v5809, %v6957
  %v7091 = vsel %vm7030, %v5810, %v6959
  %v7092 = vsel %vm7030, %v5811, %v6961
  %v7093 = vsel %vm7030, %v5812, %v6963
  %v7094 = vsel %vm7030, %v5813, %v6965
  %7159 = vrot.lane.b32.xlu0 %v6710, 12
  %v7160 = vpop.permute.xlu0 %7159
  %7161 = vrot.lane.b32.xlu0 %v6711, 12
  %v7162 = vpop.permute.xlu0 %7161
  %7163 = vrot.lane.b32.xlu0 %v6712, 12
  %v7164 = vpop.permute.xlu0 %7163
  %7165 = vrot.lane.b32.xlu0 %v6713, 12
  %v7166 = vpop.permute.xlu0 %7165
  %7167 = vrot.lane.b32.xlu0 %v6714, 12
  %v7168 = vpop.permute.xlu0 %7167
  %7169 = vrot.lane.b32.xlu0 %v6715, 12
  %v7170 = vpop.permute.xlu0 %7169
  %7171 = vrot.lane.b32.xlu0 %v6716, 12
  %v7172 = vpop.permute.xlu0 %7171
  %7173 = vrot.lane.b32.xlu0 %v6717, 12
  %v7174 = vpop.permute.xlu0 %7173
  %7175 = vrot.lane.b32.xlu0 %v6718, 12
  %v7176 = vpop.permute.xlu0 %7175
  %7177 = vrot.lane.b32.xlu0 %v6719, 12
  %v7178 = vpop.permute.xlu0 %7177
  %7179 = vrot.lane.b32.xlu0 %v6720, 12
  %v7180 = vpop.permute.xlu0 %7179
  %7181 = vrot.lane.b32.xlu0 %v6721, 12
  %v7182 = vpop.permute.xlu0 %7181
  %7183 = vrot.lane.b32.xlu0 %v6722, 12
  %v7184 = vpop.permute.xlu0 %7183
  %7185 = vrot.lane.b32.xlu0 %v6723, 12
  %v7186 = vpop.permute.xlu0 %7185
  %7187 = vrot.lane.b32.xlu0 %v6724, 12
  %v7188 = vpop.permute.xlu0 %7187
  %7189 = vrot.lane.b32.xlu0 %v6725, 12
  %v7190 = vpop.permute.xlu0 %7189
  %7191 = vrot.lane.b32.xlu0 %v6726, 12
  %v7192 = vpop.permute.xlu0 %7191
  %7193 = vrot.lane.b32.xlu0 %v6727, 12
  %v7194 = vpop.permute.xlu0 %7193
  %7195 = vrot.lane.b32.xlu0 %v6728, 12
  %v7196 = vpop.permute.xlu0 %7195
  %7197 = vrot.lane.b32.xlu0 %v6729, 12
  %v7198 = vpop.permute.xlu0 %7197
  %7199 = vrot.lane.b32.xlu0 %v6730, 12
  %v7200 = vpop.permute.xlu0 %7199
  %7201 = vrot.lane.b32.xlu0 %v6731, 12
  %v7202 = vpop.permute.xlu0 %7201
  %7203 = vrot.lane.b32.xlu0 %v6732, 12
  %v7204 = vpop.permute.xlu0 %7203
  %7205 = vrot.lane.b32.xlu0 %v6733, 12
  %v7206 = vpop.permute.xlu0 %7205
  %7207 = vrot.lane.b32.xlu0 %v6734, 12
  %v7208 = vpop.permute.xlu0 %7207
  %7209 = vrot.lane.b32.xlu0 %v6735, 12
  %v7210 = vpop.permute.xlu0 %7209
  %7211 = vrot.lane.b32.xlu0 %v6736, 12
  %v7212 = vpop.permute.xlu0 %7211
  %7213 = vrot.lane.b32.xlu0 %v6737, 12
  %v7214 = vpop.permute.xlu0 %7213
  %7215 = vrot.lane.b32.xlu0 %v6738, 12
  %v7216 = vpop.permute.xlu0 %7215
  %7217 = vrot.lane.b32.xlu0 %v6739, 12
  %v7218 = vpop.permute.xlu0 %7217
  %7219 = vrot.lane.b32.xlu0 %v6740, 12
  %v7220 = vpop.permute.xlu0 %7219
  %7221 = vrot.lane.b32.xlu0 %v6741, 12
  %v7222 = vpop.permute.xlu0 %7221
  %7223 = vrot.lane.b32.xlu0 %v6742, 12
  %v7224 = vpop.permute.xlu0 %7223
  %7225 = vrot.lane.b32.xlu0 %v6743, 12
  %v7226 = vpop.permute.xlu0 %7225
  %7227 = vrot.lane.b32.xlu0 %v6744, 12
  %v7228 = vpop.permute.xlu0 %7227
  %7229 = vrot.lane.b32.xlu0 %v6745, 12
  %v7230 = vpop.permute.xlu0 %7229
  %7231 = vrot.lane.b32.xlu0 %v6746, 12
  %v7232 = vpop.permute.xlu0 %7231
  %7233 = vrot.lane.b32.xlu0 %v6747, 12
  %v7234 = vpop.permute.xlu0 %7233
  %7235 = vrot.lane.b32.xlu0 %v6748, 12
  %v7236 = vpop.permute.xlu0 %7235
  %7237 = vrot.lane.b32.xlu0 %v6749, 12
  %v7238 = vpop.permute.xlu0 %7237
  %7239 = vrot.lane.b32.xlu0 %v6750, 12
  %v7240 = vpop.permute.xlu0 %7239
  %7241 = vrot.lane.b32.xlu0 %v6751, 12
  %v7242 = vpop.permute.xlu0 %7241
  %7243 = vrot.lane.b32.xlu0 %v6752, 12
  %v7244 = vpop.permute.xlu0 %7243
  %7245 = vrot.lane.b32.xlu0 %v6753, 12
  %v7246 = vpop.permute.xlu0 %7245
  %7247 = vrot.lane.b32.xlu0 %v6754, 12
  %v7248 = vpop.permute.xlu0 %7247
  %7249 = vrot.lane.b32.xlu0 %v6755, 12
  %v7250 = vpop.permute.xlu0 %7249
  %7251 = vrot.lane.b32.xlu0 %v6756, 12
  %v7252 = vpop.permute.xlu0 %7251
  %7253 = vrot.lane.b32.xlu0 %v6757, 12
  %v7254 = vpop.permute.xlu0 %7253
  %7255 = vrot.lane.b32.xlu0 %v6758, 12
  %v7256 = vpop.permute.xlu0 %7255
  %7257 = vrot.lane.b32.xlu0 %v6759, 12
  %v7258 = vpop.permute.xlu0 %7257
  %7259 = vrot.lane.b32.xlu0 %v6760, 12
  %v7260 = vpop.permute.xlu0 %7259
  %7261 = vrot.lane.b32.xlu0 %v6761, 12
  %v7262 = vpop.permute.xlu0 %7261
  %7263 = vrot.lane.b32.xlu0 %v6762, 12
  %v7264 = vpop.permute.xlu0 %7263
  %7265 = vrot.lane.b32.xlu0 %v6763, 12
  %v7266 = vpop.permute.xlu0 %7265
  %7267 = vrot.lane.b32.xlu0 %v6764, 12
  %v7268 = vpop.permute.xlu0 %7267
  %7269 = vrot.lane.b32.xlu0 %v6765, 12
  %v7270 = vpop.permute.xlu0 %7269
  %7271 = vrot.lane.b32.xlu0 %v6766, 12
  %v7272 = vpop.permute.xlu0 %7271
  %7273 = vrot.lane.b32.xlu0 %v6767, 12
  %v7274 = vpop.permute.xlu0 %7273
  %7275 = vrot.lane.b32.xlu0 %v6768, 12
  %v7276 = vpop.permute.xlu0 %7275
  %7277 = vrot.lane.b32.xlu0 %v6769, 12
  %v7278 = vpop.permute.xlu0 %7277
  %7279 = vrot.lane.b32.xlu0 %v6770, 12
  %v7280 = vpop.permute.xlu0 %7279
  %7281 = vrot.lane.b32.xlu0 %v6771, 12
  %v7282 = vpop.permute.xlu0 %7281
  %7283 = vrot.lane.b32.xlu0 %v6772, 12
  %v7284 = vpop.permute.xlu0 %7283
  %7285 = vrot.lane.b32.xlu0 %v6773, 12
  %v7286 = vpop.permute.xlu0 %7285
  %v7351 = vsel %vm7030, %v6390, %v7160
  %v7352 = vsel %vm7030, %v6391, %v7162
  %v7353 = vsel %vm7030, %v6392, %v7164
  %v7354 = vsel %vm7030, %v6393, %v7166
  %v7355 = vsel %vm7030, %v6394, %v7168
  %v7356 = vsel %vm7030, %v6395, %v7170
  %v7357 = vsel %vm7030, %v6396, %v7172
  %v7358 = vsel %vm7030, %v6397, %v7174
  %v7359 = vsel %vm7030, %v6398, %v7176
  %v7360 = vsel %vm7030, %v6399, %v7178
  %v7361 = vsel %vm7030, %v6400, %v7180
  %v7362 = vsel %vm7030, %v6401, %v7182
  %v7363 = vsel %vm7030, %v6402, %v7184
  %v7364 = vsel %vm7030, %v6403, %v7186
  %v7365 = vsel %vm7030, %v6404, %v7188
  %v7366 = vsel %vm7030, %v6405, %v7190
  %v7367 = vsel %vm7030, %v6406, %v7192
  %v7368 = vsel %vm7030, %v6407, %v7194
  %v7369 = vsel %vm7030, %v6408, %v7196
  %v7370 = vsel %vm7030, %v6409, %v7198
  %v7371 = vsel %vm7030, %v6410, %v7200
  %v7372 = vsel %vm7030, %v6411, %v7202
  %v7373 = vsel %vm7030, %v6412, %v7204
  %v7374 = vsel %vm7030, %v6413, %v7206
  %v7375 = vsel %vm7030, %v6414, %v7208
  %v7376 = vsel %vm7030, %v6415, %v7210
  %v7377 = vsel %vm7030, %v6416, %v7212
  %v7378 = vsel %vm7030, %v6417, %v7214
  %v7379 = vsel %vm7030, %v6418, %v7216
  %v7380 = vsel %vm7030, %v6419, %v7218
  %v7381 = vsel %vm7030, %v6420, %v7220
  %v7382 = vsel %vm7030, %v6421, %v7222
  %v7383 = vsel %vm7030, %v6422, %v7224
  %v7384 = vsel %vm7030, %v6423, %v7226
  %v7385 = vsel %vm7030, %v6424, %v7228
  %v7386 = vsel %vm7030, %v6425, %v7230
  %v7387 = vsel %vm7030, %v6426, %v7232
  %v7388 = vsel %vm7030, %v6427, %v7234
  %v7389 = vsel %vm7030, %v6428, %v7236
  %v7390 = vsel %vm7030, %v6429, %v7238
  %v7391 = vsel %vm7030, %v6430, %v7240
  %v7392 = vsel %vm7030, %v6431, %v7242
  %v7393 = vsel %vm7030, %v6432, %v7244
  %v7394 = vsel %vm7030, %v6433, %v7246
  %v7395 = vsel %vm7030, %v6434, %v7248
  %v7396 = vsel %vm7030, %v6435, %v7250
  %v7397 = vsel %vm7030, %v6436, %v7252
  %v7398 = vsel %vm7030, %v6437, %v7254
  %v7399 = vsel %vm7030, %v6438, %v7256
  %v7400 = vsel %vm7030, %v6439, %v7258
  %v7401 = vsel %vm7030, %v6440, %v7260
  %v7402 = vsel %vm7030, %v6441, %v7262
  %v7403 = vsel %vm7030, %v6442, %v7264
  %v7404 = vsel %vm7030, %v6443, %v7266
  %v7405 = vsel %vm7030, %v6444, %v7268
  %v7406 = vsel %vm7030, %v6445, %v7270
  %v7407 = vsel %vm7030, %v6446, %v7272
  %v7408 = vsel %vm7030, %v6447, %v7274
  %v7409 = vsel %vm7030, %v6448, %v7276
  %v7410 = vsel %vm7030, %v6449, %v7278
  %v7411 = vsel %vm7030, %v6450, %v7280
  %v7412 = vsel %vm7030, %v6451, %v7282
  %v7413 = vsel %vm7030, %v6452, %v7284
  %v7414 = vsel %vm7030, %v6453, %v7286
  %7479 = vrot.lane.b32.xlu0 %v7351, 24
  %v7480 = vpop.permute.xlu0 %7479
  %7481 = vrot.lane.b32.xlu0 %v7352, 24
  %v7482 = vpop.permute.xlu0 %7481
  %7483 = vrot.lane.b32.xlu0 %v7353, 24
  %v7484 = vpop.permute.xlu0 %7483
  %7485 = vrot.lane.b32.xlu0 %v7354, 24
  %v7486 = vpop.permute.xlu0 %7485
  %7487 = vrot.lane.b32.xlu0 %v7355, 24
  %v7488 = vpop.permute.xlu0 %7487
  %7489 = vrot.lane.b32.xlu0 %v7356, 24
  %v7490 = vpop.permute.xlu0 %7489
  %7491 = vrot.lane.b32.xlu0 %v7357, 24
  %v7492 = vpop.permute.xlu0 %7491
  %7493 = vrot.lane.b32.xlu0 %v7358, 24
  %v7494 = vpop.permute.xlu0 %7493
  %7495 = vrot.lane.b32.xlu0 %v7359, 24
  %v7496 = vpop.permute.xlu0 %7495
  %7497 = vrot.lane.b32.xlu0 %v7360, 24
  %v7498 = vpop.permute.xlu0 %7497
  %7499 = vrot.lane.b32.xlu0 %v7361, 24
  %v7500 = vpop.permute.xlu0 %7499
  %7501 = vrot.lane.b32.xlu0 %v7362, 24
  %v7502 = vpop.permute.xlu0 %7501
  %7503 = vrot.lane.b32.xlu0 %v7363, 24
  %v7504 = vpop.permute.xlu0 %7503
  %7505 = vrot.lane.b32.xlu0 %v7364, 24
  %v7506 = vpop.permute.xlu0 %7505
  %7507 = vrot.lane.b32.xlu0 %v7365, 24
  %v7508 = vpop.permute.xlu0 %7507
  %7509 = vrot.lane.b32.xlu0 %v7366, 24
  %v7510 = vpop.permute.xlu0 %7509
  %7511 = vrot.lane.b32.xlu0 %v7367, 24
  %v7512 = vpop.permute.xlu0 %7511
  %7513 = vrot.lane.b32.xlu0 %v7368, 24
  %v7514 = vpop.permute.xlu0 %7513
  %7515 = vrot.lane.b32.xlu0 %v7369, 24
  %v7516 = vpop.permute.xlu0 %7515
  %7517 = vrot.lane.b32.xlu0 %v7370, 24
  %v7518 = vpop.permute.xlu0 %7517
  %7519 = vrot.lane.b32.xlu0 %v7371, 24
  %v7520 = vpop.permute.xlu0 %7519
  %7521 = vrot.lane.b32.xlu0 %v7372, 24
  %v7522 = vpop.permute.xlu0 %7521
  %7523 = vrot.lane.b32.xlu0 %v7373, 24
  %v7524 = vpop.permute.xlu0 %7523
  %7525 = vrot.lane.b32.xlu0 %v7374, 24
  %v7526 = vpop.permute.xlu0 %7525
  %7527 = vrot.lane.b32.xlu0 %v7375, 24
  %v7528 = vpop.permute.xlu0 %7527
  %7529 = vrot.lane.b32.xlu0 %v7376, 24
  %v7530 = vpop.permute.xlu0 %7529
  %7531 = vrot.lane.b32.xlu0 %v7377, 24
  %v7532 = vpop.permute.xlu0 %7531
  %7533 = vrot.lane.b32.xlu0 %v7378, 24
  %v7534 = vpop.permute.xlu0 %7533
  %7535 = vrot.lane.b32.xlu0 %v7379, 24
  %v7536 = vpop.permute.xlu0 %7535
  %7537 = vrot.lane.b32.xlu0 %v7380, 24
  %v7538 = vpop.permute.xlu0 %7537
  %7539 = vrot.lane.b32.xlu0 %v7381, 24
  %v7540 = vpop.permute.xlu0 %7539
  %7541 = vrot.lane.b32.xlu0 %v7382, 24
  %v7542 = vpop.permute.xlu0 %7541
  %7543 = vrot.lane.b32.xlu0 %v7383, 24
  %v7544 = vpop.permute.xlu0 %7543
  %7545 = vrot.lane.b32.xlu0 %v7384, 24
  %v7546 = vpop.permute.xlu0 %7545
  %7547 = vrot.lane.b32.xlu0 %v7385, 24
  %v7548 = vpop.permute.xlu0 %7547
  %7549 = vrot.lane.b32.xlu0 %v7386, 24
  %v7550 = vpop.permute.xlu0 %7549
  %7551 = vrot.lane.b32.xlu0 %v7387, 24
  %v7552 = vpop.permute.xlu0 %7551
  %7553 = vrot.lane.b32.xlu0 %v7388, 24
  %v7554 = vpop.permute.xlu0 %7553
  %7555 = vrot.lane.b32.xlu0 %v7389, 24
  %v7556 = vpop.permute.xlu0 %7555
  %7557 = vrot.lane.b32.xlu0 %v7390, 24
  %v7558 = vpop.permute.xlu0 %7557
  %7559 = vrot.lane.b32.xlu0 %v7391, 24
  %v7560 = vpop.permute.xlu0 %7559
  %7561 = vrot.lane.b32.xlu0 %v7392, 24
  %v7562 = vpop.permute.xlu0 %7561
  %7563 = vrot.lane.b32.xlu0 %v7393, 24
  %v7564 = vpop.permute.xlu0 %7563
  %7565 = vrot.lane.b32.xlu0 %v7394, 24
  %v7566 = vpop.permute.xlu0 %7565
  %7567 = vrot.lane.b32.xlu0 %v7395, 24
  %v7568 = vpop.permute.xlu0 %7567
  %7569 = vrot.lane.b32.xlu0 %v7396, 24
  %v7570 = vpop.permute.xlu0 %7569
  %7571 = vrot.lane.b32.xlu0 %v7397, 24
  %v7572 = vpop.permute.xlu0 %7571
  %7573 = vrot.lane.b32.xlu0 %v7398, 24
  %v7574 = vpop.permute.xlu0 %7573
  %7575 = vrot.lane.b32.xlu0 %v7399, 24
  %v7576 = vpop.permute.xlu0 %7575
  %7577 = vrot.lane.b32.xlu0 %v7400, 24
  %v7578 = vpop.permute.xlu0 %7577
  %7579 = vrot.lane.b32.xlu0 %v7401, 24
  %v7580 = vpop.permute.xlu0 %7579
  %7581 = vrot.lane.b32.xlu0 %v7402, 24
  %v7582 = vpop.permute.xlu0 %7581
  %7583 = vrot.lane.b32.xlu0 %v7403, 24
  %v7584 = vpop.permute.xlu0 %7583
  %7585 = vrot.lane.b32.xlu0 %v7404, 24
  %v7586 = vpop.permute.xlu0 %7585
  %7587 = vrot.lane.b32.xlu0 %v7405, 24
  %v7588 = vpop.permute.xlu0 %7587
  %7589 = vrot.lane.b32.xlu0 %v7406, 24
  %v7590 = vpop.permute.xlu0 %7589
  %7591 = vrot.lane.b32.xlu0 %v7407, 24
  %v7592 = vpop.permute.xlu0 %7591
  %7593 = vrot.lane.b32.xlu0 %v7408, 24
  %v7594 = vpop.permute.xlu0 %7593
  %7595 = vrot.lane.b32.xlu0 %v7409, 24
  %v7596 = vpop.permute.xlu0 %7595
  %7597 = vrot.lane.b32.xlu0 %v7410, 24
  %v7598 = vpop.permute.xlu0 %7597
  %7599 = vrot.lane.b32.xlu0 %v7411, 24
  %v7600 = vpop.permute.xlu0 %7599
  %7601 = vrot.lane.b32.xlu0 %v7412, 24
  %v7602 = vpop.permute.xlu0 %7601
  %7603 = vrot.lane.b32.xlu0 %v7413, 24
  %v7604 = vpop.permute.xlu0 %7603
  %7605 = vrot.lane.b32.xlu0 %v7414, 24
  %v7606 = vpop.permute.xlu0 %7605
  %vm7671 = vcmask 195584
  %v7672 = vsel %vm7671, %v7031, %v7480
  %v7673 = vsel %vm7671, %v7032, %v7482
  %v7674 = vsel %vm7671, %v7033, %v7484
  %v7675 = vsel %vm7671, %v7034, %v7486
  %v7676 = vsel %vm7671, %v7035, %v7488
  %v7677 = vsel %vm7671, %v7036, %v7490
  %v7678 = vsel %vm7671, %v7037, %v7492
  %v7679 = vsel %vm7671, %v7038, %v7494
  %v7680 = vsel %vm7671, %v7039, %v7496
  %v7681 = vsel %vm7671, %v7040, %v7498
  %v7682 = vsel %vm7671, %v7041, %v7500
  %v7683 = vsel %vm7671, %v7042, %v7502
  %v7684 = vsel %vm7671, %v7043, %v7504
  %v7685 = vsel %vm7671, %v7044, %v7506
  %v7686 = vsel %vm7671, %v7045, %v7508
  %v7687 = vsel %vm7671, %v7046, %v7510
  %v7688 = vsel %vm7671, %v7047, %v7512
  %v7689 = vsel %vm7671, %v7048, %v7514
  %v7690 = vsel %vm7671, %v7049, %v7516
  %v7691 = vsel %vm7671, %v7050, %v7518
  %v7692 = vsel %vm7671, %v7051, %v7520
  %v7693 = vsel %vm7671, %v7052, %v7522
  %v7694 = vsel %vm7671, %v7053, %v7524
  %v7695 = vsel %vm7671, %v7054, %v7526
  %v7696 = vsel %vm7671, %v7055, %v7528
  %v7697 = vsel %vm7671, %v7056, %v7530
  %v7698 = vsel %vm7671, %v7057, %v7532
  %v7699 = vsel %vm7671, %v7058, %v7534
  %v7700 = vsel %vm7671, %v7059, %v7536
  %v7701 = vsel %vm7671, %v7060, %v7538
  %v7702 = vsel %vm7671, %v7061, %v7540
  %v7703 = vsel %vm7671, %v7062, %v7542
  %v7704 = vsel %vm7671, %v7063, %v7544
  %v7705 = vsel %vm7671, %v7064, %v7546
  %v7706 = vsel %vm7671, %v7065, %v7548
  %v7707 = vsel %vm7671, %v7066, %v7550
  %v7708 = vsel %vm7671, %v7067, %v7552
  %v7709 = vsel %vm7671, %v7068, %v7554
  %v7710 = vsel %vm7671, %v7069, %v7556
  %v7711 = vsel %vm7671, %v7070, %v7558
  %v7712 = vsel %vm7671, %v7071, %v7560
  %v7713 = vsel %vm7671, %v7072, %v7562
  %v7714 = vsel %vm7671, %v7073, %v7564
  %v7715 = vsel %vm7671, %v7074, %v7566
  %v7716 = vsel %vm7671, %v7075, %v7568
  %v7717 = vsel %vm7671, %v7076, %v7570
  %v7718 = vsel %vm7671, %v7077, %v7572
  %v7719 = vsel %vm7671, %v7078, %v7574
  %v7720 = vsel %vm7671, %v7079, %v7576
  %v7721 = vsel %vm7671, %v7080, %v7578
  %v7722 = vsel %vm7671, %v7081, %v7580
  %v7723 = vsel %vm7671, %v7082, %v7582
  %v7724 = vsel %vm7671, %v7083, %v7584
  %v7725 = vsel %vm7671, %v7084, %v7586
  %v7726 = vsel %vm7671, %v7085, %v7588
  %v7727 = vsel %vm7671, %v7086, %v7590
  %v7728 = vsel %vm7671, %v7087, %v7592
  %v7729 = vsel %vm7671, %v7088, %v7594
  %v7730 = vsel %vm7671, %v7089, %v7596
  %v7731 = vsel %vm7671, %v7090, %v7598
  %v7732 = vsel %vm7671, %v7091, %v7600
  %v7733 = vsel %vm7671, %v7092, %v7602
  %v7734 = vsel %vm7671, %v7093, %v7604
  %v7735 = vsel %vm7671, %v7094, %v7606
  %v7736 = vld [vmem:[%s1] sm:$0xff]
  %v7737 = vld [vmem:[%s1 + $0x8] sm:$0xff]
  %v7738 = vld [vmem:[%s1 + $0x10] sm:$0xff]
  %v7739 = vld [vmem:[%s1 + $0x18] sm:$0xff]
  %v7740 = vld [vmem:[%s1 + $0x20] sm:$0xff]
  %v7741 = vld [vmem:[%s1 + $0x28] sm:$0xff]
  %vm7742 = vcmask 392192
  %v7744 = vsel %vm7742, %v7672, 0
  %v7747 = vsel %vm7742, %v7673, 0
  %v7750 = vsel %vm7742, %v7674, 0
  %v7753 = vsel %vm7742, %v7675, 0
  %v7756 = vsel %vm7742, %v7676, 0
  %v7759 = vsel %vm7742, %v7677, 0
  %v7762 = vsel %vm7742, %v7678, 0
  %v7765 = vsel %vm7742, %v7679, 0
  %v7768 = vsel %vm7742, %v7680, 0
  %v7771 = vsel %vm7742, %v7681, 0
  %v7774 = vsel %vm7742, %v7682, 0
  %v7777 = vsel %vm7742, %v7683, 0
  %v7780 = vsel %vm7742, %v7684, 0
  %v7783 = vsel %vm7742, %v7685, 0
  %v7786 = vsel %vm7742, %v7686, 0
  %v7789 = vsel %vm7742, %v7687, 0
  %v7792 = vsel %vm7742, %v7688, 0
  %v7795 = vsel %vm7742, %v7689, 0
  %v7798 = vsel %vm7742, %v7690, 0
  %v7801 = vsel %vm7742, %v7691, 0
  %v7804 = vsel %vm7742, %v7692, 0
  %v7807 = vsel %vm7742, %v7693, 0
  %v7810 = vsel %vm7742, %v7694, 0
  %v7813 = vsel %vm7742, %v7695, 0
  %v7816 = vsel %vm7742, %v7696, 0
  %v7819 = vsel %vm7742, %v7697, 0
  %v7822 = vsel %vm7742, %v7698, 0
  %v7825 = vsel %vm7742, %v7699, 0
  %v7828 = vsel %vm7742, %v7700, 0
  %v7831 = vsel %vm7742, %v7701, 0
  %v7834 = vsel %vm7742, %v7702, 0
  %v7837 = vsel %vm7742, %v7703, 0
  %v7840 = vsel %vm7742, %v7704, 0
  %v7843 = vsel %vm7742, %v7705, 0
  %v7846 = vsel %vm7742, %v7706, 0
  %v7849 = vsel %vm7742, %v7707, 0
  %v7852 = vsel %vm7742, %v7708, 0
  %v7855 = vsel %vm7742, %v7709, 0
  %v7858 = vsel %vm7742, %v7710, 0
  %v7861 = vsel %vm7742, %v7711, 0
  %v7864 = vsel %vm7742, %v7712, 0
  %v7867 = vsel %vm7742, %v7713, 0
  %v7870 = vsel %vm7742, %v7714, 0
  %v7873 = vsel %vm7742, %v7715, 0
  %v7876 = vsel %vm7742, %v7716, 0
  %v7879 = vsel %vm7742, %v7717, 0
  %v7882 = vsel %vm7742, %v7718, 0
  %v7885 = vsel %vm7742, %v7719, 0
  %v7888 = vsel %vm7742, %v7720, 0
  %v7891 = vsel %vm7742, %v7721, 0
  %v7894 = vsel %vm7742, %v7722, 0
  %v7897 = vsel %vm7742, %v7723, 0
  %v7900 = vsel %vm7742, %v7724, 0
  %v7903 = vsel %vm7742, %v7725, 0
  %v7906 = vsel %vm7742, %v7726, 0
  %v7909 = vsel %vm7742, %v7727, 0
  %v7912 = vsel %vm7742, %v7728, 0
  %v7915 = vsel %vm7742, %v7729, 0
  %v7918 = vsel %vm7742, %v7730, 0
  %v7921 = vsel %vm7742, %v7731, 0
  %v7924 = vsel %vm7742, %v7732, 0
  %v7927 = vsel %vm7742, %v7733, 0
  %v7930 = vsel %vm7742, %v7734, 0
  %v7933 = vsel %vm7742, %v7735, 0
  %7935 = vmatpush.msra.mxu0 0.0
  %7936 = vmatpush.msra.mxu0 0.0
  %7937 = vmatpush.msra.mxu0 0.0
  %7938 = vmatpush.msra.mxu0 0.0
  %7939 = vmatpush.msra.mxu0 0.0
  %7940 = vmatpush.msra.mxu0 0.0
  %7941 = vmatpush.msra.mxu0 0.0
  %7942 = vmatpush.msra.mxu0 0.0
  %7943 = vmatpush.msra.mxu0 0.0
  %7944 = vmatpush.msra.mxu0 0.0
  %7945 = vmatpush.msra.mxu0 %v7741
  %7946 = vmatpush.msra.mxu0 %v7740
  %7947 = vmatpush.msra.mxu0 %v7739
  %7948 = vmatpush.msra.mxu0 %v7738
  %7949 = vmatpush.msra.mxu0 %v7737
  %7950 = vmatpush.msra.mxu0 %v7736
  %7951 = vmatmul.f32.gmra.mxu0 %v7744
  %v7952 = vpop.f32.mrf.mxu0
  %v7953 = vadd.f32 0.0, %v7952
  %7954 = vmatmul.f32.gmra.mxu0 %v7747
  %v7955 = vpop.f32.mrf.mxu0
  %v7956 = vadd.f32 0.0, %v7955
  %7957 = vmatmul.f32.gmra.mxu0 %v7750
  %v7958 = vpop.f32.mrf.mxu0
  %v7959 = vadd.f32 0.0, %v7958
  %7960 = vmatmul.f32.gmra.mxu0 %v7753
  %v7961 = vpop.f32.mrf.mxu0
  %v7962 = vadd.f32 0.0, %v7961
  %7963 = vmatmul.f32.gmra.mxu0 %v7756
  %v7964 = vpop.f32.mrf.mxu0
  %v7965 = vadd.f32 0.0, %v7964
  %7966 = vmatmul.f32.gmra.mxu0 %v7759
  %v7967 = vpop.f32.mrf.mxu0
  %v7968 = vadd.f32 0.0, %v7967
  %7969 = vmatmul.f32.gmra.mxu0 %v7762
  %v7970 = vpop.f32.mrf.mxu0
  %v7971 = vadd.f32 0.0, %v7970
  %7972 = vmatmul.f32.gmra.mxu0 %v7765
  %v7973 = vpop.f32.mrf.mxu0
  %v7974 = vadd.f32 0.0, %v7973
  %7975 = vmatmul.f32.gmra.mxu0 %v7768
  %v7976 = vpop.f32.mrf.mxu0
  %v7977 = vadd.f32 0.0, %v7976
  %7978 = vmatmul.f32.gmra.mxu0 %v7771
  %v7979 = vpop.f32.mrf.mxu0
  %v7980 = vadd.f32 0.0, %v7979
  %7981 = vmatmul.f32.gmra.mxu0 %v7774
  %v7982 = vpop.f32.mrf.mxu0
  %v7983 = vadd.f32 0.0, %v7982
  %7984 = vmatmul.f32.gmra.mxu0 %v7777
  %v7985 = vpop.f32.mrf.mxu0
  %v7986 = vadd.f32 0.0, %v7985
  %7987 = vmatmul.f32.gmra.mxu0 %v7780
  %v7988 = vpop.f32.mrf.mxu0
  %v7989 = vadd.f32 0.0, %v7988
  %7990 = vmatmul.f32.gmra.mxu0 %v7783
  %v7991 = vpop.f32.mrf.mxu0
  %v7992 = vadd.f32 0.0, %v7991
  %7993 = vmatmul.f32.gmra.mxu0 %v7786
  %v7994 = vpop.f32.mrf.mxu0
  %v7995 = vadd.f32 0.0, %v7994
  %7996 = vmatmul.f32.gmra.mxu0 %v7789
  %v7997 = vpop.f32.mrf.mxu0
  %v7998 = vadd.f32 0.0, %v7997
  %7999 = vmatmul.f32.gmra.mxu0 %v7792
  %v8000 = vpop.f32.mrf.mxu0
  %v8001 = vadd.f32 0.0, %v8000
  %8002 = vmatmul.f32.gmra.mxu0 %v7795
  %v8003 = vpop.f32.mrf.mxu0
  %v8004 = vadd.f32 0.0, %v8003
  %8005 = vmatmul.f32.gmra.mxu0 %v7798
  %v8006 = vpop.f32.mrf.mxu0
  %v8007 = vadd.f32 0.0, %v8006
  %8008 = vmatmul.f32.gmra.mxu0 %v7801
  %v8009 = vpop.f32.mrf.mxu0
  %v8010 = vadd.f32 0.0, %v8009
  %8011 = vmatmul.f32.gmra.mxu0 %v7804
  %v8012 = vpop.f32.mrf.mxu0
  %v8013 = vadd.f32 0.0, %v8012
  %8014 = vmatmul.f32.gmra.mxu0 %v7807
  %v8015 = vpop.f32.mrf.mxu0
  %v8016 = vadd.f32 0.0, %v8015
  %8017 = vmatmul.f32.gmra.mxu0 %v7810
  %v8018 = vpop.f32.mrf.mxu0
  %v8019 = vadd.f32 0.0, %v8018
  %8020 = vmatmul.f32.gmra.mxu0 %v7813
  %v8021 = vpop.f32.mrf.mxu0
  %v8022 = vadd.f32 0.0, %v8021
  %8023 = vmatmul.f32.gmra.mxu0 %v7816
  %v8024 = vpop.f32.mrf.mxu0
  %v8025 = vadd.f32 0.0, %v8024
  %8026 = vmatmul.f32.gmra.mxu0 %v7819
  %v8027 = vpop.f32.mrf.mxu0
  %v8028 = vadd.f32 0.0, %v8027
  %8029 = vmatmul.f32.gmra.mxu0 %v7822
  %v8030 = vpop.f32.mrf.mxu0
  %v8031 = vadd.f32 0.0, %v8030
  %8032 = vmatmul.f32.gmra.mxu0 %v7825
  %v8033 = vpop.f32.mrf.mxu0
  %v8034 = vadd.f32 0.0, %v8033
  %8035 = vmatmul.f32.gmra.mxu0 %v7828
  %v8036 = vpop.f32.mrf.mxu0
  %v8037 = vadd.f32 0.0, %v8036
  %8038 = vmatmul.f32.gmra.mxu0 %v7831
  %v8039 = vpop.f32.mrf.mxu0
  %v8040 = vadd.f32 0.0, %v8039
  %8041 = vmatmul.f32.gmra.mxu0 %v7834
  %v8042 = vpop.f32.mrf.mxu0
  %v8043 = vadd.f32 0.0, %v8042
  %8044 = vmatmul.f32.gmra.mxu0 %v7837
  %v8045 = vpop.f32.mrf.mxu0
  %v8046 = vadd.f32 0.0, %v8045
  %8047 = vmatmul.f32.gmra.mxu0 %v7840
  %v8048 = vpop.f32.mrf.mxu0
  %v8049 = vadd.f32 0.0, %v8048
  %8050 = vmatmul.f32.gmra.mxu0 %v7843
  %v8051 = vpop.f32.mrf.mxu0
  %v8052 = vadd.f32 0.0, %v8051
  %8053 = vmatmul.f32.gmra.mxu0 %v7846
  %v8054 = vpop.f32.mrf.mxu0
  %v8055 = vadd.f32 0.0, %v8054
  %8056 = vmatmul.f32.gmra.mxu0 %v7849
  %v8057 = vpop.f32.mrf.mxu0
  %v8058 = vadd.f32 0.0, %v8057
  %8059 = vmatmul.f32.gmra.mxu0 %v7852
  %v8060 = vpop.f32.mrf.mxu0
  %v8061 = vadd.f32 0.0, %v8060
  %8062 = vmatmul.f32.gmra.mxu0 %v7855
  %v8063 = vpop.f32.mrf.mxu0
  %v8064 = vadd.f32 0.0, %v8063
  %8065 = vmatmul.f32.gmra.mxu0 %v7858
  %v8066 = vpop.f32.mrf.mxu0
  %v8067 = vadd.f32 0.0, %v8066
  %8068 = vmatmul.f32.gmra.mxu0 %v7861
  %v8069 = vpop.f32.mrf.mxu0
  %v8070 = vadd.f32 0.0, %v8069
  %8071 = vmatmul.f32.gmra.mxu0 %v7864
  %v8072 = vpop.f32.mrf.mxu0
  %v8073 = vadd.f32 0.0, %v8072
  %8074 = vmatmul.f32.gmra.mxu0 %v7867
  %v8075 = vpop.f32.mrf.mxu0
  %v8076 = vadd.f32 0.0, %v8075
  %8077 = vmatmul.f32.gmra.mxu0 %v7870
  %v8078 = vpop.f32.mrf.mxu0
  %v8079 = vadd.f32 0.0, %v8078
  %8080 = vmatmul.f32.gmra.mxu0 %v7873
  %v8081 = vpop.f32.mrf.mxu0
  %v8082 = vadd.f32 0.0, %v8081
  %8083 = vmatmul.f32.gmra.mxu0 %v7876
  %v8084 = vpop.f32.mrf.mxu0
  %v8085 = vadd.f32 0.0, %v8084
  %8086 = vmatmul.f32.gmra.mxu0 %v7879
  %v8087 = vpop.f32.mrf.mxu0
  %v8088 = vadd.f32 0.0, %v8087
  %8089 = vmatmul.f32.gmra.mxu0 %v7882
  %v8090 = vpop.f32.mrf.mxu0
  %v8091 = vadd.f32 0.0, %v8090
  %8092 = vmatmul.f32.gmra.mxu0 %v7885
  %v8093 = vpop.f32.mrf.mxu0
  %v8094 = vadd.f32 0.0, %v8093
  %8095 = vmatmul.f32.gmra.mxu0 %v7888
  %v8096 = vpop.f32.mrf.mxu0
  %v8097 = vadd.f32 0.0, %v8096
  %8098 = vmatmul.f32.gmra.mxu0 %v7891
  %v8099 = vpop.f32.mrf.mxu0
  %v8100 = vadd.f32 0.0, %v8099
  %8101 = vmatmul.f32.gmra.mxu0 %v7894
  %v8102 = vpop.f32.mrf.mxu0
  %v8103 = vadd.f32 0.0, %v8102
  %8104 = vmatmul.f32.gmra.mxu0 %v7897
  %v8105 = vpop.f32.mrf.mxu0
  %v8106 = vadd.f32 0.0, %v8105
  %8107 = vmatmul.f32.gmra.mxu0 %v7900
  %v8108 = vpop.f32.mrf.mxu0
  %v8109 = vadd.f32 0.0, %v8108
  %8110 = vmatmul.f32.gmra.mxu0 %v7903
  %v8111 = vpop.f32.mrf.mxu0
  %v8112 = vadd.f32 0.0, %v8111
  %8113 = vmatmul.f32.gmra.mxu0 %v7906
  %v8114 = vpop.f32.mrf.mxu0
  %v8115 = vadd.f32 0.0, %v8114
  %8116 = vmatmul.f32.gmra.mxu0 %v7909
  %v8117 = vpop.f32.mrf.mxu0
  %v8118 = vadd.f32 0.0, %v8117
  %8119 = vmatmul.f32.gmra.mxu0 %v7912
  %v8120 = vpop.f32.mrf.mxu0
  %v8121 = vadd.f32 0.0, %v8120
  %8122 = vmatmul.f32.gmra.mxu0 %v7915
  %v8123 = vpop.f32.mrf.mxu0
  %v8124 = vadd.f32 0.0, %v8123
  %8125 = vmatmul.f32.gmra.mxu0 %v7918
  %v8126 = vpop.f32.mrf.mxu0
  %v8127 = vadd.f32 0.0, %v8126
  %8128 = vmatmul.f32.gmra.mxu0 %v7921
  %v8129 = vpop.f32.mrf.mxu0
  %v8130 = vadd.f32 0.0, %v8129
  %8131 = vmatmul.f32.gmra.mxu0 %v7924
  %v8132 = vpop.f32.mrf.mxu0
  %v8133 = vadd.f32 0.0, %v8132
  %8134 = vmatmul.f32.gmra.mxu0 %v7927
  %v8135 = vpop.f32.mrf.mxu0
  %v8136 = vadd.f32 0.0, %v8135
  %8137 = vmatmul.f32.gmra.mxu0 %v7930
  %v8138 = vpop.f32.mrf.mxu0
  %v8139 = vadd.f32 0.0, %v8138
  %8140 = vmatmul.f32.gmra.mxu0 %v7933
  %v8141 = vpop.f32.mrf.mxu0
  %v8142 = vadd.f32 0.0, %v8141
  %8143 = vdwg.mxu0
  %vm8144 = vcmp.ge.f32.partialorder %v7953, 0.0
  %vm8145 = vcmp.ge.f32.partialorder %v7956, 0.0
  %vm8146 = vcmp.ge.f32.partialorder %v7959, 0.0
  %vm8147 = vcmp.ge.f32.partialorder %v7962, 0.0
  %vm8148 = vcmp.ge.f32.partialorder %v7965, 0.0
  %vm8149 = vcmp.ge.f32.partialorder %v7968, 0.0
  %vm8150 = vcmp.ge.f32.partialorder %v7971, 0.0
  %vm8151 = vcmp.ge.f32.partialorder %v7974, 0.0
  %vm8152 = vcmp.ge.f32.partialorder %v7977, 0.0
  %vm8153 = vcmp.ge.f32.partialorder %v7980, 0.0
  %vm8154 = vcmp.ge.f32.partialorder %v7983, 0.0
  %vm8155 = vcmp.ge.f32.partialorder %v7986, 0.0
  %vm8156 = vcmp.ge.f32.partialorder %v7989, 0.0
  %vm8157 = vcmp.ge.f32.partialorder %v7992, 0.0
  %vm8158 = vcmp.ge.f32.partialorder %v7995, 0.0
  %vm8159 = vcmp.ge.f32.partialorder %v7998, 0.0
  %vm8160 = vcmp.ge.f32.partialorder %v8001, 0.0
  %vm8161 = vcmp.ge.f32.partialorder %v8004, 0.0
  %vm8162 = vcmp.ge.f32.partialorder %v8007, 0.0
  %vm8163 = vcmp.ge.f32.partialorder %v8010, 0.0
  %vm8164 = vcmp.ge.f32.partialorder %v8013, 0.0
  %vm8165 = vcmp.ge.f32.partialorder %v8016, 0.0
  %vm8166 = vcmp.ge.f32.partialorder %v8019, 0.0
  %vm8167 = vcmp.ge.f32.partialorder %v8022, 0.0
  %vm8168 = vcmp.ge.f32.partialorder %v8025, 0.0
  %vm8169 = vcmp.ge.f32.partialorder %v8028, 0.0
  %vm8170 = vcmp.ge.f32.partialorder %v8031, 0.0
  %vm8171 = vcmp.ge.f32.partialorder %v8034, 0.0
  %vm8172 = vcmp.ge.f32.partialorder %v8037, 0.0
  %vm8173 = vcmp.ge.f32.partialorder %v8040, 0.0
  %vm8174 = vcmp.ge.f32.partialorder %v8043, 0.0
  %vm8175 = vcmp.ge.f32.partialorder %v8046, 0.0
  %vm8176 = vcmp.ge.f32.partialorder %v8049, 0.0
  %vm8177 = vcmp.ge.f32.partialorder %v8052, 0.0
  %vm8178 = vcmp.ge.f32.partialorder %v8055, 0.0
  %vm8179 = vcmp.ge.f32.partialorder %v8058, 0.0
  %vm8180 = vcmp.ge.f32.partialorder %v8061, 0.0
  %vm8181 = vcmp.ge.f32.partialorder %v8064, 0.0
  %vm8182 = vcmp.ge.f32.partialorder %v8067, 0.0
  %vm8183 = vcmp.ge.f32.partialorder %v8070, 0.0
  %vm8184 = vcmp.ge.f32.partialorder %v8073, 0.0
  %vm8185 = vcmp.ge.f32.partialorder %v8076, 0.0
  %vm8186 = vcmp.ge.f32.partialorder %v8079, 0.0
  %vm8187 = vcmp.ge.f32.partialorder %v8082, 0.0
  %vm8188 = vcmp.ge.f32.partialorder %v8085, 0.0
  %vm8189 = vcmp.ge.f32.partialorder %v8088, 0.0
  %vm8190 = vcmp.ge.f32.partialorder %v8091, 0.0
  %vm8191 = vcmp.ge.f32.partialorder %v8094, 0.0
  %vm8192 = vcmp.ge.f32.partialorder %v8097, 0.0
  %vm8193 = vcmp.ge.f32.partialorder %v8100, 0.0
  %vm8194 = vcmp.ge.f32.partialorder %v8103, 0.0
  %vm8195 = vcmp.ge.f32.partialorder %v8106, 0.0
  %vm8196 = vcmp.ge.f32.partialorder %v8109, 0.0
  %vm8197 = vcmp.ge.f32.partialorder %v8112, 0.0
  %vm8198 = vcmp.ge.f32.partialorder %v8115, 0.0
  %vm8199 = vcmp.ge.f32.partialorder %v8118, 0.0
  %vm8200 = vcmp.ge.f32.partialorder %v8121, 0.0
  %vm8201 = vcmp.ge.f32.partialorder %v8124, 0.0
  %vm8202 = vcmp.ge.f32.partialorder %v8127, 0.0
  %vm8203 = vcmp.ge.f32.partialorder %v8130, 0.0
  %vm8204 = vcmp.ge.f32.partialorder %v8133, 0.0
  %vm8205 = vcmp.ge.f32.partialorder %v8136, 0.0
  %vm8206 = vcmp.ge.f32.partialorder %v8139, 0.0
  %vm8207 = vcmp.ge.f32.partialorder %v8142, 0.0
  %v8208 = vmul.f32 %v7953, 0.2
  %v8209 = vmul.f32 %v7956, 0.2
  %v8210 = vmul.f32 %v7959, 0.2
  %v8211 = vmul.f32 %v7962, 0.2
  %v8212 = vmul.f32 %v7965, 0.2
  %v8213 = vmul.f32 %v7968, 0.2
  %v8214 = vmul.f32 %v7971, 0.2
  %v8215 = vmul.f32 %v7974, 0.2
  %v8216 = vmul.f32 %v7977, 0.2
  %v8217 = vmul.f32 %v7980, 0.2
  %v8218 = vmul.f32 %v7983, 0.2
  %v8219 = vmul.f32 %v7986, 0.2
  %v8220 = vmul.f32 %v7989, 0.2
  %v8221 = vmul.f32 %v7992, 0.2
  %v8222 = vmul.f32 %v7995, 0.2
  %v8223 = vmul.f32 %v7998, 0.2
  %v8224 = vmul.f32 %v8001, 0.2
  %v8225 = vmul.f32 %v8004, 0.2
  %v8226 = vmul.f32 %v8007, 0.2
  %v8227 = vmul.f32 %v8010, 0.2
  %v8228 = vmul.f32 %v8013, 0.2
  %v8229 = vmul.f32 %v8016, 0.2
  %v8230 = vmul.f32 %v8019, 0.2
  %v8231 = vmul.f32 %v8022, 0.2
  %v8232 = vmul.f32 %v8025, 0.2
  %v8233 = vmul.f32 %v8028, 0.2
  %v8234 = vmul.f32 %v8031, 0.2
  %v8235 = vmul.f32 %v8034, 0.2
  %v8236 = vmul.f32 %v8037, 0.2
  %v8237 = vmul.f32 %v8040, 0.2
  %v8238 = vmul.f32 %v8043, 0.2
  %v8239 = vmul.f32 %v8046, 0.2
  %v8240 = vmul.f32 %v8049, 0.2
  %v8241 = vmul.f32 %v8052, 0.2
  %v8242 = vmul.f32 %v8055, 0.2
  %v8243 = vmul.f32 %v8058, 0.2
  %v8244 = vmul.f32 %v8061, 0.2
  %v8245 = vmul.f32 %v8064, 0.2
  %v8246 = vmul.f32 %v8067, 0.2
  %v8247 = vmul.f32 %v8070, 0.2
  %v8248 = vmul.f32 %v8073, 0.2
  %v8249 = vmul.f32 %v8076, 0.2
  %v8250 = vmul.f32 %v8079, 0.2
  %v8251 = vmul.f32 %v8082, 0.2
  %v8252 = vmul.f32 %v8085, 0.2
  %v8253 = vmul.f32 %v8088, 0.2
  %v8254 = vmul.f32 %v8091, 0.2
  %v8255 = vmul.f32 %v8094, 0.2
  %v8256 = vmul.f32 %v8097, 0.2
  %v8257 = vmul.f32 %v8100, 0.2
  %v8258 = vmul.f32 %v8103, 0.2
  %v8259 = vmul.f32 %v8106, 0.2
  %v8260 = vmul.f32 %v8109, 0.2
  %v8261 = vmul.f32 %v8112, 0.2
  %v8262 = vmul.f32 %v8115, 0.2
  %v8263 = vmul.f32 %v8118, 0.2
  %v8264 = vmul.f32 %v8121, 0.2
  %v8265 = vmul.f32 %v8124, 0.2
  %v8266 = vmul.f32 %v8127, 0.2
  %v8267 = vmul.f32 %v8130, 0.2
  %v8268 = vmul.f32 %v8133, 0.2
  %v8269 = vmul.f32 %v8136, 0.2
  %v8270 = vmul.f32 %v8139, 0.2
  %v8271 = vmul.f32 %v8142, 0.2
  %v8272 = vsel %vm8144, %v7953, %v8208
  %v8273 = vsel %vm8145, %v7956, %v8209
  %v8274 = vsel %vm8146, %v7959, %v8210
  %v8275 = vsel %vm8147, %v7962, %v8211
  %v8276 = vsel %vm8148, %v7965, %v8212
  %v8277 = vsel %vm8149, %v7968, %v8213
  %v8278 = vsel %vm8150, %v7971, %v8214
  %v8279 = vsel %vm8151, %v7974, %v8215
  %v8280 = vsel %vm8152, %v7977, %v8216
  %v8281 = vsel %vm8153, %v7980, %v8217
  %v8282 = vsel %vm8154, %v7983, %v8218
  %v8283 = vsel %vm8155, %v7986, %v8219
  %v8284 = vsel %vm8156, %v7989, %v8220
  %v8285 = vsel %vm8157, %v7992, %v8221
  %v8286 = vsel %vm8158, %v7995, %v8222
  %v8287 = vsel %vm8159, %v7998, %v8223
  %v8288 = vsel %vm8160, %v8001, %v8224
  %v8289 = vsel %vm8161, %v8004, %v8225
  %v8290 = vsel %vm8162, %v8007, %v8226
  %v8291 = vsel %vm8163, %v8010, %v8227
  %v8292 = vsel %vm8164, %v8013, %v8228
  %v8293 = vsel %vm8165, %v8016, %v8229
  %v8294 = vsel %vm8166, %v8019, %v8230
  %v8295 = vsel %vm8167, %v8022, %v8231
  %v8296 = vsel %vm8168, %v8025, %v8232
  %v8297 = vsel %vm8169, %v8028, %v8233
  %v8298 = vsel %vm8170, %v8031, %v8234
  %v8299 = vsel %vm8171, %v8034, %v8235
  %v8300 = vsel %vm8172, %v8037, %v8236
  %v8301 = vsel %vm8173, %v8040, %v8237
  %v8302 = vsel %vm8174, %v8043, %v8238
  %v8303 = vsel %vm8175, %v8046, %v8239
  %v8304 = vsel %vm8176, %v8049, %v8240
  %v8305 = vsel %vm8177, %v8052, %v8241
  %v8306 = vsel %vm8178, %v8055, %v8242
  %v8307 = vsel %vm8179, %v8058, %v8243
  %v8308 = vsel %vm8180, %v8061, %v8244
  %v8309 = vsel %vm8181, %v8064, %v8245
  %v8310 = vsel %vm8182, %v8067, %v8246
  %v8311 = vsel %vm8183, %v8070, %v8247
  %v8312 = vsel %vm8184, %v8073, %v8248
  %v8313 = vsel %vm8185, %v8076, %v8249
  %v8314 = vsel %vm8186, %v8079, %v8250
  %v8315 = vsel %vm8187, %v8082, %v8251
  %v8316 = vsel %vm8188, %v8085, %v8252
  %v8317 = vsel %vm8189, %v8088, %v8253
  %v8318 = vsel %vm8190, %v8091, %v8254
  %v8319 = vsel %vm8191, %v8094, %v8255
  %v8320 = vsel %vm8192, %v8097, %v8256
  %v8321 = vsel %vm8193, %v8100, %v8257
  %v8322 = vsel %vm8194, %v8103, %v8258
  %v8323 = vsel %vm8195, %v8106, %v8259
  %v8324 = vsel %vm8196, %v8109, %v8260
  %v8325 = vsel %vm8197, %v8112, %v8261
  %v8326 = vsel %vm8198, %v8115, %v8262
  %v8327 = vsel %vm8199, %v8118, %v8263
  %v8328 = vsel %vm8200, %v8121, %v8264
  %v8329 = vsel %vm8201, %v8124, %v8265
  %v8330 = vsel %vm8202, %v8127, %v8266
  %v8331 = vsel %vm8203, %v8130, %v8267
  %v8332 = vsel %vm8204, %v8133, %v8268
  %v8333 = vsel %vm8205, %v8136, %v8269
  %v8334 = vsel %vm8206, %v8139, %v8270
  %v8335 = vsel %vm8207, %v8142, %v8271
  %vm8336 = vcmask 64512
  %8337 = vst.msk [vmem:[#allocation3] sm:$0xff] %vm8336, 0.0
  %8338 = vst.msk [vmem:[#allocation3 + $0x8] sm:$0xff] %vm8336, 0.0
  %vm8339 = vcmask 58368
  %8340 = vst.msk [vmem:[#allocation3 + $0x10] sm:$0x3] %vm8339, 0.0
  %8341 = vst.msk [vmem:[#allocation3 + $0x18] sm:$0xff] %vm8336, 0.0
  %8342 = vst.msk [vmem:[#allocation3 + $0x20] sm:$0xff] %vm8336, 0.0
  %8343 = vst.msk [vmem:[#allocation3 + $0x28] sm:$0x3] %vm8339, 0.0
  %8344 = vst.msk [vmem:[#allocation3 + $0x30] sm:$0xff] %vm8336, 0.0
  %8345 = vst.msk [vmem:[#allocation3 + $0x38] sm:$0xff] %vm8336, 0.0
  %8346 = vst.msk [vmem:[#allocation3 + $0x40] sm:$0x3] %vm8339, 0.0
  %8347 = vst.msk [vmem:[#allocation3 + $0x48] sm:$0xff] %vm8336, 0.0
  %8348 = vst.msk [vmem:[#allocation3 + $0x50] sm:$0xff] %vm8336, 0.0
  %8349 = vst.msk [vmem:[#allocation3 + $0x58] sm:$0x3] %vm8339, 0.0
  %8350 = vst.msk [vmem:[#allocation3 + $0x60] sm:$0xff] %vm8336, 0.0
  %8351 = vst.msk [vmem:[#allocation3 + $0x68] sm:$0xff] %vm8336, 0.0
  %8352 = vst.msk [vmem:[#allocation3 + $0x70] sm:$0x3] %vm8339, 0.0
  %8353 = vst.msk [vmem:[#allocation3 + $0x78] sm:$0xff] %vm8336, 0.0
  %8354 = vst.msk [vmem:[#allocation3 + $0x80] sm:$0xff] %vm8336, 0.0
  %8355 = vst.msk [vmem:[#allocation3 + $0x88] sm:$0x3] %vm8339, 0.0
  %8356 = vst.msk [vmem:[#allocation3 + $0x90] sm:$0xff] %vm8336, 0.0
  %8357 = vst.msk [vmem:[#allocation3 + $0x98] sm:$0xff] %vm8336, 0.0
  %8358 = vst.msk [vmem:[#allocation3 + $0xa0] sm:$0x3] %vm8339, 0.0
  %8359 = vst.msk [vmem:[#allocation3 + $0xa8] sm:$0xff] %vm8336, 0.0
  %8360 = vst.msk [vmem:[#allocation3 + $0xb0] sm:$0xff] %vm8336, 0.0
  %8361 = vst.msk [vmem:[#allocation3 + $0xb8] sm:$0x3] %vm8339, 0.0
  %8362 = vst.msk [vmem:[#allocation3 + $0xc0] sm:$0xff] %vm8336, 0.0
  %8363 = vst.msk [vmem:[#allocation3 + $0xc8] sm:$0xff] %vm8336, 0.0
  %8364 = vst.msk [vmem:[#allocation3 + $0xd0] sm:$0x3] %vm8339, 0.0
  %8365 = vst.msk [vmem:[#allocation3 + $0xd8] sm:$0xff] %vm8336, 0.0
  %8366 = vst.msk [vmem:[#allocation3 + $0xe0] sm:$0xff] %vm8336, 0.0
  %8367 = vst.msk [vmem:[#allocation3 + $0xe8] sm:$0x3] %vm8339, 0.0
  %8368 = vst.msk [vmem:[#allocation3 + $0xf0] sm:$0xff] %vm8336, 0.0
  %8369 = vst.msk [vmem:[#allocation3 + $0xf8] sm:$0xff] %vm8336, 0.0
  %8370 = vst.msk [vmem:[#allocation3 + $0x100] sm:$0x3] %vm8339, 0.0
  %8371 = vst.msk [vmem:[#allocation3 + $0x108] sm:$0xff] %vm8336, 0.0
  %8372 = vst.msk [vmem:[#allocation3 + $0x110] sm:$0xff] %vm8336, 0.0
  %8373 = vst.msk [vmem:[#allocation3 + $0x118] sm:$0x3] %vm8339, 0.0
  %8374 = vst.msk [vmem:[#allocation3 + $0x120] sm:$0xff] %vm8336, 0.0
  %8375 = vst.msk [vmem:[#allocation3 + $0x128] sm:$0xff] %vm8336, 0.0
  %8376 = vst.msk [vmem:[#allocation3 + $0x130] sm:$0x3] %vm8339, 0.0
  %8377 = vst.msk [vmem:[#allocation3 + $0x138] sm:$0xff] %vm8336, 0.0
  %8378 = vst.msk [vmem:[#allocation3 + $0x140] sm:$0xff] %vm8336, 0.0
  %8379 = vst.msk [vmem:[#allocation3 + $0x148] sm:$0x3] %vm8339, 0.0
  %8380 = vst.msk [vmem:[#allocation3 + $0x150] sm:$0xff] %vm8336, 0.0
  %8381 = vst.msk [vmem:[#allocation3 + $0x158] sm:$0xff] %vm8336, 0.0
  %8382 = vst.msk [vmem:[#allocation3 + $0x160] sm:$0x3] %vm8339, 0.0
  %8383 = vst.msk [vmem:[#allocation3 + $0x168] sm:$0xff] %vm8336, 0.0
  %8384 = vst.msk [vmem:[#allocation3 + $0x170] sm:$0xff] %vm8336, 0.0
  %8385 = vst.msk [vmem:[#allocation3 + $0x178] sm:$0x3] %vm8339, 0.0
  %8386 = vst.msk [vmem:[#allocation3 + $0x180] sm:$0xff] %vm8336, 0.0
  %8387 = vst.msk [vmem:[#allocation3 + $0x188] sm:$0xff] %vm8336, 0.0
  %8388 = vst.msk [vmem:[#allocation3 + $0x190] sm:$0x3] %vm8339, 0.0
  %8389 = vst.msk [vmem:[#allocation3 + $0x198] sm:$0xff] %vm8336, 0.0
  %8390 = vst.msk [vmem:[#allocation3 + $0x1a0] sm:$0xff] %vm8336, 0.0
  %8391 = vst.msk [vmem:[#allocation3 + $0x1a8] sm:$0x3] %vm8339, 0.0
  %8392 = vst.msk [vmem:[#allocation3 + $0x1b0] sm:$0xff] %vm8336, 0.0
  %8393 = vst.msk [vmem:[#allocation3 + $0x1b8] sm:$0xff] %vm8336, 0.0
  %8394 = vst.msk [vmem:[#allocation3 + $0x1c0] sm:$0x3] %vm8339, 0.0
  %8395 = vst.msk [vmem:[#allocation3 + $0x1c8] sm:$0xff] %vm8336, 0.0
  %8396 = vst.msk [vmem:[#allocation3 + $0x1d0] sm:$0xff] %vm8336, 0.0
  %8397 = vst.msk [vmem:[#allocation3 + $0x1d8] sm:$0x3] %vm8339, 0.0
  %8398 = vst.msk [vmem:[#allocation3 + $0x1e0] sm:$0xff] %vm8336, 0.0
  %8399 = vst.msk [vmem:[#allocation3 + $0x1e8] sm:$0xff] %vm8336, 0.0
  %8400 = vst.msk [vmem:[#allocation3 + $0x1f0] sm:$0x3] %vm8339, 0.0
  %8401 = vst.msk [vmem:[#allocation3 + $0x1f8] sm:$0xff] %vm8336, 0.0
  %8402 = vst.msk [vmem:[#allocation3 + $0x200] sm:$0xff] %vm8336, 0.0
  %8403 = vst.msk [vmem:[#allocation3 + $0x208] sm:$0x3] %vm8339, 0.0
  %8404 = vst.msk [vmem:[#allocation3 + $0x210] sm:$0xff] %vm8336, 0.0
  %8405 = vst.msk [vmem:[#allocation3 + $0x218] sm:$0xff] %vm8336, 0.0
  %8406 = vst.msk [vmem:[#allocation3 + $0x220] sm:$0x3] %vm8339, 0.0
  %8407 = vst.msk [vmem:[#allocation3 + $0x228] sm:$0xff] %vm8336, 0.0
  %8408 = vst.msk [vmem:[#allocation3 + $0x230] sm:$0xff] %vm8336, 0.0
  %8409 = vst.msk [vmem:[#allocation3 + $0x238] sm:$0x3] %vm8339, 0.0
  %8410 = vst.msk [vmem:[#allocation3 + $0x240] sm:$0xff] %vm8336, 0.0
  %8411 = vst.msk [vmem:[#allocation3 + $0x248] sm:$0xff] %vm8336, 0.0
  %8412 = vst.msk [vmem:[#allocation3 + $0x250] sm:$0x3] %vm8339, 0.0
  %8413 = vst.msk [vmem:[#allocation3 + $0x258] sm:$0xff] %vm8336, 0.0
  %8414 = vst.msk [vmem:[#allocation3 + $0x260] sm:$0xff] %vm8336, 0.0
  %8415 = vst.msk [vmem:[#allocation3 + $0x268] sm:$0x3] %vm8339, 0.0
  %8416 = vst.msk [vmem:[#allocation3 + $0x270] sm:$0xff] %vm8336, 0.0
  %8417 = vst.msk [vmem:[#allocation3 + $0x278] sm:$0xff] %vm8336, 0.0
  %8418 = vst.msk [vmem:[#allocation3 + $0x280] sm:$0x3] %vm8339, 0.0
  %8419 = vst.msk [vmem:[#allocation3 + $0x288] sm:$0xff] %vm8336, 0.0
  %8420 = vst.msk [vmem:[#allocation3 + $0x290] sm:$0xff] %vm8336, 0.0
  %8421 = vst.msk [vmem:[#allocation3 + $0x298] sm:$0x3] %vm8339, 0.0
  %8422 = vst.msk [vmem:[#allocation3 + $0x2a0] sm:$0xff] %vm8336, 0.0
  %8423 = vst.msk [vmem:[#allocation3 + $0x2a8] sm:$0xff] %vm8336, 0.0
  %8424 = vst.msk [vmem:[#allocation3 + $0x2b0] sm:$0x3] %vm8339, 0.0
  %8425 = vst.msk [vmem:[#allocation3 + $0x2b8] sm:$0xff] %vm8336, 0.0
  %8426 = vst.msk [vmem:[#allocation3 + $0x2c0] sm:$0xff] %vm8336, 0.0
  %8427 = vst.msk [vmem:[#allocation3 + $0x2c8] sm:$0x3] %vm8339, 0.0
  %8428 = vst.msk [vmem:[#allocation3 + $0x2d0] sm:$0xff] %vm8336, 0.0
  %8429 = vst.msk [vmem:[#allocation3 + $0x2d8] sm:$0xff] %vm8336, 0.0
  %8430 = vst.msk [vmem:[#allocation3 + $0x2e0] sm:$0x3] %vm8339, 0.0
  %8431 = vst.msk [vmem:[#allocation3 + $0x2e8] sm:$0xff] %vm8336, 0.0
  %8432 = vst.msk [vmem:[#allocation3 + $0x2f0] sm:$0xff] %vm8336, 0.0
  %8433 = vst.msk [vmem:[#allocation3 + $0x2f8] sm:$0x3] %vm8339, 0.0
  %8434 = vst.msk [vmem:[#allocation3 + $0x300] sm:$0xff] %vm8336, 0.0
  %8435 = vst.msk [vmem:[#allocation3 + $0x308] sm:$0xff] %vm8336, 0.0
  %8436 = vst.msk [vmem:[#allocation3 + $0x310] sm:$0x3] %vm8339, 0.0
  %8437 = vst.msk [vmem:[#allocation3 + $0x318] sm:$0xff] %vm8336, 0.0
  %8438 = vst.msk [vmem:[#allocation3 + $0x320] sm:$0xff] %vm8336, 0.0
  %8439 = vst.msk [vmem:[#allocation3 + $0x328] sm:$0x3] %vm8339, 0.0
  %8440 = vst.msk [vmem:[#allocation3 + $0x330] sm:$0xff] %vm8336, 0.0
  %8441 = vst.msk [vmem:[#allocation3 + $0x338] sm:$0xff] %vm8336, 0.0
  %8442 = vst.msk [vmem:[#allocation3 + $0x340] sm:$0x3] %vm8339, 0.0
  %8443 = vst.msk [vmem:[#allocation3 + $0x348] sm:$0xff] %vm8336, 0.0
  %8444 = vst.msk [vmem:[#allocation3 + $0x350] sm:$0xff] %vm8336, 0.0
  %8445 = vst.msk [vmem:[#allocation3 + $0x358] sm:$0x3] %vm8339, 0.0
  %s8446 = scalar_lea.vmem [#allocation3], 24
  %8447 = vst.msk [vmem:[%s8446 + $0x1] sm:$0xff] %vm8336, %v8272
  %8448 = vst.msk [vmem:[%s8446 + $0x9] sm:$0xff] %vm8336, %v8273
  %8449 = vst.msk [vmem:[%s8446 + $0x19] sm:$0xff] %vm8336, %v8274
  %8450 = vst.msk [vmem:[%s8446 + $0x21] sm:$0xff] %vm8336, %v8275
  %8451 = vst.msk [vmem:[%s8446 + $0x31] sm:$0xff] %vm8336, %v8276
  %8452 = vst.msk [vmem:[%s8446 + $0x39] sm:$0xff] %vm8336, %v8277
  %8453 = vst.msk [vmem:[%s8446 + $0x49] sm:$0xff] %vm8336, %v8278
  %8454 = vst.msk [vmem:[%s8446 + $0x51] sm:$0xff] %vm8336, %v8279
  %8455 = vst.msk [vmem:[%s8446 + $0x61] sm:$0xff] %vm8336, %v8280
  %8456 = vst.msk [vmem:[%s8446 + $0x69] sm:$0xff] %vm8336, %v8281
  %8457 = vst.msk [vmem:[%s8446 + $0x79] sm:$0xff] %vm8336, %v8282
  %8458 = vst.msk [vmem:[%s8446 + $0x81] sm:$0xff] %vm8336, %v8283
  %8459 = vst.msk [vmem:[%s8446 + $0x91] sm:$0xff] %vm8336, %v8284
  %8460 = vst.msk [vmem:[%s8446 + $0x99] sm:$0xff] %vm8336, %v8285
  %8461 = vst.msk [vmem:[%s8446 + $0xa9] sm:$0xff] %vm8336, %v8286
  %8462 = vst.msk [vmem:[%s8446 + $0xb1] sm:$0xff] %vm8336, %v8287
  %8463 = vst.msk [vmem:[%s8446 + $0xc1] sm:$0xff] %vm8336, %v8288
  %8464 = vst.msk [vmem:[%s8446 + $0xc9] sm:$0xff] %vm8336, %v8289
  %8465 = vst.msk [vmem:[%s8446 + $0xd9] sm:$0xff] %vm8336, %v8290
  %8466 = vst.msk [vmem:[%s8446 + $0xe1] sm:$0xff] %vm8336, %v8291
  %8467 = vst.msk [vmem:[%s8446 + $0xf1] sm:$0xff] %vm8336, %v8292
  %8468 = vst.msk [vmem:[%s8446 + $0xf9] sm:$0xff] %vm8336, %v8293
  %8469 = vst.msk [vmem:[%s8446 + $0x109] sm:$0xff] %vm8336, %v8294
  %8470 = vst.msk [vmem:[%s8446 + $0x111] sm:$0xff] %vm8336, %v8295
  %8471 = vst.msk [vmem:[%s8446 + $0x121] sm:$0xff] %vm8336, %v8296
  %8472 = vst.msk [vmem:[%s8446 + $0x129] sm:$0xff] %vm8336, %v8297
  %8473 = vst.msk [vmem:[%s8446 + $0x139] sm:$0xff] %vm8336, %v8298
  %8474 = vst.msk [vmem:[%s8446 + $0x141] sm:$0xff] %vm8336, %v8299
  %8475 = vst.msk [vmem:[%s8446 + $0x151] sm:$0xff] %vm8336, %v8300
  %8476 = vst.msk [vmem:[%s8446 + $0x159] sm:$0xff] %vm8336, %v8301
  %8477 = vst.msk [vmem:[%s8446 + $0x169] sm:$0xff] %vm8336, %v8302
  %8478 = vst.msk [vmem:[%s8446 + $0x171] sm:$0xff] %vm8336, %v8303
  %8479 = vst.msk [vmem:[%s8446 + $0x1b1] sm:$0xff] %vm8336, %v8304
  %8480 = vst.msk [vmem:[%s8446 + $0x1b9] sm:$0xff] %vm8336, %v8305
  %8481 = vst.msk [vmem:[%s8446 + $0x1c9] sm:$0xff] %vm8336, %v8306
  %8482 = vst.msk [vmem:[%s8446 + $0x1d1] sm:$0xff] %vm8336, %v8307
  %8483 = vst.msk [vmem:[%s8446 + $0x1e1] sm:$0xff] %vm8336, %v8308
  %8484 = vst.msk [vmem:[%s8446 + $0x1e9] sm:$0xff] %vm8336, %v8309
  %8485 = vst.msk [vmem:[%s8446 + $0x1f9] sm:$0xff] %vm8336, %v8310
  %8486 = vst.msk [vmem:[%s8446 + $0x201] sm:$0xff] %vm8336, %v8311
  %8487 = vst.msk [vmem:[%s8446 + $0x211] sm:$0xff] %vm8336, %v8312
  %8488 = vst.msk [vmem:[%s8446 + $0x219] sm:$0xff] %vm8336, %v8313
  %8489 = vst.msk [vmem:[%s8446 + $0x229] sm:$0xff] %vm8336, %v8314
  %8490 = vst.msk [vmem:[%s8446 + $0x231] sm:$0xff] %vm8336, %v8315
  %8491 = vst.msk [vmem:[%s8446 + $0x241] sm:$0xff] %vm8336, %v8316
  %8492 = vst.msk [vmem:[%s8446 + $0x249] sm:$0xff] %vm8336, %v8317
  %8493 = vst.msk [vmem:[%s8446 + $0x259] sm:$0xff] %vm8336, %v8318
  %8494 = vst.msk [vmem:[%s8446 + $0x261] sm:$0xff] %vm8336, %v8319
  %8495 = vst.msk [vmem:[%s8446 + $0x271] sm:$0xff] %vm8336, %v8320
  %8496 = vst.msk [vmem:[%s8446 + $0x279] sm:$0xff] %vm8336, %v8321
  %8497 = vst.msk [vmem:[%s8446 + $0x289] sm:$0xff] %vm8336, %v8322
  %8498 = vst.msk [vmem:[%s8446 + $0x291] sm:$0xff] %vm8336, %v8323
  %8499 = vst.msk [vmem:[%s8446 + $0x2a1] sm:$0xff] %vm8336, %v8324
  %8500 = vst.msk [vmem:[%s8446 + $0x2a9] sm:$0xff] %vm8336, %v8325
  %8501 = vst.msk [vmem:[%s8446 + $0x2b9] sm:$0xff] %vm8336, %v8326
  %8502 = vst.msk [vmem:[%s8446 + $0x2c1] sm:$0xff] %vm8336, %v8327
  %8503 = vst.msk [vmem:[%s8446 + $0x2d1] sm:$0xff] %vm8336, %v8328
  %8504 = vst.msk [vmem:[%s8446 + $0x2d9] sm:$0xff] %vm8336, %v8329
  %8505 = vst.msk [vmem:[%s8446 + $0x2e9] sm:$0xff] %vm8336, %v8330
  %8506 = vst.msk [vmem:[%s8446 + $0x2f1] sm:$0xff] %vm8336, %v8331
  %8507 = vst.msk [vmem:[%s8446 + $0x301] sm:$0xff] %vm8336, %v8332
  %8508 = vst.msk [vmem:[%s8446 + $0x309] sm:$0xff] %vm8336, %v8333
  %8509 = vst.msk [vmem:[%s8446 + $0x319] sm:$0xff] %vm8336, %v8334
  %8510 = vst.msk [vmem:[%s8446 + $0x321] sm:$0xff] %vm8336, %v8335
  %v8511 = vld [vmem:[#allocation3] ss:$2 sm:$0xff]
  %s8512 = scalar_lea.vmem [#allocation3], 48
  %v8513 = vld [vmem:[%s8512] ss:$2 sm:$0xff]
  %s8514 = scalar_lea.vmem [#allocation3], 96
  %v8515 = vld [vmem:[%s8514] ss:$2 sm:$0xff]
  %s8516 = scalar_lea.vmem [#allocation3], 144
  %v8517 = vld [vmem:[%s8516] ss:$2 sm:$0xff]
  %s8518 = scalar_lea.vmem [#allocation3], 192
  %v8519 = vld [vmem:[%s8518] ss:$2 sm:$0xff]
  %s8520 = scalar_lea.vmem [#allocation3], 240
  %v8521 = vld [vmem:[%s8520] ss:$2 sm:$0xff]
  %s8522 = scalar_lea.vmem [#allocation3], 288
  %v8523 = vld [vmem:[%s8522] ss:$2 sm:$0xff]
  %s8524 = scalar_lea.vmem [#allocation3], 336
  %v8525 = vld [vmem:[%s8524] ss:$2 sm:$0xff]
  %s8526 = scalar_lea.vmem [#allocation3], 432
  %v8527 = vld [vmem:[%s8526] ss:$2 sm:$0xff]
  %s8528 = scalar_lea.vmem [#allocation3], 480
  %v8529 = vld [vmem:[%s8528] ss:$2 sm:$0xff]
  %s8530 = scalar_lea.vmem [#allocation3], 528
  %v8531 = vld [vmem:[%s8530] ss:$2 sm:$0xff]
  %s8532 = scalar_lea.vmem [#allocation3], 576
  %v8533 = vld [vmem:[%s8532] ss:$2 sm:$0xff]
  %s8534 = scalar_lea.vmem [#allocation3], 624
  %v8535 = vld [vmem:[%s8534] ss:$2 sm:$0xff]
  %s8536 = scalar_lea.vmem [#allocation3], 672
  %v8537 = vld [vmem:[%s8536] ss:$2 sm:$0xff]
  %s8538 = scalar_lea.vmem [#allocation3], 720
  %v8539 = vld [vmem:[%s8538] ss:$2 sm:$0xff]
  %s8540 = scalar_lea.vmem [#allocation3], 768
  %v8541 = vld [vmem:[%s8540] ss:$2 sm:$0xff]
  %s8542 = scalar_lea.vmem [#allocation3], 1
  %v8543 = vld [vmem:[%s8542] ss:$2 sm:$0xff]
  %s8544 = scalar_lea.vmem [#allocation3], 49
  %v8545 = vld [vmem:[%s8544] ss:$2 sm:$0xff]
  %s8546 = scalar_lea.vmem [#allocation3], 97
  %v8547 = vld [vmem:[%s8546] ss:$2 sm:$0xff]
  %s8548 = scalar_lea.vmem [#allocation3], 145
  %v8549 = vld [vmem:[%s8548] ss:$2 sm:$0xff]
  %s8550 = scalar_lea.vmem [#allocation3], 193
  %v8551 = vld [vmem:[%s8550] ss:$2 sm:$0xff]
  %s8552 = scalar_lea.vmem [#allocation3], 241
  %v8553 = vld [vmem:[%s8552] ss:$2 sm:$0xff]
  %s8554 = scalar_lea.vmem [#allocation3], 289
  %v8555 = vld [vmem:[%s8554] ss:$2 sm:$0xff]
  %s8556 = scalar_lea.vmem [#allocation3], 337
  %v8557 = vld [vmem:[%s8556] ss:$2 sm:$0xff]
  %s8558 = scalar_lea.vmem [#allocation3], 433
  %v8559 = vld [vmem:[%s8558] ss:$2 sm:$0xff]
  %s8560 = scalar_lea.vmem [#allocation3], 481
  %v8561 = vld [vmem:[%s8560] ss:$2 sm:$0xff]
  %s8562 = scalar_lea.vmem [#allocation3], 529
  %v8563 = vld [vmem:[%s8562] ss:$2 sm:$0xff]
  %s8564 = scalar_lea.vmem [#allocation3], 577
  %v8565 = vld [vmem:[%s8564] ss:$2 sm:$0xff]
  %s8566 = scalar_lea.vmem [#allocation3], 625
  %v8567 = vld [vmem:[%s8566] ss:$2 sm:$0xff]
  %s8568 = scalar_lea.vmem [#allocation3], 673
  %v8569 = vld [vmem:[%s8568] ss:$2 sm:$0xff]
  %s8570 = scalar_lea.vmem [#allocation3], 721
  %v8571 = vld [vmem:[%s8570] ss:$2 sm:$0xff]
  %s8572 = scalar_lea.vmem [#allocation3], 769
  %v8573 = vld [vmem:[%s8572] ss:$2 sm:$0xff]
  %s8574 = scalar_lea.vmem [#allocation3], 2
  %v8575 = vld [vmem:[%s8574] ss:$2 sm:$0xff]
  %s8576 = scalar_lea.vmem [#allocation3], 50
  %v8577 = vld [vmem:[%s8576] ss:$2 sm:$0xff]
  %s8578 = scalar_lea.vmem [#allocation3], 98
  %v8579 = vld [vmem:[%s8578] ss:$2 sm:$0xff]
  %s8580 = scalar_lea.vmem [#allocation3], 146
  %v8581 = vld [vmem:[%s8580] ss:$2 sm:$0xff]
  %s8582 = scalar_lea.vmem [#allocation3], 194
  %v8583 = vld [vmem:[%s8582] ss:$2 sm:$0xff]
  %s8584 = scalar_lea.vmem [#allocation3], 242
  %v8585 = vld [vmem:[%s8584] ss:$2 sm:$0xff]
  %s8586 = scalar_lea.vmem [#allocation3], 290
  %v8587 = vld [vmem:[%s8586] ss:$2 sm:$0xff]
  %s8588 = scalar_lea.vmem [#allocation3], 338
  %v8589 = vld [vmem:[%s8588] ss:$2 sm:$0xff]
  %s8590 = scalar_lea.vmem [#allocation3], 434
  %v8591 = vld [vmem:[%s8590] ss:$2 sm:$0xff]
  %s8592 = scalar_lea.vmem [#allocation3], 482
  %v8593 = vld [vmem:[%s8592] ss:$2 sm:$0xff]
  %s8594 = scalar_lea.vmem [#allocation3], 530
  %v8595 = vld [vmem:[%s8594] ss:$2 sm:$0xff]
  %s8596 = scalar_lea.vmem [#allocation3], 578
  %v8597 = vld [vmem:[%s8596] ss:$2 sm:$0xff]
  %s8598 = scalar_lea.vmem [#allocation3], 626
  %v8599 = vld [vmem:[%s8598] ss:$2 sm:$0xff]
  %s8600 = scalar_lea.vmem [#allocation3], 674
  %v8601 = vld [vmem:[%s8600] ss:$2 sm:$0xff]
  %s8602 = scalar_lea.vmem [#allocation3], 722
  %v8603 = vld [vmem:[%s8602] ss:$2 sm:$0xff]
  %s8604 = scalar_lea.vmem [#allocation3], 770
  %v8605 = vld [vmem:[%s8604] ss:$2 sm:$0xff]
  %s8606 = scalar_lea.vmem [#allocation3], 3
  %v8607 = vld [vmem:[%s8606] ss:$2 sm:$0xff]
  %s8608 = scalar_lea.vmem [#allocation3], 51
  %v8609 = vld [vmem:[%s8608] ss:$2 sm:$0xff]
  %s8610 = scalar_lea.vmem [#allocation3], 99
  %v8611 = vld [vmem:[%s8610] ss:$2 sm:$0xff]
  %s8612 = scalar_lea.vmem [#allocation3], 147
  %v8613 = vld [vmem:[%s8612] ss:$2 sm:$0xff]
  %s8614 = scalar_lea.vmem [#allocation3], 195
  %v8615 = vld [vmem:[%s8614] ss:$2 sm:$0xff]
  %s8616 = scalar_lea.vmem [#allocation3], 243
  %v8617 = vld [vmem:[%s8616] ss:$2 sm:$0xff]
  %s8618 = scalar_lea.vmem [#allocation3], 291
  %v8619 = vld [vmem:[%s8618] ss:$2 sm:$0xff]
  %s8620 = scalar_lea.vmem [#allocation3], 339
  %v8621 = vld [vmem:[%s8620] ss:$2 sm:$0xff]
  %s8622 = scalar_lea.vmem [#allocation3], 435
  %v8623 = vld [vmem:[%s8622] ss:$2 sm:$0xff]
  %s8624 = scalar_lea.vmem [#allocation3], 483
  %v8625 = vld [vmem:[%s8624] ss:$2 sm:$0xff]
  %s8626 = scalar_lea.vmem [#allocation3], 531
  %v8627 = vld [vmem:[%s8626] ss:$2 sm:$0xff]
  %s8628 = scalar_lea.vmem [#allocation3], 579
  %v8629 = vld [vmem:[%s8628] ss:$2 sm:$0xff]
  %s8630 = scalar_lea.vmem [#allocation3], 627
  %v8631 = vld [vmem:[%s8630] ss:$2 sm:$0xff]
  %s8632 = scalar_lea.vmem [#allocation3], 675
  %v8633 = vld [vmem:[%s8632] ss:$2 sm:$0xff]
  %s8634 = scalar_lea.vmem [#allocation3], 723
  %v8635 = vld [vmem:[%s8634] ss:$2 sm:$0xff]
  %s8636 = scalar_lea.vmem [#allocation3], 771
  %v8637 = vld [vmem:[%s8636] ss:$2 sm:$0xff]
  %v8638 = vld [vmem:[%s8446] ss:$2 sm:$0xff]
  %s8639 = scalar_lea.vmem %s8446, 48 [#allocation3]
  %v8640 = vld [vmem:[%s8639] ss:$2 sm:$0xff]
  %s8641 = scalar_lea.vmem %s8446, 96 [#allocation3]
  %v8642 = vld [vmem:[%s8641] ss:$2 sm:$0xff]
  %s8643 = scalar_lea.vmem %s8446, 144 [#allocation3]
  %v8644 = vld [vmem:[%s8643] ss:$2 sm:$0xff]
  %s8645 = scalar_lea.vmem %s8446, 192 [#allocation3]
  %v8646 = vld [vmem:[%s8645] ss:$2 sm:$0xff]
  %s8647 = scalar_lea.vmem %s8446, 240 [#allocation3]
  %v8648 = vld [vmem:[%s8647] ss:$2 sm:$0xff]
  %s8649 = scalar_lea.vmem %s8446, 288 [#allocation3]
  %v8650 = vld [vmem:[%s8649] ss:$2 sm:$0xff]
  %s8651 = scalar_lea.vmem %s8446, 336 [#allocation3]
  %v8652 = vld [vmem:[%s8651] ss:$2 sm:$0xff]
  %s8653 = scalar_lea.vmem %s8446, 432 [#allocation3]
  %v8654 = vld [vmem:[%s8653] ss:$2 sm:$0xff]
  %s8655 = scalar_lea.vmem %s8446, 480 [#allocation3]
  %v8656 = vld [vmem:[%s8655] ss:$2 sm:$0xff]
  %s8657 = scalar_lea.vmem %s8446, 528 [#allocation3]
  %v8658 = vld [vmem:[%s8657] ss:$2 sm:$0xff]
  %s8659 = scalar_lea.vmem %s8446, 576 [#allocation3]
  %v8660 = vld [vmem:[%s8659] ss:$2 sm:$0xff]
  %s8661 = scalar_lea.vmem %s8446, 624 [#allocation3]
  %v8662 = vld [vmem:[%s8661] ss:$2 sm:$0xff]
  %s8663 = scalar_lea.vmem %s8446, 672 [#allocation3]
  %v8664 = vld [vmem:[%s8663] ss:$2 sm:$0xff]
  %s8665 = scalar_lea.vmem %s8446, 720 [#allocation3]
  %v8666 = vld [vmem:[%s8665] ss:$2 sm:$0xff]
  %s8667 = scalar_lea.vmem %s8446, 768 [#allocation3]
  %v8668 = vld [vmem:[%s8667] ss:$2 sm:$0xff]
  %s8669 = scalar_lea.vmem %s8446, 1 [#allocation3]
  %v8670 = vld [vmem:[%s8669] ss:$2 sm:$0xff]
  %s8671 = scalar_lea.vmem %s8446, 49 [#allocation3]
  %v8672 = vld [vmem:[%s8671] ss:$2 sm:$0xff]
  %s8673 = scalar_lea.vmem %s8446, 97 [#allocation3]
  %v8674 = vld [vmem:[%s8673] ss:$2 sm:$0xff]
  %s8675 = scalar_lea.vmem %s8446, 145 [#allocation3]
  %v8676 = vld [vmem:[%s8675] ss:$2 sm:$0xff]
  %s8677 = scalar_lea.vmem %s8446, 193 [#allocation3]
  %v8678 = vld [vmem:[%s8677] ss:$2 sm:$0xff]
  %s8679 = scalar_lea.vmem %s8446, 241 [#allocation3]
  %v8680 = vld [vmem:[%s8679] ss:$2 sm:$0xff]
  %s8681 = scalar_lea.vmem %s8446, 289 [#allocation3]
  %v8682 = vld [vmem:[%s8681] ss:$2 sm:$0xff]
  %s8683 = scalar_lea.vmem %s8446, 337 [#allocation3]
  %v8684 = vld [vmem:[%s8683] ss:$2 sm:$0xff]
  %s8685 = scalar_lea.vmem %s8446, 433 [#allocation3]
  %v8686 = vld [vmem:[%s8685] ss:$2 sm:$0xff]
  %s8687 = scalar_lea.vmem %s8446, 481 [#allocation3]
  %v8688 = vld [vmem:[%s8687] ss:$2 sm:$0xff]
  %s8689 = scalar_lea.vmem %s8446, 529 [#allocation3]
  %v8690 = vld [vmem:[%s8689] ss:$2 sm:$0xff]
  %s8691 = scalar_lea.vmem %s8446, 577 [#allocation3]
  %v8692 = vld [vmem:[%s8691] ss:$2 sm:$0xff]
  %s8693 = scalar_lea.vmem %s8446, 625 [#allocation3]
  %v8694 = vld [vmem:[%s8693] ss:$2 sm:$0xff]
  %s8695 = scalar_lea.vmem %s8446, 673 [#allocation3]
  %v8696 = vld [vmem:[%s8695] ss:$2 sm:$0xff]
  %s8697 = scalar_lea.vmem %s8446, 721 [#allocation3]
  %v8698 = vld [vmem:[%s8697] ss:$2 sm:$0xff]
  %s8699 = scalar_lea.vmem %s8446, 769 [#allocation3]
  %v8700 = vld [vmem:[%s8699] ss:$2 sm:$0xff]
  %s8701 = scalar_lea.vmem %s8446, 2 [#allocation3]
  %v8702 = vld [vmem:[%s8701] ss:$2 sm:$0xff]
  %s8703 = scalar_lea.vmem %s8446, 50 [#allocation3]
  %v8704 = vld [vmem:[%s8703] ss:$2 sm:$0xff]
  %s8705 = scalar_lea.vmem %s8446, 98 [#allocation3]
  %v8706 = vld [vmem:[%s8705] ss:$2 sm:$0xff]
  %s8707 = scalar_lea.vmem %s8446, 146 [#allocation3]
  %v8708 = vld [vmem:[%s8707] ss:$2 sm:$0xff]
  %s8709 = scalar_lea.vmem %s8446, 194 [#allocation3]
  %v8710 = vld [vmem:[%s8709] ss:$2 sm:$0xff]
  %s8711 = scalar_lea.vmem %s8446, 242 [#allocation3]
  %v8712 = vld [vmem:[%s8711] ss:$2 sm:$0xff]
  %s8713 = scalar_lea.vmem %s8446, 290 [#allocation3]
  %v8714 = vld [vmem:[%s8713] ss:$2 sm:$0xff]
  %s8715 = scalar_lea.vmem %s8446, 338 [#allocation3]
  %v8716 = vld [vmem:[%s8715] ss:$2 sm:$0xff]
  %s8717 = scalar_lea.vmem %s8446, 434 [#allocation3]
  %v8718 = vld [vmem:[%s8717] ss:$2 sm:$0xff]
  %s8719 = scalar_lea.vmem %s8446, 482 [#allocation3]
  %v8720 = vld [vmem:[%s8719] ss:$2 sm:$0xff]
  %s8721 = scalar_lea.vmem %s8446, 530 [#allocation3]
  %v8722 = vld [vmem:[%s8721] ss:$2 sm:$0xff]
  %s8723 = scalar_lea.vmem %s8446, 578 [#allocation3]
  %v8724 = vld [vmem:[%s8723] ss:$2 sm:$0xff]
  %s8725 = scalar_lea.vmem %s8446, 626 [#allocation3]
  %v8726 = vld [vmem:[%s8725] ss:$2 sm:$0xff]
  %s8727 = scalar_lea.vmem %s8446, 674 [#allocation3]
  %v8728 = vld [vmem:[%s8727] ss:$2 sm:$0xff]
  %s8729 = scalar_lea.vmem %s8446, 722 [#allocation3]
  %v8730 = vld [vmem:[%s8729] ss:$2 sm:$0xff]
  %s8731 = scalar_lea.vmem %s8446, 770 [#allocation3]
  %v8732 = vld [vmem:[%s8731] ss:$2 sm:$0xff]
  %s8733 = scalar_lea.vmem %s8446, 3 [#allocation3]
  %v8734 = vld [vmem:[%s8733] ss:$2 sm:$0xff]
  %s8735 = scalar_lea.vmem %s8446, 51 [#allocation3]
  %v8736 = vld [vmem:[%s8735] ss:$2 sm:$0xff]
  %s8737 = scalar_lea.vmem %s8446, 99 [#allocation3]
  %v8738 = vld [vmem:[%s8737] ss:$2 sm:$0xff]
  %s8739 = scalar_lea.vmem %s8446, 147 [#allocation3]
  %v8740 = vld [vmem:[%s8739] ss:$2 sm:$0xff]
  %s8741 = scalar_lea.vmem %s8446, 195 [#allocation3]
  %v8742 = vld [vmem:[%s8741] ss:$2 sm:$0xff]
  %s8743 = scalar_lea.vmem %s8446, 243 [#allocation3]
  %v8744 = vld [vmem:[%s8743] ss:$2 sm:$0xff]
  %s8745 = scalar_lea.vmem %s8446, 291 [#allocation3]
  %v8746 = vld [vmem:[%s8745] ss:$2 sm:$0xff]
  %s8747 = scalar_lea.vmem %s8446, 339 [#allocation3]
  %v8748 = vld [vmem:[%s8747] ss:$2 sm:$0xff]
  %s8749 = scalar_lea.vmem %s8446, 435 [#allocation3]
  %v8750 = vld [vmem:[%s8749] ss:$2 sm:$0xff]
  %s8751 = scalar_lea.vmem %s8446, 483 [#allocation3]
  %v8752 = vld [vmem:[%s8751] ss:$2 sm:$0xff]
  %s8753 = scalar_lea.vmem %s8446, 531 [#allocation3]
  %v8754 = vld [vmem:[%s8753] ss:$2 sm:$0xff]
  %s8755 = scalar_lea.vmem %s8446, 579 [#allocation3]
  %v8756 = vld [vmem:[%s8755] ss:$2 sm:$0xff]
  %s8757 = scalar_lea.vmem %s8446, 627 [#allocation3]
  %v8758 = vld [vmem:[%s8757] ss:$2 sm:$0xff]
  %s8759 = scalar_lea.vmem %s8446, 675 [#allocation3]
  %v8760 = vld [vmem:[%s8759] ss:$2 sm:$0xff]
  %s8761 = scalar_lea.vmem %s8446, 723 [#allocation3]
  %v8762 = vld [vmem:[%s8761] ss:$2 sm:$0xff]
  %s8763 = scalar_lea.vmem %s8446, 771 [#allocation3]
  %v8764 = vld [vmem:[%s8763] ss:$2 sm:$0xff]
  %s8765 = scalar_lea.vmem [#allocation3], 48
  %v8766 = vld [vmem:[%s8765] ss:$2 sm:$0xff]
  %s8767 = scalar_lea.vmem %s8765, 48 [#allocation3]
  %v8768 = vld [vmem:[%s8767] ss:$2 sm:$0xff]
  %s8769 = scalar_lea.vmem %s8765, 96 [#allocation3]
  %v8770 = vld [vmem:[%s8769] ss:$2 sm:$0xff]
  %s8771 = scalar_lea.vmem %s8765, 144 [#allocation3]
  %v8772 = vld [vmem:[%s8771] ss:$2 sm:$0xff]
  %s8773 = scalar_lea.vmem %s8765, 192 [#allocation3]
  %v8774 = vld [vmem:[%s8773] ss:$2 sm:$0xff]
  %s8775 = scalar_lea.vmem %s8765, 240 [#allocation3]
  %v8776 = vld [vmem:[%s8775] ss:$2 sm:$0xff]
  %s8777 = scalar_lea.vmem %s8765, 288 [#allocation3]
  %v8778 = vld [vmem:[%s8777] ss:$2 sm:$0xff]
  %s8779 = scalar_lea.vmem %s8765, 336 [#allocation3]
  %v8780 = vld [vmem:[%s8779] ss:$2 sm:$0xff]
  %s8781 = scalar_lea.vmem %s8765, 432 [#allocation3]
  %v8782 = vld [vmem:[%s8781] ss:$2 sm:$0xff]
  %s8783 = scalar_lea.vmem %s8765, 480 [#allocation3]
  %v8784 = vld [vmem:[%s8783] ss:$2 sm:$0xff]
  %s8785 = scalar_lea.vmem %s8765, 528 [#allocation3]
  %v8786 = vld [vmem:[%s8785] ss:$2 sm:$0xff]
  %s8787 = scalar_lea.vmem %s8765, 576 [#allocation3]
  %v8788 = vld [vmem:[%s8787] ss:$2 sm:$0xff]
  %s8789 = scalar_lea.vmem %s8765, 624 [#allocation3]
  %v8790 = vld [vmem:[%s8789] ss:$2 sm:$0xff]
  %s8791 = scalar_lea.vmem %s8765, 672 [#allocation3]
  %v8792 = vld [vmem:[%s8791] ss:$2 sm:$0xff]
  %s8793 = scalar_lea.vmem %s8765, 720 [#allocation3]
  %v8794 = vld [vmem:[%s8793] ss:$2 sm:$0xff]
  %s8795 = scalar_lea.vmem %s8765, 768 [#allocation3]
  %v8796 = vld [vmem:[%s8795] ss:$2 sm:$0xff]
  %s8797 = scalar_lea.vmem %s8765, 1 [#allocation3]
  %v8798 = vld [vmem:[%s8797] ss:$2 sm:$0xff]
  %s8799 = scalar_lea.vmem %s8765, 49 [#allocation3]
  %v8800 = vld [vmem:[%s8799] ss:$2 sm:$0xff]
  %s8801 = scalar_lea.vmem %s8765, 97 [#allocation3]
  %v8802 = vld [vmem:[%s8801] ss:$2 sm:$0xff]
  %s8803 = scalar_lea.vmem %s8765, 145 [#allocation3]
  %v8804 = vld [vmem:[%s8803] ss:$2 sm:$0xff]
  %s8805 = scalar_lea.vmem %s8765, 193 [#allocation3]
  %v8806 = vld [vmem:[%s8805] ss:$2 sm:$0xff]
  %s8807 = scalar_lea.vmem %s8765, 241 [#allocation3]
  %v8808 = vld [vmem:[%s8807] ss:$2 sm:$0xff]
  %s8809 = scalar_lea.vmem %s8765, 289 [#allocation3]
  %v8810 = vld [vmem:[%s8809] ss:$2 sm:$0xff]
  %s8811 = scalar_lea.vmem %s8765, 337 [#allocation3]
  %v8812 = vld [vmem:[%s8811] ss:$2 sm:$0xff]
  %s8813 = scalar_lea.vmem %s8765, 433 [#allocation3]
  %v8814 = vld [vmem:[%s8813] ss:$2 sm:$0xff]
  %s8815 = scalar_lea.vmem %s8765, 481 [#allocation3]
  %v8816 = vld [vmem:[%s8815] ss:$2 sm:$0xff]
  %s8817 = scalar_lea.vmem %s8765, 529 [#allocation3]
  %v8818 = vld [vmem:[%s8817] ss:$2 sm:$0xff]
  %s8819 = scalar_lea.vmem %s8765, 577 [#allocation3]
  %v8820 = vld [vmem:[%s8819] ss:$2 sm:$0xff]
  %s8821 = scalar_lea.vmem %s8765, 625 [#allocation3]
  %v8822 = vld [vmem:[%s8821] ss:$2 sm:$0xff]
  %s8823 = scalar_lea.vmem %s8765, 673 [#allocation3]
  %v8824 = vld [vmem:[%s8823] ss:$2 sm:$0xff]
  %s8825 = scalar_lea.vmem %s8765, 721 [#allocation3]
  %v8826 = vld [vmem:[%s8825] ss:$2 sm:$0xff]
  %s8827 = scalar_lea.vmem %s8765, 769 [#allocation3]
  %v8828 = vld [vmem:[%s8827] ss:$2 sm:$0xff]
  %s8829 = scalar_lea.vmem %s8765, 2 [#allocation3]
  %v8830 = vld [vmem:[%s8829] ss:$2 sm:$0xff]
  %s8831 = scalar_lea.vmem %s8765, 50 [#allocation3]
  %v8832 = vld [vmem:[%s8831] ss:$2 sm:$0xff]
  %s8833 = scalar_lea.vmem %s8765, 98 [#allocation3]
  %v8834 = vld [vmem:[%s8833] ss:$2 sm:$0xff]
  %s8835 = scalar_lea.vmem %s8765, 146 [#allocation3]
  %v8836 = vld [vmem:[%s8835] ss:$2 sm:$0xff]
  %s8837 = scalar_lea.vmem %s8765, 194 [#allocation3]
  %v8838 = vld [vmem:[%s8837] ss:$2 sm:$0xff]
  %s8839 = scalar_lea.vmem %s8765, 242 [#allocation3]
  %v8840 = vld [vmem:[%s8839] ss:$2 sm:$0xff]
  %s8841 = scalar_lea.vmem %s8765, 290 [#allocation3]
  %v8842 = vld [vmem:[%s8841] ss:$2 sm:$0xff]
  %s8843 = scalar_lea.vmem %s8765, 338 [#allocation3]
  %v8844 = vld [vmem:[%s8843] ss:$2 sm:$0xff]
  %s8845 = scalar_lea.vmem %s8765, 434 [#allocation3]
  %v8846 = vld [vmem:[%s8845] ss:$2 sm:$0xff]
  %s8847 = scalar_lea.vmem %s8765, 482 [#allocation3]
  %v8848 = vld [vmem:[%s8847] ss:$2 sm:$0xff]
  %s8849 = scalar_lea.vmem %s8765, 530 [#allocation3]
  %v8850 = vld [vmem:[%s8849] ss:$2 sm:$0xff]
  %s8851 = scalar_lea.vmem %s8765, 578 [#allocation3]
  %v8852 = vld [vmem:[%s8851] ss:$2 sm:$0xff]
  %s8853 = scalar_lea.vmem %s8765, 626 [#allocation3]
  %v8854 = vld [vmem:[%s8853] ss:$2 sm:$0xff]
  %s8855 = scalar_lea.vmem %s8765, 674 [#allocation3]
  %v8856 = vld [vmem:[%s8855] ss:$2 sm:$0xff]
  %s8857 = scalar_lea.vmem %s8765, 722 [#allocation3]
  %v8858 = vld [vmem:[%s8857] ss:$2 sm:$0xff]
  %s8859 = scalar_lea.vmem %s8765, 770 [#allocation3]
  %v8860 = vld [vmem:[%s8859] ss:$2 sm:$0xff]
  %s8861 = scalar_lea.vmem %s8765, 3 [#allocation3]
  %v8862 = vld [vmem:[%s8861] ss:$2 sm:$0xff]
  %s8863 = scalar_lea.vmem %s8765, 51 [#allocation3]
  %v8864 = vld [vmem:[%s8863] ss:$2 sm:$0xff]
  %s8865 = scalar_lea.vmem %s8765, 99 [#allocation3]
  %v8866 = vld [vmem:[%s8865] ss:$2 sm:$0xff]
  %s8867 = scalar_lea.vmem %s8765, 147 [#allocation3]
  %v8868 = vld [vmem:[%s8867] ss:$2 sm:$0xff]
  %s8869 = scalar_lea.vmem %s8765, 195 [#allocation3]
  %v8870 = vld [vmem:[%s8869] ss:$2 sm:$0xff]
  %s8871 = scalar_lea.vmem %s8765, 243 [#allocation3]
  %v8872 = vld [vmem:[%s8871] ss:$2 sm:$0xff]
  %s8873 = scalar_lea.vmem %s8765, 291 [#allocation3]
  %v8874 = vld [vmem:[%s8873] ss:$2 sm:$0xff]
  %s8875 = scalar_lea.vmem %s8765, 339 [#allocation3]
  %v8876 = vld [vmem:[%s8875] ss:$2 sm:$0xff]
  %s8877 = scalar_lea.vmem %s8765, 435 [#allocation3]
  %v8878 = vld [vmem:[%s8877] ss:$2 sm:$0xff]
  %s8879 = scalar_lea.vmem %s8765, 483 [#allocation3]
  %v8880 = vld [vmem:[%s8879] ss:$2 sm:$0xff]
  %s8881 = scalar_lea.vmem %s8765, 531 [#allocation3]
  %v8882 = vld [vmem:[%s8881] ss:$2 sm:$0xff]
  %s8883 = scalar_lea.vmem %s8765, 579 [#allocation3]
  %v8884 = vld [vmem:[%s8883] ss:$2 sm:$0xff]
  %s8885 = scalar_lea.vmem %s8765, 627 [#allocation3]
  %v8886 = vld [vmem:[%s8885] ss:$2 sm:$0xff]
  %s8887 = scalar_lea.vmem %s8765, 675 [#allocation3]
  %v8888 = vld [vmem:[%s8887] ss:$2 sm:$0xff]
  %s8889 = scalar_lea.vmem %s8765, 723 [#allocation3]
  %v8890 = vld [vmem:[%s8889] ss:$2 sm:$0xff]
  %s8891 = scalar_lea.vmem %s8765, 771 [#allocation3]
  %v8892 = vld [vmem:[%s8891] ss:$2 sm:$0xff]
  %s8893 = scalar_lea.vmem [#allocation3], 72
  %v8894 = vld [vmem:[%s8893] ss:$2 sm:$0xff]
  %s8895 = scalar_lea.vmem %s8893, 48 [#allocation3]
  %v8896 = vld [vmem:[%s8895] ss:$2 sm:$0xff]
  %s8897 = scalar_lea.vmem %s8893, 96 [#allocation3]
  %v8898 = vld [vmem:[%s8897] ss:$2 sm:$0xff]
  %s8899 = scalar_lea.vmem %s8893, 144 [#allocation3]
  %v8900 = vld [vmem:[%s8899] ss:$2 sm:$0xff]
  %s8901 = scalar_lea.vmem %s8893, 192 [#allocation3]
  %v8902 = vld [vmem:[%s8901] ss:$2 sm:$0xff]
  %s8903 = scalar_lea.vmem %s8893, 240 [#allocation3]
  %v8904 = vld [vmem:[%s8903] ss:$2 sm:$0xff]
  %s8905 = scalar_lea.vmem %s8893, 288 [#allocation3]
  %v8906 = vld [vmem:[%s8905] ss:$2 sm:$0xff]
  %s8907 = scalar_lea.vmem %s8893, 336 [#allocation3]
  %v8908 = vld [vmem:[%s8907] ss:$2 sm:$0xff]
  %s8909 = scalar_lea.vmem %s8893, 432 [#allocation3]
  %v8910 = vld [vmem:[%s8909] ss:$2 sm:$0xff]
  %s8911 = scalar_lea.vmem %s8893, 480 [#allocation3]
  %v8912 = vld [vmem:[%s8911] ss:$2 sm:$0xff]
  %s8913 = scalar_lea.vmem %s8893, 528 [#allocation3]
  %v8914 = vld [vmem:[%s8913] ss:$2 sm:$0xff]
  %s8915 = scalar_lea.vmem %s8893, 576 [#allocation3]
  %v8916 = vld [vmem:[%s8915] ss:$2 sm:$0xff]
  %s8917 = scalar_lea.vmem %s8893, 624 [#allocation3]
  %v8918 = vld [vmem:[%s8917] ss:$2 sm:$0xff]
  %s8919 = scalar_lea.vmem %s8893, 672 [#allocation3]
  %v8920 = vld [vmem:[%s8919] ss:$2 sm:$0xff]
  %s8921 = scalar_lea.vmem %s8893, 720 [#allocation3]
  %v8922 = vld [vmem:[%s8921] ss:$2 sm:$0xff]
  %s8923 = scalar_lea.vmem %s8893, 768 [#allocation3]
  %v8924 = vld [vmem:[%s8923] ss:$2 sm:$0xff]
  %s8925 = scalar_lea.vmem %s8893, 1 [#allocation3]
  %v8926 = vld [vmem:[%s8925] ss:$2 sm:$0xff]
  %s8927 = scalar_lea.vmem %s8893, 49 [#allocation3]
  %v8928 = vld [vmem:[%s8927] ss:$2 sm:$0xff]
  %s8929 = scalar_lea.vmem %s8893, 97 [#allocation3]
  %v8930 = vld [vmem:[%s8929] ss:$2 sm:$0xff]
  %s8931 = scalar_lea.vmem %s8893, 145 [#allocation3]
  %v8932 = vld [vmem:[%s8931] ss:$2 sm:$0xff]
  %s8933 = scalar_lea.vmem %s8893, 193 [#allocation3]
  %v8934 = vld [vmem:[%s8933] ss:$2 sm:$0xff]
  %s8935 = scalar_lea.vmem %s8893, 241 [#allocation3]
  %v8936 = vld [vmem:[%s8935] ss:$2 sm:$0xff]
  %s8937 = scalar_lea.vmem %s8893, 289 [#allocation3]
  %v8938 = vld [vmem:[%s8937] ss:$2 sm:$0xff]
  %s8939 = scalar_lea.vmem %s8893, 337 [#allocation3]
  %v8940 = vld [vmem:[%s8939] ss:$2 sm:$0xff]
  %s8941 = scalar_lea.vmem %s8893, 433 [#allocation3]
  %v8942 = vld [vmem:[%s8941] ss:$2 sm:$0xff]
  %s8943 = scalar_lea.vmem %s8893, 481 [#allocation3]
  %v8944 = vld [vmem:[%s8943] ss:$2 sm:$0xff]
  %s8945 = scalar_lea.vmem %s8893, 529 [#allocation3]
  %v8946 = vld [vmem:[%s8945] ss:$2 sm:$0xff]
  %s8947 = scalar_lea.vmem %s8893, 577 [#allocation3]
  %v8948 = vld [vmem:[%s8947] ss:$2 sm:$0xff]
  %s8949 = scalar_lea.vmem %s8893, 625 [#allocation3]
  %v8950 = vld [vmem:[%s8949] ss:$2 sm:$0xff]
  %s8951 = scalar_lea.vmem %s8893, 673 [#allocation3]
  %v8952 = vld [vmem:[%s8951] ss:$2 sm:$0xff]
  %s8953 = scalar_lea.vmem %s8893, 721 [#allocation3]
  %v8954 = vld [vmem:[%s8953] ss:$2 sm:$0xff]
  %s8955 = scalar_lea.vmem %s8893, 769 [#allocation3]
  %v8956 = vld [vmem:[%s8955] ss:$2 sm:$0xff]
  %s8957 = scalar_lea.vmem %s8893, 2 [#allocation3]
  %v8958 = vld [vmem:[%s8957] ss:$2 sm:$0xff]
  %s8959 = scalar_lea.vmem %s8893, 50 [#allocation3]
  %v8960 = vld [vmem:[%s8959] ss:$2 sm:$0xff]
  %s8961 = scalar_lea.vmem %s8893, 98 [#allocation3]
  %v8962 = vld [vmem:[%s8961] ss:$2 sm:$0xff]
  %s8963 = scalar_lea.vmem %s8893, 146 [#allocation3]
  %v8964 = vld [vmem:[%s8963] ss:$2 sm:$0xff]
  %s8965 = scalar_lea.vmem %s8893, 194 [#allocation3]
  %v8966 = vld [vmem:[%s8965] ss:$2 sm:$0xff]
  %s8967 = scalar_lea.vmem %s8893, 242 [#allocation3]
  %v8968 = vld [vmem:[%s8967] ss:$2 sm:$0xff]
  %s8969 = scalar_lea.vmem %s8893, 290 [#allocation3]
  %v8970 = vld [vmem:[%s8969] ss:$2 sm:$0xff]
  %s8971 = scalar_lea.vmem %s8893, 338 [#allocation3]
  %v8972 = vld [vmem:[%s8971] ss:$2 sm:$0xff]
  %s8973 = scalar_lea.vmem %s8893, 434 [#allocation3]
  %v8974 = vld [vmem:[%s8973] ss:$2 sm:$0xff]
  %s8975 = scalar_lea.vmem %s8893, 482 [#allocation3]
  %v8976 = vld [vmem:[%s8975] ss:$2 sm:$0xff]
  %s8977 = scalar_lea.vmem %s8893, 530 [#allocation3]
  %v8978 = vld [vmem:[%s8977] ss:$2 sm:$0xff]
  %s8979 = scalar_lea.vmem %s8893, 578 [#allocation3]
  %v8980 = vld [vmem:[%s8979] ss:$2 sm:$0xff]
  %s8981 = scalar_lea.vmem %s8893, 626 [#allocation3]
  %v8982 = vld [vmem:[%s8981] ss:$2 sm:$0xff]
  %s8983 = scalar_lea.vmem %s8893, 674 [#allocation3]
  %v8984 = vld [vmem:[%s8983] ss:$2 sm:$0xff]
  %s8985 = scalar_lea.vmem %s8893, 722 [#allocation3]
  %v8986 = vld [vmem:[%s8985] ss:$2 sm:$0xff]
  %s8987 = scalar_lea.vmem %s8893, 770 [#allocation3]
  %v8988 = vld [vmem:[%s8987] ss:$2 sm:$0xff]
  %s8989 = scalar_lea.vmem %s8893, 3 [#allocation3]
  %v8990 = vld [vmem:[%s8989] ss:$2 sm:$0xff]
  %s8991 = scalar_lea.vmem %s8893, 51 [#allocation3]
  %v8992 = vld [vmem:[%s8991] ss:$2 sm:$0xff]
  %s8993 = scalar_lea.vmem %s8893, 99 [#allocation3]
  %v8994 = vld [vmem:[%s8993] ss:$2 sm:$0xff]
  %s8995 = scalar_lea.vmem %s8893, 147 [#allocation3]
  %v8996 = vld [vmem:[%s8995] ss:$2 sm:$0xff]
  %s8997 = scalar_lea.vmem %s8893, 195 [#allocation3]
  %v8998 = vld [vmem:[%s8997] ss:$2 sm:$0xff]
  %s8999 = scalar_lea.vmem %s8893, 243 [#allocation3]
  %v9000 = vld [vmem:[%s8999] ss:$2 sm:$0xff]
  %s9001 = scalar_lea.vmem %s8893, 291 [#allocation3]
  %v9002 = vld [vmem:[%s9001] ss:$2 sm:$0xff]
  %s9003 = scalar_lea.vmem %s8893, 339 [#allocation3]
  %v9004 = vld [vmem:[%s9003] ss:$2 sm:$0xff]
  %s9005 = scalar_lea.vmem %s8893, 435 [#allocation3]
  %v9006 = vld [vmem:[%s9005] ss:$2 sm:$0xff]
  %s9007 = scalar_lea.vmem %s8893, 483 [#allocation3]
  %v9008 = vld [vmem:[%s9007] ss:$2 sm:$0xff]
  %s9009 = scalar_lea.vmem %s8893, 531 [#allocation3]
  %v9010 = vld [vmem:[%s9009] ss:$2 sm:$0xff]
  %s9011 = scalar_lea.vmem %s8893, 579 [#allocation3]
  %v9012 = vld [vmem:[%s9011] ss:$2 sm:$0xff]
  %s9013 = scalar_lea.vmem %s8893, 627 [#allocation3]
  %v9014 = vld [vmem:[%s9013] ss:$2 sm:$0xff]
  %s9015 = scalar_lea.vmem %s8893, 675 [#allocation3]
  %v9016 = vld [vmem:[%s9015] ss:$2 sm:$0xff]
  %s9017 = scalar_lea.vmem %s8893, 723 [#allocation3]
  %v9018 = vld [vmem:[%s9017] ss:$2 sm:$0xff]
  %s9019 = scalar_lea.vmem %s8893, 771 [#allocation3]
  %v9020 = vld [vmem:[%s9019] ss:$2 sm:$0xff]
  %9037 = vrot.lane.b32.xlu0 %v8543, 8
  %v9038 = vpop.permute.xlu0 %9037
  %9039 = vrot.lane.b32.xlu0 %v8545, 8
  %v9040 = vpop.permute.xlu0 %9039
  %9041 = vrot.lane.b32.xlu0 %v8547, 8
  %v9042 = vpop.permute.xlu0 %9041
  %9043 = vrot.lane.b32.xlu0 %v8549, 8
  %v9044 = vpop.permute.xlu0 %9043
  %9045 = vrot.lane.b32.xlu0 %v8551, 8
  %v9046 = vpop.permute.xlu0 %9045
  %9047 = vrot.lane.b32.xlu0 %v8553, 8
  %v9048 = vpop.permute.xlu0 %9047
  %9049 = vrot.lane.b32.xlu0 %v8555, 8
  %v9050 = vpop.permute.xlu0 %9049
  %9051 = vrot.lane.b32.xlu0 %v8557, 8
  %v9052 = vpop.permute.xlu0 %9051
  %9053 = vrot.lane.b32.xlu0 %v8559, 8
  %v9054 = vpop.permute.xlu0 %9053
  %9055 = vrot.lane.b32.xlu0 %v8561, 8
  %v9056 = vpop.permute.xlu0 %9055
  %9057 = vrot.lane.b32.xlu0 %v8563, 8
  %v9058 = vpop.permute.xlu0 %9057
  %9059 = vrot.lane.b32.xlu0 %v8565, 8
  %v9060 = vpop.permute.xlu0 %9059
  %9061 = vrot.lane.b32.xlu0 %v8567, 8
  %v9062 = vpop.permute.xlu0 %9061
  %9063 = vrot.lane.b32.xlu0 %v8569, 8
  %v9064 = vpop.permute.xlu0 %9063
  %9065 = vrot.lane.b32.xlu0 %v8571, 8
  %v9066 = vpop.permute.xlu0 %9065
  %9067 = vrot.lane.b32.xlu0 %v8573, 8
  %v9068 = vpop.permute.xlu0 %9067
  %v9085 = vsel %vm8336, %v8511, %v9038
  %v9086 = vsel %vm8336, %v8513, %v9040
  %v9087 = vsel %vm8336, %v8515, %v9042
  %v9088 = vsel %vm8336, %v8517, %v9044
  %v9089 = vsel %vm8336, %v8519, %v9046
  %v9090 = vsel %vm8336, %v8521, %v9048
  %v9091 = vsel %vm8336, %v8523, %v9050
  %v9092 = vsel %vm8336, %v8525, %v9052
  %v9093 = vsel %vm8336, %v8527, %v9054
  %v9094 = vsel %vm8336, %v8529, %v9056
  %v9095 = vsel %vm8336, %v8531, %v9058
  %v9096 = vsel %vm8336, %v8533, %v9060
  %v9097 = vsel %vm8336, %v8535, %v9062
  %v9098 = vsel %vm8336, %v8537, %v9064
  %v9099 = vsel %vm8336, %v8539, %v9066
  %v9100 = vsel %vm8336, %v8541, %v9068
  %9117 = vrot.lane.b32.xlu0 %v8607, 8
  %v9118 = vpop.permute.xlu0 %9117
  %9119 = vrot.lane.b32.xlu0 %v8609, 8
  %v9120 = vpop.permute.xlu0 %9119
  %9121 = vrot.lane.b32.xlu0 %v8611, 8
  %v9122 = vpop.permute.xlu0 %9121
  %9123 = vrot.lane.b32.xlu0 %v8613, 8
  %v9124 = vpop.permute.xlu0 %9123
  %9125 = vrot.lane.b32.xlu0 %v8615, 8
  %v9126 = vpop.permute.xlu0 %9125
  %9127 = vrot.lane.b32.xlu0 %v8617, 8
  %v9128 = vpop.permute.xlu0 %9127
  %9129 = vrot.lane.b32.xlu0 %v8619, 8
  %v9130 = vpop.permute.xlu0 %9129
  %9131 = vrot.lane.b32.xlu0 %v8621, 8
  %v9132 = vpop.permute.xlu0 %9131
  %9133 = vrot.lane.b32.xlu0 %v8623, 8
  %v9134 = vpop.permute.xlu0 %9133
  %9135 = vrot.lane.b32.xlu0 %v8625, 8
  %v9136 = vpop.permute.xlu0 %9135
  %9137 = vrot.lane.b32.xlu0 %v8627, 8
  %v9138 = vpop.permute.xlu0 %9137
  %9139 = vrot.lane.b32.xlu0 %v8629, 8
  %v9140 = vpop.permute.xlu0 %9139
  %9141 = vrot.lane.b32.xlu0 %v8631, 8
  %v9142 = vpop.permute.xlu0 %9141
  %9143 = vrot.lane.b32.xlu0 %v8633, 8
  %v9144 = vpop.permute.xlu0 %9143
  %9145 = vrot.lane.b32.xlu0 %v8635, 8
  %v9146 = vpop.permute.xlu0 %9145
  %9147 = vrot.lane.b32.xlu0 %v8637, 8
  %v9148 = vpop.permute.xlu0 %9147
  %v9165 = vsel %vm8336, %v8575, %v9118
  %v9166 = vsel %vm8336, %v8577, %v9120
  %v9167 = vsel %vm8336, %v8579, %v9122
  %v9168 = vsel %vm8336, %v8581, %v9124
  %v9169 = vsel %vm8336, %v8583, %v9126
  %v9170 = vsel %vm8336, %v8585, %v9128
  %v9171 = vsel %vm8336, %v8587, %v9130
  %v9172 = vsel %vm8336, %v8589, %v9132
  %v9173 = vsel %vm8336, %v8591, %v9134
  %v9174 = vsel %vm8336, %v8593, %v9136
  %v9175 = vsel %vm8336, %v8595, %v9138
  %v9176 = vsel %vm8336, %v8597, %v9140
  %v9177 = vsel %vm8336, %v8599, %v9142
  %v9178 = vsel %vm8336, %v8601, %v9144
  %v9179 = vsel %vm8336, %v8603, %v9146
  %v9180 = vsel %vm8336, %v8605, %v9148
  %9197 = vrot.lane.b32.xlu0 %v8670, 8
  %v9198 = vpop.permute.xlu0 %9197
  %9199 = vrot.lane.b32.xlu0 %v8672, 8
  %v9200 = vpop.permute.xlu0 %9199
  %9201 = vrot.lane.b32.xlu0 %v8674, 8
  %v9202 = vpop.permute.xlu0 %9201
  %9203 = vrot.lane.b32.xlu0 %v8676, 8
  %v9204 = vpop.permute.xlu0 %9203
  %9205 = vrot.lane.b32.xlu0 %v8678, 8
  %v9206 = vpop.permute.xlu0 %9205
  %9207 = vrot.lane.b32.xlu0 %v8680, 8
  %v9208 = vpop.permute.xlu0 %9207
  %9209 = vrot.lane.b32.xlu0 %v8682, 8
  %v9210 = vpop.permute.xlu0 %9209
  %9211 = vrot.lane.b32.xlu0 %v8684, 8
  %v9212 = vpop.permute.xlu0 %9211
  %9213 = vrot.lane.b32.xlu0 %v8686, 8
  %v9214 = vpop.permute.xlu0 %9213
  %9215 = vrot.lane.b32.xlu0 %v8688, 8
  %v9216 = vpop.permute.xlu0 %9215
  %9217 = vrot.lane.b32.xlu0 %v8690, 8
  %v9218 = vpop.permute.xlu0 %9217
  %9219 = vrot.lane.b32.xlu0 %v8692, 8
  %v9220 = vpop.permute.xlu0 %9219
  %9221 = vrot.lane.b32.xlu0 %v8694, 8
  %v9222 = vpop.permute.xlu0 %9221
  %9223 = vrot.lane.b32.xlu0 %v8696, 8
  %v9224 = vpop.permute.xlu0 %9223
  %9225 = vrot.lane.b32.xlu0 %v8698, 8
  %v9226 = vpop.permute.xlu0 %9225
  %9227 = vrot.lane.b32.xlu0 %v8700, 8
  %v9228 = vpop.permute.xlu0 %9227
  %v9245 = vsel %vm8336, %v8638, %v9198
  %v9246 = vsel %vm8336, %v8640, %v9200
  %v9247 = vsel %vm8336, %v8642, %v9202
  %v9248 = vsel %vm8336, %v8644, %v9204
  %v9249 = vsel %vm8336, %v8646, %v9206
  %v9250 = vsel %vm8336, %v8648, %v9208
  %v9251 = vsel %vm8336, %v8650, %v9210
  %v9252 = vsel %vm8336, %v8652, %v9212
  %v9253 = vsel %vm8336, %v8654, %v9214
  %v9254 = vsel %vm8336, %v8656, %v9216
  %v9255 = vsel %vm8336, %v8658, %v9218
  %v9256 = vsel %vm8336, %v8660, %v9220
  %v9257 = vsel %vm8336, %v8662, %v9222
  %v9258 = vsel %vm8336, %v8664, %v9224
  %v9259 = vsel %vm8336, %v8666, %v9226
  %v9260 = vsel %vm8336, %v8668, %v9228
  %9277 = vrot.lane.b32.xlu0 %v8734, 8
  %v9278 = vpop.permute.xlu0 %9277
  %9279 = vrot.lane.b32.xlu0 %v8736, 8
  %v9280 = vpop.permute.xlu0 %9279
  %9281 = vrot.lane.b32.xlu0 %v8738, 8
  %v9282 = vpop.permute.xlu0 %9281
  %9283 = vrot.lane.b32.xlu0 %v8740, 8
  %v9284 = vpop.permute.xlu0 %9283
  %9285 = vrot.lane.b32.xlu0 %v8742, 8
  %v9286 = vpop.permute.xlu0 %9285
  %9287 = vrot.lane.b32.xlu0 %v8744, 8
  %v9288 = vpop.permute.xlu0 %9287
  %9289 = vrot.lane.b32.xlu0 %v8746, 8
  %v9290 = vpop.permute.xlu0 %9289
  %9291 = vrot.lane.b32.xlu0 %v8748, 8
  %v9292 = vpop.permute.xlu0 %9291
  %9293 = vrot.lane.b32.xlu0 %v8750, 8
  %v9294 = vpop.permute.xlu0 %9293
  %9295 = vrot.lane.b32.xlu0 %v8752, 8
  %v9296 = vpop.permute.xlu0 %9295
  %9297 = vrot.lane.b32.xlu0 %v8754, 8
  %v9298 = vpop.permute.xlu0 %9297
  %9299 = vrot.lane.b32.xlu0 %v8756, 8
  %v9300 = vpop.permute.xlu0 %9299
  %9301 = vrot.lane.b32.xlu0 %v8758, 8
  %v9302 = vpop.permute.xlu0 %9301
  %9303 = vrot.lane.b32.xlu0 %v8760, 8
  %v9304 = vpop.permute.xlu0 %9303
  %9305 = vrot.lane.b32.xlu0 %v8762, 8
  %v9306 = vpop.permute.xlu0 %9305
  %9307 = vrot.lane.b32.xlu0 %v8764, 8
  %v9308 = vpop.permute.xlu0 %9307
  %v9325 = vsel %vm8336, %v8702, %v9278
  %v9326 = vsel %vm8336, %v8704, %v9280
  %v9327 = vsel %vm8336, %v8706, %v9282
  %v9328 = vsel %vm8336, %v8708, %v9284
  %v9329 = vsel %vm8336, %v8710, %v9286
  %v9330 = vsel %vm8336, %v8712, %v9288
  %v9331 = vsel %vm8336, %v8714, %v9290
  %v9332 = vsel %vm8336, %v8716, %v9292
  %v9333 = vsel %vm8336, %v8718, %v9294
  %v9334 = vsel %vm8336, %v8720, %v9296
  %v9335 = vsel %vm8336, %v8722, %v9298
  %v9336 = vsel %vm8336, %v8724, %v9300
  %v9337 = vsel %vm8336, %v8726, %v9302
  %v9338 = vsel %vm8336, %v8728, %v9304
  %v9339 = vsel %vm8336, %v8730, %v9306
  %v9340 = vsel %vm8336, %v8732, %v9308
  %9357 = vrot.lane.b32.xlu0 %v8798, 8
  %v9358 = vpop.permute.xlu0 %9357
  %9359 = vrot.lane.b32.xlu0 %v8800, 8
  %v9360 = vpop.permute.xlu0 %9359
  %9361 = vrot.lane.b32.xlu0 %v8802, 8
  %v9362 = vpop.permute.xlu0 %9361
  %9363 = vrot.lane.b32.xlu0 %v8804, 8
  %v9364 = vpop.permute.xlu0 %9363
  %9365 = vrot.lane.b32.xlu0 %v8806, 8
  %v9366 = vpop.permute.xlu0 %9365
  %9367 = vrot.lane.b32.xlu0 %v8808, 8
  %v9368 = vpop.permute.xlu0 %9367
  %9369 = vrot.lane.b32.xlu0 %v8810, 8
  %v9370 = vpop.permute.xlu0 %9369
  %9371 = vrot.lane.b32.xlu0 %v8812, 8
  %v9372 = vpop.permute.xlu0 %9371
  %9373 = vrot.lane.b32.xlu0 %v8814, 8
  %v9374 = vpop.permute.xlu0 %9373
  %9375 = vrot.lane.b32.xlu0 %v8816, 8
  %v9376 = vpop.permute.xlu0 %9375
  %9377 = vrot.lane.b32.xlu0 %v8818, 8
  %v9378 = vpop.permute.xlu0 %9377
  %9379 = vrot.lane.b32.xlu0 %v8820, 8
  %v9380 = vpop.permute.xlu0 %9379
  %9381 = vrot.lane.b32.xlu0 %v8822, 8
  %v9382 = vpop.permute.xlu0 %9381
  %9383 = vrot.lane.b32.xlu0 %v8824, 8
  %v9384 = vpop.permute.xlu0 %9383
  %9385 = vrot.lane.b32.xlu0 %v8826, 8
  %v9386 = vpop.permute.xlu0 %9385
  %9387 = vrot.lane.b32.xlu0 %v8828, 8
  %v9388 = vpop.permute.xlu0 %9387
  %v9405 = vsel %vm8336, %v8766, %v9358
  %v9406 = vsel %vm8336, %v8768, %v9360
  %v9407 = vsel %vm8336, %v8770, %v9362
  %v9408 = vsel %vm8336, %v8772, %v9364
  %v9409 = vsel %vm8336, %v8774, %v9366
  %v9410 = vsel %vm8336, %v8776, %v9368
  %v9411 = vsel %vm8336, %v8778, %v9370
  %v9412 = vsel %vm8336, %v8780, %v9372
  %v9413 = vsel %vm8336, %v8782, %v9374
  %v9414 = vsel %vm8336, %v8784, %v9376
  %v9415 = vsel %vm8336, %v8786, %v9378
  %v9416 = vsel %vm8336, %v8788, %v9380
  %v9417 = vsel %vm8336, %v8790, %v9382
  %v9418 = vsel %vm8336, %v8792, %v9384
  %v9419 = vsel %vm8336, %v8794, %v9386
  %v9420 = vsel %vm8336, %v8796, %v9388
  %9437 = vrot.lane.b32.xlu0 %v8862, 8
  %v9438 = vpop.permute.xlu0 %9437
  %9439 = vrot.lane.b32.xlu0 %v8864, 8
  %v9440 = vpop.permute.xlu0 %9439
  %9441 = vrot.lane.b32.xlu0 %v8866, 8
  %v9442 = vpop.permute.xlu0 %9441
  %9443 = vrot.lane.b32.xlu0 %v8868, 8
  %v9444 = vpop.permute.xlu0 %9443
  %9445 = vrot.lane.b32.xlu0 %v8870, 8
  %v9446 = vpop.permute.xlu0 %9445
  %9447 = vrot.lane.b32.xlu0 %v8872, 8
  %v9448 = vpop.permute.xlu0 %9447
  %9449 = vrot.lane.b32.xlu0 %v8874, 8
  %v9450 = vpop.permute.xlu0 %9449
  %9451 = vrot.lane.b32.xlu0 %v8876, 8
  %v9452 = vpop.permute.xlu0 %9451
  %9453 = vrot.lane.b32.xlu0 %v8878, 8
  %v9454 = vpop.permute.xlu0 %9453
  %9455 = vrot.lane.b32.xlu0 %v8880, 8
  %v9456 = vpop.permute.xlu0 %9455
  %9457 = vrot.lane.b32.xlu0 %v8882, 8
  %v9458 = vpop.permute.xlu0 %9457
  %9459 = vrot.lane.b32.xlu0 %v8884, 8
  %v9460 = vpop.permute.xlu0 %9459
  %9461 = vrot.lane.b32.xlu0 %v8886, 8
  %v9462 = vpop.permute.xlu0 %9461
  %9463 = vrot.lane.b32.xlu0 %v8888, 8
  %v9464 = vpop.permute.xlu0 %9463
  %9465 = vrot.lane.b32.xlu0 %v8890, 8
  %v9466 = vpop.permute.xlu0 %9465
  %9467 = vrot.lane.b32.xlu0 %v8892, 8
  %v9468 = vpop.permute.xlu0 %9467
  %v9485 = vsel %vm8336, %v8830, %v9438
  %v9486 = vsel %vm8336, %v8832, %v9440
  %v9487 = vsel %vm8336, %v8834, %v9442
  %v9488 = vsel %vm8336, %v8836, %v9444
  %v9489 = vsel %vm8336, %v8838, %v9446
  %v9490 = vsel %vm8336, %v8840, %v9448
  %v9491 = vsel %vm8336, %v8842, %v9450
  %v9492 = vsel %vm8336, %v8844, %v9452
  %v9493 = vsel %vm8336, %v8846, %v9454
  %v9494 = vsel %vm8336, %v8848, %v9456
  %v9495 = vsel %vm8336, %v8850, %v9458
  %v9496 = vsel %vm8336, %v8852, %v9460
  %v9497 = vsel %vm8336, %v8854, %v9462
  %v9498 = vsel %vm8336, %v8856, %v9464
  %v9499 = vsel %vm8336, %v8858, %v9466
  %v9500 = vsel %vm8336, %v8860, %v9468
  %9517 = vrot.lane.b32.xlu0 %v8926, 8
  %v9518 = vpop.permute.xlu0 %9517
  %9519 = vrot.lane.b32.xlu0 %v8928, 8
  %v9520 = vpop.permute.xlu0 %9519
  %9521 = vrot.lane.b32.xlu0 %v8930, 8
  %v9522 = vpop.permute.xlu0 %9521
  %9523 = vrot.lane.b32.xlu0 %v8932, 8
  %v9524 = vpop.permute.xlu0 %9523
  %9525 = vrot.lane.b32.xlu0 %v8934, 8
  %v9526 = vpop.permute.xlu0 %9525
  %9527 = vrot.lane.b32.xlu0 %v8936, 8
  %v9528 = vpop.permute.xlu0 %9527
  %9529 = vrot.lane.b32.xlu0 %v8938, 8
  %v9530 = vpop.permute.xlu0 %9529
  %9531 = vrot.lane.b32.xlu0 %v8940, 8
  %v9532 = vpop.permute.xlu0 %9531
  %9533 = vrot.lane.b32.xlu0 %v8942, 8
  %v9534 = vpop.permute.xlu0 %9533
  %9535 = vrot.lane.b32.xlu0 %v8944, 8
  %v9536 = vpop.permute.xlu0 %9535
  %9537 = vrot.lane.b32.xlu0 %v8946, 8
  %v9538 = vpop.permute.xlu0 %9537
  %9539 = vrot.lane.b32.xlu0 %v8948, 8
  %v9540 = vpop.permute.xlu0 %9539
  %9541 = vrot.lane.b32.xlu0 %v8950, 8
  %v9542 = vpop.permute.xlu0 %9541
  %9543 = vrot.lane.b32.xlu0 %v8952, 8
  %v9544 = vpop.permute.xlu0 %9543
  %9545 = vrot.lane.b32.xlu0 %v8954, 8
  %v9546 = vpop.permute.xlu0 %9545
  %9547 = vrot.lane.b32.xlu0 %v8956, 8
  %v9548 = vpop.permute.xlu0 %9547
  %v9565 = vsel %vm8336, %v8894, %v9518
  %v9566 = vsel %vm8336, %v8896, %v9520
  %v9567 = vsel %vm8336, %v8898, %v9522
  %v9568 = vsel %vm8336, %v8900, %v9524
  %v9569 = vsel %vm8336, %v8902, %v9526
  %v9570 = vsel %vm8336, %v8904, %v9528
  %v9571 = vsel %vm8336, %v8906, %v9530
  %v9572 = vsel %vm8336, %v8908, %v9532
  %v9573 = vsel %vm8336, %v8910, %v9534
  %v9574 = vsel %vm8336, %v8912, %v9536
  %v9575 = vsel %vm8336, %v8914, %v9538
  %v9576 = vsel %vm8336, %v8916, %v9540
  %v9577 = vsel %vm8336, %v8918, %v9542
  %v9578 = vsel %vm8336, %v8920, %v9544
  %v9579 = vsel %vm8336, %v8922, %v9546
  %v9580 = vsel %vm8336, %v8924, %v9548
  %9597 = vrot.lane.b32.xlu0 %v8990, 8
  %v9598 = vpop.permute.xlu0 %9597
  %9599 = vrot.lane.b32.xlu0 %v8992, 8
  %v9600 = vpop.permute.xlu0 %9599
  %9601 = vrot.lane.b32.xlu0 %v8994, 8
  %v9602 = vpop.permute.xlu0 %9601
  %9603 = vrot.lane.b32.xlu0 %v8996, 8
  %v9604 = vpop.permute.xlu0 %9603
  %9605 = vrot.lane.b32.xlu0 %v8998, 8
  %v9606 = vpop.permute.xlu0 %9605
  %9607 = vrot.lane.b32.xlu0 %v9000, 8
  %v9608 = vpop.permute.xlu0 %9607
  %9609 = vrot.lane.b32.xlu0 %v9002, 8
  %v9610 = vpop.permute.xlu0 %9609
  %9611 = vrot.lane.b32.xlu0 %v9004, 8
  %v9612 = vpop.permute.xlu0 %9611
  %9613 = vrot.lane.b32.xlu0 %v9006, 8
  %v9614 = vpop.permute.xlu0 %9613
  %9615 = vrot.lane.b32.xlu0 %v9008, 8
  %v9616 = vpop.permute.xlu0 %9615
  %9617 = vrot.lane.b32.xlu0 %v9010, 8
  %v9618 = vpop.permute.xlu0 %9617
  %9619 = vrot.lane.b32.xlu0 %v9012, 8
  %v9620 = vpop.permute.xlu0 %9619
  %9621 = vrot.lane.b32.xlu0 %v9014, 8
  %v9622 = vpop.permute.xlu0 %9621
  %9623 = vrot.lane.b32.xlu0 %v9016, 8
  %v9624 = vpop.permute.xlu0 %9623
  %9625 = vrot.lane.b32.xlu0 %v9018, 8
  %v9626 = vpop.permute.xlu0 %9625
  %9627 = vrot.lane.b32.xlu0 %v9020, 8
  %v9628 = vpop.permute.xlu0 %9627
  %v9645 = vsel %vm8336, %v8958, %v9598
  %v9646 = vsel %vm8336, %v8960, %v9600
  %v9647 = vsel %vm8336, %v8962, %v9602
  %v9648 = vsel %vm8336, %v8964, %v9604
  %v9649 = vsel %vm8336, %v8966, %v9606
  %v9650 = vsel %vm8336, %v8968, %v9608
  %v9651 = vsel %vm8336, %v8970, %v9610
  %v9652 = vsel %vm8336, %v8972, %v9612
  %v9653 = vsel %vm8336, %v8974, %v9614
  %v9654 = vsel %vm8336, %v8976, %v9616
  %v9655 = vsel %vm8336, %v8978, %v9618
  %v9656 = vsel %vm8336, %v8980, %v9620
  %v9657 = vsel %vm8336, %v8982, %v9622
  %v9658 = vsel %vm8336, %v8984, %v9624
  %v9659 = vsel %vm8336, %v8986, %v9626
  %v9660 = vsel %vm8336, %v8988, %v9628
  %9677 = vrot.lane.b32.xlu0 %v9165, 16
  %v9678 = vpop.permute.xlu0 %9677
  %9679 = vrot.lane.b32.xlu0 %v9166, 16
  %v9680 = vpop.permute.xlu0 %9679
  %9681 = vrot.lane.b32.xlu0 %v9167, 16
  %v9682 = vpop.permute.xlu0 %9681
  %9683 = vrot.lane.b32.xlu0 %v9168, 16
  %v9684 = vpop.permute.xlu0 %9683
  %9685 = vrot.lane.b32.xlu0 %v9169, 16
  %v9686 = vpop.permute.xlu0 %9685
  %9687 = vrot.lane.b32.xlu0 %v9170, 16
  %v9688 = vpop.permute.xlu0 %9687
  %9689 = vrot.lane.b32.xlu0 %v9171, 16
  %v9690 = vpop.permute.xlu0 %9689
  %9691 = vrot.lane.b32.xlu0 %v9172, 16
  %v9692 = vpop.permute.xlu0 %9691
  %9693 = vrot.lane.b32.xlu0 %v9173, 16
  %v9694 = vpop.permute.xlu0 %9693
  %9695 = vrot.lane.b32.xlu0 %v9174, 16
  %v9696 = vpop.permute.xlu0 %9695
  %9697 = vrot.lane.b32.xlu0 %v9175, 16
  %v9698 = vpop.permute.xlu0 %9697
  %9699 = vrot.lane.b32.xlu0 %v9176, 16
  %v9700 = vpop.permute.xlu0 %9699
  %9701 = vrot.lane.b32.xlu0 %v9177, 16
  %v9702 = vpop.permute.xlu0 %9701
  %9703 = vrot.lane.b32.xlu0 %v9178, 16
  %v9704 = vpop.permute.xlu0 %9703
  %9705 = vrot.lane.b32.xlu0 %v9179, 16
  %v9706 = vpop.permute.xlu0 %9705
  %9707 = vrot.lane.b32.xlu0 %v9180, 16
  %v9708 = vpop.permute.xlu0 %9707
  %vm9725 = vcmask 130048
  %v9726 = vsel %vm9725, %v9085, %v9678
  %v9727 = vsel %vm9725, %v9086, %v9680
  %v9728 = vsel %vm9725, %v9087, %v9682
  %v9729 = vsel %vm9725, %v9088, %v9684
  %v9730 = vsel %vm9725, %v9089, %v9686
  %v9731 = vsel %vm9725, %v9090, %v9688
  %v9732 = vsel %vm9725, %v9091, %v9690
  %v9733 = vsel %vm9725, %v9092, %v9692
  %v9734 = vsel %vm9725, %v9093, %v9694
  %v9735 = vsel %vm9725, %v9094, %v9696
  %v9736 = vsel %vm9725, %v9095, %v9698
  %v9737 = vsel %vm9725, %v9096, %v9700
  %v9738 = vsel %vm9725, %v9097, %v9702
  %v9739 = vsel %vm9725, %v9098, %v9704
  %v9740 = vsel %vm9725, %v9099, %v9706
  %v9741 = vsel %vm9725, %v9100, %v9708
  %9758 = vrot.lane.b32.xlu0 %v9325, 16
  %v9759 = vpop.permute.xlu0 %9758
  %9760 = vrot.lane.b32.xlu0 %v9326, 16
  %v9761 = vpop.permute.xlu0 %9760
  %9762 = vrot.lane.b32.xlu0 %v9327, 16
  %v9763 = vpop.permute.xlu0 %9762
  %9764 = vrot.lane.b32.xlu0 %v9328, 16
  %v9765 = vpop.permute.xlu0 %9764
  %9766 = vrot.lane.b32.xlu0 %v9329, 16
  %v9767 = vpop.permute.xlu0 %9766
  %9768 = vrot.lane.b32.xlu0 %v9330, 16
  %v9769 = vpop.permute.xlu0 %9768
  %9770 = vrot.lane.b32.xlu0 %v9331, 16
  %v9771 = vpop.permute.xlu0 %9770
  %9772 = vrot.lane.b32.xlu0 %v9332, 16
  %v9773 = vpop.permute.xlu0 %9772
  %9774 = vrot.lane.b32.xlu0 %v9333, 16
  %v9775 = vpop.permute.xlu0 %9774
  %9776 = vrot.lane.b32.xlu0 %v9334, 16
  %v9777 = vpop.permute.xlu0 %9776
  %9778 = vrot.lane.b32.xlu0 %v9335, 16
  %v9779 = vpop.permute.xlu0 %9778
  %9780 = vrot.lane.b32.xlu0 %v9336, 16
  %v9781 = vpop.permute.xlu0 %9780
  %9782 = vrot.lane.b32.xlu0 %v9337, 16
  %v9783 = vpop.permute.xlu0 %9782
  %9784 = vrot.lane.b32.xlu0 %v9338, 16
  %v9785 = vpop.permute.xlu0 %9784
  %9786 = vrot.lane.b32.xlu0 %v9339, 16
  %v9787 = vpop.permute.xlu0 %9786
  %9788 = vrot.lane.b32.xlu0 %v9340, 16
  %v9789 = vpop.permute.xlu0 %9788
  %v9806 = vsel %vm9725, %v9245, %v9759
  %v9807 = vsel %vm9725, %v9246, %v9761
  %v9808 = vsel %vm9725, %v9247, %v9763
  %v9809 = vsel %vm9725, %v9248, %v9765
  %v9810 = vsel %vm9725, %v9249, %v9767
  %v9811 = vsel %vm9725, %v9250, %v9769
  %v9812 = vsel %vm9725, %v9251, %v9771
  %v9813 = vsel %vm9725, %v9252, %v9773
  %v9814 = vsel %vm9725, %v9253, %v9775
  %v9815 = vsel %vm9725, %v9254, %v9777
  %v9816 = vsel %vm9725, %v9255, %v9779
  %v9817 = vsel %vm9725, %v9256, %v9781
  %v9818 = vsel %vm9725, %v9257, %v9783
  %v9819 = vsel %vm9725, %v9258, %v9785
  %v9820 = vsel %vm9725, %v9259, %v9787
  %v9821 = vsel %vm9725, %v9260, %v9789
  %9838 = vrot.lane.b32.xlu0 %v9485, 16
  %v9839 = vpop.permute.xlu0 %9838
  %9840 = vrot.lane.b32.xlu0 %v9486, 16
  %v9841 = vpop.permute.xlu0 %9840
  %9842 = vrot.lane.b32.xlu0 %v9487, 16
  %v9843 = vpop.permute.xlu0 %9842
  %9844 = vrot.lane.b32.xlu0 %v9488, 16
  %v9845 = vpop.permute.xlu0 %9844
  %9846 = vrot.lane.b32.xlu0 %v9489, 16
  %v9847 = vpop.permute.xlu0 %9846
  %9848 = vrot.lane.b32.xlu0 %v9490, 16
  %v9849 = vpop.permute.xlu0 %9848
  %9850 = vrot.lane.b32.xlu0 %v9491, 16
  %v9851 = vpop.permute.xlu0 %9850
  %9852 = vrot.lane.b32.xlu0 %v9492, 16
  %v9853 = vpop.permute.xlu0 %9852
  %9854 = vrot.lane.b32.xlu0 %v9493, 16
  %v9855 = vpop.permute.xlu0 %9854
  %9856 = vrot.lane.b32.xlu0 %v9494, 16
  %v9857 = vpop.permute.xlu0 %9856
  %9858 = vrot.lane.b32.xlu0 %v9495, 16
  %v9859 = vpop.permute.xlu0 %9858
  %9860 = vrot.lane.b32.xlu0 %v9496, 16
  %v9861 = vpop.permute.xlu0 %9860
  %9862 = vrot.lane.b32.xlu0 %v9497, 16
  %v9863 = vpop.permute.xlu0 %9862
  %9864 = vrot.lane.b32.xlu0 %v9498, 16
  %v9865 = vpop.permute.xlu0 %9864
  %9866 = vrot.lane.b32.xlu0 %v9499, 16
  %v9867 = vpop.permute.xlu0 %9866
  %9868 = vrot.lane.b32.xlu0 %v9500, 16
  %v9869 = vpop.permute.xlu0 %9868
  %v9886 = vsel %vm9725, %v9405, %v9839
  %v9887 = vsel %vm9725, %v9406, %v9841
  %v9888 = vsel %vm9725, %v9407, %v9843
  %v9889 = vsel %vm9725, %v9408, %v9845
  %v9890 = vsel %vm9725, %v9409, %v9847
  %v9891 = vsel %vm9725, %v9410, %v9849
  %v9892 = vsel %vm9725, %v9411, %v9851
  %v9893 = vsel %vm9725, %v9412, %v9853
  %v9894 = vsel %vm9725, %v9413, %v9855
  %v9895 = vsel %vm9725, %v9414, %v9857
  %v9896 = vsel %vm9725, %v9415, %v9859
  %v9897 = vsel %vm9725, %v9416, %v9861
  %v9898 = vsel %vm9725, %v9417, %v9863
  %v9899 = vsel %vm9725, %v9418, %v9865
  %v9900 = vsel %vm9725, %v9419, %v9867
  %v9901 = vsel %vm9725, %v9420, %v9869
  %9918 = vrot.lane.b32.xlu0 %v9645, 16
  %v9919 = vpop.permute.xlu0 %9918
  %9920 = vrot.lane.b32.xlu0 %v9646, 16
  %v9921 = vpop.permute.xlu0 %9920
  %9922 = vrot.lane.b32.xlu0 %v9647, 16
  %v9923 = vpop.permute.xlu0 %9922
  %9924 = vrot.lane.b32.xlu0 %v9648, 16
  %v9925 = vpop.permute.xlu0 %9924
  %9926 = vrot.lane.b32.xlu0 %v9649, 16
  %v9927 = vpop.permute.xlu0 %9926
  %9928 = vrot.lane.b32.xlu0 %v9650, 16
  %v9929 = vpop.permute.xlu0 %9928
  %9930 = vrot.lane.b32.xlu0 %v9651, 16
  %v9931 = vpop.permute.xlu0 %9930
  %9932 = vrot.lane.b32.xlu0 %v9652, 16
  %v9933 = vpop.permute.xlu0 %9932
  %9934 = vrot.lane.b32.xlu0 %v9653, 16
  %v9935 = vpop.permute.xlu0 %9934
  %9936 = vrot.lane.b32.xlu0 %v9654, 16
  %v9937 = vpop.permute.xlu0 %9936
  %9938 = vrot.lane.b32.xlu0 %v9655, 16
  %v9939 = vpop.permute.xlu0 %9938
  %9940 = vrot.lane.b32.xlu0 %v9656, 16
  %v9941 = vpop.permute.xlu0 %9940
  %9942 = vrot.lane.b32.xlu0 %v9657, 16
  %v9943 = vpop.permute.xlu0 %9942
  %9944 = vrot.lane.b32.xlu0 %v9658, 16
  %v9945 = vpop.permute.xlu0 %9944
  %9946 = vrot.lane.b32.xlu0 %v9659, 16
  %v9947 = vpop.permute.xlu0 %9946
  %9948 = vrot.lane.b32.xlu0 %v9660, 16
  %v9949 = vpop.permute.xlu0 %9948
  %v9966 = vsel %vm9725, %v9565, %v9919
  %v9967 = vsel %vm9725, %v9566, %v9921
  %v9968 = vsel %vm9725, %v9567, %v9923
  %v9969 = vsel %vm9725, %v9568, %v9925
  %v9970 = vsel %vm9725, %v9569, %v9927
  %v9971 = vsel %vm9725, %v9570, %v9929
  %v9972 = vsel %vm9725, %v9571, %v9931
  %v9973 = vsel %vm9725, %v9572, %v9933
  %v9974 = vsel %vm9725, %v9573, %v9935
  %v9975 = vsel %vm9725, %v9574, %v9937
  %v9976 = vsel %vm9725, %v9575, %v9939
  %v9977 = vsel %vm9725, %v9576, %v9941
  %v9978 = vsel %vm9725, %v9577, %v9943
  %v9979 = vsel %vm9725, %v9578, %v9945
  %v9980 = vsel %vm9725, %v9579, %v9947
  %v9981 = vsel %vm9725, %v9580, %v9949
  %9998 = vrot.lane.b32.xlu0 %v9806, 32
  %v9999 = vpop.permute.xlu0 %9998
  %10000 = vrot.lane.b32.xlu0 %v9807, 32
  %v10001 = vpop.permute.xlu0 %10000
  %10002 = vrot.lane.b32.xlu0 %v9808, 32
  %v10003 = vpop.permute.xlu0 %10002
  %10004 = vrot.lane.b32.xlu0 %v9809, 32
  %v10005 = vpop.permute.xlu0 %10004
  %10006 = vrot.lane.b32.xlu0 %v9810, 32
  %v10007 = vpop.permute.xlu0 %10006
  %10008 = vrot.lane.b32.xlu0 %v9811, 32
  %v10009 = vpop.permute.xlu0 %10008
  %10010 = vrot.lane.b32.xlu0 %v9812, 32
  %v10011 = vpop.permute.xlu0 %10010
  %10012 = vrot.lane.b32.xlu0 %v9813, 32
  %v10013 = vpop.permute.xlu0 %10012
  %10014 = vrot.lane.b32.xlu0 %v9814, 32
  %v10015 = vpop.permute.xlu0 %10014
  %10016 = vrot.lane.b32.xlu0 %v9815, 32
  %v10017 = vpop.permute.xlu0 %10016
  %10018 = vrot.lane.b32.xlu0 %v9816, 32
  %v10019 = vpop.permute.xlu0 %10018
  %10020 = vrot.lane.b32.xlu0 %v9817, 32
  %v10021 = vpop.permute.xlu0 %10020
  %10022 = vrot.lane.b32.xlu0 %v9818, 32
  %v10023 = vpop.permute.xlu0 %10022
  %10024 = vrot.lane.b32.xlu0 %v9819, 32
  %v10025 = vpop.permute.xlu0 %10024
  %10026 = vrot.lane.b32.xlu0 %v9820, 32
  %v10027 = vpop.permute.xlu0 %10026
  %10028 = vrot.lane.b32.xlu0 %v9821, 32
  %v10029 = vpop.permute.xlu0 %10028
  %vm10046 = vcmask 261120
  %v10047 = vsel %vm10046, %v9726, %v9999
  %v10048 = vsel %vm10046, %v9727, %v10001
  %v10049 = vsel %vm10046, %v9728, %v10003
  %v10050 = vsel %vm10046, %v9729, %v10005
  %v10051 = vsel %vm10046, %v9730, %v10007
  %v10052 = vsel %vm10046, %v9731, %v10009
  %v10053 = vsel %vm10046, %v9732, %v10011
  %v10054 = vsel %vm10046, %v9733, %v10013
  %v10055 = vsel %vm10046, %v9734, %v10015
  %v10056 = vsel %vm10046, %v9735, %v10017
  %v10057 = vsel %vm10046, %v9736, %v10019
  %v10058 = vsel %vm10046, %v9737, %v10021
  %v10059 = vsel %vm10046, %v9738, %v10023
  %v10060 = vsel %vm10046, %v9739, %v10025
  %v10061 = vsel %vm10046, %v9740, %v10027
  %v10062 = vsel %vm10046, %v9741, %v10029
  %10079 = vrot.lane.b32.xlu0 %v9966, 32
  %v10080 = vpop.permute.xlu0 %10079
  %10081 = vrot.lane.b32.xlu0 %v9967, 32
  %v10082 = vpop.permute.xlu0 %10081
  %10083 = vrot.lane.b32.xlu0 %v9968, 32
  %v10084 = vpop.permute.xlu0 %10083
  %10085 = vrot.lane.b32.xlu0 %v9969, 32
  %v10086 = vpop.permute.xlu0 %10085
  %10087 = vrot.lane.b32.xlu0 %v9970, 32
  %v10088 = vpop.permute.xlu0 %10087
  %10089 = vrot.lane.b32.xlu0 %v9971, 32
  %v10090 = vpop.permute.xlu0 %10089
  %10091 = vrot.lane.b32.xlu0 %v9972, 32
  %v10092 = vpop.permute.xlu0 %10091
  %10093 = vrot.lane.b32.xlu0 %v9973, 32
  %v10094 = vpop.permute.xlu0 %10093
  %10095 = vrot.lane.b32.xlu0 %v9974, 32
  %v10096 = vpop.permute.xlu0 %10095
  %10097 = vrot.lane.b32.xlu0 %v9975, 32
  %v10098 = vpop.permute.xlu0 %10097
  %10099 = vrot.lane.b32.xlu0 %v9976, 32
  %v10100 = vpop.permute.xlu0 %10099
  %10101 = vrot.lane.b32.xlu0 %v9977, 32
  %v10102 = vpop.permute.xlu0 %10101
  %10103 = vrot.lane.b32.xlu0 %v9978, 32
  %v10104 = vpop.permute.xlu0 %10103
  %10105 = vrot.lane.b32.xlu0 %v9979, 32
  %v10106 = vpop.permute.xlu0 %10105
  %10107 = vrot.lane.b32.xlu0 %v9980, 32
  %v10108 = vpop.permute.xlu0 %10107
  %10109 = vrot.lane.b32.xlu0 %v9981, 32
  %v10110 = vpop.permute.xlu0 %10109
  %v10127 = vsel %vm10046, %v9886, %v10080
  %v10128 = vsel %vm10046, %v9887, %v10082
  %v10129 = vsel %vm10046, %v9888, %v10084
  %v10130 = vsel %vm10046, %v9889, %v10086
  %v10131 = vsel %vm10046, %v9890, %v10088
  %v10132 = vsel %vm10046, %v9891, %v10090
  %v10133 = vsel %vm10046, %v9892, %v10092
  %v10134 = vsel %vm10046, %v9893, %v10094
  %v10135 = vsel %vm10046, %v9894, %v10096
  %v10136 = vsel %vm10046, %v9895, %v10098
  %v10137 = vsel %vm10046, %v9896, %v10100
  %v10138 = vsel %vm10046, %v9897, %v10102
  %v10139 = vsel %vm10046, %v9898, %v10104
  %v10140 = vsel %vm10046, %v9899, %v10106
  %v10141 = vsel %vm10046, %v9900, %v10108
  %v10142 = vsel %vm10046, %v9901, %v10110
  %10159 = vrot.lane.b32.xlu0 %v10127, 64
  %v10160 = vpop.permute.xlu0 %10159
  %10161 = vrot.lane.b32.xlu0 %v10128, 64
  %v10162 = vpop.permute.xlu0 %10161
  %10163 = vrot.lane.b32.xlu0 %v10129, 64
  %v10164 = vpop.permute.xlu0 %10163
  %10165 = vrot.lane.b32.xlu0 %v10130, 64
  %v10166 = vpop.permute.xlu0 %10165
  %10167 = vrot.lane.b32.xlu0 %v10131, 64
  %v10168 = vpop.permute.xlu0 %10167
  %10169 = vrot.lane.b32.xlu0 %v10132, 64
  %v10170 = vpop.permute.xlu0 %10169
  %10171 = vrot.lane.b32.xlu0 %v10133, 64
  %v10172 = vpop.permute.xlu0 %10171
  %10173 = vrot.lane.b32.xlu0 %v10134, 64
  %v10174 = vpop.permute.xlu0 %10173
  %10175 = vrot.lane.b32.xlu0 %v10135, 64
  %v10176 = vpop.permute.xlu0 %10175
  %10177 = vrot.lane.b32.xlu0 %v10136, 64
  %v10178 = vpop.permute.xlu0 %10177
  %10179 = vrot.lane.b32.xlu0 %v10137, 64
  %v10180 = vpop.permute.xlu0 %10179
  %10181 = vrot.lane.b32.xlu0 %v10138, 64
  %v10182 = vpop.permute.xlu0 %10181
  %10183 = vrot.lane.b32.xlu0 %v10139, 64
  %v10184 = vpop.permute.xlu0 %10183
  %10185 = vrot.lane.b32.xlu0 %v10140, 64
  %v10186 = vpop.permute.xlu0 %10185
  %10187 = vrot.lane.b32.xlu0 %v10141, 64
  %v10188 = vpop.permute.xlu0 %10187
  %10189 = vrot.lane.b32.xlu0 %v10142, 64
  %v10190 = vpop.permute.xlu0 %10189
  %vm10207 = vcmask 523264
  %v10208 = vsel %vm10207, %v10047, %v10160
  %v10209 = vsel %vm10207, %v10048, %v10162
  %v10210 = vsel %vm10207, %v10049, %v10164
  %v10211 = vsel %vm10207, %v10050, %v10166
  %v10212 = vsel %vm10207, %v10051, %v10168
  %v10213 = vsel %vm10207, %v10052, %v10170
  %v10214 = vsel %vm10207, %v10053, %v10172
  %v10215 = vsel %vm10207, %v10054, %v10174
  %v10216 = vsel %vm10207, %v10055, %v10176
  %v10217 = vsel %vm10207, %v10056, %v10178
  %v10218 = vsel %vm10207, %v10057, %v10180
  %v10219 = vsel %vm10207, %v10058, %v10182
  %v10220 = vsel %vm10207, %v10059, %v10184
  %v10221 = vsel %vm10207, %v10060, %v10186
  %v10222 = vsel %vm10207, %v10061, %v10188
  %v10223 = vsel %vm10207, %v10062, %v10190
  %v10224 = vld [vmem:[%s2] sm:$0xff]
  %v10225 = vld [vmem:[%s2 + $0x8] sm:$0xff]
  %v10226 = vld [vmem:[%s2 + $0x10] sm:$0xff]
  %v10227 = vld [vmem:[%s2 + $0x18] sm:$0xff]
  %v10228 = vld [vmem:[%s2 + $0x20] sm:$0xff]
  %v10229 = vld [vmem:[%s2 + $0x28] sm:$0xff]
  %v10230 = vld [vmem:[%s2 + $0x30] sm:$0xff]
  %v10231 = vld [vmem:[%s2 + $0x38] sm:$0xff]
  %v10232 = vld [vmem:[%s2 + $0x40] sm:$0xff]
  %v10233 = vld [vmem:[%s2 + $0x48] sm:$0xff]
  %v10234 = vld [vmem:[%s2 + $0x50] sm:$0xff]
  %v10235 = vld [vmem:[%s2 + $0x58] sm:$0xff]
  %v10236 = vld [vmem:[%s2 + $0x60] sm:$0xff]
  %v10237 = vld [vmem:[%s2 + $0x68] sm:$0xff]
  %v10238 = vld [vmem:[%s2 + $0x70] sm:$0xff]
  %v10239 = vld [vmem:[%s2 + $0x78] sm:$0xff]
  %10240 = vmatpush.msra.mxu0 %v10239
  %10241 = vmatpush.msra.mxu0 %v10238
  %10242 = vmatpush.msra.mxu0 %v10237
  %10243 = vmatpush.msra.mxu0 %v10236
  %10244 = vmatpush.msra.mxu0 %v10235
  %10245 = vmatpush.msra.mxu0 %v10234
  %10246 = vmatpush.msra.mxu0 %v10233
  %10247 = vmatpush.msra.mxu0 %v10232
  %10248 = vmatpush.msra.mxu0 %v10231
  %10249 = vmatpush.msra.mxu0 %v10230
  %10250 = vmatpush.msra.mxu0 %v10229
  %10251 = vmatpush.msra.mxu0 %v10228
  %10252 = vmatpush.msra.mxu0 %v10227
  %10253 = vmatpush.msra.mxu0 %v10226
  %10254 = vmatpush.msra.mxu0 %v10225
  %10255 = vmatpush.msra.mxu0 %v10224
  %10256 = vmatmul.f32.gmra.mxu0 %v10208
  %v10257 = vpop.f32.mrf.mxu0
  %v10258 = vadd.f32 0.0, %v10257
  %10259 = vmatmul.f32.gmra.mxu0 %v10209
  %v10260 = vpop.f32.mrf.mxu0
  %v10261 = vadd.f32 0.0, %v10260
  %10262 = vmatmul.f32.gmra.mxu0 %v10210
  %v10263 = vpop.f32.mrf.mxu0
  %v10264 = vadd.f32 0.0, %v10263
  %10265 = vmatmul.f32.gmra.mxu0 %v10211
  %v10266 = vpop.f32.mrf.mxu0
  %v10267 = vadd.f32 0.0, %v10266
  %10268 = vmatmul.f32.gmra.mxu0 %v10212
  %v10269 = vpop.f32.mrf.mxu0
  %v10270 = vadd.f32 0.0, %v10269
  %10271 = vmatmul.f32.gmra.mxu0 %v10213
  %v10272 = vpop.f32.mrf.mxu0
  %v10273 = vadd.f32 0.0, %v10272
  %10274 = vmatmul.f32.gmra.mxu0 %v10214
  %v10275 = vpop.f32.mrf.mxu0
  %v10276 = vadd.f32 0.0, %v10275
  %10277 = vmatmul.f32.gmra.mxu0 %v10215
  %v10278 = vpop.f32.mrf.mxu0
  %v10279 = vadd.f32 0.0, %v10278
  %10280 = vmatmul.f32.gmra.mxu0 %v10216
  %v10281 = vpop.f32.mrf.mxu0
  %v10282 = vadd.f32 0.0, %v10281
  %10283 = vmatmul.f32.gmra.mxu0 %v10217
  %v10284 = vpop.f32.mrf.mxu0
  %v10285 = vadd.f32 0.0, %v10284
  %10286 = vmatmul.f32.gmra.mxu0 %v10218
  %v10287 = vpop.f32.mrf.mxu0
  %v10288 = vadd.f32 0.0, %v10287
  %10289 = vmatmul.f32.gmra.mxu0 %v10219
  %v10290 = vpop.f32.mrf.mxu0
  %v10291 = vadd.f32 0.0, %v10290
  %10292 = vmatmul.f32.gmra.mxu0 %v10220
  %v10293 = vpop.f32.mrf.mxu0
  %v10294 = vadd.f32 0.0, %v10293
  %10295 = vmatmul.f32.gmra.mxu0 %v10221
  %v10296 = vpop.f32.mrf.mxu0
  %v10297 = vadd.f32 0.0, %v10296
  %10298 = vmatmul.f32.gmra.mxu0 %v10222
  %v10299 = vpop.f32.mrf.mxu0
  %v10300 = vadd.f32 0.0, %v10299
  %10301 = vmatmul.f32.gmra.mxu0 %v10223
  %v10302 = vpop.f32.mrf.mxu0
  %v10303 = vadd.f32 0.0, %v10302
  %10304 = vdwg.mxu0
  %v10305 = vsel %vm9725, %v10258, 0.0
  %v10306 = vsel %vm9725, %v10261, 0.0
  %v10307 = vadd.f32 %v10305, %v10306
  %v10308 = vsel %vm9725, %v10264, 0.0
  %v10309 = vadd.f32 %v10307, %v10308
  %v10310 = vsel %vm9725, %v10267, 0.0
  %v10311 = vadd.f32 %v10309, %v10310
  %v10312 = vsel %vm9725, %v10270, 0.0
  %v10313 = vadd.f32 %v10311, %v10312
  %v10314 = vsel %vm9725, %v10273, 0.0
  %v10315 = vadd.f32 %v10313, %v10314
  %v10316 = vsel %vm9725, %v10276, 0.0
  %v10317 = vadd.f32 %v10315, %v10316
  %v10318 = vsel %vm9725, %v10279, 0.0
  %v10319 = vadd.f32 %v10317, %v10318
  %v10320 = vsel %vm9725, %v10282, 0.0
  %v10321 = vadd.f32 %v10319, %v10320
  %v10322 = vsel %vm9725, %v10285, 0.0
  %v10323 = vadd.f32 %v10321, %v10322
  %v10324 = vsel %vm9725, %v10288, 0.0
  %v10325 = vadd.f32 %v10323, %v10324
  %v10326 = vsel %vm9725, %v10291, 0.0
  %v10327 = vadd.f32 %v10325, %v10326
  %v10328 = vsel %vm9725, %v10294, 0.0
  %v10329 = vadd.f32 %v10327, %v10328
  %v10330 = vsel %vm9725, %v10297, 0.0
  %v10331 = vadd.f32 %v10329, %v10330
  %v10332 = vsel %vm9725, %v10300, 0.0
  %v10333 = vadd.f32 %v10331, %v10332
  %v10334 = vsel %vm9725, %v10303, 0.0
  %v10335 = vadd.f32 %v10333, %v10334
  %v10336 = vrot.slane %v10335, 4
  %v10337 = vadd.f32 %v10335, %v10336
  %v10338 = vrot.slane %v10337, 2
  %v10339 = vadd.f32 %v10337, %v10338
  %v10340 = vrot.slane %v10339, 1
  %v10341 = vadd.f32 %v10339, %v10340
  %v10342 = vrcp.pop 128.0
  %v10343 = vmul.f32 128.0, %v10342
  %v10344 = vsub.f32 1.0, %v10343
  %v10345 = vmul.f32 %v10342, %v10344
  %v10346 = vadd.f32 %v10342, %v10345
  %vm10347 = vweird.f32 %v10342
  %v10348 = vsel %vm10347, %v10342, %v10346
  %v10349 = vmul.f32 %v10341, %v10348
  %v10350 = vsub.f32 %v10258, %v10349
  %v10351 = vsub.f32 %v10261, %v10349
  %v10352 = vsub.f32 %v10264, %v10349
  %v10353 = vsub.f32 %v10267, %v10349
  %v10354 = vsub.f32 %v10270, %v10349
  %v10355 = vsub.f32 %v10273, %v10349
  %v10356 = vsub.f32 %v10276, %v10349
  %v10357 = vsub.f32 %v10279, %v10349
  %v10358 = vsub.f32 %v10282, %v10349
  %v10359 = vsub.f32 %v10285, %v10349
  %v10360 = vsub.f32 %v10288, %v10349
  %v10361 = vsub.f32 %v10291, %v10349
  %v10362 = vsub.f32 %v10294, %v10349
  %v10363 = vsub.f32 %v10297, %v10349
  %v10364 = vsub.f32 %v10300, %v10349
  %v10365 = vsub.f32 %v10303, %v10349
  %v10366 = vmul.f32 %v10350, %v10350
  %v10367 = vmul.f32 %v10351, %v10351
  %v10368 = vmul.f32 %v10352, %v10352
  %v10369 = vmul.f32 %v10353, %v10353
  %v10370 = vmul.f32 %v10354, %v10354
  %v10371 = vmul.f32 %v10355, %v10355
  %v10372 = vmul.f32 %v10356, %v10356
  %v10373 = vmul.f32 %v10357, %v10357
  %v10374 = vmul.f32 %v10358, %v10358
  %v10375 = vmul.f32 %v10359, %v10359
  %v10376 = vmul.f32 %v10360, %v10360
  %v10377 = vmul.f32 %v10361, %v10361
  %v10378 = vmul.f32 %v10362, %v10362
  %v10379 = vmul.f32 %v10363, %v10363
  %v10380 = vmul.f32 %v10364, %v10364
  %v10381 = vmul.f32 %v10365, %v10365
  %v10382 = vsel %vm9725, %v10366, 0.0
  %v10383 = vsel %vm9725, %v10367, 0.0
  %v10384 = vadd.f32 %v10382, %v10383
  %v10385 = vsel %vm9725, %v10368, 0.0
  %v10386 = vadd.f32 %v10384, %v10385
  %v10387 = vsel %vm9725, %v10369, 0.0
  %v10388 = vadd.f32 %v10386, %v10387
  %v10389 = vsel %vm9725, %v10370, 0.0
  %v10390 = vadd.f32 %v10388, %v10389
  %v10391 = vsel %vm9725, %v10371, 0.0
  %v10392 = vadd.f32 %v10390, %v10391
  %v10393 = vsel %vm9725, %v10372, 0.0
  %v10394 = vadd.f32 %v10392, %v10393
  %v10395 = vsel %vm9725, %v10373, 0.0
  %v10396 = vadd.f32 %v10394, %v10395
  %v10397 = vsel %vm9725, %v10374, 0.0
  %v10398 = vadd.f32 %v10396, %v10397
  %v10399 = vsel %vm9725, %v10375, 0.0
  %v10400 = vadd.f32 %v10398, %v10399
  %v10401 = vsel %vm9725, %v10376, 0.0
  %v10402 = vadd.f32 %v10400, %v10401
  %v10403 = vsel %vm9725, %v10377, 0.0
  %v10404 = vadd.f32 %v10402, %v10403
  %v10405 = vsel %vm9725, %v10378, 0.0
  %v10406 = vadd.f32 %v10404, %v10405
  %v10407 = vsel %vm9725, %v10379, 0.0
  %v10408 = vadd.f32 %v10406, %v10407
  %v10409 = vsel %vm9725, %v10380, 0.0
  %v10410 = vadd.f32 %v10408, %v10409
  %v10411 = vsel %vm9725, %v10381, 0.0
  %v10412 = vadd.f32 %v10410, %v10411
  %v10413 = vrot.slane %v10412, 4
  %v10414 = vadd.f32 %v10412, %v10413
  %v10415 = vrot.slane %v10414, 2
  %v10416 = vadd.f32 %v10414, %v10415
  %v10417 = vrot.slane %v10416, 1
  %v10418 = vadd.f32 %v10416, %v10417
  %v10419 = vmul.f32 %v10418, %v10348
  %v10420 = vadd.f32 %v10419, 1e-05
  %v10421 = vrsqrt.pop %v10420
  %v10422 = vmul.f32 %v10421, %v10420
  %v10423 = vmul.f32 %v10422, %v10421
  %v10424 = vmul.f32 0.5, %v10423
  %v10425 = vsub.f32 1.5, %v10424
  %v10426 = vmul.f32 %v10421, %v10425
  %vm10427 = vweird.f32 %v10420
  %vm10428 = vweird.f32 %v10421
  %vm10429 = vmor %vm10427, %vm10428
  %v10430 = vsel %vm10429, %v10421, %v10426
  %v10431 = vmul.f32 %v10350, %v10430
  %v10432 = vmul.f32 %v10351, %v10430
  %v10433 = vmul.f32 %v10352, %v10430
  %v10434 = vmul.f32 %v10353, %v10430
  %v10435 = vmul.f32 %v10354, %v10430
  %v10436 = vmul.f32 %v10355, %v10430
  %v10437 = vmul.f32 %v10356, %v10430
  %v10438 = vmul.f32 %v10357, %v10430
  %v10439 = vmul.f32 %v10358, %v10430
  %v10440 = vmul.f32 %v10359, %v10430
  %v10441 = vmul.f32 %v10360, %v10430
  %v10442 = vmul.f32 %v10361, %v10430
  %v10443 = vmul.f32 %v10362, %v10430
  %v10444 = vmul.f32 %v10363, %v10430
  %v10445 = vmul.f32 %v10364, %v10430
  %v10446 = vmul.f32 %v10365, %v10430
  %v10447 = vld [vmem:[%s5] sm:$0x1]
  %v10449 = vperm.slane %v10447, 0
  %v10451 = vmul.f32 %v10431, %v10449
  %v10452 = vmul.f32 %v10432, %v10449
  %v10453 = vmul.f32 %v10433, %v10449
  %v10454 = vmul.f32 %v10434, %v10449
  %v10455 = vmul.f32 %v10435, %v10449
  %v10456 = vmul.f32 %v10436, %v10449
  %v10457 = vmul.f32 %v10437, %v10449
  %v10458 = vmul.f32 %v10438, %v10449
  %v10459 = vmul.f32 %v10439, %v10449
  %v10460 = vmul.f32 %v10440, %v10449
  %v10461 = vmul.f32 %v10441, %v10449
  %v10462 = vmul.f32 %v10442, %v10449
  %v10463 = vmul.f32 %v10443, %v10449
  %v10464 = vmul.f32 %v10444, %v10449
  %v10465 = vmul.f32 %v10445, %v10449
  %v10466 = vmul.f32 %v10446, %v10449
  %v10467 = vld [vmem:[%s6] sm:$0x1]
  %v10469 = vperm.slane %v10467, 0
  %v10471 = vadd.f32 %v10451, %v10469
  %v10472 = vadd.f32 %v10452, %v10469
  %v10473 = vadd.f32 %v10453, %v10469
  %v10474 = vadd.f32 %v10454, %v10469
  %v10475 = vadd.f32 %v10455, %v10469
  %v10476 = vadd.f32 %v10456, %v10469
  %v10477 = vadd.f32 %v10457, %v10469
  %v10478 = vadd.f32 %v10458, %v10469
  %v10479 = vadd.f32 %v10459, %v10469
  %v10480 = vadd.f32 %v10460, %v10469
  %v10481 = vadd.f32 %v10461, %v10469
  %v10482 = vadd.f32 %v10462, %v10469
  %v10483 = vadd.f32 %v10463, %v10469
  %v10484 = vadd.f32 %v10464, %v10469
  %v10485 = vadd.f32 %v10465, %v10469
  %v10486 = vadd.f32 %v10466, %v10469
  %vm10487 = vcmp.ge.f32.partialorder %v10471, 0.0
  %vm10488 = vcmp.ge.f32.partialorder %v10472, 0.0
  %vm10489 = vcmp.ge.f32.partialorder %v10473, 0.0
  %vm10490 = vcmp.ge.f32.partialorder %v10474, 0.0
  %vm10491 = vcmp.ge.f32.partialorder %v10475, 0.0
  %vm10492 = vcmp.ge.f32.partialorder %v10476, 0.0
  %vm10493 = vcmp.ge.f32.partialorder %v10477, 0.0
  %vm10494 = vcmp.ge.f32.partialorder %v10478, 0.0
  %vm10495 = vcmp.ge.f32.partialorder %v10479, 0.0
  %vm10496 = vcmp.ge.f32.partialorder %v10480, 0.0
  %vm10497 = vcmp.ge.f32.partialorder %v10481, 0.0
  %vm10498 = vcmp.ge.f32.partialorder %v10482, 0.0
  %vm10499 = vcmp.ge.f32.partialorder %v10483, 0.0
  %vm10500 = vcmp.ge.f32.partialorder %v10484, 0.0
  %vm10501 = vcmp.ge.f32.partialorder %v10485, 0.0
  %vm10502 = vcmp.ge.f32.partialorder %v10486, 0.0
  %v10503 = vmul.f32 %v10471, 0.2
  %v10504 = vmul.f32 %v10472, 0.2
  %v10505 = vmul.f32 %v10473, 0.2
  %v10506 = vmul.f32 %v10474, 0.2
  %v10507 = vmul.f32 %v10475, 0.2
  %v10508 = vmul.f32 %v10476, 0.2
  %v10509 = vmul.f32 %v10477, 0.2
  %v10510 = vmul.f32 %v10478, 0.2
  %v10511 = vmul.f32 %v10479, 0.2
  %v10512 = vmul.f32 %v10480, 0.2
  %v10513 = vmul.f32 %v10481, 0.2
  %v10514 = vmul.f32 %v10482, 0.2
  %v10515 = vmul.f32 %v10483, 0.2
  %v10516 = vmul.f32 %v10484, 0.2
  %v10517 = vmul.f32 %v10485, 0.2
  %v10518 = vmul.f32 %v10486, 0.2
  %v10519 = vsel %vm10487, %v10471, %v10503
  %v10520 = vsel %vm10488, %v10472, %v10504
  %v10521 = vsel %vm10489, %v10473, %v10505
  %v10522 = vsel %vm10490, %v10474, %v10506
  %v10523 = vsel %vm10491, %v10475, %v10507
  %v10524 = vsel %vm10492, %v10476, %v10508
  %v10525 = vsel %vm10493, %v10477, %v10509
  %v10526 = vsel %vm10494, %v10478, %v10510
  %v10527 = vsel %vm10495, %v10479, %v10511
  %v10528 = vsel %vm10496, %v10480, %v10512
  %v10529 = vsel %vm10497, %v10481, %v10513
  %v10530 = vsel %vm10498, %v10482, %v10514
  %v10531 = vsel %vm10499, %v10483, %v10515
  %v10532 = vsel %vm10500, %v10484, %v10516
  %v10533 = vsel %vm10501, %v10485, %v10517
  %v10534 = vsel %vm10502, %v10486, %v10518
  %10535 = vst.msk [vmem:[#allocation4] sm:$0xff] %vm9725, 0.0
  %vm10536 = vcmask 123904
  %10537 = vst.msk [vmem:[#allocation4 + $0x8] sm:$0x3] %vm10536, 0.0
  %10538 = vst.msk [vmem:[#allocation4 + $0x10] sm:$0xff] %vm9725, 0.0
  %10539 = vst.msk [vmem:[#allocation4 + $0x18] sm:$0x3] %vm10536, 0.0
  %10540 = vst.msk [vmem:[#allocation4 + $0x20] sm:$0xff] %vm9725, 0.0
  %10541 = vst.msk [vmem:[#allocation4 + $0x28] sm:$0x3] %vm10536, 0.0
  %10542 = vst.msk [vmem:[#allocation4 + $0x30] sm:$0xff] %vm9725, 0.0
  %10543 = vst.msk [vmem:[#allocation4 + $0x38] sm:$0x3] %vm10536, 0.0
  %10544 = vst.msk [vmem:[#allocation4 + $0x40] sm:$0xff] %vm9725, 0.0
  %10545 = vst.msk [vmem:[#allocation4 + $0x48] sm:$0x3] %vm10536, 0.0
  %10546 = vst.msk [vmem:[#allocation4 + $0x50] sm:$0xff] %vm9725, 0.0
  %10547 = vst.msk [vmem:[#allocation4 + $0x58] sm:$0x3] %vm10536, 0.0
  %10548 = vst.msk [vmem:[#allocation4 + $0x60] sm:$0xff] %vm9725, 0.0
  %10549 = vst.msk [vmem:[#allocation4 + $0x68] sm:$0x3] %vm10536, 0.0
  %10550 = vst.msk [vmem:[#allocation4 + $0x70] sm:$0xff] %vm9725, 0.0
  %10551 = vst.msk [vmem:[#allocation4 + $0x78] sm:$0x3] %vm10536, 0.0
  %10552 = vst.msk [vmem:[#allocation4 + $0x80] sm:$0xff] %vm9725, 0.0
  %10553 = vst.msk [vmem:[#allocation4 + $0x88] sm:$0x3] %vm10536, 0.0
  %10554 = vst.msk [vmem:[#allocation4 + $0x90] sm:$0xff] %vm9725, 0.0
  %10555 = vst.msk [vmem:[#allocation4 + $0x98] sm:$0x3] %vm10536, 0.0
  %10556 = vst.msk [vmem:[#allocation4 + $0xa0] sm:$0xff] %vm9725, 0.0
  %10557 = vst.msk [vmem:[#allocation4 + $0xa8] sm:$0x3] %vm10536, 0.0
  %10558 = vst.msk [vmem:[#allocation4 + $0xb0] sm:$0xff] %vm9725, 0.0
  %10559 = vst.msk [vmem:[#allocation4 + $0xb8] sm:$0x3] %vm10536, 0.0
  %10560 = vst.msk [vmem:[#allocation4 + $0xc0] sm:$0xff] %vm9725, 0.0
  %10561 = vst.msk [vmem:[#allocation4 + $0xc8] sm:$0x3] %vm10536, 0.0
  %10562 = vst.msk [vmem:[#allocation4 + $0xd0] sm:$0xff] %vm9725, 0.0
  %10563 = vst.msk [vmem:[#allocation4 + $0xd8] sm:$0x3] %vm10536, 0.0
  %10564 = vst.msk [vmem:[#allocation4 + $0xe0] sm:$0xff] %vm9725, 0.0
  %10565 = vst.msk [vmem:[#allocation4 + $0xe8] sm:$0x3] %vm10536, 0.0
  %10566 = vst.msk [vmem:[#allocation4 + $0xf0] sm:$0xff] %vm9725, 0.0
  %10567 = vst.msk [vmem:[#allocation4 + $0xf8] sm:$0x3] %vm10536, 0.0
  %10568 = vst.msk [vmem:[#allocation4 + $0x100] sm:$0xff] %vm9725, 0.0
  %10569 = vst.msk [vmem:[#allocation4 + $0x108] sm:$0x3] %vm10536, 0.0
  %10570 = vst.msk [vmem:[#allocation4 + $0x110] sm:$0xff] %vm9725, 0.0
  %10571 = vst.msk [vmem:[#allocation4 + $0x118] sm:$0x3] %vm10536, 0.0
  %10572 = vst.msk [vmem:[#allocation4 + $0x120] sm:$0xff] %vm9725, 0.0
  %10573 = vst.msk [vmem:[#allocation4 + $0x128] sm:$0x3] %vm10536, 0.0
  %10574 = vst.msk [vmem:[#allocation4 + $0x130] sm:$0xff] %vm9725, 0.0
  %10575 = vst.msk [vmem:[#allocation4 + $0x138] sm:$0x3] %vm10536, 0.0
  %s10576 = scalar_lea.vmem [#allocation4], 16
  %10577 = vst.msk [vmem:[%s10576 + $0x1] sm:$0xff] %vm9725, %v10519
  %10578 = vst.msk [vmem:[%s10576 + $0x11] sm:$0xff] %vm9725, %v10520
  %10579 = vst.msk [vmem:[%s10576 + $0x21] sm:$0xff] %vm9725, %v10521
  %10580 = vst.msk [vmem:[%s10576 + $0x31] sm:$0xff] %vm9725, %v10522
  %10581 = vst.msk [vmem:[%s10576 + $0x41] sm:$0xff] %vm9725, %v10523
  %10582 = vst.msk [vmem:[%s10576 + $0x51] sm:$0xff] %vm9725, %v10524
  %10583 = vst.msk [vmem:[%s10576 + $0x61] sm:$0xff] %vm9725, %v10525
  %10584 = vst.msk [vmem:[%s10576 + $0x71] sm:$0xff] %vm9725, %v10526
  %10585 = vst.msk [vmem:[%s10576 + $0xa1] sm:$0xff] %vm9725, %v10527
  %10586 = vst.msk [vmem:[%s10576 + $0xb1] sm:$0xff] %vm9725, %v10528
  %10587 = vst.msk [vmem:[%s10576 + $0xc1] sm:$0xff] %vm9725, %v10529
  %10588 = vst.msk [vmem:[%s10576 + $0xd1] sm:$0xff] %vm9725, %v10530
  %10589 = vst.msk [vmem:[%s10576 + $0xe1] sm:$0xff] %vm9725, %v10531
  %10590 = vst.msk [vmem:[%s10576 + $0xf1] sm:$0xff] %vm9725, %v10532
  %10591 = vst.msk [vmem:[%s10576 + $0x101] sm:$0xff] %vm9725, %v10533
  %10592 = vst.msk [vmem:[%s10576 + $0x111] sm:$0xff] %vm9725, %v10534
  %v10593 = vld [vmem:[#allocation4] ss:$2 sm:$0xf]
  %s10594 = scalar_lea.vmem [#allocation4], 32
  %v10595 = vld [vmem:[%s10594] ss:$2 sm:$0xf]
  %s10596 = scalar_lea.vmem [#allocation4], 64
  %v10597 = vld [vmem:[%s10596] ss:$2 sm:$0xf]
  %s10598 = scalar_lea.vmem [#allocation4], 96
  %v10599 = vld [vmem:[%s10598] ss:$2 sm:$0xf]
  %s10600 = scalar_lea.vmem [#allocation4], 160
  %v10601 = vld [vmem:[%s10600] ss:$2 sm:$0xf]
  %s10602 = scalar_lea.vmem [#allocation4], 192
  %v10603 = vld [vmem:[%s10602] ss:$2 sm:$0xf]
  %s10604 = scalar_lea.vmem [#allocation4], 224
  %v10605 = vld [vmem:[%s10604] ss:$2 sm:$0xf]
  %s10606 = scalar_lea.vmem [#allocation4], 256
  %v10607 = vld [vmem:[%s10606] ss:$2 sm:$0xf]
  %s10608 = scalar_lea.vmem [#allocation4], 1
  %v10609 = vld [vmem:[%s10608] ss:$2 sm:$0xf]
  %s10610 = scalar_lea.vmem [#allocation4], 33
  %v10611 = vld [vmem:[%s10610] ss:$2 sm:$0xf]
  %s10612 = scalar_lea.vmem [#allocation4], 65
  %v10613 = vld [vmem:[%s10612] ss:$2 sm:$0xf]
  %s10614 = scalar_lea.vmem [#allocation4], 97
  %v10615 = vld [vmem:[%s10614] ss:$2 sm:$0xf]
  %s10616 = scalar_lea.vmem [#allocation4], 161
  %v10617 = vld [vmem:[%s10616] ss:$2 sm:$0xf]
  %s10618 = scalar_lea.vmem [#allocation4], 193
  %v10619 = vld [vmem:[%s10618] ss:$2 sm:$0xf]
  %s10620 = scalar_lea.vmem [#allocation4], 225
  %v10621 = vld [vmem:[%s10620] ss:$2 sm:$0xf]
  %s10622 = scalar_lea.vmem [#allocation4], 257
  %v10623 = vld [vmem:[%s10622] ss:$2 sm:$0xf]
  %s10624 = scalar_lea.vmem [#allocation4], 2
  %v10625 = vld [vmem:[%s10624] ss:$2 sm:$0xf]
  %s10626 = scalar_lea.vmem [#allocation4], 34
  %v10627 = vld [vmem:[%s10626] ss:$2 sm:$0xf]
  %s10628 = scalar_lea.vmem [#allocation4], 66
  %v10629 = vld [vmem:[%s10628] ss:$2 sm:$0xf]
  %s10630 = scalar_lea.vmem [#allocation4], 98
  %v10631 = vld [vmem:[%s10630] ss:$2 sm:$0xf]
  %s10632 = scalar_lea.vmem [#allocation4], 162
  %v10633 = vld [vmem:[%s10632] ss:$2 sm:$0xf]
  %s10634 = scalar_lea.vmem [#allocation4], 194
  %v10635 = vld [vmem:[%s10634] ss:$2 sm:$0xf]
  %s10636 = scalar_lea.vmem [#allocation4], 226
  %v10637 = vld [vmem:[%s10636] ss:$2 sm:$0xf]
  %s10638 = scalar_lea.vmem [#allocation4], 258
  %v10639 = vld [vmem:[%s10638] ss:$2 sm:$0xf]
  %s10640 = scalar_lea.vmem [#allocation4], 3
  %v10641 = vld [vmem:[%s10640] ss:$2 sm:$0xf]
  %s10642 = scalar_lea.vmem [#allocation4], 35
  %v10643 = vld [vmem:[%s10642] ss:$2 sm:$0xf]
  %s10644 = scalar_lea.vmem [#allocation4], 67
  %v10645 = vld [vmem:[%s10644] ss:$2 sm:$0xf]
  %s10646 = scalar_lea.vmem [#allocation4], 99
  %v10647 = vld [vmem:[%s10646] ss:$2 sm:$0xf]
  %s10648 = scalar_lea.vmem [#allocation4], 163
  %v10649 = vld [vmem:[%s10648] ss:$2 sm:$0xf]
  %s10650 = scalar_lea.vmem [#allocation4], 195
  %v10651 = vld [vmem:[%s10650] ss:$2 sm:$0xf]
  %s10652 = scalar_lea.vmem [#allocation4], 227
  %v10653 = vld [vmem:[%s10652] ss:$2 sm:$0xf]
  %s10654 = scalar_lea.vmem [#allocation4], 259
  %v10655 = vld [vmem:[%s10654] ss:$2 sm:$0xf]
  %v10656 = vld [vmem:[%s10576] ss:$2 sm:$0xf]
  %s10657 = scalar_lea.vmem %s10576, 32 [#allocation4]
  %v10658 = vld [vmem:[%s10657] ss:$2 sm:$0xf]
  %s10659 = scalar_lea.vmem %s10576, 64 [#allocation4]
  %v10660 = vld [vmem:[%s10659] ss:$2 sm:$0xf]
  %s10661 = scalar_lea.vmem %s10576, 96 [#allocation4]
  %v10662 = vld [vmem:[%s10661] ss:$2 sm:$0xf]
  %s10663 = scalar_lea.vmem %s10576, 160 [#allocation4]
  %v10664 = vld [vmem:[%s10663] ss:$2 sm:$0xf]
  %s10665 = scalar_lea.vmem %s10576, 192 [#allocation4]
  %v10666 = vld [vmem:[%s10665] ss:$2 sm:$0xf]
  %s10667 = scalar_lea.vmem %s10576, 224 [#allocation4]
  %v10668 = vld [vmem:[%s10667] ss:$2 sm:$0xf]
  %s10669 = scalar_lea.vmem %s10576, 256 [#allocation4]
  %v10670 = vld [vmem:[%s10669] ss:$2 sm:$0xf]
  %s10671 = scalar_lea.vmem %s10576, 1 [#allocation4]
  %v10672 = vld [vmem:[%s10671] ss:$2 sm:$0xf]
  %s10673 = scalar_lea.vmem %s10576, 33 [#allocation4]
  %v10674 = vld [vmem:[%s10673] ss:$2 sm:$0xf]
  %s10675 = scalar_lea.vmem %s10576, 65 [#allocation4]
  %v10676 = vld [vmem:[%s10675] ss:$2 sm:$0xf]
  %s10677 = scalar_lea.vmem %s10576, 97 [#allocation4]
  %v10678 = vld [vmem:[%s10677] ss:$2 sm:$0xf]
  %s10679 = scalar_lea.vmem %s10576, 161 [#allocation4]
  %v10680 = vld [vmem:[%s10679] ss:$2 sm:$0xf]
  %s10681 = scalar_lea.vmem %s10576, 193 [#allocation4]
  %v10682 = vld [vmem:[%s10681] ss:$2 sm:$0xf]
  %s10683 = scalar_lea.vmem %s10576, 225 [#allocation4]
  %v10684 = vld [vmem:[%s10683] ss:$2 sm:$0xf]
  %s10685 = scalar_lea.vmem %s10576, 257 [#allocation4]
  %v10686 = vld [vmem:[%s10685] ss:$2 sm:$0xf]
  %s10687 = scalar_lea.vmem %s10576, 2 [#allocation4]
  %v10688 = vld [vmem:[%s10687] ss:$2 sm:$0xf]
  %s10689 = scalar_lea.vmem %s10576, 34 [#allocation4]
  %v10690 = vld [vmem:[%s10689] ss:$2 sm:$0xf]
  %s10691 = scalar_lea.vmem %s10576, 66 [#allocation4]
  %v10692 = vld [vmem:[%s10691] ss:$2 sm:$0xf]
  %s10693 = scalar_lea.vmem %s10576, 98 [#allocation4]
  %v10694 = vld [vmem:[%s10693] ss:$2 sm:$0xf]
  %s10695 = scalar_lea.vmem %s10576, 162 [#allocation4]
  %v10696 = vld [vmem:[%s10695] ss:$2 sm:$0xf]
  %s10697 = scalar_lea.vmem %s10576, 194 [#allocation4]
  %v10698 = vld [vmem:[%s10697] ss:$2 sm:$0xf]
  %s10699 = scalar_lea.vmem %s10576, 226 [#allocation4]
  %v10700 = vld [vmem:[%s10699] ss:$2 sm:$0xf]
  %s10701 = scalar_lea.vmem %s10576, 258 [#allocation4]
  %v10702 = vld [vmem:[%s10701] ss:$2 sm:$0xf]
  %s10703 = scalar_lea.vmem %s10576, 3 [#allocation4]
  %v10704 = vld [vmem:[%s10703] ss:$2 sm:$0xf]
  %s10705 = scalar_lea.vmem %s10576, 35 [#allocation4]
  %v10706 = vld [vmem:[%s10705] ss:$2 sm:$0xf]
  %s10707 = scalar_lea.vmem %s10576, 67 [#allocation4]
  %v10708 = vld [vmem:[%s10707] ss:$2 sm:$0xf]
  %s10709 = scalar_lea.vmem %s10576, 99 [#allocation4]
  %v10710 = vld [vmem:[%s10709] ss:$2 sm:$0xf]
  %s10711 = scalar_lea.vmem %s10576, 163 [#allocation4]
  %v10712 = vld [vmem:[%s10711] ss:$2 sm:$0xf]
  %s10713 = scalar_lea.vmem %s10576, 195 [#allocation4]
  %v10714 = vld [vmem:[%s10713] ss:$2 sm:$0xf]
  %s10715 = scalar_lea.vmem %s10576, 227 [#allocation4]
  %v10716 = vld [vmem:[%s10715] ss:$2 sm:$0xf]
  %s10717 = scalar_lea.vmem %s10576, 259 [#allocation4]
  %v10718 = vld [vmem:[%s10717] ss:$2 sm:$0xf]
  %s10719 = scalar_lea.vmem [#allocation4], 32
  %v10720 = vld [vmem:[%s10719] ss:$2 sm:$0xf]
  %s10721 = scalar_lea.vmem %s10719, 32 [#allocation4]
  %v10722 = vld [vmem:[%s10721] ss:$2 sm:$0xf]
  %s10723 = scalar_lea.vmem %s10719, 64 [#allocation4]
  %v10724 = vld [vmem:[%s10723] ss:$2 sm:$0xf]
  %s10725 = scalar_lea.vmem %s10719, 96 [#allocation4]
  %v10726 = vld [vmem:[%s10725] ss:$2 sm:$0xf]
  %s10727 = scalar_lea.vmem %s10719, 160 [#allocation4]
  %v10728 = vld [vmem:[%s10727] ss:$2 sm:$0xf]
  %s10729 = scalar_lea.vmem %s10719, 192 [#allocation4]
  %v10730 = vld [vmem:[%s10729] ss:$2 sm:$0xf]
  %s10731 = scalar_lea.vmem %s10719, 224 [#allocation4]
  %v10732 = vld [vmem:[%s10731] ss:$2 sm:$0xf]
  %s10733 = scalar_lea.vmem %s10719, 256 [#allocation4]
  %v10734 = vld [vmem:[%s10733] ss:$2 sm:$0xf]
  %s10735 = scalar_lea.vmem %s10719, 1 [#allocation4]
  %v10736 = vld [vmem:[%s10735] ss:$2 sm:$0xf]
  %s10737 = scalar_lea.vmem %s10719, 33 [#allocation4]
  %v10738 = vld [vmem:[%s10737] ss:$2 sm:$0xf]
  %s10739 = scalar_lea.vmem %s10719, 65 [#allocation4]
  %v10740 = vld [vmem:[%s10739] ss:$2 sm:$0xf]
  %s10741 = scalar_lea.vmem %s10719, 97 [#allocation4]
  %v10742 = vld [vmem:[%s10741] ss:$2 sm:$0xf]
  %s10743 = scalar_lea.vmem %s10719, 161 [#allocation4]
  %v10744 = vld [vmem:[%s10743] ss:$2 sm:$0xf]
  %s10745 = scalar_lea.vmem %s10719, 193 [#allocation4]
  %v10746 = vld [vmem:[%s10745] ss:$2 sm:$0xf]
  %s10747 = scalar_lea.vmem %s10719, 225 [#allocation4]
  %v10748 = vld [vmem:[%s10747] ss:$2 sm:$0xf]
  %s10749 = scalar_lea.vmem %s10719, 257 [#allocation4]
  %v10750 = vld [vmem:[%s10749] ss:$2 sm:$0xf]
  %s10751 = scalar_lea.vmem %s10719, 2 [#allocation4]
  %v10752 = vld [vmem:[%s10751] ss:$2 sm:$0xf]
  %s10753 = scalar_lea.vmem %s10719, 34 [#allocation4]
  %v10754 = vld [vmem:[%s10753] ss:$2 sm:$0xf]
  %s10755 = scalar_lea.vmem %s10719, 66 [#allocation4]
  %v10756 = vld [vmem:[%s10755] ss:$2 sm:$0xf]
  %s10757 = scalar_lea.vmem %s10719, 98 [#allocation4]
  %v10758 = vld [vmem:[%s10757] ss:$2 sm:$0xf]
  %s10759 = scalar_lea.vmem %s10719, 162 [#allocation4]
  %v10760 = vld [vmem:[%s10759] ss:$2 sm:$0xf]
  %s10761 = scalar_lea.vmem %s10719, 194 [#allocation4]
  %v10762 = vld [vmem:[%s10761] ss:$2 sm:$0xf]
  %s10763 = scalar_lea.vmem %s10719, 226 [#allocation4]
  %v10764 = vld [vmem:[%s10763] ss:$2 sm:$0xf]
  %s10765 = scalar_lea.vmem %s10719, 258 [#allocation4]
  %v10766 = vld [vmem:[%s10765] ss:$2 sm:$0xf]
  %s10767 = scalar_lea.vmem %s10719, 3 [#allocation4]
  %v10768 = vld [vmem:[%s10767] ss:$2 sm:$0xf]
  %s10769 = scalar_lea.vmem %s10719, 35 [#allocation4]
  %v10770 = vld [vmem:[%s10769] ss:$2 sm:$0xf]
  %s10771 = scalar_lea.vmem %s10719, 67 [#allocation4]
  %v10772 = vld [vmem:[%s10771] ss:$2 sm:$0xf]
  %s10773 = scalar_lea.vmem %s10719, 99 [#allocation4]
  %v10774 = vld [vmem:[%s10773] ss:$2 sm:$0xf]
  %s10775 = scalar_lea.vmem %s10719, 163 [#allocation4]
  %v10776 = vld [vmem:[%s10775] ss:$2 sm:$0xf]
  %s10777 = scalar_lea.vmem %s10719, 195 [#allocation4]
  %v10778 = vld [vmem:[%s10777] ss:$2 sm:$0xf]
  %s10779 = scalar_lea.vmem %s10719, 227 [#allocation4]
  %v10780 = vld [vmem:[%s10779] ss:$2 sm:$0xf]
  %s10781 = scalar_lea.vmem %s10719, 259 [#allocation4]
  %v10782 = vld [vmem:[%s10781] ss:$2 sm:$0xf]
  %s10783 = scalar_lea.vmem [#allocation4], 48
  %v10784 = vld [vmem:[%s10783] ss:$2 sm:$0xf]
  %s10785 = scalar_lea.vmem %s10783, 32 [#allocation4]
  %v10786 = vld [vmem:[%s10785] ss:$2 sm:$0xf]
  %s10787 = scalar_lea.vmem %s10783, 64 [#allocation4]
  %v10788 = vld [vmem:[%s10787] ss:$2 sm:$0xf]
  %s10789 = scalar_lea.vmem %s10783, 96 [#allocation4]
  %v10790 = vld [vmem:[%s10789] ss:$2 sm:$0xf]
  %s10791 = scalar_lea.vmem %s10783, 160 [#allocation4]
  %v10792 = vld [vmem:[%s10791] ss:$2 sm:$0xf]
  %s10793 = scalar_lea.vmem %s10783, 192 [#allocation4]
  %v10794 = vld [vmem:[%s10793] ss:$2 sm:$0xf]
  %s10795 = scalar_lea.vmem %s10783, 224 [#allocation4]
  %v10796 = vld [vmem:[%s10795] ss:$2 sm:$0xf]
  %s10797 = scalar_lea.vmem %s10783, 256 [#allocation4]
  %v10798 = vld [vmem:[%s10797] ss:$2 sm:$0xf]
  %s10799 = scalar_lea.vmem %s10783, 1 [#allocation4]
  %v10800 = vld [vmem:[%s10799] ss:$2 sm:$0xf]
  %s10801 = scalar_lea.vmem %s10783, 33 [#allocation4]
  %v10802 = vld [vmem:[%s10801] ss:$2 sm:$0xf]
  %s10803 = scalar_lea.vmem %s10783, 65 [#allocation4]
  %v10804 = vld [vmem:[%s10803] ss:$2 sm:$0xf]
  %s10805 = scalar_lea.vmem %s10783, 97 [#allocation4]
  %v10806 = vld [vmem:[%s10805] ss:$2 sm:$0xf]
  %s10807 = scalar_lea.vmem %s10783, 161 [#allocation4]
  %v10808 = vld [vmem:[%s10807] ss:$2 sm:$0xf]
  %s10809 = scalar_lea.vmem %s10783, 193 [#allocation4]
  %v10810 = vld [vmem:[%s10809] ss:$2 sm:$0xf]
  %s10811 = scalar_lea.vmem %s10783, 225 [#allocation4]
  %v10812 = vld [vmem:[%s10811] ss:$2 sm:$0xf]
  %s10813 = scalar_lea.vmem %s10783, 257 [#allocation4]
  %v10814 = vld [vmem:[%s10813] ss:$2 sm:$0xf]
  %s10815 = scalar_lea.vmem %s10783, 2 [#allocation4]
  %v10816 = vld [vmem:[%s10815] ss:$2 sm:$0xf]
  %s10817 = scalar_lea.vmem %s10783, 34 [#allocation4]
  %v10818 = vld [vmem:[%s10817] ss:$2 sm:$0xf]
  %s10819 = scalar_lea.vmem %s10783, 66 [#allocation4]
  %v10820 = vld [vmem:[%s10819] ss:$2 sm:$0xf]
  %s10821 = scalar_lea.vmem %s10783, 98 [#allocation4]
  %v10822 = vld [vmem:[%s10821] ss:$2 sm:$0xf]
  %s10823 = scalar_lea.vmem %s10783, 162 [#allocation4]
  %v10824 = vld [vmem:[%s10823] ss:$2 sm:$0xf]
  %s10825 = scalar_lea.vmem %s10783, 194 [#allocation4]
  %v10826 = vld [vmem:[%s10825] ss:$2 sm:$0xf]
  %s10827 = scalar_lea.vmem %s10783, 226 [#allocation4]
  %v10828 = vld [vmem:[%s10827] ss:$2 sm:$0xf]
  %s10829 = scalar_lea.vmem %s10783, 258 [#allocation4]
  %v10830 = vld [vmem:[%s10829] ss:$2 sm:$0xf]
  %s10831 = scalar_lea.vmem %s10783, 3 [#allocation4]
  %v10832 = vld [vmem:[%s10831] ss:$2 sm:$0xf]
  %s10833 = scalar_lea.vmem %s10783, 35 [#allocation4]
  %v10834 = vld [vmem:[%s10833] ss:$2 sm:$0xf]
  %s10835 = scalar_lea.vmem %s10783, 67 [#allocation4]
  %v10836 = vld [vmem:[%s10835] ss:$2 sm:$0xf]
  %s10837 = scalar_lea.vmem %s10783, 99 [#allocation4]
  %v10838 = vld [vmem:[%s10837] ss:$2 sm:$0xf]
  %s10839 = scalar_lea.vmem %s10783, 163 [#allocation4]
  %v10840 = vld [vmem:[%s10839] ss:$2 sm:$0xf]
  %s10841 = scalar_lea.vmem %s10783, 195 [#allocation4]
  %v10842 = vld [vmem:[%s10841] ss:$2 sm:$0xf]
  %s10843 = scalar_lea.vmem %s10783, 227 [#allocation4]
  %v10844 = vld [vmem:[%s10843] ss:$2 sm:$0xf]
  %s10845 = scalar_lea.vmem %s10783, 259 [#allocation4]
  %v10846 = vld [vmem:[%s10845] ss:$2 sm:$0xf]
  %10855 = vrot.lane.b32.xlu0 %v10609, 16
  %v10856 = vpop.permute.xlu0 %10855
  %10857 = vrot.lane.b32.xlu0 %v10611, 16
  %v10858 = vpop.permute.xlu0 %10857
  %10859 = vrot.lane.b32.xlu0 %v10613, 16
  %v10860 = vpop.permute.xlu0 %10859
  %10861 = vrot.lane.b32.xlu0 %v10615, 16
  %v10862 = vpop.permute.xlu0 %10861
  %10863 = vrot.lane.b32.xlu0 %v10617, 16
  %v10864 = vpop.permute.xlu0 %10863
  %10865 = vrot.lane.b32.xlu0 %v10619, 16
  %v10866 = vpop.permute.xlu0 %10865
  %10867 = vrot.lane.b32.xlu0 %v10621, 16
  %v10868 = vpop.permute.xlu0 %10867
  %10869 = vrot.lane.b32.xlu0 %v10623, 16
  %v10870 = vpop.permute.xlu0 %10869
  %v10879 = vsel %vm9725, %v10593, %v10856
  %v10880 = vsel %vm9725, %v10595, %v10858
  %v10881 = vsel %vm9725, %v10597, %v10860
  %v10882 = vsel %vm9725, %v10599, %v10862
  %v10883 = vsel %vm9725, %v10601, %v10864
  %v10884 = vsel %vm9725, %v10603, %v10866
  %v10885 = vsel %vm9725, %v10605, %v10868
  %v10886 = vsel %vm9725, %v10607, %v10870
  %10895 = vrot.lane.b32.xlu0 %v10641, 16
  %v10896 = vpop.permute.xlu0 %10895
  %10897 = vrot.lane.b32.xlu0 %v10643, 16
  %v10898 = vpop.permute.xlu0 %10897
  %10899 = vrot.lane.b32.xlu0 %v10645, 16
  %v10900 = vpop.permute.xlu0 %10899
  %10901 = vrot.lane.b32.xlu0 %v10647, 16
  %v10902 = vpop.permute.xlu0 %10901
  %10903 = vrot.lane.b32.xlu0 %v10649, 16
  %v10904 = vpop.permute.xlu0 %10903
  %10905 = vrot.lane.b32.xlu0 %v10651, 16
  %v10906 = vpop.permute.xlu0 %10905
  %10907 = vrot.lane.b32.xlu0 %v10653, 16
  %v10908 = vpop.permute.xlu0 %10907
  %10909 = vrot.lane.b32.xlu0 %v10655, 16
  %v10910 = vpop.permute.xlu0 %10909
  %v10919 = vsel %vm9725, %v10625, %v10896
  %v10920 = vsel %vm9725, %v10627, %v10898
  %v10921 = vsel %vm9725, %v10629, %v10900
  %v10922 = vsel %vm9725, %v10631, %v10902
  %v10923 = vsel %vm9725, %v10633, %v10904
  %v10924 = vsel %vm9725, %v10635, %v10906
  %v10925 = vsel %vm9725, %v10637, %v10908
  %v10926 = vsel %vm9725, %v10639, %v10910
  %10935 = vrot.lane.b32.xlu0 %v10672, 16
  %v10936 = vpop.permute.xlu0 %10935
  %10937 = vrot.lane.b32.xlu0 %v10674, 16
  %v10938 = vpop.permute.xlu0 %10937
  %10939 = vrot.lane.b32.xlu0 %v10676, 16
  %v10940 = vpop.permute.xlu0 %10939
  %10941 = vrot.lane.b32.xlu0 %v10678, 16
  %v10942 = vpop.permute.xlu0 %10941
  %10943 = vrot.lane.b32.xlu0 %v10680, 16
  %v10944 = vpop.permute.xlu0 %10943
  %10945 = vrot.lane.b32.xlu0 %v10682, 16
  %v10946 = vpop.permute.xlu0 %10945
  %10947 = vrot.lane.b32.xlu0 %v10684, 16
  %v10948 = vpop.permute.xlu0 %10947
  %10949 = vrot.lane.b32.xlu0 %v10686, 16
  %v10950 = vpop.permute.xlu0 %10949
  %v10959 = vsel %vm9725, %v10656, %v10936
  %v10960 = vsel %vm9725, %v10658, %v10938
  %v10961 = vsel %vm9725, %v10660, %v10940
  %v10962 = vsel %vm9725, %v10662, %v10942
  %v10963 = vsel %vm9725, %v10664, %v10944
  %v10964 = vsel %vm9725, %v10666, %v10946
  %v10965 = vsel %vm9725, %v10668, %v10948
  %v10966 = vsel %vm9725, %v10670, %v10950
  %10975 = vrot.lane.b32.xlu0 %v10704, 16
  %v10976 = vpop.permute.xlu0 %10975
  %10977 = vrot.lane.b32.xlu0 %v10706, 16
  %v10978 = vpop.permute.xlu0 %10977
  %10979 = vrot.lane.b32.xlu0 %v10708, 16
  %v10980 = vpop.permute.xlu0 %10979
  %10981 = vrot.lane.b32.xlu0 %v10710, 16
  %v10982 = vpop.permute.xlu0 %10981
  %10983 = vrot.lane.b32.xlu0 %v10712, 16
  %v10984 = vpop.permute.xlu0 %10983
  %10985 = vrot.lane.b32.xlu0 %v10714, 16
  %v10986 = vpop.permute.xlu0 %10985
  %10987 = vrot.lane.b32.xlu0 %v10716, 16
  %v10988 = vpop.permute.xlu0 %10987
  %10989 = vrot.lane.b32.xlu0 %v10718, 16
  %v10990 = vpop.permute.xlu0 %10989
  %v10999 = vsel %vm9725, %v10688, %v10976
  %v11000 = vsel %vm9725, %v10690, %v10978
  %v11001 = vsel %vm9725, %v10692, %v10980
  %v11002 = vsel %vm9725, %v10694, %v10982
  %v11003 = vsel %vm9725, %v10696, %v10984
  %v11004 = vsel %vm9725, %v10698, %v10986
  %v11005 = vsel %vm9725, %v10700, %v10988
  %v11006 = vsel %vm9725, %v10702, %v10990
  %11015 = vrot.lane.b32.xlu0 %v10736, 16
  %v11016 = vpop.permute.xlu0 %11015
  %11017 = vrot.lane.b32.xlu0 %v10738, 16
  %v11018 = vpop.permute.xlu0 %11017
  %11019 = vrot.lane.b32.xlu0 %v10740, 16
  %v11020 = vpop.permute.xlu0 %11019
  %11021 = vrot.lane.b32.xlu0 %v10742, 16
  %v11022 = vpop.permute.xlu0 %11021
  %11023 = vrot.lane.b32.xlu0 %v10744, 16
  %v11024 = vpop.permute.xlu0 %11023
  %11025 = vrot.lane.b32.xlu0 %v10746, 16
  %v11026 = vpop.permute.xlu0 %11025
  %11027 = vrot.lane.b32.xlu0 %v10748, 16
  %v11028 = vpop.permute.xlu0 %11027
  %11029 = vrot.lane.b32.xlu0 %v10750, 16
  %v11030 = vpop.permute.xlu0 %11029
  %v11039 = vsel %vm9725, %v10720, %v11016
  %v11040 = vsel %vm9725, %v10722, %v11018
  %v11041 = vsel %vm9725, %v10724, %v11020
  %v11042 = vsel %vm9725, %v10726, %v11022
  %v11043 = vsel %vm9725, %v10728, %v11024
  %v11044 = vsel %vm9725, %v10730, %v11026
  %v11045 = vsel %vm9725, %v10732, %v11028
  %v11046 = vsel %vm9725, %v10734, %v11030
  %11055 = vrot.lane.b32.xlu0 %v10768, 16
  %v11056 = vpop.permute.xlu0 %11055
  %11057 = vrot.lane.b32.xlu0 %v10770, 16
  %v11058 = vpop.permute.xlu0 %11057
  %11059 = vrot.lane.b32.xlu0 %v10772, 16
  %v11060 = vpop.permute.xlu0 %11059
  %11061 = vrot.lane.b32.xlu0 %v10774, 16
  %v11062 = vpop.permute.xlu0 %11061
  %11063 = vrot.lane.b32.xlu0 %v10776, 16
  %v11064 = vpop.permute.xlu0 %11063
  %11065 = vrot.lane.b32.xlu0 %v10778, 16
  %v11066 = vpop.permute.xlu0 %11065
  %11067 = vrot.lane.b32.xlu0 %v10780, 16
  %v11068 = vpop.permute.xlu0 %11067
  %11069 = vrot.lane.b32.xlu0 %v10782, 16
  %v11070 = vpop.permute.xlu0 %11069
  %v11079 = vsel %vm9725, %v10752, %v11056
  %v11080 = vsel %vm9725, %v10754, %v11058
  %v11081 = vsel %vm9725, %v10756, %v11060
  %v11082 = vsel %vm9725, %v10758, %v11062
  %v11083 = vsel %vm9725, %v10760, %v11064
  %v11084 = vsel %vm9725, %v10762, %v11066
  %v11085 = vsel %vm9725, %v10764, %v11068
  %v11086 = vsel %vm9725, %v10766, %v11070
  %11095 = vrot.lane.b32.xlu0 %v10800, 16
  %v11096 = vpop.permute.xlu0 %11095
  %11097 = vrot.lane.b32.xlu0 %v10802, 16
  %v11098 = vpop.permute.xlu0 %11097
  %11099 = vrot.lane.b32.xlu0 %v10804, 16
  %v11100 = vpop.permute.xlu0 %11099
  %11101 = vrot.lane.b32.xlu0 %v10806, 16
  %v11102 = vpop.permute.xlu0 %11101
  %11103 = vrot.lane.b32.xlu0 %v10808, 16
  %v11104 = vpop.permute.xlu0 %11103
  %11105 = vrot.lane.b32.xlu0 %v10810, 16
  %v11106 = vpop.permute.xlu0 %11105
  %11107 = vrot.lane.b32.xlu0 %v10812, 16
  %v11108 = vpop.permute.xlu0 %11107
  %11109 = vrot.lane.b32.xlu0 %v10814, 16
  %v11110 = vpop.permute.xlu0 %11109
  %v11119 = vsel %vm9725, %v10784, %v11096
  %v11120 = vsel %vm9725, %v10786, %v11098
  %v11121 = vsel %vm9725, %v10788, %v11100
  %v11122 = vsel %vm9725, %v10790, %v11102
  %v11123 = vsel %vm9725, %v10792, %v11104
  %v11124 = vsel %vm9725, %v10794, %v11106
  %v11125 = vsel %vm9725, %v10796, %v11108
  %v11126 = vsel %vm9725, %v10798, %v11110
  %11135 = vrot.lane.b32.xlu0 %v10832, 16
  %v11136 = vpop.permute.xlu0 %11135
  %11137 = vrot.lane.b32.xlu0 %v10834, 16
  %v11138 = vpop.permute.xlu0 %11137
  %11139 = vrot.lane.b32.xlu0 %v10836, 16
  %v11140 = vpop.permute.xlu0 %11139
  %11141 = vrot.lane.b32.xlu0 %v10838, 16
  %v11142 = vpop.permute.xlu0 %11141
  %11143 = vrot.lane.b32.xlu0 %v10840, 16
  %v11144 = vpop.permute.xlu0 %11143
  %11145 = vrot.lane.b32.xlu0 %v10842, 16
  %v11146 = vpop.permute.xlu0 %11145
  %11147 = vrot.lane.b32.xlu0 %v10844, 16
  %v11148 = vpop.permute.xlu0 %11147
  %11149 = vrot.lane.b32.xlu0 %v10846, 16
  %v11150 = vpop.permute.xlu0 %11149
  %v11159 = vsel %vm9725, %v10816, %v11136
  %v11160 = vsel %vm9725, %v10818, %v11138
  %v11161 = vsel %vm9725, %v10820, %v11140
  %v11162 = vsel %vm9725, %v10822, %v11142
  %v11163 = vsel %vm9725, %v10824, %v11144
  %v11164 = vsel %vm9725, %v10826, %v11146
  %v11165 = vsel %vm9725, %v10828, %v11148
  %v11166 = vsel %vm9725, %v10830, %v11150
  %11175 = vrot.lane.b32.xlu0 %v10919, 32
  %v11176 = vpop.permute.xlu0 %11175
  %11177 = vrot.lane.b32.xlu0 %v10920, 32
  %v11178 = vpop.permute.xlu0 %11177
  %11179 = vrot.lane.b32.xlu0 %v10921, 32
  %v11180 = vpop.permute.xlu0 %11179
  %11181 = vrot.lane.b32.xlu0 %v10922, 32
  %v11182 = vpop.permute.xlu0 %11181
  %11183 = vrot.lane.b32.xlu0 %v10923, 32
  %v11184 = vpop.permute.xlu0 %11183
  %11185 = vrot.lane.b32.xlu0 %v10924, 32
  %v11186 = vpop.permute.xlu0 %11185
  %11187 = vrot.lane.b32.xlu0 %v10925, 32
  %v11188 = vpop.permute.xlu0 %11187
  %11189 = vrot.lane.b32.xlu0 %v10926, 32
  %v11190 = vpop.permute.xlu0 %11189
  %v11199 = vsel %vm10046, %v10879, %v11176
  %v11200 = vsel %vm10046, %v10880, %v11178
  %v11201 = vsel %vm10046, %v10881, %v11180
  %v11202 = vsel %vm10046, %v10882, %v11182
  %v11203 = vsel %vm10046, %v10883, %v11184
  %v11204 = vsel %vm10046, %v10884, %v11186
  %v11205 = vsel %vm10046, %v10885, %v11188
  %v11206 = vsel %vm10046, %v10886, %v11190
  %11215 = vrot.lane.b32.xlu0 %v10999, 32
  %v11216 = vpop.permute.xlu0 %11215
  %11217 = vrot.lane.b32.xlu0 %v11000, 32
  %v11218 = vpop.permute.xlu0 %11217
  %11219 = vrot.lane.b32.xlu0 %v11001, 32
  %v11220 = vpop.permute.xlu0 %11219
  %11221 = vrot.lane.b32.xlu0 %v11002, 32
  %v11222 = vpop.permute.xlu0 %11221
  %11223 = vrot.lane.b32.xlu0 %v11003, 32
  %v11224 = vpop.permute.xlu0 %11223
  %11225 = vrot.lane.b32.xlu0 %v11004, 32
  %v11226 = vpop.permute.xlu0 %11225
  %11227 = vrot.lane.b32.xlu0 %v11005, 32
  %v11228 = vpop.permute.xlu0 %11227
  %11229 = vrot.lane.b32.xlu0 %v11006, 32
  %v11230 = vpop.permute.xlu0 %11229
  %v11239 = vsel %vm10046, %v10959, %v11216
  %v11240 = vsel %vm10046, %v10960, %v11218
  %v11241 = vsel %vm10046, %v10961, %v11220
  %v11242 = vsel %vm10046, %v10962, %v11222
  %v11243 = vsel %vm10046, %v10963, %v11224
  %v11244 = vsel %vm10046, %v10964, %v11226
  %v11245 = vsel %vm10046, %v10965, %v11228
  %v11246 = vsel %vm10046, %v10966, %v11230
  %11255 = vrot.lane.b32.xlu0 %v11079, 32
  %v11256 = vpop.permute.xlu0 %11255
  %11257 = vrot.lane.b32.xlu0 %v11080, 32
  %v11258 = vpop.permute.xlu0 %11257
  %11259 = vrot.lane.b32.xlu0 %v11081, 32
  %v11260 = vpop.permute.xlu0 %11259
  %11261 = vrot.lane.b32.xlu0 %v11082, 32
  %v11262 = vpop.permute.xlu0 %11261
  %11263 = vrot.lane.b32.xlu0 %v11083, 32
  %v11264 = vpop.permute.xlu0 %11263
  %11265 = vrot.lane.b32.xlu0 %v11084, 32
  %v11266 = vpop.permute.xlu0 %11265
  %11267 = vrot.lane.b32.xlu0 %v11085, 32
  %v11268 = vpop.permute.xlu0 %11267
  %11269 = vrot.lane.b32.xlu0 %v11086, 32
  %v11270 = vpop.permute.xlu0 %11269
  %v11279 = vsel %vm10046, %v11039, %v11256
  %v11280 = vsel %vm10046, %v11040, %v11258
  %v11281 = vsel %vm10046, %v11041, %v11260
  %v11282 = vsel %vm10046, %v11042, %v11262
  %v11283 = vsel %vm10046, %v11043, %v11264
  %v11284 = vsel %vm10046, %v11044, %v11266
  %v11285 = vsel %vm10046, %v11045, %v11268
  %v11286 = vsel %vm10046, %v11046, %v11270
  %11295 = vrot.lane.b32.xlu0 %v11159, 32
  %v11296 = vpop.permute.xlu0 %11295
  %11297 = vrot.lane.b32.xlu0 %v11160, 32
  %v11298 = vpop.permute.xlu0 %11297
  %11299 = vrot.lane.b32.xlu0 %v11161, 32
  %v11300 = vpop.permute.xlu0 %11299
  %11301 = vrot.lane.b32.xlu0 %v11162, 32
  %v11302 = vpop.permute.xlu0 %11301
  %11303 = vrot.lane.b32.xlu0 %v11163, 32
  %v11304 = vpop.permute.xlu0 %11303
  %11305 = vrot.lane.b32.xlu0 %v11164, 32
  %v11306 = vpop.permute.xlu0 %11305
  %11307 = vrot.lane.b32.xlu0 %v11165, 32
  %v11308 = vpop.permute.xlu0 %11307
  %11309 = vrot.lane.b32.xlu0 %v11166, 32
  %v11310 = vpop.permute.xlu0 %11309
  %v11319 = vsel %vm10046, %v11119, %v11296
  %v11320 = vsel %vm10046, %v11120, %v11298
  %v11321 = vsel %vm10046, %v11121, %v11300
  %v11322 = vsel %vm10046, %v11122, %v11302
  %v11323 = vsel %vm10046, %v11123, %v11304
  %v11324 = vsel %vm10046, %v11124, %v11306
  %v11325 = vsel %vm10046, %v11125, %v11308
  %v11326 = vsel %vm10046, %v11126, %v11310
  %11335 = vrot.lane.b32.xlu0 %v11239, 64
  %v11336 = vpop.permute.xlu0 %11335
  %11337 = vrot.lane.b32.xlu0 %v11240, 64
  %v11338 = vpop.permute.xlu0 %11337
  %11339 = vrot.lane.b32.xlu0 %v11241, 64
  %v11340 = vpop.permute.xlu0 %11339
  %11341 = vrot.lane.b32.xlu0 %v11242, 64
  %v11342 = vpop.permute.xlu0 %11341
  %11343 = vrot.lane.b32.xlu0 %v11243, 64
  %v11344 = vpop.permute.xlu0 %11343
  %11345 = vrot.lane.b32.xlu0 %v11244, 64
  %v11346 = vpop.permute.xlu0 %11345
  %11347 = vrot.lane.b32.xlu0 %v11245, 64
  %v11348 = vpop.permute.xlu0 %11347
  %11349 = vrot.lane.b32.xlu0 %v11246, 64
  %v11350 = vpop.permute.xlu0 %11349
  %v11359 = vsel %vm10207, %v11199, %v11336
  %v11360 = vsel %vm10207, %v11200, %v11338
  %v11361 = vsel %vm10207, %v11201, %v11340
  %v11362 = vsel %vm10207, %v11202, %v11342
  %v11363 = vsel %vm10207, %v11203, %v11344
  %v11364 = vsel %vm10207, %v11204, %v11346
  %v11365 = vsel %vm10207, %v11205, %v11348
  %v11366 = vsel %vm10207, %v11206, %v11350
  %11375 = vrot.lane.b32.xlu0 %v11319, 64
  %v11376 = vpop.permute.xlu0 %11375
  %11377 = vrot.lane.b32.xlu0 %v11320, 64
  %v11378 = vpop.permute.xlu0 %11377
  %11379 = vrot.lane.b32.xlu0 %v11321, 64
  %v11380 = vpop.permute.xlu0 %11379
  %11381 = vrot.lane.b32.xlu0 %v11322, 64
  %v11382 = vpop.permute.xlu0 %11381
  %11383 = vrot.lane.b32.xlu0 %v11323, 64
  %v11384 = vpop.permute.xlu0 %11383
  %11385 = vrot.lane.b32.xlu0 %v11324, 64
  %v11386 = vpop.permute.xlu0 %11385
  %11387 = vrot.lane.b32.xlu0 %v11325, 64
  %v11388 = vpop.permute.xlu0 %11387
  %11389 = vrot.lane.b32.xlu0 %v11326, 64
  %v11390 = vpop.permute.xlu0 %11389
  %v11399 = vsel %vm10207, %v11279, %v11376
  %v11400 = vsel %vm10207, %v11280, %v11378
  %v11401 = vsel %vm10207, %v11281, %v11380
  %v11402 = vsel %vm10207, %v11282, %v11382
  %v11403 = vsel %vm10207, %v11283, %v11384
  %v11404 = vsel %vm10207, %v11284, %v11386
  %v11405 = vsel %vm10207, %v11285, %v11388
  %v11406 = vsel %vm10207, %v11286, %v11390
  %v11423 = vrot.slane %v11399, 4
  %v11424 = vrot.slane %v11400, 4
  %v11425 = vrot.slane %v11401, 4
  %v11426 = vrot.slane %v11402, 4
  %v11427 = vrot.slane %v11403, 4
  %v11428 = vrot.slane %v11404, 4
  %v11429 = vrot.slane %v11405, 4
  %v11430 = vrot.slane %v11406, 4
  %vm11431 = vcmask 1043456
  %v11432 = vsel %vm11431, %v11359, %v11423
  %v11433 = vsel %vm11431, %v11360, %v11424
  %v11434 = vsel %vm11431, %v11361, %v11425
  %v11435 = vsel %vm11431, %v11362, %v11426
  %v11436 = vsel %vm11431, %v11363, %v11427
  %v11437 = vsel %vm11431, %v11364, %v11428
  %v11438 = vsel %vm11431, %v11365, %v11429
  %v11439 = vsel %vm11431, %v11366, %v11430
  %v11440 = vld [vmem:[%s3] sm:$0xff]
  %v11441 = vld [vmem:[%s3 + $0x8] sm:$0xff]
  %v11442 = vld [vmem:[%s3 + $0x10] sm:$0xff]
  %v11443 = vld [vmem:[%s3 + $0x18] sm:$0xff]
  %v11444 = vld [vmem:[%s3 + $0x20] sm:$0xff]
  %v11445 = vld [vmem:[%s3 + $0x28] sm:$0xff]
  %v11446 = vld [vmem:[%s3 + $0x30] sm:$0xff]
  %v11447 = vld [vmem:[%s3 + $0x38] sm:$0xff]
  %v11448 = vld [vmem:[%s3 + $0x40] sm:$0xff]
  %v11449 = vld [vmem:[%s3 + $0x48] sm:$0xff]
  %v11450 = vld [vmem:[%s3 + $0x50] sm:$0xff]
  %v11451 = vld [vmem:[%s3 + $0x58] sm:$0xff]
  %v11452 = vld [vmem:[%s3 + $0x60] sm:$0xff]
  %v11453 = vld [vmem:[%s3 + $0x68] sm:$0xff]
  %v11454 = vld [vmem:[%s3 + $0x70] sm:$0xff]
  %v11455 = vld [vmem:[%s3 + $0x78] sm:$0xff]
  %v11456 = vld [vmem:[%s3 + $0x80] sm:$0xff]
  %v11457 = vld [vmem:[%s3 + $0x88] sm:$0xff]
  %v11458 = vld [vmem:[%s3 + $0x90] sm:$0xff]
  %v11459 = vld [vmem:[%s3 + $0x98] sm:$0xff]
  %v11460 = vld [vmem:[%s3 + $0xa0] sm:$0xff]
  %v11461 = vld [vmem:[%s3 + $0xa8] sm:$0xff]
  %v11462 = vld [vmem:[%s3 + $0xb0] sm:$0xff]
  %v11463 = vld [vmem:[%s3 + $0xb8] sm:$0xff]
  %v11464 = vld [vmem:[%s3 + $0xc0] sm:$0xff]
  %v11465 = vld [vmem:[%s3 + $0xc8] sm:$0xff]
  %v11466 = vld [vmem:[%s3 + $0xd0] sm:$0xff]
  %v11467 = vld [vmem:[%s3 + $0xd8] sm:$0xff]
  %v11468 = vld [vmem:[%s3 + $0xe0] sm:$0xff]
  %v11469 = vld [vmem:[%s3 + $0xe8] sm:$0xff]
  %v11470 = vld [vmem:[%s3 + $0xf0] sm:$0xff]
  %v11471 = vld [vmem:[%s3 + $0xf8] sm:$0xff]
  %11472 = vst [vmem:[#allocation1] ss:$2 sm:$0xff] %v11432
  %s11473 = scalar_lea.vmem [#allocation1], 1
  %11474 = vst [vmem:[%s11473] ss:$2 sm:$0xff] %v11433
  %s11475 = scalar_lea.vmem [#allocation1], 16
  %11476 = vst [vmem:[%s11475] ss:$2 sm:$0xff] %v11434
  %s11477 = scalar_lea.vmem [#allocation1], 17
  %11478 = vst [vmem:[%s11477] ss:$2 sm:$0xff] %v11435
  %s11479 = scalar_lea.vmem [#allocation1], 32
  %11480 = vst [vmem:[%s11479] ss:$2 sm:$0xff] %v11436
  %s11481 = scalar_lea.vmem [#allocation1], 33
  %11482 = vst [vmem:[%s11481] ss:$2 sm:$0xff] %v11437
  %s11483 = scalar_lea.vmem [#allocation1], 48
  %11484 = vst [vmem:[%s11483] ss:$2 sm:$0xff] %v11438
  %s11485 = scalar_lea.vmem [#allocation1], 49
  %11486 = vst [vmem:[%s11485] ss:$2 sm:$0xff] %v11439
  %v11487 = vld.sshfl [vmem:[#allocation1] sm:$0xff pattern:$0x75316420]
  %v11488 = vld.sshfl [vmem:[#allocation1 + $0x8] sm:$0xff pattern:$0x75316420]
  %v11489 = vld.sshfl [vmem:[#allocation1 + $0x10] sm:$0xff pattern:$0x75316420]
  %v11490 = vld.sshfl [vmem:[#allocation1 + $0x18] sm:$0xff pattern:$0x75316420]
  %v11491 = vld.sshfl [vmem:[#allocation1 + $0x20] sm:$0xff pattern:$0x75316420]
  %v11492 = vld.sshfl [vmem:[#allocation1 + $0x28] sm:$0xff pattern:$0x75316420]
  %v11493 = vld.sshfl [vmem:[#allocation1 + $0x30] sm:$0xff pattern:$0x75316420]
  %v11494 = vld.sshfl [vmem:[#allocation1 + $0x38] sm:$0xff pattern:$0x75316420]
  %11503 = vmatpush.msra.mxu0 %v11455
  %11504 = vmatpush.msra.mxu0 %v11454
  %11505 = vmatpush.msra.mxu0 %v11453
  %11506 = vmatpush.msra.mxu0 %v11452
  %11507 = vmatpush.msra.mxu0 %v11451
  %11508 = vmatpush.msra.mxu0 %v11450
  %11509 = vmatpush.msra.mxu0 %v11449
  %11510 = vmatpush.msra.mxu0 %v11448
  %11511 = vmatpush.msra.mxu0 %v11447
  %11512 = vmatpush.msra.mxu0 %v11446
  %11513 = vmatpush.msra.mxu0 %v11445
  %11514 = vmatpush.msra.mxu0 %v11444
  %11515 = vmatpush.msra.mxu0 %v11443
  %11516 = vmatpush.msra.mxu0 %v11442
  %11517 = vmatpush.msra.mxu0 %v11441
  %11518 = vmatpush.msra.mxu0 %v11440
  %11519 = vmatmul.f32.gmra.mxu0 %v11487
  %v11520 = vpop.f32.mrf.mxu0
  %v11521 = vadd.f32 0.0, %v11520
  %11522 = vmatmul.f32.gmra.mxu0 %v11489
  %v11523 = vpop.f32.mrf.mxu0
  %v11524 = vadd.f32 0.0, %v11523
  %11525 = vmatmul.f32.gmra.mxu0 %v11491
  %v11526 = vpop.f32.mrf.mxu0
  %v11527 = vadd.f32 0.0, %v11526
  %11528 = vmatmul.f32.gmra.mxu0 %v11493
  %v11529 = vpop.f32.mrf.mxu0
  %v11530 = vadd.f32 0.0, %v11529
  %11531 = vdwg.mxu0
  %11532 = vmatpush.msra.mxu0 %v11471
  %11533 = vmatpush.msra.mxu0 %v11470
  %11534 = vmatpush.msra.mxu0 %v11469
  %11535 = vmatpush.msra.mxu0 %v11468
  %11536 = vmatpush.msra.mxu0 %v11467
  %11537 = vmatpush.msra.mxu0 %v11466
  %11538 = vmatpush.msra.mxu0 %v11465
  %11539 = vmatpush.msra.mxu0 %v11464
  %11540 = vmatpush.msra.mxu0 %v11463
  %11541 = vmatpush.msra.mxu0 %v11462
  %11542 = vmatpush.msra.mxu0 %v11461
  %11543 = vmatpush.msra.mxu0 %v11460
  %11544 = vmatpush.msra.mxu0 %v11459
  %11545 = vmatpush.msra.mxu0 %v11458
  %11546 = vmatpush.msra.mxu0 %v11457
  %11547 = vmatpush.msra.mxu0 %v11456
  %11548 = vmatmul.f32.gmra.mxu0 %v11488
  %v11549 = vpop.f32.mrf.mxu0
  %v11550 = vadd.f32 %v11521, %v11549
  %11551 = vmatmul.f32.gmra.mxu0 %v11490
  %v11552 = vpop.f32.mrf.mxu0
  %v11553 = vadd.f32 %v11524, %v11552
  %11554 = vmatmul.f32.gmra.mxu0 %v11492
  %v11555 = vpop.f32.mrf.mxu0
  %v11556 = vadd.f32 %v11527, %v11555
  %11557 = vmatmul.f32.gmra.mxu0 %v11494
  %v11558 = vpop.f32.mrf.mxu0
  %v11559 = vadd.f32 %v11530, %v11558
  %11560 = vdwg.mxu0
  %v11561 = vsel %vm10046, %v11550, 0.0
  %v11562 = vsel %vm10046, %v11553, 0.0
  %v11563 = vadd.f32 %v11561, %v11562
  %v11564 = vsel %vm10046, %v11556, 0.0
  %v11565 = vadd.f32 %v11563, %v11564
  %v11566 = vsel %vm10046, %v11559, 0.0
  %v11567 = vadd.f32 %v11565, %v11566
  %v11568 = vrot.slane %v11567, 4
  %v11569 = vadd.f32 %v11567, %v11568
  %v11570 = vrot.slane %v11569, 2
  %v11571 = vadd.f32 %v11569, %v11570
  %v11572 = vrot.slane %v11571, 1
  %v11573 = vadd.f32 %v11571, %v11572
  %v11574 = vrcp.pop 32.0
  %v11575 = vmul.f32 32.0, %v11574
  %v11576 = vsub.f32 1.0, %v11575
  %v11577 = vmul.f32 %v11574, %v11576
  %v11578 = vadd.f32 %v11574, %v11577
  %vm11579 = vweird.f32 %v11574
  %v11580 = vsel %vm11579, %v11574, %v11578
  %v11581 = vmul.f32 %v11573, %v11580
  %v11582 = vsub.f32 %v11550, %v11581
  %v11583 = vsub.f32 %v11553, %v11581
  %v11584 = vsub.f32 %v11556, %v11581
  %v11585 = vsub.f32 %v11559, %v11581
  %v11586 = vmul.f32 %v11582, %v11582
  %v11587 = vmul.f32 %v11583, %v11583
  %v11588 = vmul.f32 %v11584, %v11584
  %v11589 = vmul.f32 %v11585, %v11585
  %v11590 = vsel %vm10046, %v11586, 0.0
  %v11591 = vsel %vm10046, %v11587, 0.0
  %v11592 = vadd.f32 %v11590, %v11591
  %v11593 = vsel %vm10046, %v11588, 0.0
  %v11594 = vadd.f32 %v11592, %v11593
  %v11595 = vsel %vm10046, %v11589, 0.0
  %v11596 = vadd.f32 %v11594, %v11595
  %v11597 = vrot.slane %v11596, 4
  %v11598 = vadd.f32 %v11596, %v11597
  %v11599 = vrot.slane %v11598, 2
  %v11600 = vadd.f32 %v11598, %v11599
  %v11601 = vrot.slane %v11600, 1
  %v11602 = vadd.f32 %v11600, %v11601
  %v11603 = vmul.f32 %v11602, %v11580
  %v11604 = vadd.f32 %v11603, 1e-05
  %v11605 = vrsqrt.pop %v11604
  %v11606 = vmul.f32 %v11605, %v11604
  %v11607 = vmul.f32 %v11606, %v11605
  %v11608 = vmul.f32 0.5, %v11607
  %v11609 = vsub.f32 1.5, %v11608
  %v11610 = vmul.f32 %v11605, %v11609
  %vm11611 = vweird.f32 %v11604
  %vm11612 = vweird.f32 %v11605
  %vm11613 = vmor %vm11611, %vm11612
  %v11614 = vsel %vm11613, %v11605, %v11610
  %v11615 = vmul.f32 %v11582, %v11614
  %v11616 = vmul.f32 %v11583, %v11614
  %v11617 = vmul.f32 %v11584, %v11614
  %v11618 = vmul.f32 %v11585, %v11614
  %v11619 = vld [vmem:[%s7] sm:$0x1]
  %v11621 = vperm.slane %v11619, 0
  %v11623 = vmul.f32 %v11615, %v11621
  %v11624 = vmul.f32 %v11616, %v11621
  %v11625 = vmul.f32 %v11617, %v11621
  %v11626 = vmul.f32 %v11618, %v11621
  %v11627 = vld [vmem:[%s8] sm:$0x1]
  %v11629 = vperm.slane %v11627, 0
  %v11631 = vadd.f32 %v11623, %v11629
  %v11632 = vadd.f32 %v11624, %v11629
  %v11633 = vadd.f32 %v11625, %v11629
  %v11634 = vadd.f32 %v11626, %v11629
  %vm11635 = vcmp.ge.f32.partialorder %v11631, 0.0
  %vm11636 = vcmp.ge.f32.partialorder %v11632, 0.0
  %vm11637 = vcmp.ge.f32.partialorder %v11633, 0.0
  %vm11638 = vcmp.ge.f32.partialorder %v11634, 0.0
  %v11639 = vmul.f32 %v11631, 0.2
  %v11640 = vmul.f32 %v11632, 0.2
  %v11641 = vmul.f32 %v11633, 0.2
  %v11642 = vmul.f32 %v11634, 0.2
  %v11643 = vsel %vm11635, %v11631, %v11639
  %v11644 = vsel %vm11636, %v11632, %v11640
  %v11645 = vsel %vm11637, %v11633, %v11641
  %v11646 = vsel %vm11638, %v11634, %v11642
  %v11651 = vrot.slane %v11643, 4
  %v11652 = vrot.slane %v11644, 4
  %v11653 = vrot.slane %v11645, 4
  %v11654 = vrot.slane %v11646, 4
  %vm11659 = vcmask 257024
  %11660 = vst.msk [vmem:[#allocation5] sm:$0xf] %vm11659, %v11643
  %11661 = vst.msk [vmem:[#allocation5 + $0x4] sm:$0xf] %vm11659, %v11651
  %11662 = vst.msk [vmem:[#allocation5 + $0x8] sm:$0xf] %vm11659, %v11644
  %11663 = vst.msk [vmem:[#allocation5 + $0xc] sm:$0xf] %vm11659, %v11652
  %11664 = vst.msk [vmem:[#allocation5 + $0x10] sm:$0xf] %vm11659, %v11645
  %11665 = vst.msk [vmem:[#allocation5 + $0x14] sm:$0xf] %vm11659, %v11653
  %11666 = vst.msk [vmem:[#allocation5 + $0x18] sm:$0xf] %vm11659, %v11646
  %11667 = vst.msk [vmem:[#allocation5 + $0x1c] sm:$0xf] %vm11659, %v11654
  %v11668 = vld [vmem:[#allocation5] sm:$0x1]
  %v11669 = vld [vmem:[#allocation5 + $0x10] sm:$0x1]
  %v11670 = vld [vmem:[#allocation5 + $0x1] sm:$0x1]
  %v11671 = vld [vmem:[#allocation5 + $0x11] sm:$0x1]
  %v11672 = vld [vmem:[#allocation5 + $0x2] sm:$0x1]
  %v11673 = vld [vmem:[#allocation5 + $0x12] sm:$0x1]
  %v11674 = vld [vmem:[#allocation5 + $0x3] sm:$0x1]
  %v11675 = vld [vmem:[#allocation5 + $0x13] sm:$0x1]
  %s11676 = scalar_lea.vmem [#allocation5], 4
  %v11677 = vld [vmem:[%s11676] sm:$0x1]
  %v11678 = vld [vmem:[%s11676 + $0x10] sm:$0x1]
  %v11679 = vld [vmem:[%s11676 + $0x1] sm:$0x1]
  %v11680 = vld [vmem:[%s11676 + $0x11] sm:$0x1]
  %v11681 = vld [vmem:[%s11676 + $0x2] sm:$0x1]
  %v11682 = vld [vmem:[%s11676 + $0x12] sm:$0x1]
  %v11683 = vld [vmem:[%s11676 + $0x3] sm:$0x1]
  %v11684 = vld [vmem:[%s11676 + $0x13] sm:$0x1]
  %s11685 = scalar_lea.vmem [#allocation5], 8
  %v11686 = vld [vmem:[%s11685] sm:$0x1]
  %v11687 = vld [vmem:[%s11685 + $0x10] sm:$0x1]
  %v11688 = vld [vmem:[%s11685 + $0x1] sm:$0x1]
  %v11689 = vld [vmem:[%s11685 + $0x11] sm:$0x1]
  %v11690 = vld [vmem:[%s11685 + $0x2] sm:$0x1]
  %v11691 = vld [vmem:[%s11685 + $0x12] sm:$0x1]
  %v11692 = vld [vmem:[%s11685 + $0x3] sm:$0x1]
  %v11693 = vld [vmem:[%s11685 + $0x13] sm:$0x1]
  %s11694 = scalar_lea.vmem [#allocation5], 12
  %v11695 = vld [vmem:[%s11694] sm:$0x1]
  %v11696 = vld [vmem:[%s11694 + $0x10] sm:$0x1]
  %v11697 = vld [vmem:[%s11694 + $0x1] sm:$0x1]
  %v11698 = vld [vmem:[%s11694 + $0x11] sm:$0x1]
  %v11699 = vld [vmem:[%s11694 + $0x2] sm:$0x1]
  %v11700 = vld [vmem:[%s11694 + $0x12] sm:$0x1]
  %v11701 = vld [vmem:[%s11694 + $0x3] sm:$0x1]
  %v11702 = vld [vmem:[%s11694 + $0x13] sm:$0x1]
  %11705 = vrot.lane.b32.xlu0 %v11670, 32
  %v11706 = vpop.permute.xlu0 %11705
  %11707 = vrot.lane.b32.xlu0 %v11671, 32
  %v11708 = vpop.permute.xlu0 %11707
  %v11711 = vsel %vm10046, %v11668, %v11706
  %v11712 = vsel %vm10046, %v11669, %v11708
  %11715 = vrot.lane.b32.xlu0 %v11674, 32
  %v11716 = vpop.permute.xlu0 %11715
  %11717 = vrot.lane.b32.xlu0 %v11675, 32
  %v11718 = vpop.permute.xlu0 %11717
  %v11721 = vsel %vm10046, %v11672, %v11716
  %v11722 = vsel %vm10046, %v11673, %v11718
  %11725 = vrot.lane.b32.xlu0 %v11679, 32
  %v11726 = vpop.permute.xlu0 %11725
  %11727 = vrot.lane.b32.xlu0 %v11680, 32
  %v11728 = vpop.permute.xlu0 %11727
  %v11731 = vsel %vm10046, %v11677, %v11726
  %v11732 = vsel %vm10046, %v11678, %v11728
  %11735 = vrot.lane.b32.xlu0 %v11683, 32
  %v11736 = vpop.permute.xlu0 %11735
  %11737 = vrot.lane.b32.xlu0 %v11684, 32
  %v11738 = vpop.permute.xlu0 %11737
  %v11741 = vsel %vm10046, %v11681, %v11736
  %v11742 = vsel %vm10046, %v11682, %v11738
  %11745 = vrot.lane.b32.xlu0 %v11688, 32
  %v11746 = vpop.permute.xlu0 %11745
  %11747 = vrot.lane.b32.xlu0 %v11689, 32
  %v11748 = vpop.permute.xlu0 %11747
  %v11751 = vsel %vm10046, %v11686, %v11746
  %v11752 = vsel %vm10046, %v11687, %v11748
  %11755 = vrot.lane.b32.xlu0 %v11692, 32
  %v11756 = vpop.permute.xlu0 %11755
  %11757 = vrot.lane.b32.xlu0 %v11693, 32
  %v11758 = vpop.permute.xlu0 %11757
  %v11761 = vsel %vm10046, %v11690, %v11756
  %v11762 = vsel %vm10046, %v11691, %v11758
  %11765 = vrot.lane.b32.xlu0 %v11697, 32
  %v11766 = vpop.permute.xlu0 %11765
  %11767 = vrot.lane.b32.xlu0 %v11698, 32
  %v11768 = vpop.permute.xlu0 %11767
  %v11771 = vsel %vm10046, %v11695, %v11766
  %v11772 = vsel %vm10046, %v11696, %v11768
  %11775 = vrot.lane.b32.xlu0 %v11701, 32
  %v11776 = vpop.permute.xlu0 %11775
  %11777 = vrot.lane.b32.xlu0 %v11702, 32
  %v11778 = vpop.permute.xlu0 %11777
  %v11781 = vsel %vm10046, %v11699, %v11776
  %v11782 = vsel %vm10046, %v11700, %v11778
  %11785 = vrot.lane.b32.xlu0 %v11721, 64
  %v11786 = vpop.permute.xlu0 %11785
  %11787 = vrot.lane.b32.xlu0 %v11722, 64
  %v11788 = vpop.permute.xlu0 %11787
  %v11791 = vsel %vm10207, %v11711, %v11786
  %v11792 = vsel %vm10207, %v11712, %v11788
  %11795 = vrot.lane.b32.xlu0 %v11741, 64
  %v11796 = vpop.permute.xlu0 %11795
  %11797 = vrot.lane.b32.xlu0 %v11742, 64
  %v11798 = vpop.permute.xlu0 %11797
  %v11801 = vsel %vm10207, %v11731, %v11796
  %v11802 = vsel %vm10207, %v11732, %v11798
  %11805 = vrot.lane.b32.xlu0 %v11761, 64
  %v11806 = vpop.permute.xlu0 %11805
  %11807 = vrot.lane.b32.xlu0 %v11762, 64
  %v11808 = vpop.permute.xlu0 %11807
  %v11811 = vsel %vm10207, %v11751, %v11806
  %v11812 = vsel %vm10207, %v11752, %v11808
  %11815 = vrot.lane.b32.xlu0 %v11781, 64
  %v11816 = vpop.permute.xlu0 %11815
  %11817 = vrot.lane.b32.xlu0 %v11782, 64
  %v11818 = vpop.permute.xlu0 %11817
  %v11821 = vsel %vm10207, %v11771, %v11816
  %v11822 = vsel %vm10207, %v11772, %v11818
  %v11823 = vld [vmem:[%s4] sm:$0xff]
  %v11824 = vld [vmem:[%s4 + $0x8] sm:$0xff]
  %v11825 = vld [vmem:[%s4 + $0x10] sm:$0xff]
  %v11826 = vld [vmem:[%s4 + $0x18] sm:$0xff]
  %v11827 = vld [vmem:[%s4 + $0x20] sm:$0xff]
  %v11828 = vld [vmem:[%s4 + $0x28] sm:$0xff]
  %v11829 = vld [vmem:[%s4 + $0x30] sm:$0xff]
  %v11830 = vld [vmem:[%s4 + $0x38] sm:$0xff]
  %v11831 = vld [vmem:[%s4 + $0x40] sm:$0xff]
  %v11832 = vld [vmem:[%s4 + $0x48] sm:$0xff]
  %v11833 = vld [vmem:[%s4 + $0x50] sm:$0xff]
  %v11834 = vld [vmem:[%s4 + $0x58] sm:$0xff]
  %v11835 = vld [vmem:[%s4 + $0x60] sm:$0xff]
  %v11836 = vld [vmem:[%s4 + $0x68] sm:$0xff]
  %v11837 = vld [vmem:[%s4 + $0x70] sm:$0xff]
  %v11838 = vld [vmem:[%s4 + $0x78] sm:$0xff]
  %v11839 = vld [vmem:[%s4 + $0x80] sm:$0xff]
  %v11840 = vld [vmem:[%s4 + $0x88] sm:$0xff]
  %v11841 = vld [vmem:[%s4 + $0x90] sm:$0xff]
  %v11842 = vld [vmem:[%s4 + $0x98] sm:$0xff]
  %v11843 = vld [vmem:[%s4 + $0xa0] sm:$0xff]
  %v11844 = vld [vmem:[%s4 + $0xa8] sm:$0xff]
  %v11845 = vld [vmem:[%s4 + $0xb0] sm:$0xff]
  %v11846 = vld [vmem:[%s4 + $0xb8] sm:$0xff]
  %v11847 = vld [vmem:[%s4 + $0xc0] sm:$0xff]
  %v11848 = vld [vmem:[%s4 + $0xc8] sm:$0xff]
  %v11849 = vld [vmem:[%s4 + $0xd0] sm:$0xff]
  %v11850 = vld [vmem:[%s4 + $0xd8] sm:$0xff]
  %v11851 = vld [vmem:[%s4 + $0xe0] sm:$0xff]
  %v11852 = vld [vmem:[%s4 + $0xe8] sm:$0xff]
  %v11853 = vld [vmem:[%s4 + $0xf0] sm:$0xff]
  %v11854 = vld [vmem:[%s4 + $0xf8] sm:$0xff]
  %v11855 = vld [vmem:[%s4 + $0x100] sm:$0xff]
  %v11856 = vld [vmem:[%s4 + $0x108] sm:$0xff]
  %v11857 = vld [vmem:[%s4 + $0x110] sm:$0xff]
  %v11858 = vld [vmem:[%s4 + $0x118] sm:$0xff]
  %v11859 = vld [vmem:[%s4 + $0x120] sm:$0xff]
  %v11860 = vld [vmem:[%s4 + $0x128] sm:$0xff]
  %v11861 = vld [vmem:[%s4 + $0x130] sm:$0xff]
  %v11862 = vld [vmem:[%s4 + $0x138] sm:$0xff]
  %v11863 = vld [vmem:[%s4 + $0x140] sm:$0xff]
  %v11864 = vld [vmem:[%s4 + $0x148] sm:$0xff]
  %v11865 = vld [vmem:[%s4 + $0x150] sm:$0xff]
  %v11866 = vld [vmem:[%s4 + $0x158] sm:$0xff]
  %v11867 = vld [vmem:[%s4 + $0x160] sm:$0xff]
  %v11868 = vld [vmem:[%s4 + $0x168] sm:$0xff]
  %v11869 = vld [vmem:[%s4 + $0x170] sm:$0xff]
  %v11870 = vld [vmem:[%s4 + $0x178] sm:$0xff]
  %v11871 = vld [vmem:[%s4 + $0x180] sm:$0xff]
  %v11872 = vld [vmem:[%s4 + $0x188] sm:$0xff]
  %v11873 = vld [vmem:[%s4 + $0x190] sm:$0xff]
  %v11874 = vld [vmem:[%s4 + $0x198] sm:$0xff]
  %v11875 = vld [vmem:[%s4 + $0x1a0] sm:$0xff]
  %v11876 = vld [vmem:[%s4 + $0x1a8] sm:$0xff]
  %v11877 = vld [vmem:[%s4 + $0x1b0] sm:$0xff]
  %v11878 = vld [vmem:[%s4 + $0x1b8] sm:$0xff]
  %v11879 = vld [vmem:[%s4 + $0x1c0] sm:$0xff]
  %v11880 = vld [vmem:[%s4 + $0x1c8] sm:$0xff]
  %v11881 = vld [vmem:[%s4 + $0x1d0] sm:$0xff]
  %v11882 = vld [vmem:[%s4 + $0x1d8] sm:$0xff]
  %v11883 = vld [vmem:[%s4 + $0x1e0] sm:$0xff]
  %v11884 = vld [vmem:[%s4 + $0x1e8] sm:$0xff]
  %v11885 = vld [vmem:[%s4 + $0x1f0] sm:$0xff]
  %v11886 = vld [vmem:[%s4 + $0x1f8] sm:$0xff]
  %v11895 = vrot.slane %v11792, 7
  %vm11896 = vcmask 1041409
  %v11897 = vsel %vm11896, %v11895, %v11791
  %v11898 = vrot.slane %v11802, 7
  %v11899 = vsel %vm11896, %v11898, %v11801
  %v11900 = vrot.slane %v11812, 7
  %v11901 = vsel %vm11896, %v11900, %v11811
  %v11902 = vrot.slane %v11822, 7
  %v11903 = vsel %vm11896, %v11902, %v11821
  %11908 = vmatpush.msra.mxu0 %v11838
  %11909 = vmatpush.msra.mxu0 %v11837
  %11910 = vmatpush.msra.mxu0 %v11836
  %11911 = vmatpush.msra.mxu0 %v11835
  %11912 = vmatpush.msra.mxu0 %v11834
  %11913 = vmatpush.msra.mxu0 %v11833
  %11914 = vmatpush.msra.mxu0 %v11832
  %11915 = vmatpush.msra.mxu0 %v11831
  %11916 = vmatpush.msra.mxu0 %v11830
  %11917 = vmatpush.msra.mxu0 %v11829
  %11918 = vmatpush.msra.mxu0 %v11828
  %11919 = vmatpush.msra.mxu0 %v11827
  %11920 = vmatpush.msra.mxu0 %v11826
  %11921 = vmatpush.msra.mxu0 %v11825
  %11922 = vmatpush.msra.mxu0 %v11824
  %11923 = vmatpush.msra.mxu0 %v11823
  %11924 = vmatmul.f32.gmra.mxu0 %v11897
  %v11925 = vpop.f32.mrf.mxu0
  %v11926 = vadd.f32 0.0, %v11925
  %11927 = vdwg.mxu0
  %11928 = vmatpush.msra.mxu0 %v11854
  %11929 = vmatpush.msra.mxu0 %v11853
  %11930 = vmatpush.msra.mxu0 %v11852
  %11931 = vmatpush.msra.mxu0 %v11851
  %11932 = vmatpush.msra.mxu0 %v11850
  %11933 = vmatpush.msra.mxu0 %v11849
  %11934 = vmatpush.msra.mxu0 %v11848
  %11935 = vmatpush.msra.mxu0 %v11847
  %11936 = vmatpush.msra.mxu0 %v11846
  %11937 = vmatpush.msra.mxu0 %v11845
  %11938 = vmatpush.msra.mxu0 %v11844
  %11939 = vmatpush.msra.mxu0 %v11843
  %11940 = vmatpush.msra.mxu0 %v11842
  %11941 = vmatpush.msra.mxu0 %v11841
  %11942 = vmatpush.msra.mxu0 %v11840
  %11943 = vmatpush.msra.mxu0 %v11839
  %11944 = vmatmul.f32.gmra.mxu0 %v11899
  %v11945 = vpop.f32.mrf.mxu0
  %v11946 = vadd.f32 %v11926, %v11945
  %11947 = vdwg.mxu0
  %11948 = vmatpush.msra.mxu0 %v11870
  %11949 = vmatpush.msra.mxu0 %v11869
  %11950 = vmatpush.msra.mxu0 %v11868
  %11951 = vmatpush.msra.mxu0 %v11867
  %11952 = vmatpush.msra.mxu0 %v11866
  %11953 = vmatpush.msra.mxu0 %v11865
  %11954 = vmatpush.msra.mxu0 %v11864
  %11955 = vmatpush.msra.mxu0 %v11863
  %11956 = vmatpush.msra.mxu0 %v11862
  %11957 = vmatpush.msra.mxu0 %v11861
  %11958 = vmatpush.msra.mxu0 %v11860
  %11959 = vmatpush.msra.mxu0 %v11859
  %11960 = vmatpush.msra.mxu0 %v11858
  %11961 = vmatpush.msra.mxu0 %v11857
  %11962 = vmatpush.msra.mxu0 %v11856
  %11963 = vmatpush.msra.mxu0 %v11855
  %11964 = vmatmul.f32.gmra.mxu0 %v11901
  %v11965 = vpop.f32.mrf.mxu0
  %v11966 = vadd.f32 %v11946, %v11965
  %11967 = vdwg.mxu0
  %11968 = vmatpush.msra.mxu0 %v11886
  %11969 = vmatpush.msra.mxu0 %v11885
  %11970 = vmatpush.msra.mxu0 %v11884
  %11971 = vmatpush.msra.mxu0 %v11883
  %11972 = vmatpush.msra.mxu0 %v11882
  %11973 = vmatpush.msra.mxu0 %v11881
  %11974 = vmatpush.msra.mxu0 %v11880
  %11975 = vmatpush.msra.mxu0 %v11879
  %11976 = vmatpush.msra.mxu0 %v11878
  %11977 = vmatpush.msra.mxu0 %v11877
  %11978 = vmatpush.msra.mxu0 %v11876
  %11979 = vmatpush.msra.mxu0 %v11875
  %11980 = vmatpush.msra.mxu0 %v11874
  %11981 = vmatpush.msra.mxu0 %v11873
  %11982 = vmatpush.msra.mxu0 %v11872
  %11983 = vmatpush.msra.mxu0 %v11871
  %11984 = vmatmul.f32.gmra.mxu0 %v11903
  %v11985 = vpop.f32.mrf.mxu0
  %v11986 = vadd.f32 %v11966, %v11985
  %11987 = vdwg.mxu0
  %v11988 = vand.u32 2147483647, %v11986
  %v11989 = vsub.f32 0.0, %v11988
  %v11990 = vmul.f32 %v11989, 1.442695
  %v11991 = vpow.pop %v11990
  %vm11992 = vcmp.ge.f32.partialorder %v11986, 0.0
  %v11993 = vadd.f32 %v11991, 1.0
  %v11994 = vrcp.pop %v11993
  %v11995 = vmul.f32 %v11993, %v11994
  %v11996 = vsub.f32 1.0, %v11995
  %v11997 = vmul.f32 %v11994, %v11996
  %v11998 = vadd.f32 %v11994, %v11997
  %vm11999 = vweird.f32 %v11993
  %vm12000 = vweird.f32 %v11994
  %vm12001 = vmor %vm11999, %vm12000
  %v12002 = vsel %vm12001, %v11994, %v11998
  %v12003 = vand.u32 2147483647, %v11993
  %vm12004 = vcmp.eq.f32.partialorder %v12003, 8.507059e+37
  %v12005 = vand.u32 %v11993, 2147483648
  %v12006 = vor.u32 1.1754944e-38, %v12005
  %v12007 = vsel %vm12004, %v12006, %v12002
  %v12008 = vmul.f32 1.0, %v12007
  %v12009 = vmul.f32 %v11991, %v12007
  %v12010 = vsel %vm11992, %v12008, %v12009
  %vm12011 = vcmask 1024
  %12012 = vst.msk [vmem:[%s9] sm:$0x3] %vm12011, %v12010
  // Predicated region
  $region38: #{discriminator_forward.1} parent=0 // pred_check
    _
  $region39: #{discriminator_forward.1} parent=0 // pred_check_branch
    %12014 = sbr.rel (0) target = $region41
  $region40: #{discriminator_forward.1} parent=0 // pred_region
    _
  $region41: #{discriminator_forward.1} parent=0 // pred_fallthru
    _
  // Predicated region
  $region42: #{discriminator_forward.1} parent=0 // pred_check
    _
  $region43: #{discriminator_forward.1} parent=0 // pred_check_branch
    %12016 = sbr.rel (0) target = $region45
  $region44: #{discriminator_forward.1} parent=0 // pred_region
    _
  $region45: #{discriminator_forward.1} parent=0 // pred_fallthru
    _

</llo_original>
